<compile_context>
chip_gen: v7x
topology: tpu7x:2x2x1
jax: 0.10.0
libtpu: 0.0.40
codegen_flags: <defaults>
</compile_context>

<pallas_src>
import math

import jax
import jax.numpy as jnp
from jax.experimental import pallas as pl
from jax.experimental.pallas import tpu as pltpu

HIDDEN = 32
HEADS = 4
HEAD_DIM = HIDDEN // HEADS
LAYERS = 2
FF = HIDDEN * 4
EPS = 1e-5
MAX_LEN = 64      # positional-encoding table length (only first B rows used)
LANES = 128


# ----------------------------- static slab layout -----------------------------

def _build_layouts():
    mat, vec = {}, {}
    m, v = [0], [0]

    def add_mat(name, rows, cols):
        mat[name] = (m[0], rows, cols)
        m[0] += rows

    def add_vec(name, cols, rows=1):
        vec[name] = (v[0], cols)
        v[0] += rows

    add_vec("pe", HIDDEN, rows=MAX_LEN)                      # pe table, rows 0..63
    for l in range(LAYERS):
        p = f"enc{l}_"
        add_mat(p + "qkv_w", HIDDEN, 3 * HIDDEN); add_vec(p + "qkv_b", 3 * HIDDEN)
        add_mat(p + "out_w", HIDDEN, HIDDEN);     add_vec(p + "out_b", HIDDEN)
        add_mat(p + "ff1_w", HIDDEN, FF);         add_vec(p + "ff1_b", FF)
        add_mat(p + "ff2_w", FF, HIDDEN);         add_vec(p + "ff2_b", HIDDEN)
        for nm in ("ln1_g", "ln1_b", "ln2_g", "ln2_b"):
            add_vec(p + nm, HIDDEN)
    add_vec("enc_norm_g", HIDDEN); add_vec("enc_norm_b", HIDDEN)
    # hoisted cross-attention K/V weights for ALL decoder layers: (D, 2*LAYERS*D)
    add_mat("ca_kv_w", HIDDEN, 2 * LAYERS * HIDDEN)
    add_vec("ca_kv_b", 2 * LAYERS * HIDDEN)
    for l in range(LAYERS):
        p = f"dec{l}_"
        add_mat(p + "sa_qkv_w", HIDDEN, 3 * HIDDEN); add_vec(p + "sa_qkv_b", 3 * HIDDEN)
        add_mat(p + "sa_out_w", HIDDEN, HIDDEN);     add_vec(p + "sa_out_b", HIDDEN)
        add_mat(p + "ca_q_w", HIDDEN, HIDDEN);       add_vec(p + "ca_q_b", HIDDEN)
        add_mat(p + "ca_out_w", HIDDEN, HIDDEN);     add_vec(p + "ca_out_b", HIDDEN)
        add_mat(p + "ff1_w", HIDDEN, FF);            add_vec(p + "ff1_b", FF)
        add_mat(p + "ff2_w", FF, HIDDEN);            add_vec(p + "ff2_b", HIDDEN)
        for nm in ("ln1_g", "ln1_b", "ln2_g", "ln2_b", "ln3_g", "ln3_b"):
            add_vec(p + nm, HIDDEN)
    add_vec("dec_norm_g", HIDDEN); add_vec("dec_norm_b", HIDDEN)
    mrows = ((m[0] + 31) // 32) * 32
    vrows = ((v[0] + 7) // 8) * 8
    return mat, mrows, vec, vrows


MAT_LAYOUT, MAT_ROWS, VEC_LAYOUT, VEC_ROWS = _build_layouts()


# --------------------------------- the kernel ---------------------------------

def _make_kernel(B, S_src, S_tgt):
    D, H, Dh = HIDDEN, HEADS, HEAD_DIM
    f32, bf16 = jnp.float32, jnp.bfloat16

    def kernel(src_ref, tgt_ref, mat_ref, vec_ref, out_ref):
        # ---- static-slice views into the packed parameter slabs -------------
        def Wm(name):                                    # bf16 (rows, cols)
            o, r, c = MAT_LAYOUT[name]
            return mat_ref[o:o + r, 0:c]

        def Vv(name):                                    # f32 (1, cols)
            o, c = VEC_LAYOUT[name]
            return vec_ref[o:o + 1, 0:c]

        def lin(x2d, wname, bname):
            return (jnp.dot(x2d.astype(bf16), Wm(wname),
                            preferred_element_type=f32) + Vv(bname))

        def layernorm(x2d, gname, bname):
            m = jnp.mean(x2d, axis=-1, keepdims=True)
            v = jnp.mean(jnp.square(x2d - m), axis=-1, keepdims=True)
            return (x2d - m) * jax.lax.rsqrt(v + EPS) * Vv(gname) + Vv(bname)

        def split_heads(x3, col0):
            # take D lanes starting at col0 of x3 (B, S, C) and stack the H
            # heads on the leading axis -> (H*B, S, Dh)
            return jnp.concatenate(
                [x3[:, :, col0 + h * Dh: col0 + (h + 1) * Dh] for h in range(H)],
                axis=0)

        def attend(q_hb, k_hb, v_hb, Sq):
            # ONE batched dot per stage; batch dim = H*B.  q already scaled
            # (1/sqrt(Dh) folded into weights at init).
            s = jnp.einsum("nqd,nkd->nqk", q_hb.astype(bf16), k_hb.astype(bf16),
                           preferred_element_type=f32)
            s = s - jnp.max(s, axis=-1, keepdims=True)
            p = jnp.exp(s)
            p = p * pl.reciprocal(jnp.sum(p, axis=-1, keepdims=True), approx=True)
            ctx = jnp.einsum("nqk,nkd->nqd", p.astype(bf16), v_hb.astype(bf16),
                             preferred_element_type=f32)          # (H*B, Sq, Dh)
            ctx = jnp.concatenate([ctx[h * B:(h + 1) * B] for h in range(H)],
                                  axis=-1)                        # (B, Sq, D)
            return ctx.reshape(B * Sq, D)

        def ffn(x2d, p):
            h1 = jnp.maximum(lin(x2d, p + "ff1_w", p + "ff1_b"), 0.0)
            return lin(h1, p + "ff2_w", p + "ff2_b")

        # positional encoding quirk: pe[:B] broadcast over the sequence axis
        pe_off, _ = VEC_LAYOUT["pe"]
        pe_b = vec_ref[pe_off:pe_off + B, 0:D].reshape(B, 1, D)   # f32 (B,1,D)

        # ------------------------------ encoder ------------------------------
        x = (src_ref[...] + pe_b).reshape(B * S_src, D)
        for l in range(LAYERS):
            p = f"enc{l}_"
            qkv3 = lin(x, p + "qkv_w", p + "qkv_b").reshape(B, S_src, 3 * D)
            ctx = attend(split_heads(qkv3, 0), split_heads(qkv3, D),
                         split_heads(qkv3, 2 * D), S_src)
            sa = lin(ctx, p + "out_w", p + "out_b")
            x = layernorm(x + sa, p + "ln1_g", p + "ln1_b")
            x = layernorm(x + ffn(x, p), p + "ln2_g", p + "ln2_b")
        memory = layernorm(x, "enc_norm_g", "enc_norm_b")         # (B*S_src, D)

        # hoisted cross-attention K/V for BOTH decoder layers (memory is
        # layer-invariant): one (D, 4D) matmul instead of 2x (D, 2D) per call
        mem_kv3 = lin(memory, "ca_kv_w", "ca_kv_b").reshape(B, S_src,
                                                            2 * LAYERS * D)

        # ------------------------------ decoder ------------------------------
        y = (tgt_ref[...] + pe_b).reshape(B * S_tgt, D)
        for l in range(LAYERS):
            p = f"dec{l}_"
            # self-attention (unmasked: tgt_mask=None path)
            qkv3 = lin(y, p + "sa_qkv_w", p + "sa_qkv_b").reshape(B, S_tgt, 3 * D)
            ctx = attend(split_heads(qkv3, 0), split_heads(qkv3, D),
                         split_heads(qkv3, 2 * D), S_tgt)
            sa = lin(ctx, p + "sa_out_w", p + "sa_out_b")
            y = layernorm(y + sa, p + "ln1_g", p + "ln1_b")
            # cross-attention (Q from post-norm1 y; K/V hoisted above)
            q3 = lin(y, p + "ca_q_w", p + "ca_q_b").reshape(B, S_tgt, D)
            ctx = attend(split_heads(q3, 0),
                         split_heads(mem_kv3, 2 * l * D),
                         split_heads(mem_kv3, (2 * l + 1) * D), S_tgt)
            ca = lin(ctx, p + "ca_out_w", p + "ca_out_b")
            y = layernorm(y + ca, p + "ln2_g", p + "ln2_b")
            y = layernorm(y + ffn(y, p), p + "ln3_g", p + "ln3_b")
        y = layernorm(y, "dec_norm_g", "dec_norm_b")

        out_ref[...] = y.reshape(B, S_tgt, D).astype(out_ref.dtype)

    return kernel


# --------------------------------- forward ------------------------------------

def transformer_tsp_forward(params, src, tgt, src_mask=None, tgt_mask=None):
    # TODO(synk): src/tgt key-padding & attention masks and dropout are not
    # implemented (this reproduces the mask=None, eval-mode path).
    del src_mask, tgt_mask
    B, S_src, D = src.shape
    S_tgt = tgt.shape[1]
    assert D == HIDDEN
    assert B <= MAX_LEN, "PositionalEncoding quirk requires batch <= pe table length"

    kernel = _make_kernel(B, S_src, S_tgt)
    vmem = lambda: pl.BlockSpec(memory_space=pltpu.MemorySpace.VMEM)
    return pl.pallas_call(
        kernel,
        out_shape=jax.ShapeDtypeStruct((B, S_tgt, D), jnp.float32),
        in_specs=[vmem(), vmem(), vmem(), vmem()],
        out_specs=vmem(),
    )(src, tgt, params["mat"], params["vec"])


# -------------------------------- param setup ----------------------------------

def _make_pe_table(d_model, max_len=MAX_LEN):
    position = jnp.arange(max_len, dtype=jnp.float32)[:, None]
    div_term = jnp.exp(jnp.arange(0, d_model, 2, dtype=jnp.float32)
                       * (-math.log(10000.0) / d_model))
    pe = jnp.zeros((max_len, d_model), dtype=jnp.float32)
    pe = pe.at[:, 0::2].set(jnp.sin(position * div_term))
    pe = pe.at[:, 1::2].set(jnp.cos(position * div_term))
    return pe                                               # (max_len, d_model)


def _init_linear(key, in_dim, out_dim):
    """(in, out) weight + (1, out) bias, PyTorch nn.Linear-style init."""
    k1, k2 = jax.random.split(key)
    bound = 1.0 / math.sqrt(in_dim)
    w = jax.random.uniform(k1, (in_dim, out_dim), jnp.float32, -bound, bound)
    b = jax.random.uniform(k2, (1, out_dim), jnp.float32, -bound, bound)
    return w, b


def _init_inproj(key, d):
    """Fused QKV in-projection, pre-transposed to (d, 3d); zero bias."""
    bound = 1.0 / math.sqrt(d)
    w = jax.random.uniform(key, (d, 3 * d), jnp.float32, -bound, bound)
    b = jnp.zeros((1, 3 * d), jnp.float32)
    return w, b


def init_params(key):
    D = HIDDEN
    scale = 1.0 / math.sqrt(HEAD_DIM)
    keys = iter(jax.random.split(key, 32))
    mats, vecs = {}, {}

    def ln(prefix, names):
        for nm in names:
            vecs[prefix + nm + "_g"] = jnp.ones((1, D), jnp.float32)
            vecs[prefix + nm + "_b"] = jnp.zeros((1, D), jnp.float32)

    # encoder layers
    for l in range(LAYERS):
        p = f"enc{l}_"
        w, b = _init_inproj(next(keys), D)
        # fold 1/sqrt(Dh) into the Q columns (weight AND bias)
        w = w.at[:, :D].multiply(scale); b = b.at[:, :D].multiply(scale)
        mats[p + "qkv_w"] = w; vecs[p + "qkv_b"] = b
        w, b = _init_linear(next(keys), D, D);  mats[p + "out_w"] = w; vecs[p + "out_b"] = b
        w, b = _init_linear(next(keys), D, FF); mats[p + "ff1_w"] = w; vecs[p + "ff1_b"] = b
        w, b = _init_linear(next(keys), FF, D); mats[p + "ff2_w"] = w; vecs[p + "ff2_b"] = b
        ln(p, ("ln1", "ln2"))
    vecs["enc_norm_g"] = jnp.ones((1, D), jnp.float32)
    vecs["enc_norm_b"] = jnp.zeros((1, D), jnp.float32)

    # decoder layers (+ hoisted/fused cross-attention K/V for all layers)
    ca_kv_w = jnp.zeros((D, 2 * LAYERS * D), jnp.float32)
    ca_kv_b = jnp.zeros((1, 2 * LAYERS * D), jnp.float32)
    for l in range(LAYERS):
        p = f"dec{l}_"
        w, b = _init_inproj(next(keys), D)                  # self-attn in-proj
        w = w.at[:, :D].multiply(scale); b = b.at[:, :D].multiply(scale)
        mats[p + "sa_qkv_w"] = w; vecs[p + "sa_qkv_b"] = b
        w, b = _init_linear(next(keys), D, D);  mats[p + "sa_out_w"] = w; vecs[p + "sa_out_b"] = b
        w, b = _init_inproj(next(keys), D)                  # cross-attn in-proj
        mats[p + "ca_q_w"] = w[:, :D] * scale
        vecs[p + "ca_q_b"] = b[:, :D] * scale
        ca_kv_w = ca_kv_w.at[:, 2 * l * D:(2 * l + 2) * D].set(w[:, D:])
        ca_kv_b = ca_kv_b.at[:, 2 * l * D:(2 * l + 2) * D].set(b[:, D:])
        w, b = _init_linear(next(keys), D, D);  mats[p + "ca_out_w"] = w; vecs[p + "ca_out_b"] = b
        w, b = _init_linear(next(keys), D, FF); mats[p + "ff1_w"] = w; vecs[p + "ff1_b"] = b
        w, b = _init_linear(next(keys), FF, D); mats[p + "ff2_w"] = w; vecs[p + "ff2_b"] = b
        ln(p, ("ln1", "ln2", "ln3"))
    mats["ca_kv_w"] = ca_kv_w; vecs["ca_kv_b"] = ca_kv_b
    vecs["dec_norm_g"] = jnp.ones((1, D), jnp.float32)
    vecs["dec_norm_b"] = jnp.zeros((1, D), jnp.float32)

    # ---- pack everything into the two 128-lane slabs (at init time) ----
    mat_slab = jnp.zeros((MAT_ROWS, LANES), jnp.float32)
    for name, (o, r, c) in MAT_LAYOUT.items():
        mat_slab = mat_slab.at[o:o + r, :c].set(mats[name])
    vec_slab = jnp.zeros((VEC_ROWS, LANES), jnp.float32)
    pe_o, pe_c = VEC_LAYOUT["pe"]
    vec_slab = vec_slab.at[pe_o:pe_o + MAX_LEN, :pe_c].set(_make_pe_table(D))
    for name, (o, c) in VEC_LAYOUT.items():
        if name == "pe":
            continue
        vec_slab = vec_slab.at[o:o + 1, :c].set(vecs[name])

    return {"mat": mat_slab.astype(jnp.bfloat16),   # matrices: bf16 MXU operands
            "vec": vec_slab}                        # biases / LN / pe: f32


# ------------------------------------ main -------------------------------------

if __name__ == "__main__":
    key = jax.random.PRNGKey(0)
    k_src, k_tgt, k_par = jax.random.split(key, 3)

    B, S_SRC, S_TGT = 2, 8, 8
    src = jax.random.normal(k_src, (B, S_SRC, HIDDEN), dtype=jnp.float32)
    tgt = jax.random.normal(k_tgt, (B, S_TGT, HIDDEN), dtype=jnp.float32)

    params = init_params(k_par)
    fwd = jax.jit(transformer_tsp_forward)
    out = jax.block_until_ready(fwd(params, src, tgt))

    assert out.shape == (B, S_TGT, HIDDEN), out.shape
    assert bool(jnp.all(jnp.isfinite(out)))
    print("KERNEL_OK")
</pallas_src>

<mosaic_0001>
module attributes {stable_mosaic.version = 11 : i64} {
  func.func @kernel(%arg0: memref<2x8x32xf32, #tpu.memory_space<vmem>>, %arg1: memref<2x8x32xf32, #tpu.memory_space<vmem>>, %arg2: memref<1056x128xbf16, #tpu.memory_space<vmem>>, %arg3: memref<112x128xf32, #tpu.memory_space<vmem>>, %arg4: memref<2x8x32xf32, #tpu.memory_space<vmem>>) attributes {dimension_semantics = [], scalar_prefetch = 0 : i64, scratch_operands = 0 : i64, tpu.core_type = #tpu.core_type<tc>} {
    %c0 = arith.constant 0 : index
    %c0_0 = arith.constant 0 : index
    %0 = vector.load %arg3[%c0, %c0_0] : memref<112x128xf32, #tpu.memory_space<vmem>>, vector<2x32xf32>
    %1 = vector.shape_cast %0 : vector<2x32xf32> to vector<2x1x32xf32>
    %c0_1 = arith.constant 0 : index
    %c0_2 = arith.constant 0 : index
    %c0_3 = arith.constant 0 : index
    %2 = vector.load %arg0[%c0_1, %c0_2, %c0_3] : memref<2x8x32xf32, #tpu.memory_space<vmem>>, vector<2x8x32xf32>
    %3 = vector.broadcast %1 : vector<2x1x32xf32> to vector<2x8x32xf32>
    %4 = arith.addf %2, %3 : vector<2x8x32xf32>
    %5 = vector.shape_cast %4 : vector<2x8x32xf32> to vector<16x32xf32>
    %6 = arith.truncf %5 : vector<16x32xf32> to vector<16x32xbf16>
    %c0_4 = arith.constant 0 : index
    %c0_5 = arith.constant 0 : index
    %7 = vector.load %arg2[%c0_4, %c0_5] : memref<1056x128xbf16, #tpu.memory_space<vmem>>, vector<32x96xbf16>
    %cst = arith.constant dense<0.000000e+00> : vector<16x96xf32>
    %8 = tpu.matmul %6, %7, %cst {dimension_numbers = #tpu.dot_dimension_numbers<[1], [0], [0], [1], [0, 0, 1, 1], [], []>} : vector<16x32xbf16>, vector<32x96xbf16>, vector<16x96xf32> -> vector<16x96xf32>
    %c64 = arith.constant 64 : index
    %c0_6 = arith.constant 0 : index
    %9 = vector.load %arg3[%c64, %c0_6] : memref<112x128xf32, #tpu.memory_space<vmem>>, vector<1x96xf32>
    %10 = vector.broadcast %9 : vector<1x96xf32> to vector<16x96xf32>
    %11 = arith.addf %8, %10 : vector<16x96xf32>
    %12 = vector.shape_cast %11 : vector<16x96xf32> to vector<2x8x96xf32>
    %13 = vector.extract_strided_slice %12 {offsets = [0, 0, 0], sizes = [2, 8, 8], strides = [1, 1, 1]} : vector<2x8x96xf32> to vector<2x8x8xf32>
    %14 = vector.extract_strided_slice %12 {offsets = [0, 0, 8], sizes = [2, 8, 8], strides = [1, 1, 1]} : vector<2x8x96xf32> to vector<2x8x8xf32>
    %15 = vector.extract_strided_slice %12 {offsets = [0, 0, 16], sizes = [2, 8, 8], strides = [1, 1, 1]} : vector<2x8x96xf32> to vector<2x8x8xf32>
    %16 = vector.extract_strided_slice %12 {offsets = [0, 0, 24], sizes = [2, 8, 8], strides = [1, 1, 1]} : vector<2x8x96xf32> to vector<2x8x8xf32>
    %17 = tpu.concatenate %13, %14, %15, %16 in 0 : vector<2x8x8xf32>, vector<2x8x8xf32>, vector<2x8x8xf32>, vector<2x8x8xf32> -> vector<8x8x8xf32>
    %18 = vector.extract_strided_slice %12 {offsets = [0, 0, 32], sizes = [2, 8, 8], strides = [1, 1, 1]} : vector<2x8x96xf32> to vector<2x8x8xf32>
    %19 = vector.extract_strided_slice %12 {offsets = [0, 0, 40], sizes = [2, 8, 8], strides = [1, 1, 1]} : vector<2x8x96xf32> to vector<2x8x8xf32>
    %20 = vector.extract_strided_slice %12 {offsets = [0, 0, 48], sizes = [2, 8, 8], strides = [1, 1, 1]} : vector<2x8x96xf32> to vector<2x8x8xf32>
    %21 = vector.extract_strided_slice %12 {offsets = [0, 0, 56], sizes = [2, 8, 8], strides = [1, 1, 1]} : vector<2x8x96xf32> to vector<2x8x8xf32>
    %22 = tpu.concatenate %18, %19, %20, %21 in 0 : vector<2x8x8xf32>, vector<2x8x8xf32>, vector<2x8x8xf32>, vector<2x8x8xf32> -> vector<8x8x8xf32>
    %23 = vector.extract_strided_slice %12 {offsets = [0, 0, 64], sizes = [2, 8, 8], strides = [1, 1, 1]} : vector<2x8x96xf32> to vector<2x8x8xf32>
    %24 = vector.extract_strided_slice %12 {offsets = [0, 0, 72], sizes = [2, 8, 8], strides = [1, 1, 1]} : vector<2x8x96xf32> to vector<2x8x8xf32>
    %25 = vector.extract_strided_slice %12 {offsets = [0, 0, 80], sizes = [2, 8, 8], strides = [1, 1, 1]} : vector<2x8x96xf32> to vector<2x8x8xf32>
    %26 = vector.extract_strided_slice %12 {offsets = [0, 0, 88], sizes = [2, 8, 8], strides = [1, 1, 1]} : vector<2x8x96xf32> to vector<2x8x8xf32>
    %27 = tpu.concatenate %23, %24, %25, %26 in 0 : vector<2x8x8xf32>, vector<2x8x8xf32>, vector<2x8x8xf32>, vector<2x8x8xf32> -> vector<8x8x8xf32>
    %28 = arith.truncf %17 : vector<8x8x8xf32> to vector<8x8x8xbf16>
    %29 = arith.truncf %22 : vector<8x8x8xf32> to vector<8x8x8xbf16>
    "tpu.trace_start"() <{level = 10 : i32, message = "nqd,nkd->nqk"}> : () -> ()
    %cst_7 = arith.constant dense<0.000000e+00> : vector<8x8x8xf32>
    %30 = tpu.matmul %28, %29, %cst_7 {dimension_numbers = #tpu.dot_dimension_numbers<[2], [2], [1], [1], [0, 0, 0, 1, 1, 1], [0], [0]>} : vector<8x8x8xbf16>, vector<8x8x8xbf16>, vector<8x8x8xf32> -> vector<8x8x8xf32>
    "tpu.trace_stop"() : () -> ()
    %cst_8 = arith.constant dense<0xFF800000> : vector<8x8xf32>
    %31 = vector.multi_reduction <maximumf>, %30, %cst_8 [2] : vector<8x8x8xf32> to vector<8x8xf32>
    %32 = vector.shape_cast %31 : vector<8x8xf32> to vector<8x8x1xf32>
    %33 = vector.broadcast %32 : vector<8x8x1xf32> to vector<8x8x8xf32>
    %34 = arith.subf %30, %33 : vector<8x8x8xf32>
    %35 = math.exp %34 : vector<8x8x8xf32>
    %cst_9 = arith.constant dense<0.000000e+00> : vector<8x8xf32>
    %36 = vector.multi_reduction <add>, %35, %cst_9 [2] : vector<8x8x8xf32> to vector<8x8xf32>
    %37 = vector.shape_cast %36 : vector<8x8xf32> to vector<8x8x1xf32>
    %38 = tpu.reciprocal %37 {approx = true} : vector<8x8x1xf32> -> vector<8x8x1xf32>
    %39 = vector.broadcast %38 : vector<8x8x1xf32> to vector<8x8x8xf32>
    %40 = arith.mulf %35, %39 : vector<8x8x8xf32>
    %41 = arith.truncf %40 : vector<8x8x8xf32> to vector<8x8x8xbf16>
    %42 = arith.truncf %27 : vector<8x8x8xf32> to vector<8x8x8xbf16>
    "tpu.trace_start"() <{level = 10 : i32, message = "nqk,nkd->nqd"}> : () -> ()
    %cst_10 = arith.constant dense<0.000000e+00> : vector<8x8x8xf32>
    %43 = tpu.matmul %41, %42, %cst_10 {dimension_numbers = #tpu.dot_dimension_numbers<[2], [1], [1], [2], [0, 0, 0, 1, 1, 2], [0], [0]>} : vector<8x8x8xbf16>, vector<8x8x8xbf16>, vector<8x8x8xf32> -> vector<8x8x8xf32>
    "tpu.trace_stop"() : () -> ()
    %44 = vector.extract_strided_slice %43 {offsets = [0, 0, 0], sizes = [2, 8, 8], strides = [1, 1, 1]} : vector<8x8x8xf32> to vector<2x8x8xf32>
    %45 = vector.extract_strided_slice %43 {offsets = [2, 0, 0], sizes = [2, 8, 8], strides = [1, 1, 1]} : vector<8x8x8xf32> to vector<2x8x8xf32>
    %46 = vector.extract_strided_slice %43 {offsets = [4, 0, 0], sizes = [2, 8, 8], strides = [1, 1, 1]} : vector<8x8x8xf32> to vector<2x8x8xf32>
    %47 = vector.extract_strided_slice %43 {offsets = [6, 0, 0], sizes = [2, 8, 8], strides = [1, 1, 1]} : vector<8x8x8xf32> to vector<2x8x8xf32>
    %48 = tpu.concatenate %44, %45, %46, %47 in 2 : vector<2x8x8xf32>, vector<2x8x8xf32>, vector<2x8x8xf32>, vector<2x8x8xf32> -> vector<2x8x32xf32>
    %49 = vector.shape_cast %48 : vector<2x8x32xf32> to vector<16x32xf32>
    %50 = arith.truncf %49 : vector<16x32xf32> to vector<16x32xbf16>
    %c32 = arith.constant 32 : index
    %c0_11 = arith.constant 0 : index
    %51 = vector.load %arg2[%c32, %c0_11] : memref<1056x128xbf16, #tpu.memory_space<vmem>>, vector<32x32xbf16>
    %cst_12 = arith.constant dense<0.000000e+00> : vector<16x32xf32>
    %52 = tpu.matmul %50, %51, %cst_12 {dimension_numbers = #tpu.dot_dimension_numbers<[1], [0], [0], [1], [0, 0, 1, 1], [], []>} : vector<16x32xbf16>, vector<32x32xbf16>, vector<16x32xf32> -> vector<16x32xf32>
    %c65 = arith.constant 65 : index
    %c0_13 = arith.constant 0 : index
    %53 = vector.load %arg3[%c65, %c0_13] : memref<112x128xf32, #tpu.memory_space<vmem>>, vector<1x32xf32>
    %54 = vector.broadcast %53 : vector<1x32xf32> to vector<16x32xf32>
    %55 = arith.addf %52, %54 : vector<16x32xf32>
    %56 = arith.addf %5, %55 : vector<16x32xf32>
    %cst_14 = arith.constant dense<0.000000e+00> : vector<16xf32>
    %57 = vector.multi_reduction <add>, %56, %cst_14 [1] : vector<16x32xf32> to vector<16xf32>
    %58 = vector.shape_cast %57 : vector<16xf32> to vector<16x1xf32>
    %cst_15 = arith.constant 3.200000e+01 : f32
    %59 = vector.broadcast %cst_15 : f32 to vector<16x1xf32>
    %60 = arith.divf %58, %59 : vector<16x1xf32>
    %61 = vector.broadcast %60 : vector<16x1xf32> to vector<16x32xf32>
    %62 = arith.subf %56, %61 : vector<16x32xf32>
    %63 = arith.mulf %62, %62 : vector<16x32xf32>
    %cst_16 = arith.constant dense<0.000000e+00> : vector<16xf32>
    %64 = vector.multi_reduction <add>, %63, %cst_16 [1] : vector<16x32xf32> to vector<16xf32>
    %65 = vector.shape_cast %64 : vector<16xf32> to vector<16x1xf32>
    %cst_17 = arith.constant 3.200000e+01 : f32
    %66 = vector.broadcast %cst_17 : f32 to vector<16x1xf32>
    %67 = arith.divf %65, %66 : vector<16x1xf32>
    %68 = vector.broadcast %60 : vector<16x1xf32> to vector<16x32xf32>
    %69 = arith.subf %56, %68 : vector<16x32xf32>
    %cst_18 = arith.constant 9.99999974E-6 : f32
    %70 = vector.broadcast %cst_18 : f32 to vector<16x1xf32>
    %71 = arith.addf %67, %70 : vector<16x1xf32>
    %72 = math.rsqrt %71 : vector<16x1xf32>
    %73 = vector.broadcast %72 : vector<16x1xf32> to vector<16x32xf32>
    %74 = arith.mulf %69, %73 : vector<16x32xf32>
    %c68 = arith.constant 68 : index
    %c0_19 = arith.constant 0 : index
    %75 = vector.load %arg3[%c68, %c0_19] : memref<112x128xf32, #tpu.memory_space<vmem>>, vector<1x32xf32>
    %76 = vector.broadcast %75 : vector<1x32xf32> to vector<16x32xf32>
    %77 = arith.mulf %74, %76 : vector<16x32xf32>
    %c69 = arith.constant 69 : index
    %c0_20 = arith.constant 0 : index
    %78 = vector.load %arg3[%c69, %c0_20] : memref<112x128xf32, #tpu.memory_space<vmem>>, vector<1x32xf32>
    %79 = vector.broadcast %78 : vector<1x32xf32> to vector<16x32xf32>
    %80 = arith.addf %77, %79 : vector<16x32xf32>
    %81 = arith.truncf %80 : vector<16x32xf32> to vector<16x32xbf16>
    %c64_21 = arith.constant 64 : index
    %c0_22 = arith.constant 0 : index
    %82 = vector.load %arg2[%c64_21, %c0_22] : memref<1056x128xbf16, #tpu.memory_space<vmem>>, vector<32x128xbf16>
    %cst_23 = arith.constant dense<0.000000e+00> : vector<16x128xf32>
    %83 = tpu.matmul %81, %82, %cst_23 {dimension_numbers = #tpu.dot_dimension_numbers<[1], [0], [0], [1], [0, 0, 1, 1], [], []>} : vector<16x32xbf16>, vector<32x128xbf16>, vector<16x128xf32> -> vector<16x128xf32>
    %c66 = arith.constant 66 : index
    %c0_24 = arith.constant 0 : index
    %84 = vector.load %arg3[%c66, %c0_24] : memref<112x128xf32, #tpu.memory_space<vmem>>, vector<1x128xf32>
    %85 = vector.broadcast %84 : vector<1x128xf32> to vector<16x128xf32>
    %86 = arith.addf %83, %85 : vector<16x128xf32>
    %cst_25 = arith.constant 0.000000e+00 : f32
    %87 = vector.broadcast %cst_25 : f32 to vector<16x128xf32>
    %88 = arith.maximumf %86, %87 : vector<16x128xf32>
    %89 = arith.truncf %88 : vector<16x128xf32> to vector<16x128xbf16>
    %c96 = arith.constant 96 : index
    %c0_26 = arith.constant 0 : index
    %90 = vector.load %arg2[%c96, %c0_26] : memref<1056x128xbf16, #tpu.memory_space<vmem>>, vector<128x32xbf16>
    %cst_27 = arith.constant dense<0.000000e+00> : vector<16x32xf32>
    %91 = tpu.matmul %89, %90, %cst_27 {dimension_numbers = #tpu.dot_dimension_numbers<[1], [0], [0], [1], [0, 0, 1, 1], [], []>} : vector<16x128xbf16>, vector<128x32xbf16>, vector<16x32xf32> -> vector<16x32xf32>
    %c67 = arith.constant 67 : index
    %c0_28 = arith.constant 0 : index
    %92 = vector.load %arg3[%c67, %c0_28] : memref<112x128xf32, #tpu.memory_space<vmem>>, vector<1x32xf32>
    %93 = vector.broadcast %92 : vector<1x32xf32> to vector<16x32xf32>
    %94 = arith.addf %91, %93 : vector<16x32xf32>
    %95 = arith.addf %80, %94 : vector<16x32xf32>
    %cst_29 = arith.constant dense<0.000000e+00> : vector<16xf32>
    %96 = vector.multi_reduction <add>, %95, %cst_29 [1] : vector<16x32xf32> to vector<16xf32>
    %97 = vector.shape_cast %96 : vector<16xf32> to vector<16x1xf32>
    %cst_30 = arith.constant 3.200000e+01 : f32
    %98 = vector.broadcast %cst_30 : f32 to vector<16x1xf32>
    %99 = arith.divf %97, %98 : vector<16x1xf32>
    %100 = vector.broadcast %99 : vector<16x1xf32> to vector<16x32xf32>
    %101 = arith.subf %95, %100 : vector<16x32xf32>
    %102 = arith.mulf %101, %101 : vector<16x32xf32>
    %cst_31 = arith.constant dense<0.000000e+00> : vector<16xf32>
    %103 = vector.multi_reduction <add>, %102, %cst_31 [1] : vector<16x32xf32> to vector<16xf32>
    %104 = vector.shape_cast %103 : vector<16xf32> to vector<16x1xf32>
    %cst_32 = arith.constant 3.200000e+01 : f32
    %105 = vector.broadcast %cst_32 : f32 to vector<16x1xf32>
    %106 = arith.divf %104, %105 : vector<16x1xf32>
    %107 = vector.broadcast %99 : vector<16x1xf32> to vector<16x32xf32>
    %108 = arith.subf %95, %107 : vector<16x32xf32>
    %cst_33 = arith.constant 9.99999974E-6 : f32
    %109 = vector.broadcast %cst_33 : f32 to vector<16x1xf32>
    %110 = arith.addf %106, %109 : vector<16x1xf32>
    %111 = math.rsqrt %110 : vector<16x1xf32>
    %112 = vector.broadcast %111 : vector<16x1xf32> to vector<16x32xf32>
    %113 = arith.mulf %108, %112 : vector<16x32xf32>
    %c70 = arith.constant 70 : index
    %c0_34 = arith.constant 0 : index
    %114 = vector.load %arg3[%c70, %c0_34] : memref<112x128xf32, #tpu.memory_space<vmem>>, vector<1x32xf32>
    %115 = vector.broadcast %114 : vector<1x32xf32> to vector<16x32xf32>
    %116 = arith.mulf %113, %115 : vector<16x32xf32>
    %c71 = arith.constant 71 : index
    %c0_35 = arith.constant 0 : index
    %117 = vector.load %arg3[%c71, %c0_35] : memref<112x128xf32, #tpu.memory_space<vmem>>, vector<1x32xf32>
    %118 = vector.broadcast %117 : vector<1x32xf32> to vector<16x32xf32>
    %119 = arith.addf %116, %118 : vector<16x32xf32>
    %120 = arith.truncf %119 : vector<16x32xf32> to vector<16x32xbf16>
    %c224 = arith.constant 224 : index
    %c0_36 = arith.constant 0 : index
    %121 = vector.load %arg2[%c224, %c0_36] : memref<1056x128xbf16, #tpu.memory_space<vmem>>, vector<32x96xbf16>
    %cst_37 = arith.constant dense<0.000000e+00> : vector<16x96xf32>
    %122 = tpu.matmul %120, %121, %cst_37 {dimension_numbers = #tpu.dot_dimension_numbers<[1], [0], [0], [1], [0, 0, 1, 1], [], []>} : vector<16x32xbf16>, vector<32x96xbf16>, vector<16x96xf32> -> vector<16x96xf32>
    %c72 = arith.constant 72 : index
    %c0_38 = arith.constant 0 : index
    %123 = vector.load %arg3[%c72, %c0_38] : memref<112x128xf32, #tpu.memory_space<vmem>>, vector<1x96xf32>
    %124 = vector.broadcast %123 : vector<1x96xf32> to vector<16x96xf32>
    %125 = arith.addf %122, %124 : vector<16x96xf32>
    %126 = vector.shape_cast %125 : vector<16x96xf32> to vector<2x8x96xf32>
    %127 = vector.extract_strided_slice %126 {offsets = [0, 0, 0], sizes = [2, 8, 8], strides = [1, 1, 1]} : vector<2x8x96xf32> to vector<2x8x8xf32>
    %128 = vector.extract_strided_slice %126 {offsets = [0, 0, 8], sizes = [2, 8, 8], strides = [1, 1, 1]} : vector<2x8x96xf32> to vector<2x8x8xf32>
    %129 = vector.extract_strided_slice %126 {offsets = [0, 0, 16], sizes = [2, 8, 8], strides = [1, 1, 1]} : vector<2x8x96xf32> to vector<2x8x8xf32>
    %130 = vector.extract_strided_slice %126 {offsets = [0, 0, 24], sizes = [2, 8, 8], strides = [1, 1, 1]} : vector<2x8x96xf32> to vector<2x8x8xf32>
    %131 = tpu.concatenate %127, %128, %129, %130 in 0 : vector<2x8x8xf32>, vector<2x8x8xf32>, vector<2x8x8xf32>, vector<2x8x8xf32> -> vector<8x8x8xf32>
    %132 = vector.extract_strided_slice %126 {offsets = [0, 0, 32], sizes = [2, 8, 8], strides = [1, 1, 1]} : vector<2x8x96xf32> to vector<2x8x8xf32>
    %133 = vector.extract_strided_slice %126 {offsets = [0, 0, 40], sizes = [2, 8, 8], strides = [1, 1, 1]} : vector<2x8x96xf32> to vector<2x8x8xf32>
    %134 = vector.extract_strided_slice %126 {offsets = [0, 0, 48], sizes = [2, 8, 8], strides = [1, 1, 1]} : vector<2x8x96xf32> to vector<2x8x8xf32>
    %135 = vector.extract_strided_slice %126 {offsets = [0, 0, 56], sizes = [2, 8, 8], strides = [1, 1, 1]} : vector<2x8x96xf32> to vector<2x8x8xf32>
    %136 = tpu.concatenate %132, %133, %134, %135 in 0 : vector<2x8x8xf32>, vector<2x8x8xf32>, vector<2x8x8xf32>, vector<2x8x8xf32> -> vector<8x8x8xf32>
    %137 = vector.extract_strided_slice %126 {offsets = [0, 0, 64], sizes = [2, 8, 8], strides = [1, 1, 1]} : vector<2x8x96xf32> to vector<2x8x8xf32>
    %138 = vector.extract_strided_slice %126 {offsets = [0, 0, 72], sizes = [2, 8, 8], strides = [1, 1, 1]} : vector<2x8x96xf32> to vector<2x8x8xf32>
    %139 = vector.extract_strided_slice %126 {offsets = [0, 0, 80], sizes = [2, 8, 8], strides = [1, 1, 1]} : vector<2x8x96xf32> to vector<2x8x8xf32>
    %140 = vector.extract_strided_slice %126 {offsets = [0, 0, 88], sizes = [2, 8, 8], strides = [1, 1, 1]} : vector<2x8x96xf32> to vector<2x8x8xf32>
    %141 = tpu.concatenate %137, %138, %139, %140 in 0 : vector<2x8x8xf32>, vector<2x8x8xf32>, vector<2x8x8xf32>, vector<2x8x8xf32> -> vector<8x8x8xf32>
    %142 = arith.truncf %131 : vector<8x8x8xf32> to vector<8x8x8xbf16>
    %143 = arith.truncf %136 : vector<8x8x8xf32> to vector<8x8x8xbf16>
    "tpu.trace_start"() <{level = 10 : i32, message = "nqd,nkd->nqk"}> : () -> ()
    %cst_39 = arith.constant dense<0.000000e+00> : vector<8x8x8xf32>
    %144 = tpu.matmul %142, %143, %cst_39 {dimension_numbers = #tpu.dot_dimension_numbers<[2], [2], [1], [1], [0, 0, 0, 1, 1, 1], [0], [0]>} : vector<8x8x8xbf16>, vector<8x8x8xbf16>, vector<8x8x8xf32> -> vector<8x8x8xf32>
    "tpu.trace_stop"() : () -> ()
    %cst_40 = arith.constant dense<0xFF800000> : vector<8x8xf32>
    %145 = vector.multi_reduction <maximumf>, %144, %cst_40 [2] : vector<8x8x8xf32> to vector<8x8xf32>
    %146 = vector.shape_cast %145 : vector<8x8xf32> to vector<8x8x1xf32>
    %147 = vector.broadcast %146 : vector<8x8x1xf32> to vector<8x8x8xf32>
    %148 = arith.subf %144, %147 : vector<8x8x8xf32>
    %149 = math.exp %148 : vector<8x8x8xf32>
    %cst_41 = arith.constant dense<0.000000e+00> : vector<8x8xf32>
    %150 = vector.multi_reduction <add>, %149, %cst_41 [2] : vector<8x8x8xf32> to vector<8x8xf32>
    %151 = vector.shape_cast %150 : vector<8x8xf32> to vector<8x8x1xf32>
    %152 = tpu.reciprocal %151 {approx = true} : vector<8x8x1xf32> -> vector<8x8x1xf32>
    %153 = vector.broadcast %152 : vector<8x8x1xf32> to vector<8x8x8xf32>
    %154 = arith.mulf %149, %153 : vector<8x8x8xf32>
    %155 = arith.truncf %154 : vector<8x8x8xf32> to vector<8x8x8xbf16>
    %156 = arith.truncf %141 : vector<8x8x8xf32> to vector<8x8x8xbf16>
    "tpu.trace_start"() <{level = 10 : i32, message = "nqk,nkd->nqd"}> : () -> ()
    %cst_42 = arith.constant dense<0.000000e+00> : vector<8x8x8xf32>
    %157 = tpu.matmul %155, %156, %cst_42 {dimension_numbers = #tpu.dot_dimension_numbers<[2], [1], [1], [2], [0, 0, 0, 1, 1, 2], [0], [0]>} : vector<8x8x8xbf16>, vector<8x8x8xbf16>, vector<8x8x8xf32> -> vector<8x8x8xf32>
    "tpu.trace_stop"() : () -> ()
    %158 = vector.extract_strided_slice %157 {offsets = [0, 0, 0], sizes = [2, 8, 8], strides = [1, 1, 1]} : vector<8x8x8xf32> to vector<2x8x8xf32>
    %159 = vector.extract_strided_slice %157 {offsets = [2, 0, 0], sizes = [2, 8, 8], strides = [1, 1, 1]} : vector<8x8x8xf32> to vector<2x8x8xf32>
    %160 = vector.extract_strided_slice %157 {offsets = [4, 0, 0], sizes = [2, 8, 8], strides = [1, 1, 1]} : vector<8x8x8xf32> to vector<2x8x8xf32>
    %161 = vector.extract_strided_slice %157 {offsets = [6, 0, 0], sizes = [2, 8, 8], strides = [1, 1, 1]} : vector<8x8x8xf32> to vector<2x8x8xf32>
    %162 = tpu.concatenate %158, %159, %160, %161 in 2 : vector<2x8x8xf32>, vector<2x8x8xf32>, vector<2x8x8xf32>, vector<2x8x8xf32> -> vector<2x8x32xf32>
    %163 = vector.shape_cast %162 : vector<2x8x32xf32> to vector<16x32xf32>
    %164 = arith.truncf %163 : vector<16x32xf32> to vector<16x32xbf16>
    %c256 = arith.constant 256 : index
    %c0_43 = arith.constant 0 : index
    %165 = vector.load %arg2[%c256, %c0_43] : memref<1056x128xbf16, #tpu.memory_space<vmem>>, vector<32x32xbf16>
    %cst_44 = arith.constant dense<0.000000e+00> : vector<16x32xf32>
    %166 = tpu.matmul %164, %165, %cst_44 {dimension_numbers = #tpu.dot_dimension_numbers<[1], [0], [0], [1], [0, 0, 1, 1], [], []>} : vector<16x32xbf16>, vector<32x32xbf16>, vector<16x32xf32> -> vector<16x32xf32>
    %c73 = arith.constant 73 : index
    %c0_45 = arith.constant 0 : index
    %167 = vector.load %arg3[%c73, %c0_45] : memref<112x128xf32, #tpu.memory_space<vmem>>, vector<1x32xf32>
    %168 = vector.broadcast %167 : vector<1x32xf32> to vector<16x32xf32>
    %169 = arith.addf %166, %168 : vector<16x32xf32>
    %170 = arith.addf %119, %169 : vector<16x32xf32>
    %cst_46 = arith.constant dense<0.000000e+00> : vector<16xf32>
    %171 = vector.multi_reduction <add>, %170, %cst_46 [1] : vector<16x32xf32> to vector<16xf32>
    %172 = vector.shape_cast %171 : vector<16xf32> to vector<16x1xf32>
    %cst_47 = arith.constant 3.200000e+01 : f32
    %173 = vector.broadcast %cst_47 : f32 to vector<16x1xf32>
    %174 = arith.divf %172, %173 : vector<16x1xf32>
    %175 = vector.broadcast %174 : vector<16x1xf32> to vector<16x32xf32>
    %176 = arith.subf %170, %175 : vector<16x32xf32>
    %177 = arith.mulf %176, %176 : vector<16x32xf32>
    %cst_48 = arith.constant dense<0.000000e+00> : vector<16xf32>
    %178 = vector.multi_reduction <add>, %177, %cst_48 [1] : vector<16x32xf32> to vector<16xf32>
    %179 = vector.shape_cast %178 : vector<16xf32> to vector<16x1xf32>
    %cst_49 = arith.constant 3.200000e+01 : f32
    %180 = vector.broadcast %cst_49 : f32 to vector<16x1xf32>
    %181 = arith.divf %179, %180 : vector<16x1xf32>
    %182 = vector.broadcast %174 : vector<16x1xf32> to vector<16x32xf32>
    %183 = arith.subf %170, %182 : vector<16x32xf32>
    %cst_50 = arith.constant 9.99999974E-6 : f32
    %184 = vector.broadcast %cst_50 : f32 to vector<16x1xf32>
    %185 = arith.addf %181, %184 : vector<16x1xf32>
    %186 = math.rsqrt %185 : vector<16x1xf32>
    %187 = vector.broadcast %186 : vector<16x1xf32> to vector<16x32xf32>
    %188 = arith.mulf %183, %187 : vector<16x32xf32>
    %c76 = arith.constant 76 : index
    %c0_51 = arith.constant 0 : index
    %189 = vector.load %arg3[%c76, %c0_51] : memref<112x128xf32, #tpu.memory_space<vmem>>, vector<1x32xf32>
    %190 = vector.broadcast %189 : vector<1x32xf32> to vector<16x32xf32>
    %191 = arith.mulf %188, %190 : vector<16x32xf32>
    %c77 = arith.constant 77 : index
    %c0_52 = arith.constant 0 : index
    %192 = vector.load %arg3[%c77, %c0_52] : memref<112x128xf32, #tpu.memory_space<vmem>>, vector<1x32xf32>
    %193 = vector.broadcast %192 : vector<1x32xf32> to vector<16x32xf32>
    %194 = arith.addf %191, %193 : vector<16x32xf32>
    %195 = arith.truncf %194 : vector<16x32xf32> to vector<16x32xbf16>
    %c288 = arith.constant 288 : index
    %c0_53 = arith.constant 0 : index
    %196 = vector.load %arg2[%c288, %c0_53] : memref<1056x128xbf16, #tpu.memory_space<vmem>>, vector<32x128xbf16>
    %cst_54 = arith.constant dense<0.000000e+00> : vector<16x128xf32>
    %197 = tpu.matmul %195, %196, %cst_54 {dimension_numbers = #tpu.dot_dimension_numbers<[1], [0], [0], [1], [0, 0, 1, 1], [], []>} : vector<16x32xbf16>, vector<32x128xbf16>, vector<16x128xf32> -> vector<16x128xf32>
    %c74 = arith.constant 74 : index
    %c0_55 = arith.constant 0 : index
    %198 = vector.load %arg3[%c74, %c0_55] : memref<112x128xf32, #tpu.memory_space<vmem>>, vector<1x128xf32>
    %199 = vector.broadcast %198 : vector<1x128xf32> to vector<16x128xf32>
    %200 = arith.addf %197, %199 : vector<16x128xf32>
    %cst_56 = arith.constant 0.000000e+00 : f32
    %201 = vector.broadcast %cst_56 : f32 to vector<16x128xf32>
    %202 = arith.maximumf %200, %201 : vector<16x128xf32>
    %203 = arith.truncf %202 : vector<16x128xf32> to vector<16x128xbf16>
    %c320 = arith.constant 320 : index
    %c0_57 = arith.constant 0 : index
    %204 = vector.load %arg2[%c320, %c0_57] : memref<1056x128xbf16, #tpu.memory_space<vmem>>, vector<128x32xbf16>
    %cst_58 = arith.constant dense<0.000000e+00> : vector<16x32xf32>
    %205 = tpu.matmul %203, %204, %cst_58 {dimension_numbers = #tpu.dot_dimension_numbers<[1], [0], [0], [1], [0, 0, 1, 1], [], []>} : vector<16x128xbf16>, vector<128x32xbf16>, vector<16x32xf32> -> vector<16x32xf32>
    %c75 = arith.constant 75 : index
    %c0_59 = arith.constant 0 : index
    %206 = vector.load %arg3[%c75, %c0_59] : memref<112x128xf32, #tpu.memory_space<vmem>>, vector<1x32xf32>
    %207 = vector.broadcast %206 : vector<1x32xf32> to vector<16x32xf32>
    %208 = arith.addf %205, %207 : vector<16x32xf32>
    %209 = arith.addf %194, %208 : vector<16x32xf32>
    %cst_60 = arith.constant dense<0.000000e+00> : vector<16xf32>
    %210 = vector.multi_reduction <add>, %209, %cst_60 [1] : vector<16x32xf32> to vector<16xf32>
    %211 = vector.shape_cast %210 : vector<16xf32> to vector<16x1xf32>
    %cst_61 = arith.constant 3.200000e+01 : f32
    %212 = vector.broadcast %cst_61 : f32 to vector<16x1xf32>
    %213 = arith.divf %211, %212 : vector<16x1xf32>
    %214 = vector.broadcast %213 : vector<16x1xf32> to vector<16x32xf32>
    %215 = arith.subf %209, %214 : vector<16x32xf32>
    %216 = arith.mulf %215, %215 : vector<16x32xf32>
    %cst_62 = arith.constant dense<0.000000e+00> : vector<16xf32>
    %217 = vector.multi_reduction <add>, %216, %cst_62 [1] : vector<16x32xf32> to vector<16xf32>
    %218 = vector.shape_cast %217 : vector<16xf32> to vector<16x1xf32>
    %cst_63 = arith.constant 3.200000e+01 : f32
    %219 = vector.broadcast %cst_63 : f32 to vector<16x1xf32>
    %220 = arith.divf %218, %219 : vector<16x1xf32>
    %221 = vector.broadcast %213 : vector<16x1xf32> to vector<16x32xf32>
    %222 = arith.subf %209, %221 : vector<16x32xf32>
    %cst_64 = arith.constant 9.99999974E-6 : f32
    %223 = vector.broadcast %cst_64 : f32 to vector<16x1xf32>
    %224 = arith.addf %220, %223 : vector<16x1xf32>
    %225 = math.rsqrt %224 : vector<16x1xf32>
    %226 = vector.broadcast %225 : vector<16x1xf32> to vector<16x32xf32>
    %227 = arith.mulf %222, %226 : vector<16x32xf32>
    %c78 = arith.constant 78 : index
    %c0_65 = arith.constant 0 : index
    %228 = vector.load %arg3[%c78, %c0_65] : memref<112x128xf32, #tpu.memory_space<vmem>>, vector<1x32xf32>
    %229 = vector.broadcast %228 : vector<1x32xf32> to vector<16x32xf32>
    %230 = arith.mulf %227, %229 : vector<16x32xf32>
    %c79 = arith.constant 79 : index
    %c0_66 = arith.constant 0 : index
    %231 = vector.load %arg3[%c79, %c0_66] : memref<112x128xf32, #tpu.memory_space<vmem>>, vector<1x32xf32>
    %232 = vector.broadcast %231 : vector<1x32xf32> to vector<16x32xf32>
    %233 = arith.addf %230, %232 : vector<16x32xf32>
    %cst_67 = arith.constant dense<0.000000e+00> : vector<16xf32>
    %234 = vector.multi_reduction <add>, %233, %cst_67 [1] : vector<16x32xf32> to vector<16xf32>
    %235 = vector.shape_cast %234 : vector<16xf32> to vector<16x1xf32>
    %cst_68 = arith.constant 3.200000e+01 : f32
    %236 = vector.broadcast %cst_68 : f32 to vector<16x1xf32>
    %237 = arith.divf %235, %236 : vector<16x1xf32>
    %238 = vector.broadcast %237 : vector<16x1xf32> to vector<16x32xf32>
    %239 = arith.subf %233, %238 : vector<16x32xf32>
    %240 = arith.mulf %239, %239 : vector<16x32xf32>
    %cst_69 = arith.constant dense<0.000000e+00> : vector<16xf32>
    %241 = vector.multi_reduction <add>, %240, %cst_69 [1] : vector<16x32xf32> to vector<16xf32>
    %242 = vector.shape_cast %241 : vector<16xf32> to vector<16x1xf32>
    %cst_70 = arith.constant 3.200000e+01 : f32
    %243 = vector.broadcast %cst_70 : f32 to vector<16x1xf32>
    %244 = arith.divf %242, %243 : vector<16x1xf32>
    %245 = vector.broadcast %237 : vector<16x1xf32> to vector<16x32xf32>
    %246 = arith.subf %233, %245 : vector<16x32xf32>
    %cst_71 = arith.constant 9.99999974E-6 : f32
    %247 = vector.broadcast %cst_71 : f32 to vector<16x1xf32>
    %248 = arith.addf %244, %247 : vector<16x1xf32>
    %249 = math.rsqrt %248 : vector<16x1xf32>
    %250 = vector.broadcast %249 : vector<16x1xf32> to vector<16x32xf32>
    %251 = arith.mulf %246, %250 : vector<16x32xf32>
    %c80 = arith.constant 80 : index
    %c0_72 = arith.constant 0 : index
    %252 = vector.load %arg3[%c80, %c0_72] : memref<112x128xf32, #tpu.memory_space<vmem>>, vector<1x32xf32>
    %253 = vector.broadcast %252 : vector<1x32xf32> to vector<16x32xf32>
    %254 = arith.mulf %251, %253 : vector<16x32xf32>
    %c81 = arith.constant 81 : index
    %c0_73 = arith.constant 0 : index
    %255 = vector.load %arg3[%c81, %c0_73] : memref<112x128xf32, #tpu.memory_space<vmem>>, vector<1x32xf32>
    %256 = vector.broadcast %255 : vector<1x32xf32> to vector<16x32xf32>
    %257 = arith.addf %254, %256 : vector<16x32xf32>
    %258 = arith.truncf %257 : vector<16x32xf32> to vector<16x32xbf16>
    %c448 = arith.constant 448 : index
    %c0_74 = arith.constant 0 : index
    %259 = vector.load %arg2[%c448, %c0_74] : memref<1056x128xbf16, #tpu.memory_space<vmem>>, vector<32x128xbf16>
    %cst_75 = arith.constant dense<0.000000e+00> : vector<16x128xf32>
    %260 = tpu.matmul %258, %259, %cst_75 {dimension_numbers = #tpu.dot_dimension_numbers<[1], [0], [0], [1], [0, 0, 1, 1], [], []>} : vector<16x32xbf16>, vector<32x128xbf16>, vector<16x128xf32> -> vector<16x128xf32>
    %c82 = arith.constant 82 : index
    %c0_76 = arith.constant 0 : index
    %261 = vector.load %arg3[%c82, %c0_76] : memref<112x128xf32, #tpu.memory_space<vmem>>, vector<1x128xf32>
    %262 = vector.broadcast %261 : vector<1x128xf32> to vector<16x128xf32>
    %263 = arith.addf %260, %262 : vector<16x128xf32>
    %264 = vector.shape_cast %263 : vector<16x128xf32> to vector<2x8x128xf32>
    %c0_77 = arith.constant 0 : index
    %c0_78 = arith.constant 0 : index
    %c0_79 = arith.constant 0 : index
    %265 = vector.load %arg1[%c0_77, %c0_78, %c0_79] : memref<2x8x32xf32, #tpu.memory_space<vmem>>, vector<2x8x32xf32>
    %266 = vector.broadcast %1 : vector<2x1x32xf32> to vector<2x8x32xf32>
    %267 = arith.addf %265, %266 : vector<2x8x32xf32>
    %268 = vector.shape_cast %267 : vector<2x8x32xf32> to vector<16x32xf32>
    %269 = arith.truncf %268 : vector<16x32xf32> to vector<16x32xbf16>
    %c480 = arith.constant 480 : index
    %c0_80 = arith.constant 0 : index
    %270 = vector.load %arg2[%c480, %c0_80] : memref<1056x128xbf16, #tpu.memory_space<vmem>>, vector<32x96xbf16>
    %cst_81 = arith.constant dense<0.000000e+00> : vector<16x96xf32>
    %271 = tpu.matmul %269, %270, %cst_81 {dimension_numbers = #tpu.dot_dimension_numbers<[1], [0], [0], [1], [0, 0, 1, 1], [], []>} : vector<16x32xbf16>, vector<32x96xbf16>, vector<16x96xf32> -> vector<16x96xf32>
    %c83 = arith.constant 83 : index
    %c0_82 = arith.constant 0 : index
    %272 = vector.load %arg3[%c83, %c0_82] : memref<112x128xf32, #tpu.memory_space<vmem>>, vector<1x96xf32>
    %273 = vector.broadcast %272 : vector<1x96xf32> to vector<16x96xf32>
    %274 = arith.addf %271, %273 : vector<16x96xf32>
    %275 = vector.shape_cast %274 : vector<16x96xf32> to vector<2x8x96xf32>
    %276 = vector.extract_strided_slice %275 {offsets = [0, 0, 0], sizes = [2, 8, 8], strides = [1, 1, 1]} : vector<2x8x96xf32> to vector<2x8x8xf32>
    %277 = vector.extract_strided_slice %275 {offsets = [0, 0, 8], sizes = [2, 8, 8], strides = [1, 1, 1]} : vector<2x8x96xf32> to vector<2x8x8xf32>
    %278 = vector.extract_strided_slice %275 {offsets = [0, 0, 16], sizes = [2, 8, 8], strides = [1, 1, 1]} : vector<2x8x96xf32> to vector<2x8x8xf32>
    %279 = vector.extract_strided_slice %275 {offsets = [0, 0, 24], sizes = [2, 8, 8], strides = [1, 1, 1]} : vector<2x8x96xf32> to vector<2x8x8xf32>
    %280 = tpu.concatenate %276, %277, %278, %279 in 0 : vector<2x8x8xf32>, vector<2x8x8xf32>, vector<2x8x8xf32>, vector<2x8x8xf32> -> vector<8x8x8xf32>
    %281 = vector.extract_strided_slice %275 {offsets = [0, 0, 32], sizes = [2, 8, 8], strides = [1, 1, 1]} : vector<2x8x96xf32> to vector<2x8x8xf32>
    %282 = vector.extract_strided_slice %275 {offsets = [0, 0, 40], sizes = [2, 8, 8], strides = [1, 1, 1]} : vector<2x8x96xf32> to vector<2x8x8xf32>
    %283 = vector.extract_strided_slice %275 {offsets = [0, 0, 48], sizes = [2, 8, 8], strides = [1, 1, 1]} : vector<2x8x96xf32> to vector<2x8x8xf32>
    %284 = vector.extract_strided_slice %275 {offsets = [0, 0, 56], sizes = [2, 8, 8], strides = [1, 1, 1]} : vector<2x8x96xf32> to vector<2x8x8xf32>
    %285 = tpu.concatenate %281, %282, %283, %284 in 0 : vector<2x8x8xf32>, vector<2x8x8xf32>, vector<2x8x8xf32>, vector<2x8x8xf32> -> vector<8x8x8xf32>
    %286 = vector.extract_strided_slice %275 {offsets = [0, 0, 64], sizes = [2, 8, 8], strides = [1, 1, 1]} : vector<2x8x96xf32> to vector<2x8x8xf32>
    %287 = vector.extract_strided_slice %275 {offsets = [0, 0, 72], sizes = [2, 8, 8], strides = [1, 1, 1]} : vector<2x8x96xf32> to vector<2x8x8xf32>
    %288 = vector.extract_strided_slice %275 {offsets = [0, 0, 80], sizes = [2, 8, 8], strides = [1, 1, 1]} : vector<2x8x96xf32> to vector<2x8x8xf32>
    %289 = vector.extract_strided_slice %275 {offsets = [0, 0, 88], sizes = [2, 8, 8], strides = [1, 1, 1]} : vector<2x8x96xf32> to vector<2x8x8xf32>
    %290 = tpu.concatenate %286, %287, %288, %289 in 0 : vector<2x8x8xf32>, vector<2x8x8xf32>, vector<2x8x8xf32>, vector<2x8x8xf32> -> vector<8x8x8xf32>
    %291 = arith.truncf %280 : vector<8x8x8xf32> to vector<8x8x8xbf16>
    %292 = arith.truncf %285 : vector<8x8x8xf32> to vector<8x8x8xbf16>
    "tpu.trace_start"() <{level = 10 : i32, message = "nqd,nkd->nqk"}> : () -> ()
    %cst_83 = arith.constant dense<0.000000e+00> : vector<8x8x8xf32>
    %293 = tpu.matmul %291, %292, %cst_83 {dimension_numbers = #tpu.dot_dimension_numbers<[2], [2], [1], [1], [0, 0, 0, 1, 1, 1], [0], [0]>} : vector<8x8x8xbf16>, vector<8x8x8xbf16>, vector<8x8x8xf32> -> vector<8x8x8xf32>
    "tpu.trace_stop"() : () -> ()
    %cst_84 = arith.constant dense<0xFF800000> : vector<8x8xf32>
    %294 = vector.multi_reduction <maximumf>, %293, %cst_84 [2] : vector<8x8x8xf32> to vector<8x8xf32>
    %295 = vector.shape_cast %294 : vector<8x8xf32> to vector<8x8x1xf32>
    %296 = vector.broadcast %295 : vector<8x8x1xf32> to vector<8x8x8xf32>
    %297 = arith.subf %293, %296 : vector<8x8x8xf32>
    %298 = math.exp %297 : vector<8x8x8xf32>
    %cst_85 = arith.constant dense<0.000000e+00> : vector<8x8xf32>
    %299 = vector.multi_reduction <add>, %298, %cst_85 [2] : vector<8x8x8xf32> to vector<8x8xf32>
    %300 = vector.shape_cast %299 : vector<8x8xf32> to vector<8x8x1xf32>
    %301 = tpu.reciprocal %300 {approx = true} : vector<8x8x1xf32> -> vector<8x8x1xf32>
    %302 = vector.broadcast %301 : vector<8x8x1xf32> to vector<8x8x8xf32>
    %303 = arith.mulf %298, %302 : vector<8x8x8xf32>
    %304 = arith.truncf %303 : vector<8x8x8xf32> to vector<8x8x8xbf16>
    %305 = arith.truncf %290 : vector<8x8x8xf32> to vector<8x8x8xbf16>
    "tpu.trace_start"() <{level = 10 : i32, message = "nqk,nkd->nqd"}> : () -> ()
    %cst_86 = arith.constant dense<0.000000e+00> : vector<8x8x8xf32>
    %306 = tpu.matmul %304, %305, %cst_86 {dimension_numbers = #tpu.dot_dimension_numbers<[2], [1], [1], [2], [0, 0, 0, 1, 1, 2], [0], [0]>} : vector<8x8x8xbf16>, vector<8x8x8xbf16>, vector<8x8x8xf32> -> vector<8x8x8xf32>
    "tpu.trace_stop"() : () -> ()
    %307 = vector.extract_strided_slice %306 {offsets = [0, 0, 0], sizes = [2, 8, 8], strides = [1, 1, 1]} : vector<8x8x8xf32> to vector<2x8x8xf32>
    %308 = vector.extract_strided_slice %306 {offsets = [2, 0, 0], sizes = [2, 8, 8], strides = [1, 1, 1]} : vector<8x8x8xf32> to vector<2x8x8xf32>
    %309 = vector.extract_strided_slice %306 {offsets = [4, 0, 0], sizes = [2, 8, 8], strides = [1, 1, 1]} : vector<8x8x8xf32> to vector<2x8x8xf32>
    %310 = vector.extract_strided_slice %306 {offsets = [6, 0, 0], sizes = [2, 8, 8], strides = [1, 1, 1]} : vector<8x8x8xf32> to vector<2x8x8xf32>
    %311 = tpu.concatenate %307, %308, %309, %310 in 2 : vector<2x8x8xf32>, vector<2x8x8xf32>, vector<2x8x8xf32>, vector<2x8x8xf32> -> vector<2x8x32xf32>
    %312 = vector.shape_cast %311 : vector<2x8x32xf32> to vector<16x32xf32>
    %313 = arith.truncf %312 : vector<16x32xf32> to vector<16x32xbf16>
    %c512 = arith.constant 512 : index
    %c0_87 = arith.constant 0 : index
    %314 = vector.load %arg2[%c512, %c0_87] : memref<1056x128xbf16, #tpu.memory_space<vmem>>, vector<32x32xbf16>
    %cst_88 = arith.constant dense<0.000000e+00> : vector<16x32xf32>
    %315 = tpu.matmul %313, %314, %cst_88 {dimension_numbers = #tpu.dot_dimension_numbers<[1], [0], [0], [1], [0, 0, 1, 1], [], []>} : vector<16x32xbf16>, vector<32x32xbf16>, vector<16x32xf32> -> vector<16x32xf32>
    %c84 = arith.constant 84 : index
    %c0_89 = arith.constant 0 : index
    %316 = vector.load %arg3[%c84, %c0_89] : memref<112x128xf32, #tpu.memory_space<vmem>>, vector<1x32xf32>
    %317 = vector.broadcast %316 : vector<1x32xf32> to vector<16x32xf32>
    %318 = arith.addf %315, %317 : vector<16x32xf32>
    %319 = arith.addf %268, %318 : vector<16x32xf32>
    %cst_90 = arith.constant dense<0.000000e+00> : vector<16xf32>
    %320 = vector.multi_reduction <add>, %319, %cst_90 [1] : vector<16x32xf32> to vector<16xf32>
    %321 = vector.shape_cast %320 : vector<16xf32> to vector<16x1xf32>
    %cst_91 = arith.constant 3.200000e+01 : f32
    %322 = vector.broadcast %cst_91 : f32 to vector<16x1xf32>
    %323 = arith.divf %321, %322 : vector<16x1xf32>
    %324 = vector.broadcast %323 : vector<16x1xf32> to vector<16x32xf32>
    %325 = arith.subf %319, %324 : vector<16x32xf32>
    %326 = arith.mulf %325, %325 : vector<16x32xf32>
    %cst_92 = arith.constant dense<0.000000e+00> : vector<16xf32>
    %327 = vector.multi_reduction <add>, %326, %cst_92 [1] : vector<16x32xf32> to vector<16xf32>
    %328 = vector.shape_cast %327 : vector<16xf32> to vector<16x1xf32>
    %cst_93 = arith.constant 3.200000e+01 : f32
    %329 = vector.broadcast %cst_93 : f32 to vector<16x1xf32>
    %330 = arith.divf %328, %329 : vector<16x1xf32>
    %331 = vector.broadcast %323 : vector<16x1xf32> to vector<16x32xf32>
    %332 = arith.subf %319, %331 : vector<16x32xf32>
    %cst_94 = arith.constant 9.99999974E-6 : f32
    %333 = vector.broadcast %cst_94 : f32 to vector<16x1xf32>
    %334 = arith.addf %330, %333 : vector<16x1xf32>
    %335 = math.rsqrt %334 : vector<16x1xf32>
    %336 = vector.broadcast %335 : vector<16x1xf32> to vector<16x32xf32>
    %337 = arith.mulf %332, %336 : vector<16x32xf32>
    %c89 = arith.constant 89 : index
    %c0_95 = arith.constant 0 : index
    %338 = vector.load %arg3[%c89, %c0_95] : memref<112x128xf32, #tpu.memory_space<vmem>>, vector<1x32xf32>
    %339 = vector.broadcast %338 : vector<1x32xf32> to vector<16x32xf32>
    %340 = arith.mulf %337, %339 : vector<16x32xf32>
    %c90 = arith.constant 90 : index
    %c0_96 = arith.constant 0 : index
    %341 = vector.load %arg3[%c90, %c0_96] : memref<112x128xf32, #tpu.memory_space<vmem>>, vector<1x32xf32>
    %342 = vector.broadcast %341 : vector<1x32xf32> to vector<16x32xf32>
    %343 = arith.addf %340, %342 : vector<16x32xf32>
    %344 = arith.truncf %343 : vector<16x32xf32> to vector<16x32xbf16>
    %c544 = arith.constant 544 : index
    %c0_97 = arith.constant 0 : index
    %345 = vector.load %arg2[%c544, %c0_97] : memref<1056x128xbf16, #tpu.memory_space<vmem>>, vector<32x32xbf16>
    %cst_98 = arith.constant dense<0.000000e+00> : vector<16x32xf32>
    %346 = tpu.matmul %344, %345, %cst_98 {dimension_numbers = #tpu.dot_dimension_numbers<[1], [0], [0], [1], [0, 0, 1, 1], [], []>} : vector<16x32xbf16>, vector<32x32xbf16>, vector<16x32xf32> -> vector<16x32xf32>
    %c85 = arith.constant 85 : index
    %c0_99 = arith.constant 0 : index
    %347 = vector.load %arg3[%c85, %c0_99] : memref<112x128xf32, #tpu.memory_space<vmem>>, vector<1x32xf32>
    %348 = vector.broadcast %347 : vector<1x32xf32> to vector<16x32xf32>
    %349 = arith.addf %346, %348 : vector<16x32xf32>
    %350 = vector.shape_cast %349 : vector<16x32xf32> to vector<2x8x32xf32>
    %351 = vector.extract_strided_slice %350 {offsets = [0, 0, 0], sizes = [2, 8, 8], strides = [1, 1, 1]} : vector<2x8x32xf32> to vector<2x8x8xf32>
    %352 = vector.extract_strided_slice %350 {offsets = [0, 0, 8], sizes = [2, 8, 8], strides = [1, 1, 1]} : vector<2x8x32xf32> to vector<2x8x8xf32>
    %353 = vector.extract_strided_slice %350 {offsets = [0, 0, 16], sizes = [2, 8, 8], strides = [1, 1, 1]} : vector<2x8x32xf32> to vector<2x8x8xf32>
    %354 = vector.extract_strided_slice %350 {offsets = [0, 0, 24], sizes = [2, 8, 8], strides = [1, 1, 1]} : vector<2x8x32xf32> to vector<2x8x8xf32>
    %355 = tpu.concatenate %351, %352, %353, %354 in 0 : vector<2x8x8xf32>, vector<2x8x8xf32>, vector<2x8x8xf32>, vector<2x8x8xf32> -> vector<8x8x8xf32>
    %356 = vector.extract_strided_slice %264 {offsets = [0, 0, 0], sizes = [2, 8, 8], strides = [1, 1, 1]} : vector<2x8x128xf32> to vector<2x8x8xf32>
    %357 = vector.extract_strided_slice %264 {offsets = [0, 0, 8], sizes = [2, 8, 8], strides = [1, 1, 1]} : vector<2x8x128xf32> to vector<2x8x8xf32>
    %358 = vector.extract_strided_slice %264 {offsets = [0, 0, 16], sizes = [2, 8, 8], strides = [1, 1, 1]} : vector<2x8x128xf32> to vector<2x8x8xf32>
    %359 = vector.extract_strided_slice %264 {offsets = [0, 0, 24], sizes = [2, 8, 8], strides = [1, 1, 1]} : vector<2x8x128xf32> to vector<2x8x8xf32>
    %360 = tpu.concatenate %356, %357, %358, %359 in 0 : vector<2x8x8xf32>, vector<2x8x8xf32>, vector<2x8x8xf32>, vector<2x8x8xf32> -> vector<8x8x8xf32>
    %361 = vector.extract_strided_slice %264 {offsets = [0, 0, 32], sizes = [2, 8, 8], strides = [1, 1, 1]} : vector<2x8x128xf32> to vector<2x8x8xf32>
    %362 = vector.extract_strided_slice %264 {offsets = [0, 0, 40], sizes = [2, 8, 8], strides = [1, 1, 1]} : vector<2x8x128xf32> to vector<2x8x8xf32>
    %363 = vector.extract_strided_slice %264 {offsets = [0, 0, 48], sizes = [2, 8, 8], strides = [1, 1, 1]} : vector<2x8x128xf32> to vector<2x8x8xf32>
    %364 = vector.extract_strided_slice %264 {offsets = [0, 0, 56], sizes = [2, 8, 8], strides = [1, 1, 1]} : vector<2x8x128xf32> to vector<2x8x8xf32>
    %365 = tpu.concatenate %361, %362, %363, %364 in 0 : vector<2x8x8xf32>, vector<2x8x8xf32>, vector<2x8x8xf32>, vector<2x8x8xf32> -> vector<8x8x8xf32>
    %366 = arith.truncf %355 : vector<8x8x8xf32> to vector<8x8x8xbf16>
    %367 = arith.truncf %360 : vector<8x8x8xf32> to vector<8x8x8xbf16>
    "tpu.trace_start"() <{level = 10 : i32, message = "nqd,nkd->nqk"}> : () -> ()
    %cst_100 = arith.constant dense<0.000000e+00> : vector<8x8x8xf32>
    %368 = tpu.matmul %366, %367, %cst_100 {dimension_numbers = #tpu.dot_dimension_numbers<[2], [2], [1], [1], [0, 0, 0, 1, 1, 1], [0], [0]>} : vector<8x8x8xbf16>, vector<8x8x8xbf16>, vector<8x8x8xf32> -> vector<8x8x8xf32>
    "tpu.trace_stop"() : () -> ()
    %cst_101 = arith.constant dense<0xFF800000> : vector<8x8xf32>
    %369 = vector.multi_reduction <maximumf>, %368, %cst_101 [2] : vector<8x8x8xf32> to vector<8x8xf32>
    %370 = vector.shape_cast %369 : vector<8x8xf32> to vector<8x8x1xf32>
    %371 = vector.broadcast %370 : vector<8x8x1xf32> to vector<8x8x8xf32>
    %372 = arith.subf %368, %371 : vector<8x8x8xf32>
    %373 = math.exp %372 : vector<8x8x8xf32>
    %cst_102 = arith.constant dense<0.000000e+00> : vector<8x8xf32>
    %374 = vector.multi_reduction <add>, %373, %cst_102 [2] : vector<8x8x8xf32> to vector<8x8xf32>
    %375 = vector.shape_cast %374 : vector<8x8xf32> to vector<8x8x1xf32>
    %376 = tpu.reciprocal %375 {approx = true} : vector<8x8x1xf32> -> vector<8x8x1xf32>
    %377 = vector.broadcast %376 : vector<8x8x1xf32> to vector<8x8x8xf32>
    %378 = arith.mulf %373, %377 : vector<8x8x8xf32>
    %379 = arith.truncf %378 : vector<8x8x8xf32> to vector<8x8x8xbf16>
    %380 = arith.truncf %365 : vector<8x8x8xf32> to vector<8x8x8xbf16>
    "tpu.trace_start"() <{level = 10 : i32, message = "nqk,nkd->nqd"}> : () -> ()
    %cst_103 = arith.constant dense<0.000000e+00> : vector<8x8x8xf32>
    %381 = tpu.matmul %379, %380, %cst_103 {dimension_numbers = #tpu.dot_dimension_numbers<[2], [1], [1], [2], [0, 0, 0, 1, 1, 2], [0], [0]>} : vector<8x8x8xbf16>, vector<8x8x8xbf16>, vector<8x8x8xf32> -> vector<8x8x8xf32>
    "tpu.trace_stop"() : () -> ()
    %382 = vector.extract_strided_slice %381 {offsets = [0, 0, 0], sizes = [2, 8, 8], strides = [1, 1, 1]} : vector<8x8x8xf32> to vector<2x8x8xf32>
    %383 = vector.extract_strided_slice %381 {offsets = [2, 0, 0], sizes = [2, 8, 8], strides = [1, 1, 1]} : vector<8x8x8xf32> to vector<2x8x8xf32>
    %384 = vector.extract_strided_slice %381 {offsets = [4, 0, 0], sizes = [2, 8, 8], strides = [1, 1, 1]} : vector<8x8x8xf32> to vector<2x8x8xf32>
    %385 = vector.extract_strided_slice %381 {offsets = [6, 0, 0], sizes = [2, 8, 8], strides = [1, 1, 1]} : vector<8x8x8xf32> to vector<2x8x8xf32>
    %386 = tpu.concatenate %382, %383, %384, %385 in 2 : vector<2x8x8xf32>, vector<2x8x8xf32>, vector<2x8x8xf32>, vector<2x8x8xf32> -> vector<2x8x32xf32>
    %387 = vector.shape_cast %386 : vector<2x8x32xf32> to vector<16x32xf32>
    %388 = arith.truncf %387 : vector<16x32xf32> to vector<16x32xbf16>
    %c576 = arith.constant 576 : index
    %c0_104 = arith.constant 0 : index
    %389 = vector.load %arg2[%c576, %c0_104] : memref<1056x128xbf16, #tpu.memory_space<vmem>>, vector<32x32xbf16>
    %cst_105 = arith.constant dense<0.000000e+00> : vector<16x32xf32>
    %390 = tpu.matmul %388, %389, %cst_105 {dimension_numbers = #tpu.dot_dimension_numbers<[1], [0], [0], [1], [0, 0, 1, 1], [], []>} : vector<16x32xbf16>, vector<32x32xbf16>, vector<16x32xf32> -> vector<16x32xf32>
    %c86 = arith.constant 86 : index
    %c0_106 = arith.constant 0 : index
    %391 = vector.load %arg3[%c86, %c0_106] : memref<112x128xf32, #tpu.memory_space<vmem>>, vector<1x32xf32>
    %392 = vector.broadcast %391 : vector<1x32xf32> to vector<16x32xf32>
    %393 = arith.addf %390, %392 : vector<16x32xf32>
    %394 = arith.addf %343, %393 : vector<16x32xf32>
    %cst_107 = arith.constant dense<0.000000e+00> : vector<16xf32>
    %395 = vector.multi_reduction <add>, %394, %cst_107 [1] : vector<16x32xf32> to vector<16xf32>
    %396 = vector.shape_cast %395 : vector<16xf32> to vector<16x1xf32>
    %cst_108 = arith.constant 3.200000e+01 : f32
    %397 = vector.broadcast %cst_108 : f32 to vector<16x1xf32>
    %398 = arith.divf %396, %397 : vector<16x1xf32>
    %399 = vector.broadcast %398 : vector<16x1xf32> to vector<16x32xf32>
    %400 = arith.subf %394, %399 : vector<16x32xf32>
    %401 = arith.mulf %400, %400 : vector<16x32xf32>
    %cst_109 = arith.constant dense<0.000000e+00> : vector<16xf32>
    %402 = vector.multi_reduction <add>, %401, %cst_109 [1] : vector<16x32xf32> to vector<16xf32>
    %403 = vector.shape_cast %402 : vector<16xf32> to vector<16x1xf32>
    %cst_110 = arith.constant 3.200000e+01 : f32
    %404 = vector.broadcast %cst_110 : f32 to vector<16x1xf32>
    %405 = arith.divf %403, %404 : vector<16x1xf32>
    %406 = vector.broadcast %398 : vector<16x1xf32> to vector<16x32xf32>
    %407 = arith.subf %394, %406 : vector<16x32xf32>
    %cst_111 = arith.constant 9.99999974E-6 : f32
    %408 = vector.broadcast %cst_111 : f32 to vector<16x1xf32>
    %409 = arith.addf %405, %408 : vector<16x1xf32>
    %410 = math.rsqrt %409 : vector<16x1xf32>
    %411 = vector.broadcast %410 : vector<16x1xf32> to vector<16x32xf32>
    %412 = arith.mulf %407, %411 : vector<16x32xf32>
    %c91 = arith.constant 91 : index
    %c0_112 = arith.constant 0 : index
    %413 = vector.load %arg3[%c91, %c0_112] : memref<112x128xf32, #tpu.memory_space<vmem>>, vector<1x32xf32>
    %414 = vector.broadcast %413 : vector<1x32xf32> to vector<16x32xf32>
    %415 = arith.mulf %412, %414 : vector<16x32xf32>
    %c92 = arith.constant 92 : index
    %c0_113 = arith.constant 0 : index
    %416 = vector.load %arg3[%c92, %c0_113] : memref<112x128xf32, #tpu.memory_space<vmem>>, vector<1x32xf32>
    %417 = vector.broadcast %416 : vector<1x32xf32> to vector<16x32xf32>
    %418 = arith.addf %415, %417 : vector<16x32xf32>
    %419 = arith.truncf %418 : vector<16x32xf32> to vector<16x32xbf16>
    %c608 = arith.constant 608 : index
    %c0_114 = arith.constant 0 : index
    %420 = vector.load %arg2[%c608, %c0_114] : memref<1056x128xbf16, #tpu.memory_space<vmem>>, vector<32x128xbf16>
    %cst_115 = arith.constant dense<0.000000e+00> : vector<16x128xf32>
    %421 = tpu.matmul %419, %420, %cst_115 {dimension_numbers = #tpu.dot_dimension_numbers<[1], [0], [0], [1], [0, 0, 1, 1], [], []>} : vector<16x32xbf16>, vector<32x128xbf16>, vector<16x128xf32> -> vector<16x128xf32>
    %c87 = arith.constant 87 : index
    %c0_116 = arith.constant 0 : index
    %422 = vector.load %arg3[%c87, %c0_116] : memref<112x128xf32, #tpu.memory_space<vmem>>, vector<1x128xf32>
    %423 = vector.broadcast %422 : vector<1x128xf32> to vector<16x128xf32>
    %424 = arith.addf %421, %423 : vector<16x128xf32>
    %cst_117 = arith.constant 0.000000e+00 : f32
    %425 = vector.broadcast %cst_117 : f32 to vector<16x128xf32>
    %426 = arith.maximumf %424, %425 : vector<16x128xf32>
    %427 = arith.truncf %426 : vector<16x128xf32> to vector<16x128xbf16>
    %c640 = arith.constant 640 : index
    %c0_118 = arith.constant 0 : index
    %428 = vector.load %arg2[%c640, %c0_118] : memref<1056x128xbf16, #tpu.memory_space<vmem>>, vector<128x32xbf16>
    %cst_119 = arith.constant dense<0.000000e+00> : vector<16x32xf32>
    %429 = tpu.matmul %427, %428, %cst_119 {dimension_numbers = #tpu.dot_dimension_numbers<[1], [0], [0], [1], [0, 0, 1, 1], [], []>} : vector<16x128xbf16>, vector<128x32xbf16>, vector<16x32xf32> -> vector<16x32xf32>
    %c88 = arith.constant 88 : index
    %c0_120 = arith.constant 0 : index
    %430 = vector.load %arg3[%c88, %c0_120] : memref<112x128xf32, #tpu.memory_space<vmem>>, vector<1x32xf32>
    %431 = vector.broadcast %430 : vector<1x32xf32> to vector<16x32xf32>
    %432 = arith.addf %429, %431 : vector<16x32xf32>
    %433 = arith.addf %418, %432 : vector<16x32xf32>
    %cst_121 = arith.constant dense<0.000000e+00> : vector<16xf32>
    %434 = vector.multi_reduction <add>, %433, %cst_121 [1] : vector<16x32xf32> to vector<16xf32>
    %435 = vector.shape_cast %434 : vector<16xf32> to vector<16x1xf32>
    %cst_122 = arith.constant 3.200000e+01 : f32
    %436 = vector.broadcast %cst_122 : f32 to vector<16x1xf32>
    %437 = arith.divf %435, %436 : vector<16x1xf32>
    %438 = vector.broadcast %437 : vector<16x1xf32> to vector<16x32xf32>
    %439 = arith.subf %433, %438 : vector<16x32xf32>
    %440 = arith.mulf %439, %439 : vector<16x32xf32>
    %cst_123 = arith.constant dense<0.000000e+00> : vector<16xf32>
    %441 = vector.multi_reduction <add>, %440, %cst_123 [1] : vector<16x32xf32> to vector<16xf32>
    %442 = vector.shape_cast %441 : vector<16xf32> to vector<16x1xf32>
    %cst_124 = arith.constant 3.200000e+01 : f32
    %443 = vector.broadcast %cst_124 : f32 to vector<16x1xf32>
    %444 = arith.divf %442, %443 : vector<16x1xf32>
    %445 = vector.broadcast %437 : vector<16x1xf32> to vector<16x32xf32>
    %446 = arith.subf %433, %445 : vector<16x32xf32>
    %cst_125 = arith.constant 9.99999974E-6 : f32
    %447 = vector.broadcast %cst_125 : f32 to vector<16x1xf32>
    %448 = arith.addf %444, %447 : vector<16x1xf32>
    %449 = math.rsqrt %448 : vector<16x1xf32>
    %450 = vector.broadcast %449 : vector<16x1xf32> to vector<16x32xf32>
    %451 = arith.mulf %446, %450 : vector<16x32xf32>
    %c93 = arith.constant 93 : index
    %c0_126 = arith.constant 0 : index
    %452 = vector.load %arg3[%c93, %c0_126] : memref<112x128xf32, #tpu.memory_space<vmem>>, vector<1x32xf32>
    %453 = vector.broadcast %452 : vector<1x32xf32> to vector<16x32xf32>
    %454 = arith.mulf %451, %453 : vector<16x32xf32>
    %c94 = arith.constant 94 : index
    %c0_127 = arith.constant 0 : index
    %455 = vector.load %arg3[%c94, %c0_127] : memref<112x128xf32, #tpu.memory_space<vmem>>, vector<1x32xf32>
    %456 = vector.broadcast %455 : vector<1x32xf32> to vector<16x32xf32>
    %457 = arith.addf %454, %456 : vector<16x32xf32>
    %458 = arith.truncf %457 : vector<16x32xf32> to vector<16x32xbf16>
    %c768 = arith.constant 768 : index
    %c0_128 = arith.constant 0 : index
    %459 = vector.load %arg2[%c768, %c0_128] : memref<1056x128xbf16, #tpu.memory_space<vmem>>, vector<32x96xbf16>
    %cst_129 = arith.constant dense<0.000000e+00> : vector<16x96xf32>
    %460 = tpu.matmul %458, %459, %cst_129 {dimension_numbers = #tpu.dot_dimension_numbers<[1], [0], [0], [1], [0, 0, 1, 1], [], []>} : vector<16x32xbf16>, vector<32x96xbf16>, vector<16x96xf32> -> vector<16x96xf32>
    %c95 = arith.constant 95 : index
    %c0_130 = arith.constant 0 : index
    %461 = vector.load %arg3[%c95, %c0_130] : memref<112x128xf32, #tpu.memory_space<vmem>>, vector<1x96xf32>
    %462 = vector.broadcast %461 : vector<1x96xf32> to vector<16x96xf32>
    %463 = arith.addf %460, %462 : vector<16x96xf32>
    %464 = vector.shape_cast %463 : vector<16x96xf32> to vector<2x8x96xf32>
    %465 = vector.extract_strided_slice %464 {offsets = [0, 0, 0], sizes = [2, 8, 8], strides = [1, 1, 1]} : vector<2x8x96xf32> to vector<2x8x8xf32>
    %466 = vector.extract_strided_slice %464 {offsets = [0, 0, 8], sizes = [2, 8, 8], strides = [1, 1, 1]} : vector<2x8x96xf32> to vector<2x8x8xf32>
    %467 = vector.extract_strided_slice %464 {offsets = [0, 0, 16], sizes = [2, 8, 8], strides = [1, 1, 1]} : vector<2x8x96xf32> to vector<2x8x8xf32>
    %468 = vector.extract_strided_slice %464 {offsets = [0, 0, 24], sizes = [2, 8, 8], strides = [1, 1, 1]} : vector<2x8x96xf32> to vector<2x8x8xf32>
    %469 = tpu.concatenate %465, %466, %467, %468 in 0 : vector<2x8x8xf32>, vector<2x8x8xf32>, vector<2x8x8xf32>, vector<2x8x8xf32> -> vector<8x8x8xf32>
    %470 = vector.extract_strided_slice %464 {offsets = [0, 0, 32], sizes = [2, 8, 8], strides = [1, 1, 1]} : vector<2x8x96xf32> to vector<2x8x8xf32>
    %471 = vector.extract_strided_slice %464 {offsets = [0, 0, 40], sizes = [2, 8, 8], strides = [1, 1, 1]} : vector<2x8x96xf32> to vector<2x8x8xf32>
    %472 = vector.extract_strided_slice %464 {offsets = [0, 0, 48], sizes = [2, 8, 8], strides = [1, 1, 1]} : vector<2x8x96xf32> to vector<2x8x8xf32>
    %473 = vector.extract_strided_slice %464 {offsets = [0, 0, 56], sizes = [2, 8, 8], strides = [1, 1, 1]} : vector<2x8x96xf32> to vector<2x8x8xf32>
    %474 = tpu.concatenate %470, %471, %472, %473 in 0 : vector<2x8x8xf32>, vector<2x8x8xf32>, vector<2x8x8xf32>, vector<2x8x8xf32> -> vector<8x8x8xf32>
    %475 = vector.extract_strided_slice %464 {offsets = [0, 0, 64], sizes = [2, 8, 8], strides = [1, 1, 1]} : vector<2x8x96xf32> to vector<2x8x8xf32>
    %476 = vector.extract_strided_slice %464 {offsets = [0, 0, 72], sizes = [2, 8, 8], strides = [1, 1, 1]} : vector<2x8x96xf32> to vector<2x8x8xf32>
    %477 = vector.extract_strided_slice %464 {offsets = [0, 0, 80], sizes = [2, 8, 8], strides = [1, 1, 1]} : vector<2x8x96xf32> to vector<2x8x8xf32>
    %478 = vector.extract_strided_slice %464 {offsets = [0, 0, 88], sizes = [2, 8, 8], strides = [1, 1, 1]} : vector<2x8x96xf32> to vector<2x8x8xf32>
    %479 = tpu.concatenate %475, %476, %477, %478 in 0 : vector<2x8x8xf32>, vector<2x8x8xf32>, vector<2x8x8xf32>, vector<2x8x8xf32> -> vector<8x8x8xf32>
    %480 = arith.truncf %469 : vector<8x8x8xf32> to vector<8x8x8xbf16>
    %481 = arith.truncf %474 : vector<8x8x8xf32> to vector<8x8x8xbf16>
    "tpu.trace_start"() <{level = 10 : i32, message = "nqd,nkd->nqk"}> : () -> ()
    %cst_131 = arith.constant dense<0.000000e+00> : vector<8x8x8xf32>
    %482 = tpu.matmul %480, %481, %cst_131 {dimension_numbers = #tpu.dot_dimension_numbers<[2], [2], [1], [1], [0, 0, 0, 1, 1, 1], [0], [0]>} : vector<8x8x8xbf16>, vector<8x8x8xbf16>, vector<8x8x8xf32> -> vector<8x8x8xf32>
    "tpu.trace_stop"() : () -> ()
    %cst_132 = arith.constant dense<0xFF800000> : vector<8x8xf32>
    %483 = vector.multi_reduction <maximumf>, %482, %cst_132 [2] : vector<8x8x8xf32> to vector<8x8xf32>
    %484 = vector.shape_cast %483 : vector<8x8xf32> to vector<8x8x1xf32>
    %485 = vector.broadcast %484 : vector<8x8x1xf32> to vector<8x8x8xf32>
    %486 = arith.subf %482, %485 : vector<8x8x8xf32>
    %487 = math.exp %486 : vector<8x8x8xf32>
    %cst_133 = arith.constant dense<0.000000e+00> : vector<8x8xf32>
    %488 = vector.multi_reduction <add>, %487, %cst_133 [2] : vector<8x8x8xf32> to vector<8x8xf32>
    %489 = vector.shape_cast %488 : vector<8x8xf32> to vector<8x8x1xf32>
    %490 = tpu.reciprocal %489 {approx = true} : vector<8x8x1xf32> -> vector<8x8x1xf32>
    %491 = vector.broadcast %490 : vector<8x8x1xf32> to vector<8x8x8xf32>
    %492 = arith.mulf %487, %491 : vector<8x8x8xf32>
    %493 = arith.truncf %492 : vector<8x8x8xf32> to vector<8x8x8xbf16>
    %494 = arith.truncf %479 : vector<8x8x8xf32> to vector<8x8x8xbf16>
    "tpu.trace_start"() <{level = 10 : i32, message = "nqk,nkd->nqd"}> : () -> ()
    %cst_134 = arith.constant dense<0.000000e+00> : vector<8x8x8xf32>
    %495 = tpu.matmul %493, %494, %cst_134 {dimension_numbers = #tpu.dot_dimension_numbers<[2], [1], [1], [2], [0, 0, 0, 1, 1, 2], [0], [0]>} : vector<8x8x8xbf16>, vector<8x8x8xbf16>, vector<8x8x8xf32> -> vector<8x8x8xf32>
    "tpu.trace_stop"() : () -> ()
    %496 = vector.extract_strided_slice %495 {offsets = [0, 0, 0], sizes = [2, 8, 8], strides = [1, 1, 1]} : vector<8x8x8xf32> to vector<2x8x8xf32>
    %497 = vector.extract_strided_slice %495 {offsets = [2, 0, 0], sizes = [2, 8, 8], strides = [1, 1, 1]} : vector<8x8x8xf32> to vector<2x8x8xf32>
    %498 = vector.extract_strided_slice %495 {offsets = [4, 0, 0], sizes = [2, 8, 8], strides = [1, 1, 1]} : vector<8x8x8xf32> to vector<2x8x8xf32>
    %499 = vector.extract_strided_slice %495 {offsets = [6, 0, 0], sizes = [2, 8, 8], strides = [1, 1, 1]} : vector<8x8x8xf32> to vector<2x8x8xf32>
    %500 = tpu.concatenate %496, %497, %498, %499 in 2 : vector<2x8x8xf32>, vector<2x8x8xf32>, vector<2x8x8xf32>, vector<2x8x8xf32> -> vector<2x8x32xf32>
    %501 = vector.shape_cast %500 : vector<2x8x32xf32> to vector<16x32xf32>
    %502 = arith.truncf %501 : vector<16x32xf32> to vector<16x32xbf16>
    %c800 = arith.constant 800 : index
    %c0_135 = arith.constant 0 : index
    %503 = vector.load %arg2[%c800, %c0_135] : memref<1056x128xbf16, #tpu.memory_space<vmem>>, vector<32x32xbf16>
    %cst_136 = arith.constant dense<0.000000e+00> : vector<16x32xf32>
    %504 = tpu.matmul %502, %503, %cst_136 {dimension_numbers = #tpu.dot_dimension_numbers<[1], [0], [0], [1], [0, 0, 1, 1], [], []>} : vector<16x32xbf16>, vector<32x32xbf16>, vector<16x32xf32> -> vector<16x32xf32>
    %c96_137 = arith.constant 96 : index
    %c0_138 = arith.constant 0 : index
    %505 = vector.load %arg3[%c96_137, %c0_138] : memref<112x128xf32, #tpu.memory_space<vmem>>, vector<1x32xf32>
    %506 = vector.broadcast %505 : vector<1x32xf32> to vector<16x32xf32>
    %507 = arith.addf %504, %506 : vector<16x32xf32>
    %508 = arith.addf %457, %507 : vector<16x32xf32>
    %cst_139 = arith.constant dense<0.000000e+00> : vector<16xf32>
    %509 = vector.multi_reduction <add>, %508, %cst_139 [1] : vector<16x32xf32> to vector<16xf32>
    %510 = vector.shape_cast %509 : vector<16xf32> to vector<16x1xf32>
    %cst_140 = arith.constant 3.200000e+01 : f32
    %511 = vector.broadcast %cst_140 : f32 to vector<16x1xf32>
    %512 = arith.divf %510, %511 : vector<16x1xf32>
    %513 = vector.broadcast %512 : vector<16x1xf32> to vector<16x32xf32>
    %514 = arith.subf %508, %513 : vector<16x32xf32>
    %515 = arith.mulf %514, %514 : vector<16x32xf32>
    %cst_141 = arith.constant dense<0.000000e+00> : vector<16xf32>
    %516 = vector.multi_reduction <add>, %515, %cst_141 [1] : vector<16x32xf32> to vector<16xf32>
    %517 = vector.shape_cast %516 : vector<16xf32> to vector<16x1xf32>
    %cst_142 = arith.constant 3.200000e+01 : f32
    %518 = vector.broadcast %cst_142 : f32 to vector<16x1xf32>
    %519 = arith.divf %517, %518 : vector<16x1xf32>
    %520 = vector.broadcast %512 : vector<16x1xf32> to vector<16x32xf32>
    %521 = arith.subf %508, %520 : vector<16x32xf32>
    %cst_143 = arith.constant 9.99999974E-6 : f32
    %522 = vector.broadcast %cst_143 : f32 to vector<16x1xf32>
    %523 = arith.addf %519, %522 : vector<16x1xf32>
    %524 = math.rsqrt %523 : vector<16x1xf32>
    %525 = vector.broadcast %524 : vector<16x1xf32> to vector<16x32xf32>
    %526 = arith.mulf %521, %525 : vector<16x32xf32>
    %c101 = arith.constant 101 : index
    %c0_144 = arith.constant 0 : index
    %527 = vector.load %arg3[%c101, %c0_144] : memref<112x128xf32, #tpu.memory_space<vmem>>, vector<1x32xf32>
    %528 = vector.broadcast %527 : vector<1x32xf32> to vector<16x32xf32>
    %529 = arith.mulf %526, %528 : vector<16x32xf32>
    %c102 = arith.constant 102 : index
    %c0_145 = arith.constant 0 : index
    %530 = vector.load %arg3[%c102, %c0_145] : memref<112x128xf32, #tpu.memory_space<vmem>>, vector<1x32xf32>
    %531 = vector.broadcast %530 : vector<1x32xf32> to vector<16x32xf32>
    %532 = arith.addf %529, %531 : vector<16x32xf32>
    %533 = arith.truncf %532 : vector<16x32xf32> to vector<16x32xbf16>
    %c832 = arith.constant 832 : index
    %c0_146 = arith.constant 0 : index
    %534 = vector.load %arg2[%c832, %c0_146] : memref<1056x128xbf16, #tpu.memory_space<vmem>>, vector<32x32xbf16>
    %cst_147 = arith.constant dense<0.000000e+00> : vector<16x32xf32>
    %535 = tpu.matmul %533, %534, %cst_147 {dimension_numbers = #tpu.dot_dimension_numbers<[1], [0], [0], [1], [0, 0, 1, 1], [], []>} : vector<16x32xbf16>, vector<32x32xbf16>, vector<16x32xf32> -> vector<16x32xf32>
    %c97 = arith.constant 97 : index
    %c0_148 = arith.constant 0 : index
    %536 = vector.load %arg3[%c97, %c0_148] : memref<112x128xf32, #tpu.memory_space<vmem>>, vector<1x32xf32>
    %537 = vector.broadcast %536 : vector<1x32xf32> to vector<16x32xf32>
    %538 = arith.addf %535, %537 : vector<16x32xf32>
    %539 = vector.shape_cast %538 : vector<16x32xf32> to vector<2x8x32xf32>
    %540 = vector.extract_strided_slice %539 {offsets = [0, 0, 0], sizes = [2, 8, 8], strides = [1, 1, 1]} : vector<2x8x32xf32> to vector<2x8x8xf32>
    %541 = vector.extract_strided_slice %539 {offsets = [0, 0, 8], sizes = [2, 8, 8], strides = [1, 1, 1]} : vector<2x8x32xf32> to vector<2x8x8xf32>
    %542 = vector.extract_strided_slice %539 {offsets = [0, 0, 16], sizes = [2, 8, 8], strides = [1, 1, 1]} : vector<2x8x32xf32> to vector<2x8x8xf32>
    %543 = vector.extract_strided_slice %539 {offsets = [0, 0, 24], sizes = [2, 8, 8], strides = [1, 1, 1]} : vector<2x8x32xf32> to vector<2x8x8xf32>
    %544 = tpu.concatenate %540, %541, %542, %543 in 0 : vector<2x8x8xf32>, vector<2x8x8xf32>, vector<2x8x8xf32>, vector<2x8x8xf32> -> vector<8x8x8xf32>
    %545 = vector.extract_strided_slice %264 {offsets = [0, 0, 64], sizes = [2, 8, 8], strides = [1, 1, 1]} : vector<2x8x128xf32> to vector<2x8x8xf32>
    %546 = vector.extract_strided_slice %264 {offsets = [0, 0, 72], sizes = [2, 8, 8], strides = [1, 1, 1]} : vector<2x8x128xf32> to vector<2x8x8xf32>
    %547 = vector.extract_strided_slice %264 {offsets = [0, 0, 80], sizes = [2, 8, 8], strides = [1, 1, 1]} : vector<2x8x128xf32> to vector<2x8x8xf32>
    %548 = vector.extract_strided_slice %264 {offsets = [0, 0, 88], sizes = [2, 8, 8], strides = [1, 1, 1]} : vector<2x8x128xf32> to vector<2x8x8xf32>
    %549 = tpu.concatenate %545, %546, %547, %548 in 0 : vector<2x8x8xf32>, vector<2x8x8xf32>, vector<2x8x8xf32>, vector<2x8x8xf32> -> vector<8x8x8xf32>
    %550 = vector.extract_strided_slice %264 {offsets = [0, 0, 96], sizes = [2, 8, 8], strides = [1, 1, 1]} : vector<2x8x128xf32> to vector<2x8x8xf32>
    %551 = vector.extract_strided_slice %264 {offsets = [0, 0, 104], sizes = [2, 8, 8], strides = [1, 1, 1]} : vector<2x8x128xf32> to vector<2x8x8xf32>
    %552 = vector.extract_strided_slice %264 {offsets = [0, 0, 112], sizes = [2, 8, 8], strides = [1, 1, 1]} : vector<2x8x128xf32> to vector<2x8x8xf32>
    %553 = vector.extract_strided_slice %264 {offsets = [0, 0, 120], sizes = [2, 8, 8], strides = [1, 1, 1]} : vector<2x8x128xf32> to vector<2x8x8xf32>
    %554 = tpu.concatenate %550, %551, %552, %553 in 0 : vector<2x8x8xf32>, vector<2x8x8xf32>, vector<2x8x8xf32>, vector<2x8x8xf32> -> vector<8x8x8xf32>
    %555 = arith.truncf %544 : vector<8x8x8xf32> to vector<8x8x8xbf16>
    %556 = arith.truncf %549 : vector<8x8x8xf32> to vector<8x8x8xbf16>
    "tpu.trace_start"() <{level = 10 : i32, message = "nqd,nkd->nqk"}> : () -> ()
    %cst_149 = arith.constant dense<0.000000e+00> : vector<8x8x8xf32>
    %557 = tpu.matmul %555, %556, %cst_149 {dimension_numbers = #tpu.dot_dimension_numbers<[2], [2], [1], [1], [0, 0, 0, 1, 1, 1], [0], [0]>} : vector<8x8x8xbf16>, vector<8x8x8xbf16>, vector<8x8x8xf32> -> vector<8x8x8xf32>
    "tpu.trace_stop"() : () -> ()
    %cst_150 = arith.constant dense<0xFF800000> : vector<8x8xf32>
    %558 = vector.multi_reduction <maximumf>, %557, %cst_150 [2] : vector<8x8x8xf32> to vector<8x8xf32>
    %559 = vector.shape_cast %558 : vector<8x8xf32> to vector<8x8x1xf32>
    %560 = vector.broadcast %559 : vector<8x8x1xf32> to vector<8x8x8xf32>
    %561 = arith.subf %557, %560 : vector<8x8x8xf32>
    %562 = math.exp %561 : vector<8x8x8xf32>
    %cst_151 = arith.constant dense<0.000000e+00> : vector<8x8xf32>
    %563 = vector.multi_reduction <add>, %562, %cst_151 [2] : vector<8x8x8xf32> to vector<8x8xf32>
    %564 = vector.shape_cast %563 : vector<8x8xf32> to vector<8x8x1xf32>
    %565 = tpu.reciprocal %564 {approx = true} : vector<8x8x1xf32> -> vector<8x8x1xf32>
    %566 = vector.broadcast %565 : vector<8x8x1xf32> to vector<8x8x8xf32>
    %567 = arith.mulf %562, %566 : vector<8x8x8xf32>
    %568 = arith.truncf %567 : vector<8x8x8xf32> to vector<8x8x8xbf16>
    %569 = arith.truncf %554 : vector<8x8x8xf32> to vector<8x8x8xbf16>
    "tpu.trace_start"() <{level = 10 : i32, message = "nqk,nkd->nqd"}> : () -> ()
    %cst_152 = arith.constant dense<0.000000e+00> : vector<8x8x8xf32>
    %570 = tpu.matmul %568, %569, %cst_152 {dimension_numbers = #tpu.dot_dimension_numbers<[2], [1], [1], [2], [0, 0, 0, 1, 1, 2], [0], [0]>} : vector<8x8x8xbf16>, vector<8x8x8xbf16>, vector<8x8x8xf32> -> vector<8x8x8xf32>
    "tpu.trace_stop"() : () -> ()
    %571 = vector.extract_strided_slice %570 {offsets = [0, 0, 0], sizes = [2, 8, 8], strides = [1, 1, 1]} : vector<8x8x8xf32> to vector<2x8x8xf32>
    %572 = vector.extract_strided_slice %570 {offsets = [2, 0, 0], sizes = [2, 8, 8], strides = [1, 1, 1]} : vector<8x8x8xf32> to vector<2x8x8xf32>
    %573 = vector.extract_strided_slice %570 {offsets = [4, 0, 0], sizes = [2, 8, 8], strides = [1, 1, 1]} : vector<8x8x8xf32> to vector<2x8x8xf32>
    %574 = vector.extract_strided_slice %570 {offsets = [6, 0, 0], sizes = [2, 8, 8], strides = [1, 1, 1]} : vector<8x8x8xf32> to vector<2x8x8xf32>
    %575 = tpu.concatenate %571, %572, %573, %574 in 2 : vector<2x8x8xf32>, vector<2x8x8xf32>, vector<2x8x8xf32>, vector<2x8x8xf32> -> vector<2x8x32xf32>
    %576 = vector.shape_cast %575 : vector<2x8x32xf32> to vector<16x32xf32>
    %577 = arith.truncf %576 : vector<16x32xf32> to vector<16x32xbf16>
    %c864 = arith.constant 864 : index
    %c0_153 = arith.constant 0 : index
    %578 = vector.load %arg2[%c864, %c0_153] : memref<1056x128xbf16, #tpu.memory_space<vmem>>, vector<32x32xbf16>
    %cst_154 = arith.constant dense<0.000000e+00> : vector<16x32xf32>
    %579 = tpu.matmul %577, %578, %cst_154 {dimension_numbers = #tpu.dot_dimension_numbers<[1], [0], [0], [1], [0, 0, 1, 1], [], []>} : vector<16x32xbf16>, vector<32x32xbf16>, vector<16x32xf32> -> vector<16x32xf32>
    %c98 = arith.constant 98 : index
    %c0_155 = arith.constant 0 : index
    %580 = vector.load %arg3[%c98, %c0_155] : memref<112x128xf32, #tpu.memory_space<vmem>>, vector<1x32xf32>
    %581 = vector.broadcast %580 : vector<1x32xf32> to vector<16x32xf32>
    %582 = arith.addf %579, %581 : vector<16x32xf32>
    %583 = arith.addf %532, %582 : vector<16x32xf32>
    %cst_156 = arith.constant dense<0.000000e+00> : vector<16xf32>
    %584 = vector.multi_reduction <add>, %583, %cst_156 [1] : vector<16x32xf32> to vector<16xf32>
    %585 = vector.shape_cast %584 : vector<16xf32> to vector<16x1xf32>
    %cst_157 = arith.constant 3.200000e+01 : f32
    %586 = vector.broadcast %cst_157 : f32 to vector<16x1xf32>
    %587 = arith.divf %585, %586 : vector<16x1xf32>
    %588 = vector.broadcast %587 : vector<16x1xf32> to vector<16x32xf32>
    %589 = arith.subf %583, %588 : vector<16x32xf32>
    %590 = arith.mulf %589, %589 : vector<16x32xf32>
    %cst_158 = arith.constant dense<0.000000e+00> : vector<16xf32>
    %591 = vector.multi_reduction <add>, %590, %cst_158 [1] : vector<16x32xf32> to vector<16xf32>
    %592 = vector.shape_cast %591 : vector<16xf32> to vector<16x1xf32>
    %cst_159 = arith.constant 3.200000e+01 : f32
    %593 = vector.broadcast %cst_159 : f32 to vector<16x1xf32>
    %594 = arith.divf %592, %593 : vector<16x1xf32>
    %595 = vector.broadcast %587 : vector<16x1xf32> to vector<16x32xf32>
    %596 = arith.subf %583, %595 : vector<16x32xf32>
    %cst_160 = arith.constant 9.99999974E-6 : f32
    %597 = vector.broadcast %cst_160 : f32 to vector<16x1xf32>
    %598 = arith.addf %594, %597 : vector<16x1xf32>
    %599 = math.rsqrt %598 : vector<16x1xf32>
    %600 = vector.broadcast %599 : vector<16x1xf32> to vector<16x32xf32>
    %601 = arith.mulf %596, %600 : vector<16x32xf32>
    %c103 = arith.constant 103 : index
    %c0_161 = arith.constant 0 : index
    %602 = vector.load %arg3[%c103, %c0_161] : memref<112x128xf32, #tpu.memory_space<vmem>>, vector<1x32xf32>
    %603 = vector.broadcast %602 : vector<1x32xf32> to vector<16x32xf32>
    %604 = arith.mulf %601, %603 : vector<16x32xf32>
    %c104 = arith.constant 104 : index
    %c0_162 = arith.constant 0 : index
    %605 = vector.load %arg3[%c104, %c0_162] : memref<112x128xf32, #tpu.memory_space<vmem>>, vector<1x32xf32>
    %606 = vector.broadcast %605 : vector<1x32xf32> to vector<16x32xf32>
    %607 = arith.addf %604, %606 : vector<16x32xf32>
    %608 = arith.truncf %607 : vector<16x32xf32> to vector<16x32xbf16>
    %c896 = arith.constant 896 : index
    %c0_163 = arith.constant 0 : index
    %609 = vector.load %arg2[%c896, %c0_163] : memref<1056x128xbf16, #tpu.memory_space<vmem>>, vector<32x128xbf16>
    %cst_164 = arith.constant dense<0.000000e+00> : vector<16x128xf32>
    %610 = tpu.matmul %608, %609, %cst_164 {dimension_numbers = #tpu.dot_dimension_numbers<[1], [0], [0], [1], [0, 0, 1, 1], [], []>} : vector<16x32xbf16>, vector<32x128xbf16>, vector<16x128xf32> -> vector<16x128xf32>
    %c99 = arith.constant 99 : index
    %c0_165 = arith.constant 0 : index
    %611 = vector.load %arg3[%c99, %c0_165] : memref<112x128xf32, #tpu.memory_space<vmem>>, vector<1x128xf32>
    %612 = vector.broadcast %611 : vector<1x128xf32> to vector<16x128xf32>
    %613 = arith.addf %610, %612 : vector<16x128xf32>
    %cst_166 = arith.constant 0.000000e+00 : f32
    %614 = vector.broadcast %cst_166 : f32 to vector<16x128xf32>
    %615 = arith.maximumf %613, %614 : vector<16x128xf32>
    %616 = arith.truncf %615 : vector<16x128xf32> to vector<16x128xbf16>
    %c928 = arith.constant 928 : index
    %c0_167 = arith.constant 0 : index
    %617 = vector.load %arg2[%c928, %c0_167] : memref<1056x128xbf16, #tpu.memory_space<vmem>>, vector<128x32xbf16>
    %cst_168 = arith.constant dense<0.000000e+00> : vector<16x32xf32>
    %618 = tpu.matmul %616, %617, %cst_168 {dimension_numbers = #tpu.dot_dimension_numbers<[1], [0], [0], [1], [0, 0, 1, 1], [], []>} : vector<16x128xbf16>, vector<128x32xbf16>, vector<16x32xf32> -> vector<16x32xf32>
    %c100 = arith.constant 100 : index
    %c0_169 = arith.constant 0 : index
    %619 = vector.load %arg3[%c100, %c0_169] : memref<112x128xf32, #tpu.memory_space<vmem>>, vector<1x32xf32>
    %620 = vector.broadcast %619 : vector<1x32xf32> to vector<16x32xf32>
    %621 = arith.addf %618, %620 : vector<16x32xf32>
    %622 = arith.addf %607, %621 : vector<16x32xf32>
    %cst_170 = arith.constant dense<0.000000e+00> : vector<16xf32>
    %623 = vector.multi_reduction <add>, %622, %cst_170 [1] : vector<16x32xf32> to vector<16xf32>
    %624 = vector.shape_cast %623 : vector<16xf32> to vector<16x1xf32>
    %cst_171 = arith.constant 3.200000e+01 : f32
    %625 = vector.broadcast %cst_171 : f32 to vector<16x1xf32>
    %626 = arith.divf %624, %625 : vector<16x1xf32>
    %627 = vector.broadcast %626 : vector<16x1xf32> to vector<16x32xf32>
    %628 = arith.subf %622, %627 : vector<16x32xf32>
    %629 = arith.mulf %628, %628 : vector<16x32xf32>
    %cst_172 = arith.constant dense<0.000000e+00> : vector<16xf32>
    %630 = vector.multi_reduction <add>, %629, %cst_172 [1] : vector<16x32xf32> to vector<16xf32>
    %631 = vector.shape_cast %630 : vector<16xf32> to vector<16x1xf32>
    %cst_173 = arith.constant 3.200000e+01 : f32
    %632 = vector.broadcast %cst_173 : f32 to vector<16x1xf32>
    %633 = arith.divf %631, %632 : vector<16x1xf32>
    %634 = vector.broadcast %626 : vector<16x1xf32> to vector<16x32xf32>
    %635 = arith.subf %622, %634 : vector<16x32xf32>
    %cst_174 = arith.constant 9.99999974E-6 : f32
    %636 = vector.broadcast %cst_174 : f32 to vector<16x1xf32>
    %637 = arith.addf %633, %636 : vector<16x1xf32>
    %638 = math.rsqrt %637 : vector<16x1xf32>
    %639 = vector.broadcast %638 : vector<16x1xf32> to vector<16x32xf32>
    %640 = arith.mulf %635, %639 : vector<16x32xf32>
    %c105 = arith.constant 105 : index
    %c0_175 = arith.constant 0 : index
    %641 = vector.load %arg3[%c105, %c0_175] : memref<112x128xf32, #tpu.memory_space<vmem>>, vector<1x32xf32>
    %642 = vector.broadcast %641 : vector<1x32xf32> to vector<16x32xf32>
    %643 = arith.mulf %640, %642 : vector<16x32xf32>
    %c106 = arith.constant 106 : index
    %c0_176 = arith.constant 0 : index
    %644 = vector.load %arg3[%c106, %c0_176] : memref<112x128xf32, #tpu.memory_space<vmem>>, vector<1x32xf32>
    %645 = vector.broadcast %644 : vector<1x32xf32> to vector<16x32xf32>
    %646 = arith.addf %643, %645 : vector<16x32xf32>
    %cst_177 = arith.constant dense<0.000000e+00> : vector<16xf32>
    %647 = vector.multi_reduction <add>, %646, %cst_177 [1] : vector<16x32xf32> to vector<16xf32>
    %648 = vector.shape_cast %647 : vector<16xf32> to vector<16x1xf32>
    %cst_178 = arith.constant 3.200000e+01 : f32
    %649 = vector.broadcast %cst_178 : f32 to vector<16x1xf32>
    %650 = arith.divf %648, %649 : vector<16x1xf32>
    %651 = vector.broadcast %650 : vector<16x1xf32> to vector<16x32xf32>
    %652 = arith.subf %646, %651 : vector<16x32xf32>
    %653 = arith.mulf %652, %652 : vector<16x32xf32>
    %cst_179 = arith.constant dense<0.000000e+00> : vector<16xf32>
    %654 = vector.multi_reduction <add>, %653, %cst_179 [1] : vector<16x32xf32> to vector<16xf32>
    %655 = vector.shape_cast %654 : vector<16xf32> to vector<16x1xf32>
    %cst_180 = arith.constant 3.200000e+01 : f32
    %656 = vector.broadcast %cst_180 : f32 to vector<16x1xf32>
    %657 = arith.divf %655, %656 : vector<16x1xf32>
    %658 = vector.broadcast %650 : vector<16x1xf32> to vector<16x32xf32>
    %659 = arith.subf %646, %658 : vector<16x32xf32>
    %cst_181 = arith.constant 9.99999974E-6 : f32
    %660 = vector.broadcast %cst_181 : f32 to vector<16x1xf32>
    %661 = arith.addf %657, %660 : vector<16x1xf32>
    %662 = math.rsqrt %661 : vector<16x1xf32>
    %663 = vector.broadcast %662 : vector<16x1xf32> to vector<16x32xf32>
    %664 = arith.mulf %659, %663 : vector<16x32xf32>
    %c107 = arith.constant 107 : index
    %c0_182 = arith.constant 0 : index
    %665 = vector.load %arg3[%c107, %c0_182] : memref<112x128xf32, #tpu.memory_space<vmem>>, vector<1x32xf32>
    %666 = vector.broadcast %665 : vector<1x32xf32> to vector<16x32xf32>
    %667 = arith.mulf %664, %666 : vector<16x32xf32>
    %c108 = arith.constant 108 : index
    %c0_183 = arith.constant 0 : index
    %668 = vector.load %arg3[%c108, %c0_183] : memref<112x128xf32, #tpu.memory_space<vmem>>, vector<1x32xf32>
    %669 = vector.broadcast %668 : vector<1x32xf32> to vector<16x32xf32>
    %670 = arith.addf %667, %669 : vector<16x32xf32>
    %671 = vector.shape_cast %670 : vector<16x32xf32> to vector<2x8x32xf32>
    %c0_184 = arith.constant 0 : index
    %c0_185 = arith.constant 0 : index
    %c0_186 = arith.constant 0 : index
    %672 = vector.load %arg4[%c0_184, %c0_185, %c0_186] : memref<2x8x32xf32, #tpu.memory_space<vmem>>, vector<2x8x32xf32>
    tpu.vector_store %arg4[%c0_184, %c0_185, %c0_186], %671 {strides = array<i32>} : memref<2x8x32xf32, #tpu.memory_space<vmem>>, vector<2x8x32xf32>,
    return
  }
}

</mosaic_0001>

<llo_original>
// kernel: transformer_tsp_forward.1
$region0: #{transformer_tsp_forward.1}
  #allocation0 [shape = 'u32[]', space=smem, size = 0x4, offset = 0x4, fixed_abs, tag = 'smem constant byte address 0x4 - core index']
  #allocation1 [shape = 'u32[144,128]{1,0:T(1,128)}', space=vmem, size = 0x12000, scoped, tag = 'internal scratch']
  %s0 = inlined_call_operand.hbm [shape: f32[2,8,32], index: 0, kind: input, shape index: {}]
  %s1 = inlined_call_operand.hbm [shape: f32[2,8,32], index: 1, kind: input, shape index: {}]
  %s2 = inlined_call_operand.hbm [shape: bf16[1056,128], index: 2, kind: input, shape index: {}]
  %s3 = inlined_call_operand.hbm [shape: f32[112,128], index: 3, kind: input, shape index: {}]
  %s4 = inlined_call_operand.hbm [shape: f32[2,8,32], index: 4, kind: output, shape index: {}]
  %s5 = sld [smem:[#allocation0]]
  $region42: #{transformer_tsp_forward.1} parent=0
    _
  %s7 = ssub.s32 1, %s5
  %s8 = scalar_select 0, %s7, %s5
  $region1: #{transformer_tsp_forward.1} parent=0
    #allocation2 [shape = 'u8[8192]{0}', space=vmem, size = 0x2000, scoped, tag = 'input window, operand 0, single buffered']
    #allocation3 [shape = 's32[1]{0}', space=sflag, size = 0x4, scoped, tag = 'scoped memory for transformer_tsp_forward.1']
    #allocation4 [shape = 's32[1]{0}', space=sflag, size = 0x4, scoped, tag = 'scoped memory for transformer_tsp_forward.1']
    #allocation5 [shape = 'u8[8192]{0}', space=vmem, size = 0x2000, scoped, tag = 'input window, operand 1, single buffered']
    #allocation6 [shape = 's32[1]{0}', space=sflag, size = 0x4, scoped, tag = 'scoped memory for transformer_tsp_forward.1']
    #allocation7 [shape = 'u8[270336]{0}', space=vmem, size = 0x42000, scoped, tag = 'input window, operand 2, single buffered']
    #allocation8 [shape = 'u8[57344]{0}', space=vmem, size = 0xe000, scoped, tag = 'input window, operand 3, single buffered']
    #allocation9 [shape = 's32[1]{0}', space=sflag, size = 0x4, scoped, tag = 'scoped memory for transformer_tsp_forward.1']
    #allocation10 [shape = 'u8[8192]{0}', space=vmem, size = 0x2000, scoped, tag = 'output window, operand 0, single buffered']
    %9 = vsyncpa [#allocation3], 0
    %10 = vsyncpa [#allocation6], 0
    %11 = vsyncpa [#allocation9], 0
    %12 = vsyncpa [#allocation4], 0
    // Predicated region
    $region2: #{transformer_tsp_forward.1} parent=1 // pred_check
      _
    $region3: #{transformer_tsp_forward.1} parent=1 // pred_check_branch
      %14 = sbr.rel (0) target = $region5
    $region4: #{transformer_tsp_forward.1} parent=1 // pred_region
      %s16 = ssub.s32 256, 256
      %17 = vsyncadd [#allocation3], %s16
      %s18 = sshll.u32 [#allocation2], 4
      %s19 = int_to_ptr.vmem [resolvable:$true] %s18
      %24 = dma.hbm_to_vmem [thread:$0]  %s0, 256, %s19, [#allocation3], 128, 128, 8
    $region5: #{transformer_tsp_forward.1} parent=1 // pred_fallthru
      _
    // Predicated region
    $region6: #{transformer_tsp_forward.1} parent=1 // pred_check
      _
    $region7: #{transformer_tsp_forward.1} parent=1 // pred_check_branch
      %26 = sbr.rel (0) target = $region9
    $region8: #{transformer_tsp_forward.1} parent=1 // pred_region
      %s28 = ssub.s32 256, 256
      %29 = vsyncadd [#allocation6], %s28
      %s30 = sshll.u32 [#allocation5], 4
      %s31 = int_to_ptr.vmem [resolvable:$true] %s30
      %36 = dma.hbm_to_vmem [thread:$0]  %s1, 256, %s31, [#allocation6], 128, 128, 8
    $region9: #{transformer_tsp_forward.1} parent=1 // pred_fallthru
      _
    // Predicated region
    $region10: #{transformer_tsp_forward.1} parent=1 // pred_check
      _
    $region11: #{transformer_tsp_forward.1} parent=1 // pred_check_branch
      %38 = sbr.rel (0) target = $region13
    $region12: #{transformer_tsp_forward.1} parent=1 // pred_region
      %s40 = ssub.s32 8448, 8448
      %41 = vsyncadd [#allocation6], %s40
      %s42 = sshll.u32 [#allocation7], 4
      %s43 = int_to_ptr.vmem [resolvable:$true] %s42
      %48 = dma.hbm_to_vmem [thread:$0]  %s2, 8448, %s43, [#allocation6], 64, 64, 4
    $region13: #{transformer_tsp_forward.1} parent=1 // pred_fallthru
      _
    // Predicated region
    $region14: #{transformer_tsp_forward.1} parent=1 // pred_check
      _
    $region15: #{transformer_tsp_forward.1} parent=1 // pred_check_branch
      %50 = sbr.rel (0) target = $region17
    $region16: #{transformer_tsp_forward.1} parent=1 // pred_region
      %s52 = ssub.s32 1792, 1792
      %53 = vsyncadd [#allocation9], %s52
      %s54 = sshll.u32 [#allocation8], 4
      %s55 = int_to_ptr.vmem [resolvable:$true] %s54
      %60 = dma.hbm_to_vmem [thread:$0]  %s3, 1792, %s55, [#allocation9], 128, 128, 8
    $region17: #{transformer_tsp_forward.1} parent=1 // pred_fallthru
      _
    // Predicated region
    $region18: #{transformer_tsp_forward.1} parent=1 // pred_check
      _
    $region19: #{transformer_tsp_forward.1} parent=1 // pred_check_branch
      %62 = sbr.rel (0) target = $region21
    $region20: #{transformer_tsp_forward.1} parent=1 // pred_region
      %63 = dma.done [#allocation3], 256
    $region21: #{transformer_tsp_forward.1} parent=1 // pred_fallthru
      _
    // Predicated region
    $region22: #{transformer_tsp_forward.1} parent=1 // pred_check
      _
    $region23: #{transformer_tsp_forward.1} parent=1 // pred_check_branch
      %65 = sbr.rel (0) target = $region25
    $region24: #{transformer_tsp_forward.1} parent=1 // pred_region
      %66 = dma.done [#allocation6], 256
    $region25: #{transformer_tsp_forward.1} parent=1 // pred_fallthru
      _
    // Predicated region
    $region26: #{transformer_tsp_forward.1} parent=1 // pred_check
      _
    $region27: #{transformer_tsp_forward.1} parent=1 // pred_check_branch
      %68 = sbr.rel (0) target = $region29
    $region28: #{transformer_tsp_forward.1} parent=1 // pred_region
      %69 = dma.done [#allocation6], 8448
    $region29: #{transformer_tsp_forward.1} parent=1 // pred_fallthru
      _
    // Predicated region
    $region30: #{transformer_tsp_forward.1} parent=1 // pred_check
      _
    $region31: #{transformer_tsp_forward.1} parent=1 // pred_check_branch
      %71 = sbr.rel (0) target = $region33
    $region32: #{transformer_tsp_forward.1} parent=1 // pred_region
      %72 = dma.done [#allocation9], 1792
    $region33: #{transformer_tsp_forward.1} parent=1 // pred_fallthru
      _
    %v74 = vld [vmem:[#allocation8] sm:$0x3]
    %v77 = vunpack.c.l.s4 1966171168
    %v78 = vunpack.c.0.s8 %v77
    %v79 = vlaneseq
    %v80 = vshrl.u32 %v79, 7
    %v81 = vsub.s32 %v78, %v80
    %v82 = vrot.slane %v74, %v81
    %v83 = vcombine.high %v82, %v82
    %v85 = vunpack.c.l.s4 1966171168
    %v86 = vunpack.c.0.s8 %v85
    %v87 = vlaneseq
    %v88 = vshrl.u32 %v87, 7
    %v89 = vsub.s32 %v86, %v88
    %v90 = vrot.slane %v82, %v89
    %v92 = vunpack.c.l.s4 1966171168
    %v93 = vunpack.c.0.s8 %v92
    %v94 = vlaneseq
    %v95 = vshrl.u32 %v94, 7
    %v96 = vsub.s32 %v93, %v95
    %v97 = vrot.slane %v83, %v96
    %v98 = vld [vmem:[#allocation2] sm:$0xff]
    %v99 = vld [vmem:[#allocation2 + $0x8] sm:$0xff]
    %v100 = vlaneseq
    %v101 = vshrl.u32 %v100, 7
    %v102 = vsub.s32 0, %v101
    %v103 = vrot.slane %v90, %v102
    %v104 = vlaneseq
    %v105 = vshrl.u32 %v104, 7
    %v106 = vsub.s32 0, %v105
    %v107 = vrot.slane %v97, %v106
    %v110 = vadd.f32 %v98, %v103
    %v111 = vadd.f32 %v99, %v107
    %v112 = vpack.c.bf16 %v111, %v110
    %v113 = vld [vmem:[#allocation7] sm:$0xf]
    %v114 = vld [vmem:[#allocation7 + $0x4] sm:$0xf]
    %v115 = vld [vmem:[#allocation7 + $0x8] sm:$0xf]
    %v116 = vld [vmem:[#allocation7 + $0xc] sm:$0xf]
    %v117 = vld [vmem:[#allocation8 + $0x40] sm:$0x1]
    %v118 = vlaneseq
    %v119 = vshrl.u32 %v118, 7
    %v120 = vsub.s32 0, %v119
    %v121 = vrot.slane %v117, %v120
    %v126 = vunpack.c.l.b16 %v113
    %v127 = vunpack.c.l.b16 %v114
    %v128 = vunpack.c.l.b16 %v115
    %v129 = vunpack.c.l.b16 %v116
    %v130 = vpack.c.b16 %v127, %v126
    %v131 = vpack.c.b16 %v129, %v128
    %vm134 = vcmask 261120
    %v136 = vsel %vm134, %v112, 0
    %138 = vmatprep.subr.bf16.mxu0 0
    %139 = vmatpush1.bf16.msra.mxu0 %v130
    %140 = vmatprep.subr.bf16.mxu0 0
    %141 = vmatpush1.bf16.msra.mxu0 %v131
    %142 = vmatprep.subr.bf16.mxu0 0
    %143 = vmatpush1.bf16.msra.mxu0 0
    %144 = vmatprep.subr.bf16.mxu0 0
    %145 = vmatpush1.bf16.msra.mxu0 0
    %146 = vmatprep.subr.bf16.mxu0 0
    %147 = vmatpush1.bf16.msra.mxu0 0
    %148 = vmatprep.subr.bf16.mxu0 0
    %149 = vmatpush1.bf16.msra.mxu0 0
    %150 = vmatprep.subr.bf16.mxu0 0
    %151 = vmatpush1.bf16.msra.mxu0 0
    %152 = vmatprep.subr.bf16.mxu0 0
    %153 = vmatpush1.bf16.msra.mxu0 0
    %154 = vmatprep.subr.bf16.mxu0 0
    %155 = vmatpush1.bf16.msra.mxu0 0
    %156 = vmatprep.subr.bf16.mxu0 0
    %157 = vmatpush1.bf16.msra.mxu0 0
    %158 = vmatprep.subr.bf16.mxu0 0
    %159 = vmatpush1.bf16.msra.mxu0 0
    %160 = vmatprep.subr.bf16.mxu0 0
    %161 = vmatpush1.bf16.msra.mxu0 0
    %162 = vmatprep.subr.bf16.mxu0 0
    %163 = vmatpush1.bf16.msra.mxu0 0
    %164 = vmatprep.subr.bf16.mxu0 0
    %165 = vmatpush1.bf16.msra.mxu0 0
    %166 = vmatprep.subr.bf16.mxu0 0
    %167 = vmatpush1.bf16.msra.mxu0 0
    %168 = vmatprep.subr.bf16.mxu0 0
    %169 = vmatpush1.bf16.msra.mxu0 0
    %170 = vmatprep.mubr.bf16.mxu0 0
    %171 = vmatmul.mubr.bf16.gmra.mrb[0].mxu0 %v136
    %v172 = vpop.f32.mrb[0].mxu0
    %v173 = vadd.f32 %v121, %v172
    %v174 = vpop.f32.mrb[0].mxu0
    %v175 = vpop.f32.mrb[0].mxu0
    %v176 = vadd.f32 %v121, %v175
    %v177 = vpop.f32.mrb[0].mxu0
    %178 = vdwg.mxu0
    %181 = vrot.lane.b32.xlu0 %v173, 120
    %v182 = vpop.permute.xlu0 %181
    %183 = vrot.lane.b32.xlu0 %v176, 120
    %v184 = vpop.permute.xlu0 %183
    %187 = vrot.lane.b32.xlu0 %v173, 112
    %v188 = vpop.permute.xlu0 %187
    %189 = vrot.lane.b32.xlu0 %v176, 112
    %v190 = vpop.permute.xlu0 %189
    %193 = vrot.lane.b32.xlu0 %v173, 104
    %v194 = vpop.permute.xlu0 %193
    %195 = vrot.lane.b32.xlu0 %v176, 104
    %v196 = vpop.permute.xlu0 %195
    %v199 = vpack.c.bf16 %v173, %v173
    %v200 = vpack.c.bf16 %v176, %v176
    %v201 = vpack.c.bf16 %v182, %v182
    %v202 = vpack.c.bf16 %v184, %v184
    %v203 = vpack.c.bf16 %v188, %v188
    %v204 = vpack.c.bf16 %v190, %v190
    %v205 = vpack.c.bf16 %v194, %v194
    %v206 = vpack.c.bf16 %v196, %v196
    %208 = vrot.lane.b32.xlu0 %v199, 96
    %v209 = vpop.permute.xlu0 %208
    %vm210 = vcmask 64512
    %v212 = vsel %vm210, %v199, 0
    %v215 = vsel %vm210, %v209, 0
    %217 = vmatprep.subr.bf16.mxu0 0
    %218 = vmatpush1.bf16.xpose.msra.mxu0 %v215
    %219 = vmatprep.subr.bf16.mxu0 0
    %220 = vmatpush1.bf16.xpose.msra.mxu0 0
    %221 = vmatprep.subr.bf16.mxu0 0
    %222 = vmatpush1.bf16.xpose.msra.mxu0 0
    %223 = vmatprep.subr.bf16.mxu0 0
    %224 = vmatpush1.bf16.xpose.msra.mxu0 0
    %225 = vmatprep.subr.bf16.mxu0 0
    %226 = vmatpush1.bf16.xpose.msra.mxu0 0
    %227 = vmatprep.subr.bf16.mxu0 0
    %228 = vmatpush1.bf16.xpose.msra.mxu0 0
    %229 = vmatprep.subr.bf16.mxu0 0
    %230 = vmatpush1.bf16.xpose.msra.mxu0 0
    %231 = vmatprep.subr.bf16.mxu0 0
    %232 = vmatpush1.bf16.xpose.msra.mxu0 0
    %233 = vmatprep.subr.bf16.mxu0 0
    %234 = vmatpush1.bf16.xpose.msra.mxu0 0
    %235 = vmatprep.subr.bf16.mxu0 0
    %236 = vmatpush1.bf16.xpose.msra.mxu0 0
    %237 = vmatprep.subr.bf16.mxu0 0
    %238 = vmatpush1.bf16.xpose.msra.mxu0 0
    %239 = vmatprep.subr.bf16.mxu0 0
    %240 = vmatpush1.bf16.xpose.msra.mxu0 0
    %241 = vmatprep.subr.bf16.mxu0 0
    %242 = vmatpush1.bf16.xpose.msra.mxu0 0
    %243 = vmatprep.subr.bf16.mxu0 0
    %244 = vmatpush1.bf16.xpose.msra.mxu0 0
    %245 = vmatprep.subr.bf16.mxu0 0
    %246 = vmatpush1.bf16.xpose.msra.mxu0 0
    %247 = vmatprep.subr.bf16.mxu0 0
    %248 = vmatpush1.bf16.xpose.msra.mxu0 0
    %249 = vmatprep.mubr.bf16.mxu0 0
    %250 = vmatmul.mubr.bf16.gmra.mrb[0].mxu0 %v212
    %v251 = vpop.f32.mrb[0].mxu0
    %v252 = vadd.f32 0.0, %v251
    %v253 = vpop.f32.mrb[0].mxu0
    %v254 = vpop.f32.mrb[0].mxu0
    %v255 = vpop.f32.mrb[0].mxu0
    %256 = vdwg.mxu0
    %258 = vrot.lane.b32.xlu0 %v200, 96
    %v259 = vpop.permute.xlu0 %258
    %v261 = vsel %vm210, %v200, 0
    %v264 = vsel %vm210, %v259, 0
    %266 = vmatprep.subr.bf16.mxu0 0
    %267 = vmatpush1.bf16.xpose.msra.mxu0 %v264
    %268 = vmatprep.subr.bf16.mxu0 0
    %269 = vmatpush1.bf16.xpose.msra.mxu0 0
    %270 = vmatprep.subr.bf16.mxu0 0
    %271 = vmatpush1.bf16.xpose.msra.mxu0 0
    %272 = vmatprep.subr.bf16.mxu0 0
    %273 = vmatpush1.bf16.xpose.msra.mxu0 0
    %274 = vmatprep.subr.bf16.mxu0 0
    %275 = vmatpush1.bf16.xpose.msra.mxu0 0
    %276 = vmatprep.subr.bf16.mxu0 0
    %277 = vmatpush1.bf16.xpose.msra.mxu0 0
    %278 = vmatprep.subr.bf16.mxu0 0
    %279 = vmatpush1.bf16.xpose.msra.mxu0 0
    %280 = vmatprep.subr.bf16.mxu0 0
    %281 = vmatpush1.bf16.xpose.msra.mxu0 0
    %282 = vmatprep.subr.bf16.mxu0 0
    %283 = vmatpush1.bf16.xpose.msra.mxu0 0
    %284 = vmatprep.subr.bf16.mxu0 0
    %285 = vmatpush1.bf16.xpose.msra.mxu0 0
    %286 = vmatprep.subr.bf16.mxu0 0
    %287 = vmatpush1.bf16.xpose.msra.mxu0 0
    %288 = vmatprep.subr.bf16.mxu0 0
    %289 = vmatpush1.bf16.xpose.msra.mxu0 0
    %290 = vmatprep.subr.bf16.mxu0 0
    %291 = vmatpush1.bf16.xpose.msra.mxu0 0
    %292 = vmatprep.subr.bf16.mxu0 0
    %293 = vmatpush1.bf16.xpose.msra.mxu0 0
    %294 = vmatprep.subr.bf16.mxu0 0
    %295 = vmatpush1.bf16.xpose.msra.mxu0 0
    %296 = vmatprep.subr.bf16.mxu0 0
    %297 = vmatpush1.bf16.xpose.msra.mxu0 0
    %298 = vmatprep.mubr.bf16.mxu0 0
    %299 = vmatmul.mubr.bf16.gmra.mrb[0].mxu0 %v261
    %v300 = vpop.f32.mrb[0].mxu0
    %v301 = vadd.f32 0.0, %v300
    %v302 = vpop.f32.mrb[0].mxu0
    %v303 = vpop.f32.mrb[0].mxu0
    %v304 = vpop.f32.mrb[0].mxu0
    %305 = vdwg.mxu0
    %307 = vrot.lane.b32.xlu0 %v201, 96
    %v308 = vpop.permute.xlu0 %307
    %v310 = vsel %vm210, %v201, 0
    %v313 = vsel %vm210, %v308, 0
    %315 = vmatprep.subr.bf16.mxu0 0
    %316 = vmatpush1.bf16.xpose.msra.mxu0 %v313
    %317 = vmatprep.subr.bf16.mxu0 0
    %318 = vmatpush1.bf16.xpose.msra.mxu0 0
    %319 = vmatprep.subr.bf16.mxu0 0
    %320 = vmatpush1.bf16.xpose.msra.mxu0 0
    %321 = vmatprep.subr.bf16.mxu0 0
    %322 = vmatpush1.bf16.xpose.msra.mxu0 0
    %323 = vmatprep.subr.bf16.mxu0 0
    %324 = vmatpush1.bf16.xpose.msra.mxu0 0
    %325 = vmatprep.subr.bf16.mxu0 0
    %326 = vmatpush1.bf16.xpose.msra.mxu0 0
    %327 = vmatprep.subr.bf16.mxu0 0
    %328 = vmatpush1.bf16.xpose.msra.mxu0 0
    %329 = vmatprep.subr.bf16.mxu0 0
    %330 = vmatpush1.bf16.xpose.msra.mxu0 0
    %331 = vmatprep.subr.bf16.mxu0 0
    %332 = vmatpush1.bf16.xpose.msra.mxu0 0
    %333 = vmatprep.subr.bf16.mxu0 0
    %334 = vmatpush1.bf16.xpose.msra.mxu0 0
    %335 = vmatprep.subr.bf16.mxu0 0
    %336 = vmatpush1.bf16.xpose.msra.mxu0 0
    %337 = vmatprep.subr.bf16.mxu0 0
    %338 = vmatpush1.bf16.xpose.msra.mxu0 0
    %339 = vmatprep.subr.bf16.mxu0 0
    %340 = vmatpush1.bf16.xpose.msra.mxu0 0
    %341 = vmatprep.subr.bf16.mxu0 0
    %342 = vmatpush1.bf16.xpose.msra.mxu0 0
    %343 = vmatprep.subr.bf16.mxu0 0
    %344 = vmatpush1.bf16.xpose.msra.mxu0 0
    %345 = vmatprep.subr.bf16.mxu0 0
    %346 = vmatpush1.bf16.xpose.msra.mxu0 0
    %347 = vmatprep.mubr.bf16.mxu0 0
    %348 = vmatmul.mubr.bf16.gmra.mrb[0].mxu0 %v310
    %v349 = vpop.f32.mrb[0].mxu0
    %v350 = vadd.f32 0.0, %v349
    %v351 = vpop.f32.mrb[0].mxu0
    %v352 = vpop.f32.mrb[0].mxu0
    %v353 = vpop.f32.mrb[0].mxu0
    %354 = vdwg.mxu0
    %356 = vrot.lane.b32.xlu0 %v202, 96
    %v357 = vpop.permute.xlu0 %356
    %v359 = vsel %vm210, %v202, 0
    %v362 = vsel %vm210, %v357, 0
    %364 = vmatprep.subr.bf16.mxu0 0
    %365 = vmatpush1.bf16.xpose.msra.mxu0 %v362
    %366 = vmatprep.subr.bf16.mxu0 0
    %367 = vmatpush1.bf16.xpose.msra.mxu0 0
    %368 = vmatprep.subr.bf16.mxu0 0
    %369 = vmatpush1.bf16.xpose.msra.mxu0 0
    %370 = vmatprep.subr.bf16.mxu0 0
    %371 = vmatpush1.bf16.xpose.msra.mxu0 0
    %372 = vmatprep.subr.bf16.mxu0 0
    %373 = vmatpush1.bf16.xpose.msra.mxu0 0
    %374 = vmatprep.subr.bf16.mxu0 0
    %375 = vmatpush1.bf16.xpose.msra.mxu0 0
    %376 = vmatprep.subr.bf16.mxu0 0
    %377 = vmatpush1.bf16.xpose.msra.mxu0 0
    %378 = vmatprep.subr.bf16.mxu0 0
    %379 = vmatpush1.bf16.xpose.msra.mxu0 0
    %380 = vmatprep.subr.bf16.mxu0 0
    %381 = vmatpush1.bf16.xpose.msra.mxu0 0
    %382 = vmatprep.subr.bf16.mxu0 0
    %383 = vmatpush1.bf16.xpose.msra.mxu0 0
    %384 = vmatprep.subr.bf16.mxu0 0
    %385 = vmatpush1.bf16.xpose.msra.mxu0 0
    %386 = vmatprep.subr.bf16.mxu0 0
    %387 = vmatpush1.bf16.xpose.msra.mxu0 0
    %388 = vmatprep.subr.bf16.mxu0 0
    %389 = vmatpush1.bf16.xpose.msra.mxu0 0
    %390 = vmatprep.subr.bf16.mxu0 0
    %391 = vmatpush1.bf16.xpose.msra.mxu0 0
    %392 = vmatprep.subr.bf16.mxu0 0
    %393 = vmatpush1.bf16.xpose.msra.mxu0 0
    %394 = vmatprep.subr.bf16.mxu0 0
    %395 = vmatpush1.bf16.xpose.msra.mxu0 0
    %396 = vmatprep.mubr.bf16.mxu0 0
    %397 = vmatmul.mubr.bf16.gmra.mrb[0].mxu0 %v359
    %v398 = vpop.f32.mrb[0].mxu0
    %v399 = vadd.f32 0.0, %v398
    %v400 = vpop.f32.mrb[0].mxu0
    %v401 = vpop.f32.mrb[0].mxu0
    %v402 = vpop.f32.mrb[0].mxu0
    %403 = vdwg.mxu0
    %405 = vrot.lane.b32.xlu0 %v203, 96
    %v406 = vpop.permute.xlu0 %405
    %v408 = vsel %vm210, %v203, 0
    %v411 = vsel %vm210, %v406, 0
    %413 = vmatprep.subr.bf16.mxu0 0
    %414 = vmatpush1.bf16.xpose.msra.mxu0 %v411
    %415 = vmatprep.subr.bf16.mxu0 0
    %416 = vmatpush1.bf16.xpose.msra.mxu0 0
    %417 = vmatprep.subr.bf16.mxu0 0
    %418 = vmatpush1.bf16.xpose.msra.mxu0 0
    %419 = vmatprep.subr.bf16.mxu0 0
    %420 = vmatpush1.bf16.xpose.msra.mxu0 0
    %421 = vmatprep.subr.bf16.mxu0 0
    %422 = vmatpush1.bf16.xpose.msra.mxu0 0
    %423 = vmatprep.subr.bf16.mxu0 0
    %424 = vmatpush1.bf16.xpose.msra.mxu0 0
    %425 = vmatprep.subr.bf16.mxu0 0
    %426 = vmatpush1.bf16.xpose.msra.mxu0 0
    %427 = vmatprep.subr.bf16.mxu0 0
    %428 = vmatpush1.bf16.xpose.msra.mxu0 0
    %429 = vmatprep.subr.bf16.mxu0 0
    %430 = vmatpush1.bf16.xpose.msra.mxu0 0
    %431 = vmatprep.subr.bf16.mxu0 0
    %432 = vmatpush1.bf16.xpose.msra.mxu0 0
    %433 = vmatprep.subr.bf16.mxu0 0
    %434 = vmatpush1.bf16.xpose.msra.mxu0 0
    %435 = vmatprep.subr.bf16.mxu0 0
    %436 = vmatpush1.bf16.xpose.msra.mxu0 0
    %437 = vmatprep.subr.bf16.mxu0 0
    %438 = vmatpush1.bf16.xpose.msra.mxu0 0
    %439 = vmatprep.subr.bf16.mxu0 0
    %440 = vmatpush1.bf16.xpose.msra.mxu0 0
    %441 = vmatprep.subr.bf16.mxu0 0
    %442 = vmatpush1.bf16.xpose.msra.mxu0 0
    %443 = vmatprep.subr.bf16.mxu0 0
    %444 = vmatpush1.bf16.xpose.msra.mxu0 0
    %445 = vmatprep.mubr.bf16.mxu0 0
    %446 = vmatmul.mubr.bf16.gmra.mrb[0].mxu0 %v408
    %v447 = vpop.f32.mrb[0].mxu0
    %v448 = vadd.f32 0.0, %v447
    %v449 = vpop.f32.mrb[0].mxu0
    %v450 = vpop.f32.mrb[0].mxu0
    %v451 = vpop.f32.mrb[0].mxu0
    %452 = vdwg.mxu0
    %454 = vrot.lane.b32.xlu0 %v204, 96
    %v455 = vpop.permute.xlu0 %454
    %v457 = vsel %vm210, %v204, 0
    %v460 = vsel %vm210, %v455, 0
    %462 = vmatprep.subr.bf16.mxu0 0
    %463 = vmatpush1.bf16.xpose.msra.mxu0 %v460
    %464 = vmatprep.subr.bf16.mxu0 0
    %465 = vmatpush1.bf16.xpose.msra.mxu0 0
    %466 = vmatprep.subr.bf16.mxu0 0
    %467 = vmatpush1.bf16.xpose.msra.mxu0 0
    %468 = vmatprep.subr.bf16.mxu0 0
    %469 = vmatpush1.bf16.xpose.msra.mxu0 0
    %470 = vmatprep.subr.bf16.mxu0 0
    %471 = vmatpush1.bf16.xpose.msra.mxu0 0
    %472 = vmatprep.subr.bf16.mxu0 0
    %473 = vmatpush1.bf16.xpose.msra.mxu0 0
    %474 = vmatprep.subr.bf16.mxu0 0
    %475 = vmatpush1.bf16.xpose.msra.mxu0 0
    %476 = vmatprep.subr.bf16.mxu0 0
    %477 = vmatpush1.bf16.xpose.msra.mxu0 0
    %478 = vmatprep.subr.bf16.mxu0 0
    %479 = vmatpush1.bf16.xpose.msra.mxu0 0
    %480 = vmatprep.subr.bf16.mxu0 0
    %481 = vmatpush1.bf16.xpose.msra.mxu0 0
    %482 = vmatprep.subr.bf16.mxu0 0
    %483 = vmatpush1.bf16.xpose.msra.mxu0 0
    %484 = vmatprep.subr.bf16.mxu0 0
    %485 = vmatpush1.bf16.xpose.msra.mxu0 0
    %486 = vmatprep.subr.bf16.mxu0 0
    %487 = vmatpush1.bf16.xpose.msra.mxu0 0
    %488 = vmatprep.subr.bf16.mxu0 0
    %489 = vmatpush1.bf16.xpose.msra.mxu0 0
    %490 = vmatprep.subr.bf16.mxu0 0
    %491 = vmatpush1.bf16.xpose.msra.mxu0 0
    %492 = vmatprep.subr.bf16.mxu0 0
    %493 = vmatpush1.bf16.xpose.msra.mxu0 0
    %494 = vmatprep.mubr.bf16.mxu0 0
    %495 = vmatmul.mubr.bf16.gmra.mrb[0].mxu0 %v457
    %v496 = vpop.f32.mrb[0].mxu0
    %v497 = vadd.f32 0.0, %v496
    %v498 = vpop.f32.mrb[0].mxu0
    %v499 = vpop.f32.mrb[0].mxu0
    %v500 = vpop.f32.mrb[0].mxu0
    %501 = vdwg.mxu0
    %503 = vrot.lane.b32.xlu0 %v205, 96
    %v504 = vpop.permute.xlu0 %503
    %v506 = vsel %vm210, %v205, 0
    %v509 = vsel %vm210, %v504, 0
    %511 = vmatprep.subr.bf16.mxu0 0
    %512 = vmatpush1.bf16.xpose.msra.mxu0 %v509
    %513 = vmatprep.subr.bf16.mxu0 0
    %514 = vmatpush1.bf16.xpose.msra.mxu0 0
    %515 = vmatprep.subr.bf16.mxu0 0
    %516 = vmatpush1.bf16.xpose.msra.mxu0 0
    %517 = vmatprep.subr.bf16.mxu0 0
    %518 = vmatpush1.bf16.xpose.msra.mxu0 0
    %519 = vmatprep.subr.bf16.mxu0 0
    %520 = vmatpush1.bf16.xpose.msra.mxu0 0
    %521 = vmatprep.subr.bf16.mxu0 0
    %522 = vmatpush1.bf16.xpose.msra.mxu0 0
    %523 = vmatprep.subr.bf16.mxu0 0
    %524 = vmatpush1.bf16.xpose.msra.mxu0 0
    %525 = vmatprep.subr.bf16.mxu0 0
    %526 = vmatpush1.bf16.xpose.msra.mxu0 0
    %527 = vmatprep.subr.bf16.mxu0 0
    %528 = vmatpush1.bf16.xpose.msra.mxu0 0
    %529 = vmatprep.subr.bf16.mxu0 0
    %530 = vmatpush1.bf16.xpose.msra.mxu0 0
    %531 = vmatprep.subr.bf16.mxu0 0
    %532 = vmatpush1.bf16.xpose.msra.mxu0 0
    %533 = vmatprep.subr.bf16.mxu0 0
    %534 = vmatpush1.bf16.xpose.msra.mxu0 0
    %535 = vmatprep.subr.bf16.mxu0 0
    %536 = vmatpush1.bf16.xpose.msra.mxu0 0
    %537 = vmatprep.subr.bf16.mxu0 0
    %538 = vmatpush1.bf16.xpose.msra.mxu0 0
    %539 = vmatprep.subr.bf16.mxu0 0
    %540 = vmatpush1.bf16.xpose.msra.mxu0 0
    %541 = vmatprep.subr.bf16.mxu0 0
    %542 = vmatpush1.bf16.xpose.msra.mxu0 0
    %543 = vmatprep.mubr.bf16.mxu0 0
    %544 = vmatmul.mubr.bf16.gmra.mrb[0].mxu0 %v506
    %v545 = vpop.f32.mrb[0].mxu0
    %v546 = vadd.f32 0.0, %v545
    %v547 = vpop.f32.mrb[0].mxu0
    %v548 = vpop.f32.mrb[0].mxu0
    %v549 = vpop.f32.mrb[0].mxu0
    %550 = vdwg.mxu0
    %552 = vrot.lane.b32.xlu0 %v206, 96
    %v553 = vpop.permute.xlu0 %552
    %v555 = vsel %vm210, %v206, 0
    %v558 = vsel %vm210, %v553, 0
    %560 = vmatprep.subr.bf16.mxu0 0
    %561 = vmatpush1.bf16.xpose.msra.mxu0 %v558
    %562 = vmatprep.subr.bf16.mxu0 0
    %563 = vmatpush1.bf16.xpose.msra.mxu0 0
    %564 = vmatprep.subr.bf16.mxu0 0
    %565 = vmatpush1.bf16.xpose.msra.mxu0 0
    %566 = vmatprep.subr.bf16.mxu0 0
    %567 = vmatpush1.bf16.xpose.msra.mxu0 0
    %568 = vmatprep.subr.bf16.mxu0 0
    %569 = vmatpush1.bf16.xpose.msra.mxu0 0
    %570 = vmatprep.subr.bf16.mxu0 0
    %571 = vmatpush1.bf16.xpose.msra.mxu0 0
    %572 = vmatprep.subr.bf16.mxu0 0
    %573 = vmatpush1.bf16.xpose.msra.mxu0 0
    %574 = vmatprep.subr.bf16.mxu0 0
    %575 = vmatpush1.bf16.xpose.msra.mxu0 0
    %576 = vmatprep.subr.bf16.mxu0 0
    %577 = vmatpush1.bf16.xpose.msra.mxu0 0
    %578 = vmatprep.subr.bf16.mxu0 0
    %579 = vmatpush1.bf16.xpose.msra.mxu0 0
    %580 = vmatprep.subr.bf16.mxu0 0
    %581 = vmatpush1.bf16.xpose.msra.mxu0 0
    %582 = vmatprep.subr.bf16.mxu0 0
    %583 = vmatpush1.bf16.xpose.msra.mxu0 0
    %584 = vmatprep.subr.bf16.mxu0 0
    %585 = vmatpush1.bf16.xpose.msra.mxu0 0
    %586 = vmatprep.subr.bf16.mxu0 0
    %587 = vmatpush1.bf16.xpose.msra.mxu0 0
    %588 = vmatprep.subr.bf16.mxu0 0
    %589 = vmatpush1.bf16.xpose.msra.mxu0 0
    %590 = vmatprep.subr.bf16.mxu0 0
    %591 = vmatpush1.bf16.xpose.msra.mxu0 0
    %592 = vmatprep.mubr.bf16.mxu0 0
    %593 = vmatmul.mubr.bf16.gmra.mrb[0].mxu0 %v555
    %v594 = vpop.f32.mrb[0].mxu0
    %v595 = vadd.f32 0.0, %v594
    %v596 = vpop.f32.mrb[0].mxu0
    %v597 = vpop.f32.mrb[0].mxu0
    %v598 = vpop.f32.mrb[0].mxu0
    %599 = vdwg.mxu0
    %v600 = vsel %vm210, %v252, -inf
    %601 = vmax.xlane.f32.xlu0 %v600
    %v602 = vpop.xlane.xlu0 %601
    %v603 = vsel %vm210, %v301, -inf
    %604 = vmax.xlane.f32.xlu0 %v603
    %v605 = vpop.xlane.xlu0 %604
    %v606 = vsel %vm210, %v350, -inf
    %607 = vmax.xlane.f32.xlu0 %v606
    %v608 = vpop.xlane.xlu0 %607
    %v609 = vsel %vm210, %v399, -inf
    %610 = vmax.xlane.f32.xlu0 %v609
    %v611 = vpop.xlane.xlu0 %610
    %v612 = vsel %vm210, %v448, -inf
    %613 = vmax.xlane.f32.xlu0 %v612
    %v614 = vpop.xlane.xlu0 %613
    %v615 = vsel %vm210, %v497, -inf
    %616 = vmax.xlane.f32.xlu0 %v615
    %v617 = vpop.xlane.xlu0 %616
    %v618 = vsel %vm210, %v546, -inf
    %619 = vmax.xlane.f32.xlu0 %v618
    %v620 = vpop.xlane.xlu0 %619
    %v621 = vsel %vm210, %v595, -inf
    %622 = vmax.xlane.f32.xlu0 %v621
    %v623 = vpop.xlane.xlu0 %622
    %v624 = vsub.f32 %v252, %v602
    %v625 = vsub.f32 %v301, %v605
    %v626 = vsub.f32 %v350, %v608
    %v627 = vsub.f32 %v399, %v611
    %v628 = vsub.f32 %v448, %v614
    %v629 = vsub.f32 %v497, %v617
    %v630 = vsub.f32 %v546, %v620
    %v631 = vsub.f32 %v595, %v623
    %v632 = vmul.f32 %v624, 1.442695
    %v633 = vpow.pop %v632
    %v634 = vmul.f32 %v625, 1.442695
    %v635 = vpow.pop %v634
    %v636 = vmul.f32 %v626, 1.442695
    %v637 = vpow.pop %v636
    %v638 = vmul.f32 %v627, 1.442695
    %v639 = vpow.pop %v638
    %v640 = vmul.f32 %v628, 1.442695
    %v641 = vpow.pop %v640
    %v642 = vmul.f32 %v629, 1.442695
    %v643 = vpow.pop %v642
    %v644 = vmul.f32 %v630, 1.442695
    %v645 = vpow.pop %v644
    %v646 = vmul.f32 %v631, 1.442695
    %v647 = vpow.pop %v646
    %v648 = vsel %vm210, %v633, 0.0
    %649 = vadd.xlane.f32.xlu0 %v648
    %v650 = vpop.xlane.xlu0 %649
    %v651 = vsel %vm210, %v635, 0.0
    %652 = vadd.xlane.f32.xlu0 %v651
    %v653 = vpop.xlane.xlu0 %652
    %v654 = vsel %vm210, %v637, 0.0
    %655 = vadd.xlane.f32.xlu0 %v654
    %v656 = vpop.xlane.xlu0 %655
    %v657 = vsel %vm210, %v639, 0.0
    %658 = vadd.xlane.f32.xlu0 %v657
    %v659 = vpop.xlane.xlu0 %658
    %v660 = vsel %vm210, %v641, 0.0
    %661 = vadd.xlane.f32.xlu0 %v660
    %v662 = vpop.xlane.xlu0 %661
    %v663 = vsel %vm210, %v643, 0.0
    %664 = vadd.xlane.f32.xlu0 %v663
    %v665 = vpop.xlane.xlu0 %664
    %v666 = vsel %vm210, %v645, 0.0
    %667 = vadd.xlane.f32.xlu0 %v666
    %v668 = vpop.xlane.xlu0 %667
    %v669 = vsel %vm210, %v647, 0.0
    %670 = vadd.xlane.f32.xlu0 %v669
    %v671 = vpop.xlane.xlu0 %670
    %v672 = vrcp.pop %v650
    %v673 = vrcp.pop %v653
    %v674 = vrcp.pop %v656
    %v675 = vrcp.pop %v659
    %v676 = vrcp.pop %v662
    %v677 = vrcp.pop %v665
    %v678 = vrcp.pop %v668
    %v679 = vrcp.pop %v671
    %v680 = vmul.f32 %v633, %v672
    %v681 = vmul.f32 %v635, %v673
    %v682 = vmul.f32 %v637, %v674
    %v683 = vmul.f32 %v639, %v675
    %v684 = vmul.f32 %v641, %v676
    %v685 = vmul.f32 %v643, %v677
    %v686 = vmul.f32 %v645, %v678
    %v687 = vmul.f32 %v647, %v679
    %v688 = vpack.c.bf16 %v680, %v680
    %v689 = vpack.c.bf16 %v681, %v681
    %v690 = vpack.c.bf16 %v682, %v682
    %v691 = vpack.c.bf16 %v683, %v683
    %v692 = vpack.c.bf16 %v684, %v684
    %v693 = vpack.c.bf16 %v685, %v685
    %v694 = vpack.c.bf16 %v686, %v686
    %v695 = vpack.c.bf16 %v687, %v687
    %696 = vrot.lane.b32.xlu0 %v199, 64
    %v697 = vpop.permute.xlu0 %696
    %v699 = vsel %vm210, %v688, 0
    %vm701 = vcmask 1043456
    %v703 = vsel %vm701, %v697, 0
    %705 = vmatprep.subr.bf16.mxu0 0
    %706 = vmatpush1.bf16.msra.mxu0 %v703
    %707 = vmatprep.subr.bf16.mxu0 0
    %708 = vmatpush1.bf16.msra.mxu0 0
    %709 = vmatprep.subr.bf16.mxu0 0
    %710 = vmatpush1.bf16.msra.mxu0 0
    %711 = vmatprep.subr.bf16.mxu0 0
    %712 = vmatpush1.bf16.msra.mxu0 0
    %713 = vmatprep.subr.bf16.mxu0 0
    %714 = vmatpush1.bf16.msra.mxu0 0
    %715 = vmatprep.subr.bf16.mxu0 0
    %716 = vmatpush1.bf16.msra.mxu0 0
    %717 = vmatprep.subr.bf16.mxu0 0
    %718 = vmatpush1.bf16.msra.mxu0 0
    %719 = vmatprep.subr.bf16.mxu0 0
    %720 = vmatpush1.bf16.msra.mxu0 0
    %721 = vmatprep.subr.bf16.mxu0 0
    %722 = vmatpush1.bf16.msra.mxu0 0
    %723 = vmatprep.subr.bf16.mxu0 0
    %724 = vmatpush1.bf16.msra.mxu0 0
    %725 = vmatprep.subr.bf16.mxu0 0
    %726 = vmatpush1.bf16.msra.mxu0 0
    %727 = vmatprep.subr.bf16.mxu0 0
    %728 = vmatpush1.bf16.msra.mxu0 0
    %729 = vmatprep.subr.bf16.mxu0 0
    %730 = vmatpush1.bf16.msra.mxu0 0
    %731 = vmatprep.subr.bf16.mxu0 0
    %732 = vmatpush1.bf16.msra.mxu0 0
    %733 = vmatprep.subr.bf16.mxu0 0
    %734 = vmatpush1.bf16.msra.mxu0 0
    %735 = vmatprep.subr.bf16.mxu0 0
    %736 = vmatpush1.bf16.msra.mxu0 0
    %737 = vmatprep.mubr.bf16.mxu0 0
    %738 = vmatmul.mubr.bf16.gmra.mrb[0].mxu0 %v699
    %v739 = vpop.f32.mrb[0].mxu0
    %v740 = vadd.f32 0.0, %v739
    %v741 = vpop.f32.mrb[0].mxu0
    %v742 = vpop.f32.mrb[0].mxu0
    %v743 = vpop.f32.mrb[0].mxu0
    %744 = vdwg.mxu0
    %745 = vrot.lane.b32.xlu0 %v200, 64
    %v746 = vpop.permute.xlu0 %745
    %v748 = vsel %vm210, %v689, 0
    %v751 = vsel %vm701, %v746, 0
    %753 = vmatprep.subr.bf16.mxu0 0
    %754 = vmatpush1.bf16.msra.mxu0 %v751
    %755 = vmatprep.subr.bf16.mxu0 0
    %756 = vmatpush1.bf16.msra.mxu0 0
    %757 = vmatprep.subr.bf16.mxu0 0
    %758 = vmatpush1.bf16.msra.mxu0 0
    %759 = vmatprep.subr.bf16.mxu0 0
    %760 = vmatpush1.bf16.msra.mxu0 0
    %761 = vmatprep.subr.bf16.mxu0 0
    %762 = vmatpush1.bf16.msra.mxu0 0
    %763 = vmatprep.subr.bf16.mxu0 0
    %764 = vmatpush1.bf16.msra.mxu0 0
    %765 = vmatprep.subr.bf16.mxu0 0
    %766 = vmatpush1.bf16.msra.mxu0 0
    %767 = vmatprep.subr.bf16.mxu0 0
    %768 = vmatpush1.bf16.msra.mxu0 0
    %769 = vmatprep.subr.bf16.mxu0 0
    %770 = vmatpush1.bf16.msra.mxu0 0
    %771 = vmatprep.subr.bf16.mxu0 0
    %772 = vmatpush1.bf16.msra.mxu0 0
    %773 = vmatprep.subr.bf16.mxu0 0
    %774 = vmatpush1.bf16.msra.mxu0 0
    %775 = vmatprep.subr.bf16.mxu0 0
    %776 = vmatpush1.bf16.msra.mxu0 0
    %777 = vmatprep.subr.bf16.mxu0 0
    %778 = vmatpush1.bf16.msra.mxu0 0
    %779 = vmatprep.subr.bf16.mxu0 0
    %780 = vmatpush1.bf16.msra.mxu0 0
    %781 = vmatprep.subr.bf16.mxu0 0
    %782 = vmatpush1.bf16.msra.mxu0 0
    %783 = vmatprep.subr.bf16.mxu0 0
    %784 = vmatpush1.bf16.msra.mxu0 0
    %785 = vmatprep.mubr.bf16.mxu0 0
    %786 = vmatmul.mubr.bf16.gmra.mrb[0].mxu0 %v748
    %v787 = vpop.f32.mrb[0].mxu0
    %v788 = vadd.f32 0.0, %v787
    %v789 = vpop.f32.mrb[0].mxu0
    %v790 = vpop.f32.mrb[0].mxu0
    %v791 = vpop.f32.mrb[0].mxu0
    %792 = vdwg.mxu0
    %793 = vrot.lane.b32.xlu0 %v201, 64
    %v794 = vpop.permute.xlu0 %793
    %v796 = vsel %vm210, %v690, 0
    %v799 = vsel %vm701, %v794, 0
    %801 = vmatprep.subr.bf16.mxu0 0
    %802 = vmatpush1.bf16.msra.mxu0 %v799
    %803 = vmatprep.subr.bf16.mxu0 0
    %804 = vmatpush1.bf16.msra.mxu0 0
    %805 = vmatprep.subr.bf16.mxu0 0
    %806 = vmatpush1.bf16.msra.mxu0 0
    %807 = vmatprep.subr.bf16.mxu0 0
    %808 = vmatpush1.bf16.msra.mxu0 0
    %809 = vmatprep.subr.bf16.mxu0 0
    %810 = vmatpush1.bf16.msra.mxu0 0
    %811 = vmatprep.subr.bf16.mxu0 0
    %812 = vmatpush1.bf16.msra.mxu0 0
    %813 = vmatprep.subr.bf16.mxu0 0
    %814 = vmatpush1.bf16.msra.mxu0 0
    %815 = vmatprep.subr.bf16.mxu0 0
    %816 = vmatpush1.bf16.msra.mxu0 0
    %817 = vmatprep.subr.bf16.mxu0 0
    %818 = vmatpush1.bf16.msra.mxu0 0
    %819 = vmatprep.subr.bf16.mxu0 0
    %820 = vmatpush1.bf16.msra.mxu0 0
    %821 = vmatprep.subr.bf16.mxu0 0
    %822 = vmatpush1.bf16.msra.mxu0 0
    %823 = vmatprep.subr.bf16.mxu0 0
    %824 = vmatpush1.bf16.msra.mxu0 0
    %825 = vmatprep.subr.bf16.mxu0 0
    %826 = vmatpush1.bf16.msra.mxu0 0
    %827 = vmatprep.subr.bf16.mxu0 0
    %828 = vmatpush1.bf16.msra.mxu0 0
    %829 = vmatprep.subr.bf16.mxu0 0
    %830 = vmatpush1.bf16.msra.mxu0 0
    %831 = vmatprep.subr.bf16.mxu0 0
    %832 = vmatpush1.bf16.msra.mxu0 0
    %833 = vmatprep.mubr.bf16.mxu0 0
    %834 = vmatmul.mubr.bf16.gmra.mrb[0].mxu0 %v796
    %v835 = vpop.f32.mrb[0].mxu0
    %v836 = vadd.f32 0.0, %v835
    %v837 = vpop.f32.mrb[0].mxu0
    %v838 = vpop.f32.mrb[0].mxu0
    %v839 = vpop.f32.mrb[0].mxu0
    %840 = vdwg.mxu0
    %841 = vrot.lane.b32.xlu0 %v202, 64
    %v842 = vpop.permute.xlu0 %841
    %v844 = vsel %vm210, %v691, 0
    %v847 = vsel %vm701, %v842, 0
    %849 = vmatprep.subr.bf16.mxu0 0
    %850 = vmatpush1.bf16.msra.mxu0 %v847
    %851 = vmatprep.subr.bf16.mxu0 0
    %852 = vmatpush1.bf16.msra.mxu0 0
    %853 = vmatprep.subr.bf16.mxu0 0
    %854 = vmatpush1.bf16.msra.mxu0 0
    %855 = vmatprep.subr.bf16.mxu0 0
    %856 = vmatpush1.bf16.msra.mxu0 0
    %857 = vmatprep.subr.bf16.mxu0 0
    %858 = vmatpush1.bf16.msra.mxu0 0
    %859 = vmatprep.subr.bf16.mxu0 0
    %860 = vmatpush1.bf16.msra.mxu0 0
    %861 = vmatprep.subr.bf16.mxu0 0
    %862 = vmatpush1.bf16.msra.mxu0 0
    %863 = vmatprep.subr.bf16.mxu0 0
    %864 = vmatpush1.bf16.msra.mxu0 0
    %865 = vmatprep.subr.bf16.mxu0 0
    %866 = vmatpush1.bf16.msra.mxu0 0
    %867 = vmatprep.subr.bf16.mxu0 0
    %868 = vmatpush1.bf16.msra.mxu0 0
    %869 = vmatprep.subr.bf16.mxu0 0
    %870 = vmatpush1.bf16.msra.mxu0 0
    %871 = vmatprep.subr.bf16.mxu0 0
    %872 = vmatpush1.bf16.msra.mxu0 0
    %873 = vmatprep.subr.bf16.mxu0 0
    %874 = vmatpush1.bf16.msra.mxu0 0
    %875 = vmatprep.subr.bf16.mxu0 0
    %876 = vmatpush1.bf16.msra.mxu0 0
    %877 = vmatprep.subr.bf16.mxu0 0
    %878 = vmatpush1.bf16.msra.mxu0 0
    %879 = vmatprep.subr.bf16.mxu0 0
    %880 = vmatpush1.bf16.msra.mxu0 0
    %881 = vmatprep.mubr.bf16.mxu0 0
    %882 = vmatmul.mubr.bf16.gmra.mrb[0].mxu0 %v844
    %v883 = vpop.f32.mrb[0].mxu0
    %v884 = vadd.f32 0.0, %v883
    %v885 = vpop.f32.mrb[0].mxu0
    %v886 = vpop.f32.mrb[0].mxu0
    %v887 = vpop.f32.mrb[0].mxu0
    %888 = vdwg.mxu0
    %889 = vrot.lane.b32.xlu0 %v203, 64
    %v890 = vpop.permute.xlu0 %889
    %v892 = vsel %vm210, %v692, 0
    %v895 = vsel %vm701, %v890, 0
    %897 = vmatprep.subr.bf16.mxu0 0
    %898 = vmatpush1.bf16.msra.mxu0 %v895
    %899 = vmatprep.subr.bf16.mxu0 0
    %900 = vmatpush1.bf16.msra.mxu0 0
    %901 = vmatprep.subr.bf16.mxu0 0
    %902 = vmatpush1.bf16.msra.mxu0 0
    %903 = vmatprep.subr.bf16.mxu0 0
    %904 = vmatpush1.bf16.msra.mxu0 0
    %905 = vmatprep.subr.bf16.mxu0 0
    %906 = vmatpush1.bf16.msra.mxu0 0
    %907 = vmatprep.subr.bf16.mxu0 0
    %908 = vmatpush1.bf16.msra.mxu0 0
    %909 = vmatprep.subr.bf16.mxu0 0
    %910 = vmatpush1.bf16.msra.mxu0 0
    %911 = vmatprep.subr.bf16.mxu0 0
    %912 = vmatpush1.bf16.msra.mxu0 0
    %913 = vmatprep.subr.bf16.mxu0 0
    %914 = vmatpush1.bf16.msra.mxu0 0
    %915 = vmatprep.subr.bf16.mxu0 0
    %916 = vmatpush1.bf16.msra.mxu0 0
    %917 = vmatprep.subr.bf16.mxu0 0
    %918 = vmatpush1.bf16.msra.mxu0 0
    %919 = vmatprep.subr.bf16.mxu0 0
    %920 = vmatpush1.bf16.msra.mxu0 0
    %921 = vmatprep.subr.bf16.mxu0 0
    %922 = vmatpush1.bf16.msra.mxu0 0
    %923 = vmatprep.subr.bf16.mxu0 0
    %924 = vmatpush1.bf16.msra.mxu0 0
    %925 = vmatprep.subr.bf16.mxu0 0
    %926 = vmatpush1.bf16.msra.mxu0 0
    %927 = vmatprep.subr.bf16.mxu0 0
    %928 = vmatpush1.bf16.msra.mxu0 0
    %929 = vmatprep.mubr.bf16.mxu0 0
    %930 = vmatmul.mubr.bf16.gmra.mrb[0].mxu0 %v892
    %v931 = vpop.f32.mrb[0].mxu0
    %v932 = vadd.f32 0.0, %v931
    %v933 = vpop.f32.mrb[0].mxu0
    %v934 = vpop.f32.mrb[0].mxu0
    %v935 = vpop.f32.mrb[0].mxu0
    %936 = vdwg.mxu0
    %937 = vrot.lane.b32.xlu0 %v204, 64
    %v938 = vpop.permute.xlu0 %937
    %v940 = vsel %vm210, %v693, 0
    %v943 = vsel %vm701, %v938, 0
    %945 = vmatprep.subr.bf16.mxu0 0
    %946 = vmatpush1.bf16.msra.mxu0 %v943
    %947 = vmatprep.subr.bf16.mxu0 0
    %948 = vmatpush1.bf16.msra.mxu0 0
    %949 = vmatprep.subr.bf16.mxu0 0
    %950 = vmatpush1.bf16.msra.mxu0 0
    %951 = vmatprep.subr.bf16.mxu0 0
    %952 = vmatpush1.bf16.msra.mxu0 0
    %953 = vmatprep.subr.bf16.mxu0 0
    %954 = vmatpush1.bf16.msra.mxu0 0
    %955 = vmatprep.subr.bf16.mxu0 0
    %956 = vmatpush1.bf16.msra.mxu0 0
    %957 = vmatprep.subr.bf16.mxu0 0
    %958 = vmatpush1.bf16.msra.mxu0 0
    %959 = vmatprep.subr.bf16.mxu0 0
    %960 = vmatpush1.bf16.msra.mxu0 0
    %961 = vmatprep.subr.bf16.mxu0 0
    %962 = vmatpush1.bf16.msra.mxu0 0
    %963 = vmatprep.subr.bf16.mxu0 0
    %964 = vmatpush1.bf16.msra.mxu0 0
    %965 = vmatprep.subr.bf16.mxu0 0
    %966 = vmatpush1.bf16.msra.mxu0 0
    %967 = vmatprep.subr.bf16.mxu0 0
    %968 = vmatpush1.bf16.msra.mxu0 0
    %969 = vmatprep.subr.bf16.mxu0 0
    %970 = vmatpush1.bf16.msra.mxu0 0
    %971 = vmatprep.subr.bf16.mxu0 0
    %972 = vmatpush1.bf16.msra.mxu0 0
    %973 = vmatprep.subr.bf16.mxu0 0
    %974 = vmatpush1.bf16.msra.mxu0 0
    %975 = vmatprep.subr.bf16.mxu0 0
    %976 = vmatpush1.bf16.msra.mxu0 0
    %977 = vmatprep.mubr.bf16.mxu0 0
    %978 = vmatmul.mubr.bf16.gmra.mrb[0].mxu0 %v940
    %v979 = vpop.f32.mrb[0].mxu0
    %v980 = vadd.f32 0.0, %v979
    %v981 = vpop.f32.mrb[0].mxu0
    %v982 = vpop.f32.mrb[0].mxu0
    %v983 = vpop.f32.mrb[0].mxu0
    %984 = vdwg.mxu0
    %985 = vrot.lane.b32.xlu0 %v205, 64
    %v986 = vpop.permute.xlu0 %985
    %v988 = vsel %vm210, %v694, 0
    %v991 = vsel %vm701, %v986, 0
    %993 = vmatprep.subr.bf16.mxu0 0
    %994 = vmatpush1.bf16.msra.mxu0 %v991
    %995 = vmatprep.subr.bf16.mxu0 0
    %996 = vmatpush1.bf16.msra.mxu0 0
    %997 = vmatprep.subr.bf16.mxu0 0
    %998 = vmatpush1.bf16.msra.mxu0 0
    %999 = vmatprep.subr.bf16.mxu0 0
    %1000 = vmatpush1.bf16.msra.mxu0 0
    %1001 = vmatprep.subr.bf16.mxu0 0
    %1002 = vmatpush1.bf16.msra.mxu0 0
    %1003 = vmatprep.subr.bf16.mxu0 0
    %1004 = vmatpush1.bf16.msra.mxu0 0
    %1005 = vmatprep.subr.bf16.mxu0 0
    %1006 = vmatpush1.bf16.msra.mxu0 0
    %1007 = vmatprep.subr.bf16.mxu0 0
    %1008 = vmatpush1.bf16.msra.mxu0 0
    %1009 = vmatprep.subr.bf16.mxu0 0
    %1010 = vmatpush1.bf16.msra.mxu0 0
    %1011 = vmatprep.subr.bf16.mxu0 0
    %1012 = vmatpush1.bf16.msra.mxu0 0
    %1013 = vmatprep.subr.bf16.mxu0 0
    %1014 = vmatpush1.bf16.msra.mxu0 0
    %1015 = vmatprep.subr.bf16.mxu0 0
    %1016 = vmatpush1.bf16.msra.mxu0 0
    %1017 = vmatprep.subr.bf16.mxu0 0
    %1018 = vmatpush1.bf16.msra.mxu0 0
    %1019 = vmatprep.subr.bf16.mxu0 0
    %1020 = vmatpush1.bf16.msra.mxu0 0
    %1021 = vmatprep.subr.bf16.mxu0 0
    %1022 = vmatpush1.bf16.msra.mxu0 0
    %1023 = vmatprep.subr.bf16.mxu0 0
    %1024 = vmatpush1.bf16.msra.mxu0 0
    %1025 = vmatprep.mubr.bf16.mxu0 0
    %1026 = vmatmul.mubr.bf16.gmra.mrb[0].mxu0 %v988
    %v1027 = vpop.f32.mrb[0].mxu0
    %v1028 = vadd.f32 0.0, %v1027
    %v1029 = vpop.f32.mrb[0].mxu0
    %v1030 = vpop.f32.mrb[0].mxu0
    %v1031 = vpop.f32.mrb[0].mxu0
    %1032 = vdwg.mxu0
    %1033 = vrot.lane.b32.xlu0 %v206, 64
    %v1034 = vpop.permute.xlu0 %1033
    %v1036 = vsel %vm210, %v695, 0
    %v1039 = vsel %vm701, %v1034, 0
    %1041 = vmatprep.subr.bf16.mxu0 0
    %1042 = vmatpush1.bf16.msra.mxu0 %v1039
    %1043 = vmatprep.subr.bf16.mxu0 0
    %1044 = vmatpush1.bf16.msra.mxu0 0
    %1045 = vmatprep.subr.bf16.mxu0 0
    %1046 = vmatpush1.bf16.msra.mxu0 0
    %1047 = vmatprep.subr.bf16.mxu0 0
    %1048 = vmatpush1.bf16.msra.mxu0 0
    %1049 = vmatprep.subr.bf16.mxu0 0
    %1050 = vmatpush1.bf16.msra.mxu0 0
    %1051 = vmatprep.subr.bf16.mxu0 0
    %1052 = vmatpush1.bf16.msra.mxu0 0
    %1053 = vmatprep.subr.bf16.mxu0 0
    %1054 = vmatpush1.bf16.msra.mxu0 0
    %1055 = vmatprep.subr.bf16.mxu0 0
    %1056 = vmatpush1.bf16.msra.mxu0 0
    %1057 = vmatprep.subr.bf16.mxu0 0
    %1058 = vmatpush1.bf16.msra.mxu0 0
    %1059 = vmatprep.subr.bf16.mxu0 0
    %1060 = vmatpush1.bf16.msra.mxu0 0
    %1061 = vmatprep.subr.bf16.mxu0 0
    %1062 = vmatpush1.bf16.msra.mxu0 0
    %1063 = vmatprep.subr.bf16.mxu0 0
    %1064 = vmatpush1.bf16.msra.mxu0 0
    %1065 = vmatprep.subr.bf16.mxu0 0
    %1066 = vmatpush1.bf16.msra.mxu0 0
    %1067 = vmatprep.subr.bf16.mxu0 0
    %1068 = vmatpush1.bf16.msra.mxu0 0
    %1069 = vmatprep.subr.bf16.mxu0 0
    %1070 = vmatpush1.bf16.msra.mxu0 0
    %1071 = vmatprep.subr.bf16.mxu0 0
    %1072 = vmatpush1.bf16.msra.mxu0 0
    %1073 = vmatprep.mubr.bf16.mxu0 0
    %1074 = vmatmul.mubr.bf16.gmra.mrb[0].mxu0 %v1036
    %v1075 = vpop.f32.mrb[0].mxu0
    %v1076 = vadd.f32 0.0, %v1075
    %v1077 = vpop.f32.mrb[0].mxu0
    %v1078 = vpop.f32.mrb[0].mxu0
    %v1079 = vpop.f32.mrb[0].mxu0
    %1080 = vdwg.mxu0
    %1083 = vrot.lane.b32.xlu0 %v836, 8
    %v1084 = vpop.permute.xlu0 %1083
    %1085 = vrot.lane.b32.xlu0 %v884, 8
    %v1086 = vpop.permute.xlu0 %1085
    %1091 = vrot.lane.b32.xlu0 %v932, 16
    %v1092 = vpop.permute.xlu0 %1091
    %1093 = vrot.lane.b32.xlu0 %v980, 16
    %v1094 = vpop.permute.xlu0 %1093
    %1099 = vrot.lane.b32.xlu0 %v1028, 24
    %v1100 = vpop.permute.xlu0 %1099
    %1101 = vrot.lane.b32.xlu0 %v1076, 24
    %v1102 = vpop.permute.xlu0 %1101
    %v1105 = vsel %vm210, %v740, %v1084
    %v1106 = vsel %vm210, %v788, %v1086
    %vm1107 = vcmask 130048
    %v1108 = vsel %vm1107, %v1105, %v1092
    %v1109 = vsel %vm1107, %v1106, %v1094
    %vm1110 = vcmask 195584
    %v1111 = vsel %vm1110, %v1108, %v1100
    %v1112 = vsel %vm1110, %v1109, %v1102
    %v1113 = vpack.c.bf16 %v1112, %v1111
    %v1114 = vld [vmem:[#allocation7 + $0x10] sm:$0xf]
    %v1115 = vld [vmem:[#allocation7 + $0x14] sm:$0xf]
    %v1116 = vld [vmem:[#allocation7 + $0x18] sm:$0xf]
    %v1117 = vld [vmem:[#allocation7 + $0x1c] sm:$0xf]
    %v1118 = vld [vmem:[#allocation8 + $0x41] sm:$0x1]
    %v1119 = vlaneseq
    %v1120 = vshrl.u32 %v1119, 7
    %v1121 = vsub.s32 0, %v1120
    %v1122 = vrot.slane %v1118, %v1121
    %v1127 = vunpack.c.l.b16 %v1114
    %v1128 = vunpack.c.l.b16 %v1115
    %v1129 = vunpack.c.l.b16 %v1116
    %v1130 = vunpack.c.l.b16 %v1117
    %v1131 = vpack.c.b16 %v1128, %v1127
    %v1132 = vpack.c.b16 %v1130, %v1129
    %v1136 = vsel %vm134, %v1113, 0
    %1138 = vmatprep.subr.bf16.mxu0 0
    %1139 = vmatpush1.bf16.msra.mxu0 %v1131
    %1140 = vmatprep.subr.bf16.mxu0 0
    %1141 = vmatpush1.bf16.msra.mxu0 %v1132
    %1142 = vmatprep.subr.bf16.mxu0 0
    %1143 = vmatpush1.bf16.msra.mxu0 0
    %1144 = vmatprep.subr.bf16.mxu0 0
    %1145 = vmatpush1.bf16.msra.mxu0 0
    %1146 = vmatprep.subr.bf16.mxu0 0
    %1147 = vmatpush1.bf16.msra.mxu0 0
    %1148 = vmatprep.subr.bf16.mxu0 0
    %1149 = vmatpush1.bf16.msra.mxu0 0
    %1150 = vmatprep.subr.bf16.mxu0 0
    %1151 = vmatpush1.bf16.msra.mxu0 0
    %1152 = vmatprep.subr.bf16.mxu0 0
    %1153 = vmatpush1.bf16.msra.mxu0 0
    %1154 = vmatprep.subr.bf16.mxu0 0
    %1155 = vmatpush1.bf16.msra.mxu0 0
    %1156 = vmatprep.subr.bf16.mxu0 0
    %1157 = vmatpush1.bf16.msra.mxu0 0
    %1158 = vmatprep.subr.bf16.mxu0 0
    %1159 = vmatpush1.bf16.msra.mxu0 0
    %1160 = vmatprep.subr.bf16.mxu0 0
    %1161 = vmatpush1.bf16.msra.mxu0 0
    %1162 = vmatprep.subr.bf16.mxu0 0
    %1163 = vmatpush1.bf16.msra.mxu0 0
    %1164 = vmatprep.subr.bf16.mxu0 0
    %1165 = vmatpush1.bf16.msra.mxu0 0
    %1166 = vmatprep.subr.bf16.mxu0 0
    %1167 = vmatpush1.bf16.msra.mxu0 0
    %1168 = vmatprep.subr.bf16.mxu0 0
    %1169 = vmatpush1.bf16.msra.mxu0 0
    %1170 = vmatprep.mubr.bf16.mxu0 0
    %1171 = vmatmul.mubr.bf16.gmra.mrb[0].mxu0 %v1136
    %v1172 = vpop.f32.mrb[0].mxu0
    %v1173 = vadd.f32 %v1122, %v1172
    %v1174 = vpop.f32.mrb[0].mxu0
    %v1175 = vpop.f32.mrb[0].mxu0
    %v1176 = vadd.f32 %v1122, %v1175
    %v1177 = vpop.f32.mrb[0].mxu0
    %1178 = vdwg.mxu0
    %v1179 = vadd.f32 %v110, %v1173
    %v1180 = vadd.f32 %v111, %v1176
    %v1181 = vsel %vm134, %v1179, 0.0
    %1182 = vadd.xlane.f32.xlu0 %v1181
    %v1183 = vpop.xlane.xlu0 %1182
    %v1184 = vsel %vm134, %v1180, 0.0
    %1185 = vadd.xlane.f32.xlu0 %v1184
    %v1186 = vpop.xlane.xlu0 %1185
    %v1187 = vrcp.pop 32.0
    %v1188 = vmul.f32 %v1183, %v1187
    %v1189 = vmul.f32 %v1186, %v1187
    %v1190 = vsub.f32 %v1179, %v1188
    %v1191 = vsub.f32 %v1180, %v1189
    %v1192 = vmul.f32 %v1190, %v1190
    %v1193 = vmul.f32 %v1191, %v1191
    %v1194 = vsel %vm134, %v1192, 0.0
    %1195 = vadd.xlane.f32.xlu0 %v1194
    %v1196 = vpop.xlane.xlu0 %1195
    %v1197 = vsel %vm134, %v1193, 0.0
    %1198 = vadd.xlane.f32.xlu0 %v1197
    %v1199 = vpop.xlane.xlu0 %1198
    %v1200 = vmul.f32 %v1196, %v1187
    %v1201 = vmul.f32 %v1199, %v1187
    %v1202 = vadd.f32 %v1200, 1e-05
    %v1203 = vadd.f32 %v1201, 1e-05
    %v1204 = vrsqrt.pop %v1202
    %v1205 = vrsqrt.pop %v1203
    %v1206 = vmul.f32 %v1190, %v1204
    %v1207 = vmul.f32 %v1191, %v1205
    %v1208 = vld [vmem:[#allocation8 + $0x44] sm:$0x1]
    %v1209 = vlaneseq
    %v1210 = vshrl.u32 %v1209, 7
    %v1211 = vsub.s32 0, %v1210
    %v1212 = vrot.slane %v1208, %v1211
    %v1213 = vmul.f32 %v1206, %v1212
    %v1214 = vmul.f32 %v1207, %v1212
    %v1215 = vld [vmem:[#allocation8 + $0x45] sm:$0x1]
    %v1216 = vlaneseq
    %v1217 = vshrl.u32 %v1216, 7
    %v1218 = vsub.s32 0, %v1217
    %v1219 = vrot.slane %v1215, %v1218
    %v1220 = vadd.f32 %v1213, %v1219
    %v1221 = vadd.f32 %v1214, %v1219
    %v1222 = vpack.c.bf16 %v1221, %v1220
    %v1223 = vld [vmem:[#allocation7 + $0x20] sm:$0xf]
    %v1224 = vld [vmem:[#allocation7 + $0x24] sm:$0xf]
    %v1225 = vld [vmem:[#allocation7 + $0x28] sm:$0xf]
    %v1226 = vld [vmem:[#allocation7 + $0x2c] sm:$0xf]
    %v1227 = vld [vmem:[#allocation8 + $0x42] sm:$0x1]
    %v1228 = vlaneseq
    %v1229 = vshrl.u32 %v1228, 7
    %v1230 = vsub.s32 0, %v1229
    %v1231 = vrot.slane %v1227, %v1230
    %v1236 = vunpack.c.l.b16 %v1223
    %v1237 = vunpack.c.l.b16 %v1224
    %v1238 = vunpack.c.l.b16 %v1225
    %v1239 = vunpack.c.l.b16 %v1226
    %v1240 = vpack.c.b16 %v1237, %v1236
    %v1241 = vpack.c.b16 %v1239, %v1238
    %v1245 = vsel %vm134, %v1222, 0
    %1247 = vmatprep.subr.bf16.mxu0 0
    %1248 = vmatpush1.bf16.msra.mxu0 %v1240
    %1249 = vmatprep.subr.bf16.mxu0 0
    %1250 = vmatpush1.bf16.msra.mxu0 %v1241
    %1251 = vmatprep.subr.bf16.mxu0 0
    %1252 = vmatpush1.bf16.msra.mxu0 0
    %1253 = vmatprep.subr.bf16.mxu0 0
    %1254 = vmatpush1.bf16.msra.mxu0 0
    %1255 = vmatprep.subr.bf16.mxu0 0
    %1256 = vmatpush1.bf16.msra.mxu0 0
    %1257 = vmatprep.subr.bf16.mxu0 0
    %1258 = vmatpush1.bf16.msra.mxu0 0
    %1259 = vmatprep.subr.bf16.mxu0 0
    %1260 = vmatpush1.bf16.msra.mxu0 0
    %1261 = vmatprep.subr.bf16.mxu0 0
    %1262 = vmatpush1.bf16.msra.mxu0 0
    %1263 = vmatprep.subr.bf16.mxu0 0
    %1264 = vmatpush1.bf16.msra.mxu0 0
    %1265 = vmatprep.subr.bf16.mxu0 0
    %1266 = vmatpush1.bf16.msra.mxu0 0
    %1267 = vmatprep.subr.bf16.mxu0 0
    %1268 = vmatpush1.bf16.msra.mxu0 0
    %1269 = vmatprep.subr.bf16.mxu0 0
    %1270 = vmatpush1.bf16.msra.mxu0 0
    %1271 = vmatprep.subr.bf16.mxu0 0
    %1272 = vmatpush1.bf16.msra.mxu0 0
    %1273 = vmatprep.subr.bf16.mxu0 0
    %1274 = vmatpush1.bf16.msra.mxu0 0
    %1275 = vmatprep.subr.bf16.mxu0 0
    %1276 = vmatpush1.bf16.msra.mxu0 0
    %1277 = vmatprep.subr.bf16.mxu0 0
    %1278 = vmatpush1.bf16.msra.mxu0 0
    %1279 = vmatprep.mubr.bf16.mxu0 0
    %1280 = vmatmul.mubr.bf16.gmra.mrb[0].mxu0 %v1245
    %v1281 = vpop.f32.mrb[0].mxu0
    %v1282 = vadd.f32 %v1231, %v1281
    %v1283 = vpop.f32.mrb[0].mxu0
    %v1284 = vpop.f32.mrb[0].mxu0
    %v1285 = vadd.f32 %v1231, %v1284
    %v1286 = vpop.f32.mrb[0].mxu0
    %1287 = vdwg.mxu0
    %v1288 = vmax.f32 %v1282, 0.0
    %v1289 = vmax.f32 %v1285, 0.0
    %v1290 = vpack.c.bf16 %v1289, %v1288
    %v1291 = vld [vmem:[#allocation7 + $0x30] sm:$0xf]
    %v1292 = vld [vmem:[#allocation7 + $0x34] sm:$0xf]
    %v1293 = vld [vmem:[#allocation7 + $0x38] sm:$0xf]
    %v1294 = vld [vmem:[#allocation7 + $0x3c] sm:$0xf]
    %v1295 = vld [vmem:[#allocation7 + $0x40] sm:$0xf]
    %v1296 = vld [vmem:[#allocation7 + $0x44] sm:$0xf]
    %v1297 = vld [vmem:[#allocation7 + $0x48] sm:$0xf]
    %v1298 = vld [vmem:[#allocation7 + $0x4c] sm:$0xf]
    %v1299 = vld [vmem:[#allocation7 + $0x50] sm:$0xf]
    %v1300 = vld [vmem:[#allocation7 + $0x54] sm:$0xf]
    %v1301 = vld [vmem:[#allocation7 + $0x58] sm:$0xf]
    %v1302 = vld [vmem:[#allocation7 + $0x5c] sm:$0xf]
    %v1303 = vld [vmem:[#allocation7 + $0x60] sm:$0xf]
    %v1304 = vld [vmem:[#allocation7 + $0x64] sm:$0xf]
    %v1305 = vld [vmem:[#allocation7 + $0x68] sm:$0xf]
    %v1306 = vld [vmem:[#allocation7 + $0x6c] sm:$0xf]
    %v1307 = vld [vmem:[#allocation8 + $0x43] sm:$0x1]
    %v1308 = vlaneseq
    %v1309 = vshrl.u32 %v1308, 7
    %v1310 = vsub.s32 0, %v1309
    %v1311 = vrot.slane %v1307, %v1310
    %v1328 = vunpack.c.l.b16 %v1291
    %v1329 = vunpack.c.l.b16 %v1292
    %v1330 = vunpack.c.l.b16 %v1293
    %v1331 = vunpack.c.l.b16 %v1294
    %v1332 = vunpack.c.l.b16 %v1295
    %v1333 = vunpack.c.l.b16 %v1296
    %v1334 = vunpack.c.l.b16 %v1297
    %v1335 = vunpack.c.l.b16 %v1298
    %v1336 = vunpack.c.l.b16 %v1299
    %v1337 = vunpack.c.l.b16 %v1300
    %v1338 = vunpack.c.l.b16 %v1301
    %v1339 = vunpack.c.l.b16 %v1302
    %v1340 = vunpack.c.l.b16 %v1303
    %v1341 = vunpack.c.l.b16 %v1304
    %v1342 = vunpack.c.l.b16 %v1305
    %v1343 = vunpack.c.l.b16 %v1306
    %v1344 = vpack.c.b16 %v1329, %v1328
    %v1345 = vpack.c.b16 %v1331, %v1330
    %v1346 = vpack.c.b16 %v1333, %v1332
    %v1347 = vpack.c.b16 %v1335, %v1334
    %v1348 = vpack.c.b16 %v1337, %v1336
    %v1349 = vpack.c.b16 %v1339, %v1338
    %v1350 = vpack.c.b16 %v1341, %v1340
    %v1351 = vpack.c.b16 %v1343, %v1342
    %1360 = vmatprep.subr.bf16.mxu0 0
    %1361 = vmatpush1.bf16.msra.mxu0 %v1344
    %1362 = vmatprep.subr.bf16.mxu0 0
    %1363 = vmatpush1.bf16.msra.mxu0 %v1345
    %1364 = vmatprep.subr.bf16.mxu0 0
    %1365 = vmatpush1.bf16.msra.mxu0 %v1346
    %1366 = vmatprep.subr.bf16.mxu0 0
    %1367 = vmatpush1.bf16.msra.mxu0 %v1347
    %1368 = vmatprep.subr.bf16.mxu0 0
    %1369 = vmatpush1.bf16.msra.mxu0 %v1348
    %1370 = vmatprep.subr.bf16.mxu0 0
    %1371 = vmatpush1.bf16.msra.mxu0 %v1349
    %1372 = vmatprep.subr.bf16.mxu0 0
    %1373 = vmatpush1.bf16.msra.mxu0 %v1350
    %1374 = vmatprep.subr.bf16.mxu0 0
    %1375 = vmatpush1.bf16.msra.mxu0 %v1351
    %1376 = vmatprep.subr.bf16.mxu0 0
    %1377 = vmatpush1.bf16.msra.mxu0 0
    %1378 = vmatprep.subr.bf16.mxu0 0
    %1379 = vmatpush1.bf16.msra.mxu0 0
    %1380 = vmatprep.subr.bf16.mxu0 0
    %1381 = vmatpush1.bf16.msra.mxu0 0
    %1382 = vmatprep.subr.bf16.mxu0 0
    %1383 = vmatpush1.bf16.msra.mxu0 0
    %1384 = vmatprep.subr.bf16.mxu0 0
    %1385 = vmatpush1.bf16.msra.mxu0 0
    %1386 = vmatprep.subr.bf16.mxu0 0
    %1387 = vmatpush1.bf16.msra.mxu0 0
    %1388 = vmatprep.subr.bf16.mxu0 0
    %1389 = vmatpush1.bf16.msra.mxu0 0
    %1390 = vmatprep.subr.bf16.mxu0 0
    %1391 = vmatpush1.bf16.msra.mxu0 0
    %1392 = vmatprep.mubr.bf16.mxu0 0
    %1393 = vmatmul.mubr.bf16.gmra.mrb[0].mxu0 %v1290
    %v1394 = vpop.f32.mrb[0].mxu0
    %v1395 = vadd.f32 %v1311, %v1394
    %v1396 = vpop.f32.mrb[0].mxu0
    %v1397 = vpop.f32.mrb[0].mxu0
    %v1398 = vadd.f32 %v1311, %v1397
    %v1399 = vpop.f32.mrb[0].mxu0
    %1400 = vdwg.mxu0
    %v1401 = vadd.f32 %v1220, %v1395
    %v1402 = vadd.f32 %v1221, %v1398
    %v1403 = vsel %vm134, %v1401, 0.0
    %1404 = vadd.xlane.f32.xlu0 %v1403
    %v1405 = vpop.xlane.xlu0 %1404
    %v1406 = vsel %vm134, %v1402, 0.0
    %1407 = vadd.xlane.f32.xlu0 %v1406
    %v1408 = vpop.xlane.xlu0 %1407
    %v1409 = vmul.f32 %v1405, %v1187
    %v1410 = vmul.f32 %v1408, %v1187
    %v1411 = vsub.f32 %v1401, %v1409
    %v1412 = vsub.f32 %v1402, %v1410
    %v1413 = vmul.f32 %v1411, %v1411
    %v1414 = vmul.f32 %v1412, %v1412
    %v1415 = vsel %vm134, %v1413, 0.0
    %1416 = vadd.xlane.f32.xlu0 %v1415
    %v1417 = vpop.xlane.xlu0 %1416
    %v1418 = vsel %vm134, %v1414, 0.0
    %1419 = vadd.xlane.f32.xlu0 %v1418
    %v1420 = vpop.xlane.xlu0 %1419
    %v1421 = vmul.f32 %v1417, %v1187
    %v1422 = vmul.f32 %v1420, %v1187
    %v1423 = vadd.f32 %v1421, 1e-05
    %v1424 = vadd.f32 %v1422, 1e-05
    %v1425 = vrsqrt.pop %v1423
    %v1426 = vrsqrt.pop %v1424
    %v1427 = vmul.f32 %v1411, %v1425
    %v1428 = vmul.f32 %v1412, %v1426
    %v1429 = vld [vmem:[#allocation8 + $0x46] sm:$0x1]
    %v1430 = vlaneseq
    %v1431 = vshrl.u32 %v1430, 7
    %v1432 = vsub.s32 0, %v1431
    %v1433 = vrot.slane %v1429, %v1432
    %v1434 = vmul.f32 %v1427, %v1433
    %v1435 = vmul.f32 %v1428, %v1433
    %v1436 = vld [vmem:[#allocation8 + $0x47] sm:$0x1]
    %v1437 = vlaneseq
    %v1438 = vshrl.u32 %v1437, 7
    %v1439 = vsub.s32 0, %v1438
    %v1440 = vrot.slane %v1436, %v1439
    %v1441 = vadd.f32 %v1434, %v1440
    %v1442 = vadd.f32 %v1435, %v1440
    %v1443 = vpack.c.bf16 %v1442, %v1441
    %v1444 = vld [vmem:[#allocation7 + $0x70] sm:$0xf]
    %v1445 = vld [vmem:[#allocation7 + $0x74] sm:$0xf]
    %v1446 = vld [vmem:[#allocation7 + $0x78] sm:$0xf]
    %v1447 = vld [vmem:[#allocation7 + $0x7c] sm:$0xf]
    %v1448 = vld [vmem:[#allocation8 + $0x48] sm:$0x1]
    %v1449 = vlaneseq
    %v1450 = vshrl.u32 %v1449, 7
    %v1451 = vsub.s32 0, %v1450
    %v1452 = vrot.slane %v1448, %v1451
    %v1457 = vunpack.c.l.b16 %v1444
    %v1458 = vunpack.c.l.b16 %v1445
    %v1459 = vunpack.c.l.b16 %v1446
    %v1460 = vunpack.c.l.b16 %v1447
    %v1461 = vpack.c.b16 %v1458, %v1457
    %v1462 = vpack.c.b16 %v1460, %v1459
    %v1466 = vsel %vm134, %v1443, 0
    %1468 = vmatprep.subr.bf16.mxu0 0
    %1469 = vmatpush1.bf16.msra.mxu0 %v1461
    %1470 = vmatprep.subr.bf16.mxu0 0
    %1471 = vmatpush1.bf16.msra.mxu0 %v1462
    %1472 = vmatprep.subr.bf16.mxu0 0
    %1473 = vmatpush1.bf16.msra.mxu0 0
    %1474 = vmatprep.subr.bf16.mxu0 0
    %1475 = vmatpush1.bf16.msra.mxu0 0
    %1476 = vmatprep.subr.bf16.mxu0 0
    %1477 = vmatpush1.bf16.msra.mxu0 0
    %1478 = vmatprep.subr.bf16.mxu0 0
    %1479 = vmatpush1.bf16.msra.mxu0 0
    %1480 = vmatprep.subr.bf16.mxu0 0
    %1481 = vmatpush1.bf16.msra.mxu0 0
    %1482 = vmatprep.subr.bf16.mxu0 0
    %1483 = vmatpush1.bf16.msra.mxu0 0
    %1484 = vmatprep.subr.bf16.mxu0 0
    %1485 = vmatpush1.bf16.msra.mxu0 0
    %1486 = vmatprep.subr.bf16.mxu0 0
    %1487 = vmatpush1.bf16.msra.mxu0 0
    %1488 = vmatprep.subr.bf16.mxu0 0
    %1489 = vmatpush1.bf16.msra.mxu0 0
    %1490 = vmatprep.subr.bf16.mxu0 0
    %1491 = vmatpush1.bf16.msra.mxu0 0
    %1492 = vmatprep.subr.bf16.mxu0 0
    %1493 = vmatpush1.bf16.msra.mxu0 0
    %1494 = vmatprep.subr.bf16.mxu0 0
    %1495 = vmatpush1.bf16.msra.mxu0 0
    %1496 = vmatprep.subr.bf16.mxu0 0
    %1497 = vmatpush1.bf16.msra.mxu0 0
    %1498 = vmatprep.subr.bf16.mxu0 0
    %1499 = vmatpush1.bf16.msra.mxu0 0
    %1500 = vmatprep.mubr.bf16.mxu0 0
    %1501 = vmatmul.mubr.bf16.gmra.mrb[0].mxu0 %v1466
    %v1502 = vpop.f32.mrb[0].mxu0
    %v1503 = vadd.f32 %v1452, %v1502
    %v1504 = vpop.f32.mrb[0].mxu0
    %v1505 = vpop.f32.mrb[0].mxu0
    %v1506 = vadd.f32 %v1452, %v1505
    %v1507 = vpop.f32.mrb[0].mxu0
    %1508 = vdwg.mxu0
    %1511 = vrot.lane.b32.xlu0 %v1503, 120
    %v1512 = vpop.permute.xlu0 %1511
    %1513 = vrot.lane.b32.xlu0 %v1506, 120
    %v1514 = vpop.permute.xlu0 %1513
    %1517 = vrot.lane.b32.xlu0 %v1503, 112
    %v1518 = vpop.permute.xlu0 %1517
    %1519 = vrot.lane.b32.xlu0 %v1506, 112
    %v1520 = vpop.permute.xlu0 %1519
    %1523 = vrot.lane.b32.xlu0 %v1503, 104
    %v1524 = vpop.permute.xlu0 %1523
    %1525 = vrot.lane.b32.xlu0 %v1506, 104
    %v1526 = vpop.permute.xlu0 %1525
    %v1529 = vpack.c.bf16 %v1503, %v1503
    %v1530 = vpack.c.bf16 %v1506, %v1506
    %v1531 = vpack.c.bf16 %v1512, %v1512
    %v1532 = vpack.c.bf16 %v1514, %v1514
    %v1533 = vpack.c.bf16 %v1518, %v1518
    %v1534 = vpack.c.bf16 %v1520, %v1520
    %v1535 = vpack.c.bf16 %v1524, %v1524
    %v1536 = vpack.c.bf16 %v1526, %v1526
    %1538 = vrot.lane.b32.xlu0 %v1529, 96
    %v1539 = vpop.permute.xlu0 %1538
    %v1541 = vsel %vm210, %v1529, 0
    %v1544 = vsel %vm210, %v1539, 0
    %1546 = vmatprep.subr.bf16.mxu0 0
    %1547 = vmatpush1.bf16.xpose.msra.mxu0 %v1544
    %1548 = vmatprep.subr.bf16.mxu0 0
    %1549 = vmatpush1.bf16.xpose.msra.mxu0 0
    %1550 = vmatprep.subr.bf16.mxu0 0
    %1551 = vmatpush1.bf16.xpose.msra.mxu0 0
    %1552 = vmatprep.subr.bf16.mxu0 0
    %1553 = vmatpush1.bf16.xpose.msra.mxu0 0
    %1554 = vmatprep.subr.bf16.mxu0 0
    %1555 = vmatpush1.bf16.xpose.msra.mxu0 0
    %1556 = vmatprep.subr.bf16.mxu0 0
    %1557 = vmatpush1.bf16.xpose.msra.mxu0 0
    %1558 = vmatprep.subr.bf16.mxu0 0
    %1559 = vmatpush1.bf16.xpose.msra.mxu0 0
    %1560 = vmatprep.subr.bf16.mxu0 0
    %1561 = vmatpush1.bf16.xpose.msra.mxu0 0
    %1562 = vmatprep.subr.bf16.mxu0 0
    %1563 = vmatpush1.bf16.xpose.msra.mxu0 0
    %1564 = vmatprep.subr.bf16.mxu0 0
    %1565 = vmatpush1.bf16.xpose.msra.mxu0 0
    %1566 = vmatprep.subr.bf16.mxu0 0
    %1567 = vmatpush1.bf16.xpose.msra.mxu0 0
    %1568 = vmatprep.subr.bf16.mxu0 0
    %1569 = vmatpush1.bf16.xpose.msra.mxu0 0
    %1570 = vmatprep.subr.bf16.mxu0 0
    %1571 = vmatpush1.bf16.xpose.msra.mxu0 0
    %1572 = vmatprep.subr.bf16.mxu0 0
    %1573 = vmatpush1.bf16.xpose.msra.mxu0 0
    %1574 = vmatprep.subr.bf16.mxu0 0
    %1575 = vmatpush1.bf16.xpose.msra.mxu0 0
    %1576 = vmatprep.subr.bf16.mxu0 0
    %1577 = vmatpush1.bf16.xpose.msra.mxu0 0
    %1578 = vmatprep.mubr.bf16.mxu0 0
    %1579 = vmatmul.mubr.bf16.gmra.mrb[0].mxu0 %v1541
    %v1580 = vpop.f32.mrb[0].mxu0
    %v1581 = vadd.f32 0.0, %v1580
    %v1582 = vpop.f32.mrb[0].mxu0
    %v1583 = vpop.f32.mrb[0].mxu0
    %v1584 = vpop.f32.mrb[0].mxu0
    %1585 = vdwg.mxu0
    %1587 = vrot.lane.b32.xlu0 %v1530, 96
    %v1588 = vpop.permute.xlu0 %1587
    %v1590 = vsel %vm210, %v1530, 0
    %v1593 = vsel %vm210, %v1588, 0
    %1595 = vmatprep.subr.bf16.mxu0 0
    %1596 = vmatpush1.bf16.xpose.msra.mxu0 %v1593
    %1597 = vmatprep.subr.bf16.mxu0 0
    %1598 = vmatpush1.bf16.xpose.msra.mxu0 0
    %1599 = vmatprep.subr.bf16.mxu0 0
    %1600 = vmatpush1.bf16.xpose.msra.mxu0 0
    %1601 = vmatprep.subr.bf16.mxu0 0
    %1602 = vmatpush1.bf16.xpose.msra.mxu0 0
    %1603 = vmatprep.subr.bf16.mxu0 0
    %1604 = vmatpush1.bf16.xpose.msra.mxu0 0
    %1605 = vmatprep.subr.bf16.mxu0 0
    %1606 = vmatpush1.bf16.xpose.msra.mxu0 0
    %1607 = vmatprep.subr.bf16.mxu0 0
    %1608 = vmatpush1.bf16.xpose.msra.mxu0 0
    %1609 = vmatprep.subr.bf16.mxu0 0
    %1610 = vmatpush1.bf16.xpose.msra.mxu0 0
    %1611 = vmatprep.subr.bf16.mxu0 0
    %1612 = vmatpush1.bf16.xpose.msra.mxu0 0
    %1613 = vmatprep.subr.bf16.mxu0 0
    %1614 = vmatpush1.bf16.xpose.msra.mxu0 0
    %1615 = vmatprep.subr.bf16.mxu0 0
    %1616 = vmatpush1.bf16.xpose.msra.mxu0 0
    %1617 = vmatprep.subr.bf16.mxu0 0
    %1618 = vmatpush1.bf16.xpose.msra.mxu0 0
    %1619 = vmatprep.subr.bf16.mxu0 0
    %1620 = vmatpush1.bf16.xpose.msra.mxu0 0
    %1621 = vmatprep.subr.bf16.mxu0 0
    %1622 = vmatpush1.bf16.xpose.msra.mxu0 0
    %1623 = vmatprep.subr.bf16.mxu0 0
    %1624 = vmatpush1.bf16.xpose.msra.mxu0 0
    %1625 = vmatprep.subr.bf16.mxu0 0
    %1626 = vmatpush1.bf16.xpose.msra.mxu0 0
    %1627 = vmatprep.mubr.bf16.mxu0 0
    %1628 = vmatmul.mubr.bf16.gmra.mrb[0].mxu0 %v1590
    %v1629 = vpop.f32.mrb[0].mxu0
    %v1630 = vadd.f32 0.0, %v1629
    %v1631 = vpop.f32.mrb[0].mxu0
    %v1632 = vpop.f32.mrb[0].mxu0
    %v1633 = vpop.f32.mrb[0].mxu0
    %1634 = vdwg.mxu0
    %1636 = vrot.lane.b32.xlu0 %v1531, 96
    %v1637 = vpop.permute.xlu0 %1636
    %v1639 = vsel %vm210, %v1531, 0
    %v1642 = vsel %vm210, %v1637, 0
    %1644 = vmatprep.subr.bf16.mxu0 0
    %1645 = vmatpush1.bf16.xpose.msra.mxu0 %v1642
    %1646 = vmatprep.subr.bf16.mxu0 0
    %1647 = vmatpush1.bf16.xpose.msra.mxu0 0
    %1648 = vmatprep.subr.bf16.mxu0 0
    %1649 = vmatpush1.bf16.xpose.msra.mxu0 0
    %1650 = vmatprep.subr.bf16.mxu0 0
    %1651 = vmatpush1.bf16.xpose.msra.mxu0 0
    %1652 = vmatprep.subr.bf16.mxu0 0
    %1653 = vmatpush1.bf16.xpose.msra.mxu0 0
    %1654 = vmatprep.subr.bf16.mxu0 0
    %1655 = vmatpush1.bf16.xpose.msra.mxu0 0
    %1656 = vmatprep.subr.bf16.mxu0 0
    %1657 = vmatpush1.bf16.xpose.msra.mxu0 0
    %1658 = vmatprep.subr.bf16.mxu0 0
    %1659 = vmatpush1.bf16.xpose.msra.mxu0 0
    %1660 = vmatprep.subr.bf16.mxu0 0
    %1661 = vmatpush1.bf16.xpose.msra.mxu0 0
    %1662 = vmatprep.subr.bf16.mxu0 0
    %1663 = vmatpush1.bf16.xpose.msra.mxu0 0
    %1664 = vmatprep.subr.bf16.mxu0 0
    %1665 = vmatpush1.bf16.xpose.msra.mxu0 0
    %1666 = vmatprep.subr.bf16.mxu0 0
    %1667 = vmatpush1.bf16.xpose.msra.mxu0 0
    %1668 = vmatprep.subr.bf16.mxu0 0
    %1669 = vmatpush1.bf16.xpose.msra.mxu0 0
    %1670 = vmatprep.subr.bf16.mxu0 0
    %1671 = vmatpush1.bf16.xpose.msra.mxu0 0
    %1672 = vmatprep.subr.bf16.mxu0 0
    %1673 = vmatpush1.bf16.xpose.msra.mxu0 0
    %1674 = vmatprep.subr.bf16.mxu0 0
    %1675 = vmatpush1.bf16.xpose.msra.mxu0 0
    %1676 = vmatprep.mubr.bf16.mxu0 0
    %1677 = vmatmul.mubr.bf16.gmra.mrb[0].mxu0 %v1639
    %v1678 = vpop.f32.mrb[0].mxu0
    %v1679 = vadd.f32 0.0, %v1678
    %v1680 = vpop.f32.mrb[0].mxu0
    %v1681 = vpop.f32.mrb[0].mxu0
    %v1682 = vpop.f32.mrb[0].mxu0
    %1683 = vdwg.mxu0
    %1685 = vrot.lane.b32.xlu0 %v1532, 96
    %v1686 = vpop.permute.xlu0 %1685
    %v1688 = vsel %vm210, %v1532, 0
    %v1691 = vsel %vm210, %v1686, 0
    %1693 = vmatprep.subr.bf16.mxu0 0
    %1694 = vmatpush1.bf16.xpose.msra.mxu0 %v1691
    %1695 = vmatprep.subr.bf16.mxu0 0
    %1696 = vmatpush1.bf16.xpose.msra.mxu0 0
    %1697 = vmatprep.subr.bf16.mxu0 0
    %1698 = vmatpush1.bf16.xpose.msra.mxu0 0
    %1699 = vmatprep.subr.bf16.mxu0 0
    %1700 = vmatpush1.bf16.xpose.msra.mxu0 0
    %1701 = vmatprep.subr.bf16.mxu0 0
    %1702 = vmatpush1.bf16.xpose.msra.mxu0 0
    %1703 = vmatprep.subr.bf16.mxu0 0
    %1704 = vmatpush1.bf16.xpose.msra.mxu0 0
    %1705 = vmatprep.subr.bf16.mxu0 0
    %1706 = vmatpush1.bf16.xpose.msra.mxu0 0
    %1707 = vmatprep.subr.bf16.mxu0 0
    %1708 = vmatpush1.bf16.xpose.msra.mxu0 0
    %1709 = vmatprep.subr.bf16.mxu0 0
    %1710 = vmatpush1.bf16.xpose.msra.mxu0 0
    %1711 = vmatprep.subr.bf16.mxu0 0
    %1712 = vmatpush1.bf16.xpose.msra.mxu0 0
    %1713 = vmatprep.subr.bf16.mxu0 0
    %1714 = vmatpush1.bf16.xpose.msra.mxu0 0
    %1715 = vmatprep.subr.bf16.mxu0 0
    %1716 = vmatpush1.bf16.xpose.msra.mxu0 0
    %1717 = vmatprep.subr.bf16.mxu0 0
    %1718 = vmatpush1.bf16.xpose.msra.mxu0 0
    %1719 = vmatprep.subr.bf16.mxu0 0
    %1720 = vmatpush1.bf16.xpose.msra.mxu0 0
    %1721 = vmatprep.subr.bf16.mxu0 0
    %1722 = vmatpush1.bf16.xpose.msra.mxu0 0
    %1723 = vmatprep.subr.bf16.mxu0 0
    %1724 = vmatpush1.bf16.xpose.msra.mxu0 0
    %1725 = vmatprep.mubr.bf16.mxu0 0
    %1726 = vmatmul.mubr.bf16.gmra.mrb[0].mxu0 %v1688
    %v1727 = vpop.f32.mrb[0].mxu0
    %v1728 = vadd.f32 0.0, %v1727
    %v1729 = vpop.f32.mrb[0].mxu0
    %v1730 = vpop.f32.mrb[0].mxu0
    %v1731 = vpop.f32.mrb[0].mxu0
    %1732 = vdwg.mxu0
    %1734 = vrot.lane.b32.xlu0 %v1533, 96
    %v1735 = vpop.permute.xlu0 %1734
    %v1737 = vsel %vm210, %v1533, 0
    %v1740 = vsel %vm210, %v1735, 0
    %1742 = vmatprep.subr.bf16.mxu0 0
    %1743 = vmatpush1.bf16.xpose.msra.mxu0 %v1740
    %1744 = vmatprep.subr.bf16.mxu0 0
    %1745 = vmatpush1.bf16.xpose.msra.mxu0 0
    %1746 = vmatprep.subr.bf16.mxu0 0
    %1747 = vmatpush1.bf16.xpose.msra.mxu0 0
    %1748 = vmatprep.subr.bf16.mxu0 0
    %1749 = vmatpush1.bf16.xpose.msra.mxu0 0
    %1750 = vmatprep.subr.bf16.mxu0 0
    %1751 = vmatpush1.bf16.xpose.msra.mxu0 0
    %1752 = vmatprep.subr.bf16.mxu0 0
    %1753 = vmatpush1.bf16.xpose.msra.mxu0 0
    %1754 = vmatprep.subr.bf16.mxu0 0
    %1755 = vmatpush1.bf16.xpose.msra.mxu0 0
    %1756 = vmatprep.subr.bf16.mxu0 0
    %1757 = vmatpush1.bf16.xpose.msra.mxu0 0
    %1758 = vmatprep.subr.bf16.mxu0 0
    %1759 = vmatpush1.bf16.xpose.msra.mxu0 0
    %1760 = vmatprep.subr.bf16.mxu0 0
    %1761 = vmatpush1.bf16.xpose.msra.mxu0 0
    %1762 = vmatprep.subr.bf16.mxu0 0
    %1763 = vmatpush1.bf16.xpose.msra.mxu0 0
    %1764 = vmatprep.subr.bf16.mxu0 0
    %1765 = vmatpush1.bf16.xpose.msra.mxu0 0
    %1766 = vmatprep.subr.bf16.mxu0 0
    %1767 = vmatpush1.bf16.xpose.msra.mxu0 0
    %1768 = vmatprep.subr.bf16.mxu0 0
    %1769 = vmatpush1.bf16.xpose.msra.mxu0 0
    %1770 = vmatprep.subr.bf16.mxu0 0
    %1771 = vmatpush1.bf16.xpose.msra.mxu0 0
    %1772 = vmatprep.subr.bf16.mxu0 0
    %1773 = vmatpush1.bf16.xpose.msra.mxu0 0
    %1774 = vmatprep.mubr.bf16.mxu0 0
    %1775 = vmatmul.mubr.bf16.gmra.mrb[0].mxu0 %v1737
    %v1776 = vpop.f32.mrb[0].mxu0
    %v1777 = vadd.f32 0.0, %v1776
    %v1778 = vpop.f32.mrb[0].mxu0
    %v1779 = vpop.f32.mrb[0].mxu0
    %v1780 = vpop.f32.mrb[0].mxu0
    %1781 = vdwg.mxu0
    %1783 = vrot.lane.b32.xlu0 %v1534, 96
    %v1784 = vpop.permute.xlu0 %1783
    %v1786 = vsel %vm210, %v1534, 0
    %v1789 = vsel %vm210, %v1784, 0
    %1791 = vmatprep.subr.bf16.mxu0 0
    %1792 = vmatpush1.bf16.xpose.msra.mxu0 %v1789
    %1793 = vmatprep.subr.bf16.mxu0 0
    %1794 = vmatpush1.bf16.xpose.msra.mxu0 0
    %1795 = vmatprep.subr.bf16.mxu0 0
    %1796 = vmatpush1.bf16.xpose.msra.mxu0 0
    %1797 = vmatprep.subr.bf16.mxu0 0
    %1798 = vmatpush1.bf16.xpose.msra.mxu0 0
    %1799 = vmatprep.subr.bf16.mxu0 0
    %1800 = vmatpush1.bf16.xpose.msra.mxu0 0
    %1801 = vmatprep.subr.bf16.mxu0 0
    %1802 = vmatpush1.bf16.xpose.msra.mxu0 0
    %1803 = vmatprep.subr.bf16.mxu0 0
    %1804 = vmatpush1.bf16.xpose.msra.mxu0 0
    %1805 = vmatprep.subr.bf16.mxu0 0
    %1806 = vmatpush1.bf16.xpose.msra.mxu0 0
    %1807 = vmatprep.subr.bf16.mxu0 0
    %1808 = vmatpush1.bf16.xpose.msra.mxu0 0
    %1809 = vmatprep.subr.bf16.mxu0 0
    %1810 = vmatpush1.bf16.xpose.msra.mxu0 0
    %1811 = vmatprep.subr.bf16.mxu0 0
    %1812 = vmatpush1.bf16.xpose.msra.mxu0 0
    %1813 = vmatprep.subr.bf16.mxu0 0
    %1814 = vmatpush1.bf16.xpose.msra.mxu0 0
    %1815 = vmatprep.subr.bf16.mxu0 0
    %1816 = vmatpush1.bf16.xpose.msra.mxu0 0
    %1817 = vmatprep.subr.bf16.mxu0 0
    %1818 = vmatpush1.bf16.xpose.msra.mxu0 0
    %1819 = vmatprep.subr.bf16.mxu0 0
    %1820 = vmatpush1.bf16.xpose.msra.mxu0 0
    %1821 = vmatprep.subr.bf16.mxu0 0
    %1822 = vmatpush1.bf16.xpose.msra.mxu0 0
    %1823 = vmatprep.mubr.bf16.mxu0 0
    %1824 = vmatmul.mubr.bf16.gmra.mrb[0].mxu0 %v1786
    %v1825 = vpop.f32.mrb[0].mxu0
    %v1826 = vadd.f32 0.0, %v1825
    %v1827 = vpop.f32.mrb[0].mxu0
    %v1828 = vpop.f32.mrb[0].mxu0
    %v1829 = vpop.f32.mrb[0].mxu0
    %1830 = vdwg.mxu0
    %1832 = vrot.lane.b32.xlu0 %v1535, 96
    %v1833 = vpop.permute.xlu0 %1832
    %v1835 = vsel %vm210, %v1535, 0
    %v1838 = vsel %vm210, %v1833, 0
    %1840 = vmatprep.subr.bf16.mxu0 0
    %1841 = vmatpush1.bf16.xpose.msra.mxu0 %v1838
    %1842 = vmatprep.subr.bf16.mxu0 0
    %1843 = vmatpush1.bf16.xpose.msra.mxu0 0
    %1844 = vmatprep.subr.bf16.mxu0 0
    %1845 = vmatpush1.bf16.xpose.msra.mxu0 0
    %1846 = vmatprep.subr.bf16.mxu0 0
    %1847 = vmatpush1.bf16.xpose.msra.mxu0 0
    %1848 = vmatprep.subr.bf16.mxu0 0
    %1849 = vmatpush1.bf16.xpose.msra.mxu0 0
    %1850 = vmatprep.subr.bf16.mxu0 0
    %1851 = vmatpush1.bf16.xpose.msra.mxu0 0
    %1852 = vmatprep.subr.bf16.mxu0 0
    %1853 = vmatpush1.bf16.xpose.msra.mxu0 0
    %1854 = vmatprep.subr.bf16.mxu0 0
    %1855 = vmatpush1.bf16.xpose.msra.mxu0 0
    %1856 = vmatprep.subr.bf16.mxu0 0
    %1857 = vmatpush1.bf16.xpose.msra.mxu0 0
    %1858 = vmatprep.subr.bf16.mxu0 0
    %1859 = vmatpush1.bf16.xpose.msra.mxu0 0
    %1860 = vmatprep.subr.bf16.mxu0 0
    %1861 = vmatpush1.bf16.xpose.msra.mxu0 0
    %1862 = vmatprep.subr.bf16.mxu0 0
    %1863 = vmatpush1.bf16.xpose.msra.mxu0 0
    %1864 = vmatprep.subr.bf16.mxu0 0
    %1865 = vmatpush1.bf16.xpose.msra.mxu0 0
    %1866 = vmatprep.subr.bf16.mxu0 0
    %1867 = vmatpush1.bf16.xpose.msra.mxu0 0
    %1868 = vmatprep.subr.bf16.mxu0 0
    %1869 = vmatpush1.bf16.xpose.msra.mxu0 0
    %1870 = vmatprep.subr.bf16.mxu0 0
    %1871 = vmatpush1.bf16.xpose.msra.mxu0 0
    %1872 = vmatprep.mubr.bf16.mxu0 0
    %1873 = vmatmul.mubr.bf16.gmra.mrb[0].mxu0 %v1835
    %v1874 = vpop.f32.mrb[0].mxu0
    %v1875 = vadd.f32 0.0, %v1874
    %v1876 = vpop.f32.mrb[0].mxu0
    %v1877 = vpop.f32.mrb[0].mxu0
    %v1878 = vpop.f32.mrb[0].mxu0
    %1879 = vdwg.mxu0
    %1881 = vrot.lane.b32.xlu0 %v1536, 96
    %v1882 = vpop.permute.xlu0 %1881
    %v1884 = vsel %vm210, %v1536, 0
    %v1887 = vsel %vm210, %v1882, 0
    %1889 = vmatprep.subr.bf16.mxu0 0
    %1890 = vmatpush1.bf16.xpose.msra.mxu0 %v1887
    %1891 = vmatprep.subr.bf16.mxu0 0
    %1892 = vmatpush1.bf16.xpose.msra.mxu0 0
    %1893 = vmatprep.subr.bf16.mxu0 0
    %1894 = vmatpush1.bf16.xpose.msra.mxu0 0
    %1895 = vmatprep.subr.bf16.mxu0 0
    %1896 = vmatpush1.bf16.xpose.msra.mxu0 0
    %1897 = vmatprep.subr.bf16.mxu0 0
    %1898 = vmatpush1.bf16.xpose.msra.mxu0 0
    %1899 = vmatprep.subr.bf16.mxu0 0
    %1900 = vmatpush1.bf16.xpose.msra.mxu0 0
    %1901 = vmatprep.subr.bf16.mxu0 0
    %1902 = vmatpush1.bf16.xpose.msra.mxu0 0
    %1903 = vmatprep.subr.bf16.mxu0 0
    %1904 = vmatpush1.bf16.xpose.msra.mxu0 0
    %1905 = vmatprep.subr.bf16.mxu0 0
    %1906 = vmatpush1.bf16.xpose.msra.mxu0 0
    %1907 = vmatprep.subr.bf16.mxu0 0
    %1908 = vmatpush1.bf16.xpose.msra.mxu0 0
    %1909 = vmatprep.subr.bf16.mxu0 0
    %1910 = vmatpush1.bf16.xpose.msra.mxu0 0
    %1911 = vmatprep.subr.bf16.mxu0 0
    %1912 = vmatpush1.bf16.xpose.msra.mxu0 0
    %1913 = vmatprep.subr.bf16.mxu0 0
    %1914 = vmatpush1.bf16.xpose.msra.mxu0 0
    %1915 = vmatprep.subr.bf16.mxu0 0
    %1916 = vmatpush1.bf16.xpose.msra.mxu0 0
    %1917 = vmatprep.subr.bf16.mxu0 0
    %1918 = vmatpush1.bf16.xpose.msra.mxu0 0
    %1919 = vmatprep.subr.bf16.mxu0 0
    %1920 = vmatpush1.bf16.xpose.msra.mxu0 0
    %1921 = vmatprep.mubr.bf16.mxu0 0
    %1922 = vmatmul.mubr.bf16.gmra.mrb[0].mxu0 %v1884
    %v1923 = vpop.f32.mrb[0].mxu0
    %v1924 = vadd.f32 0.0, %v1923
    %v1925 = vpop.f32.mrb[0].mxu0
    %v1926 = vpop.f32.mrb[0].mxu0
    %v1927 = vpop.f32.mrb[0].mxu0
    %1928 = vdwg.mxu0
    %v1929 = vsel %vm210, %v1581, -inf
    %1930 = vmax.xlane.f32.xlu0 %v1929
    %v1931 = vpop.xlane.xlu0 %1930
    %v1932 = vsel %vm210, %v1630, -inf
    %1933 = vmax.xlane.f32.xlu0 %v1932
    %v1934 = vpop.xlane.xlu0 %1933
    %v1935 = vsel %vm210, %v1679, -inf
    %1936 = vmax.xlane.f32.xlu0 %v1935
    %v1937 = vpop.xlane.xlu0 %1936
    %v1938 = vsel %vm210, %v1728, -inf
    %1939 = vmax.xlane.f32.xlu0 %v1938
    %v1940 = vpop.xlane.xlu0 %1939
    %v1941 = vsel %vm210, %v1777, -inf
    %1942 = vmax.xlane.f32.xlu0 %v1941
    %v1943 = vpop.xlane.xlu0 %1942
    %v1944 = vsel %vm210, %v1826, -inf
    %1945 = vmax.xlane.f32.xlu0 %v1944
    %v1946 = vpop.xlane.xlu0 %1945
    %v1947 = vsel %vm210, %v1875, -inf
    %1948 = vmax.xlane.f32.xlu0 %v1947
    %v1949 = vpop.xlane.xlu0 %1948
    %v1950 = vsel %vm210, %v1924, -inf
    %1951 = vmax.xlane.f32.xlu0 %v1950
    %v1952 = vpop.xlane.xlu0 %1951
    %v1953 = vsub.f32 %v1581, %v1931
    %v1954 = vsub.f32 %v1630, %v1934
    %v1955 = vsub.f32 %v1679, %v1937
    %v1956 = vsub.f32 %v1728, %v1940
    %v1957 = vsub.f32 %v1777, %v1943
    %v1958 = vsub.f32 %v1826, %v1946
    %v1959 = vsub.f32 %v1875, %v1949
    %v1960 = vsub.f32 %v1924, %v1952
    %v1961 = vmul.f32 %v1953, 1.442695
    %v1962 = vpow.pop %v1961
    %v1963 = vmul.f32 %v1954, 1.442695
    %v1964 = vpow.pop %v1963
    %v1965 = vmul.f32 %v1955, 1.442695
    %v1966 = vpow.pop %v1965
    %v1967 = vmul.f32 %v1956, 1.442695
    %v1968 = vpow.pop %v1967
    %v1969 = vmul.f32 %v1957, 1.442695
    %v1970 = vpow.pop %v1969
    %v1971 = vmul.f32 %v1958, 1.442695
    %v1972 = vpow.pop %v1971
    %v1973 = vmul.f32 %v1959, 1.442695
    %v1974 = vpow.pop %v1973
    %v1975 = vmul.f32 %v1960, 1.442695
    %v1976 = vpow.pop %v1975
    %v1977 = vsel %vm210, %v1962, 0.0
    %1978 = vadd.xlane.f32.xlu0 %v1977
    %v1979 = vpop.xlane.xlu0 %1978
    %v1980 = vsel %vm210, %v1964, 0.0
    %1981 = vadd.xlane.f32.xlu0 %v1980
    %v1982 = vpop.xlane.xlu0 %1981
    %v1983 = vsel %vm210, %v1966, 0.0
    %1984 = vadd.xlane.f32.xlu0 %v1983
    %v1985 = vpop.xlane.xlu0 %1984
    %v1986 = vsel %vm210, %v1968, 0.0
    %1987 = vadd.xlane.f32.xlu0 %v1986
    %v1988 = vpop.xlane.xlu0 %1987
    %v1989 = vsel %vm210, %v1970, 0.0
    %1990 = vadd.xlane.f32.xlu0 %v1989
    %v1991 = vpop.xlane.xlu0 %1990
    %v1992 = vsel %vm210, %v1972, 0.0
    %1993 = vadd.xlane.f32.xlu0 %v1992
    %v1994 = vpop.xlane.xlu0 %1993
    %v1995 = vsel %vm210, %v1974, 0.0
    %1996 = vadd.xlane.f32.xlu0 %v1995
    %v1997 = vpop.xlane.xlu0 %1996
    %v1998 = vsel %vm210, %v1976, 0.0
    %1999 = vadd.xlane.f32.xlu0 %v1998
    %v2000 = vpop.xlane.xlu0 %1999
    %v2001 = vrcp.pop %v1979
    %v2002 = vrcp.pop %v1982
    %v2003 = vrcp.pop %v1985
    %v2004 = vrcp.pop %v1988
    %v2005 = vrcp.pop %v1991
    %v2006 = vrcp.pop %v1994
    %v2007 = vrcp.pop %v1997
    %v2008 = vrcp.pop %v2000
    %v2009 = vmul.f32 %v1962, %v2001
    %v2010 = vmul.f32 %v1964, %v2002
    %v2011 = vmul.f32 %v1966, %v2003
    %v2012 = vmul.f32 %v1968, %v2004
    %v2013 = vmul.f32 %v1970, %v2005
    %v2014 = vmul.f32 %v1972, %v2006
    %v2015 = vmul.f32 %v1974, %v2007
    %v2016 = vmul.f32 %v1976, %v2008
    %v2017 = vpack.c.bf16 %v2009, %v2009
    %v2018 = vpack.c.bf16 %v2010, %v2010
    %v2019 = vpack.c.bf16 %v2011, %v2011
    %v2020 = vpack.c.bf16 %v2012, %v2012
    %v2021 = vpack.c.bf16 %v2013, %v2013
    %v2022 = vpack.c.bf16 %v2014, %v2014
    %v2023 = vpack.c.bf16 %v2015, %v2015
    %v2024 = vpack.c.bf16 %v2016, %v2016
    %2025 = vrot.lane.b32.xlu0 %v1529, 64
    %v2026 = vpop.permute.xlu0 %2025
    %v2028 = vsel %vm210, %v2017, 0
    %v2031 = vsel %vm701, %v2026, 0
    %2033 = vmatprep.subr.bf16.mxu0 0
    %2034 = vmatpush1.bf16.msra.mxu0 %v2031
    %2035 = vmatprep.subr.bf16.mxu0 0
    %2036 = vmatpush1.bf16.msra.mxu0 0
    %2037 = vmatprep.subr.bf16.mxu0 0
    %2038 = vmatpush1.bf16.msra.mxu0 0
    %2039 = vmatprep.subr.bf16.mxu0 0
    %2040 = vmatpush1.bf16.msra.mxu0 0
    %2041 = vmatprep.subr.bf16.mxu0 0
    %2042 = vmatpush1.bf16.msra.mxu0 0
    %2043 = vmatprep.subr.bf16.mxu0 0
    %2044 = vmatpush1.bf16.msra.mxu0 0
    %2045 = vmatprep.subr.bf16.mxu0 0
    %2046 = vmatpush1.bf16.msra.mxu0 0
    %2047 = vmatprep.subr.bf16.mxu0 0
    %2048 = vmatpush1.bf16.msra.mxu0 0
    %2049 = vmatprep.subr.bf16.mxu0 0
    %2050 = vmatpush1.bf16.msra.mxu0 0
    %2051 = vmatprep.subr.bf16.mxu0 0
    %2052 = vmatpush1.bf16.msra.mxu0 0
    %2053 = vmatprep.subr.bf16.mxu0 0
    %2054 = vmatpush1.bf16.msra.mxu0 0
    %2055 = vmatprep.subr.bf16.mxu0 0
    %2056 = vmatpush1.bf16.msra.mxu0 0
    %2057 = vmatprep.subr.bf16.mxu0 0
    %2058 = vmatpush1.bf16.msra.mxu0 0
    %2059 = vmatprep.subr.bf16.mxu0 0
    %2060 = vmatpush1.bf16.msra.mxu0 0
    %2061 = vmatprep.subr.bf16.mxu0 0
    %2062 = vmatpush1.bf16.msra.mxu0 0
    %2063 = vmatprep.subr.bf16.mxu0 0
    %2064 = vmatpush1.bf16.msra.mxu0 0
    %2065 = vmatprep.mubr.bf16.mxu0 0
    %2066 = vmatmul.mubr.bf16.gmra.mrb[0].mxu0 %v2028
    %v2067 = vpop.f32.mrb[0].mxu0
    %v2068 = vadd.f32 0.0, %v2067
    %v2069 = vpop.f32.mrb[0].mxu0
    %v2070 = vpop.f32.mrb[0].mxu0
    %v2071 = vpop.f32.mrb[0].mxu0
    %2072 = vdwg.mxu0
    %2073 = vrot.lane.b32.xlu0 %v1530, 64
    %v2074 = vpop.permute.xlu0 %2073
    %v2076 = vsel %vm210, %v2018, 0
    %v2079 = vsel %vm701, %v2074, 0
    %2081 = vmatprep.subr.bf16.mxu0 0
    %2082 = vmatpush1.bf16.msra.mxu0 %v2079
    %2083 = vmatprep.subr.bf16.mxu0 0
    %2084 = vmatpush1.bf16.msra.mxu0 0
    %2085 = vmatprep.subr.bf16.mxu0 0
    %2086 = vmatpush1.bf16.msra.mxu0 0
    %2087 = vmatprep.subr.bf16.mxu0 0
    %2088 = vmatpush1.bf16.msra.mxu0 0
    %2089 = vmatprep.subr.bf16.mxu0 0
    %2090 = vmatpush1.bf16.msra.mxu0 0
    %2091 = vmatprep.subr.bf16.mxu0 0
    %2092 = vmatpush1.bf16.msra.mxu0 0
    %2093 = vmatprep.subr.bf16.mxu0 0
    %2094 = vmatpush1.bf16.msra.mxu0 0
    %2095 = vmatprep.subr.bf16.mxu0 0
    %2096 = vmatpush1.bf16.msra.mxu0 0
    %2097 = vmatprep.subr.bf16.mxu0 0
    %2098 = vmatpush1.bf16.msra.mxu0 0
    %2099 = vmatprep.subr.bf16.mxu0 0
    %2100 = vmatpush1.bf16.msra.mxu0 0
    %2101 = vmatprep.subr.bf16.mxu0 0
    %2102 = vmatpush1.bf16.msra.mxu0 0
    %2103 = vmatprep.subr.bf16.mxu0 0
    %2104 = vmatpush1.bf16.msra.mxu0 0
    %2105 = vmatprep.subr.bf16.mxu0 0
    %2106 = vmatpush1.bf16.msra.mxu0 0
    %2107 = vmatprep.subr.bf16.mxu0 0
    %2108 = vmatpush1.bf16.msra.mxu0 0
    %2109 = vmatprep.subr.bf16.mxu0 0
    %2110 = vmatpush1.bf16.msra.mxu0 0
    %2111 = vmatprep.subr.bf16.mxu0 0
    %2112 = vmatpush1.bf16.msra.mxu0 0
    %2113 = vmatprep.mubr.bf16.mxu0 0
    %2114 = vmatmul.mubr.bf16.gmra.mrb[0].mxu0 %v2076
    %v2115 = vpop.f32.mrb[0].mxu0
    %v2116 = vadd.f32 0.0, %v2115
    %v2117 = vpop.f32.mrb[0].mxu0
    %v2118 = vpop.f32.mrb[0].mxu0
    %v2119 = vpop.f32.mrb[0].mxu0
    %2120 = vdwg.mxu0
    %2121 = vrot.lane.b32.xlu0 %v1531, 64
    %v2122 = vpop.permute.xlu0 %2121
    %v2124 = vsel %vm210, %v2019, 0
    %v2127 = vsel %vm701, %v2122, 0
    %2129 = vmatprep.subr.bf16.mxu0 0
    %2130 = vmatpush1.bf16.msra.mxu0 %v2127
    %2131 = vmatprep.subr.bf16.mxu0 0
    %2132 = vmatpush1.bf16.msra.mxu0 0
    %2133 = vmatprep.subr.bf16.mxu0 0
    %2134 = vmatpush1.bf16.msra.mxu0 0
    %2135 = vmatprep.subr.bf16.mxu0 0
    %2136 = vmatpush1.bf16.msra.mxu0 0
    %2137 = vmatprep.subr.bf16.mxu0 0
    %2138 = vmatpush1.bf16.msra.mxu0 0
    %2139 = vmatprep.subr.bf16.mxu0 0
    %2140 = vmatpush1.bf16.msra.mxu0 0
    %2141 = vmatprep.subr.bf16.mxu0 0
    %2142 = vmatpush1.bf16.msra.mxu0 0
    %2143 = vmatprep.subr.bf16.mxu0 0
    %2144 = vmatpush1.bf16.msra.mxu0 0
    %2145 = vmatprep.subr.bf16.mxu0 0
    %2146 = vmatpush1.bf16.msra.mxu0 0
    %2147 = vmatprep.subr.bf16.mxu0 0
    %2148 = vmatpush1.bf16.msra.mxu0 0
    %2149 = vmatprep.subr.bf16.mxu0 0
    %2150 = vmatpush1.bf16.msra.mxu0 0
    %2151 = vmatprep.subr.bf16.mxu0 0
    %2152 = vmatpush1.bf16.msra.mxu0 0
    %2153 = vmatprep.subr.bf16.mxu0 0
    %2154 = vmatpush1.bf16.msra.mxu0 0
    %2155 = vmatprep.subr.bf16.mxu0 0
    %2156 = vmatpush1.bf16.msra.mxu0 0
    %2157 = vmatprep.subr.bf16.mxu0 0
    %2158 = vmatpush1.bf16.msra.mxu0 0
    %2159 = vmatprep.subr.bf16.mxu0 0
    %2160 = vmatpush1.bf16.msra.mxu0 0
    %2161 = vmatprep.mubr.bf16.mxu0 0
    %2162 = vmatmul.mubr.bf16.gmra.mrb[0].mxu0 %v2124
    %v2163 = vpop.f32.mrb[0].mxu0
    %v2164 = vadd.f32 0.0, %v2163
    %v2165 = vpop.f32.mrb[0].mxu0
    %v2166 = vpop.f32.mrb[0].mxu0
    %v2167 = vpop.f32.mrb[0].mxu0
    %2168 = vdwg.mxu0
    %2169 = vrot.lane.b32.xlu0 %v1532, 64
    %v2170 = vpop.permute.xlu0 %2169
    %v2172 = vsel %vm210, %v2020, 0
    %v2175 = vsel %vm701, %v2170, 0
    %2177 = vmatprep.subr.bf16.mxu0 0
    %2178 = vmatpush1.bf16.msra.mxu0 %v2175
    %2179 = vmatprep.subr.bf16.mxu0 0
    %2180 = vmatpush1.bf16.msra.mxu0 0
    %2181 = vmatprep.subr.bf16.mxu0 0
    %2182 = vmatpush1.bf16.msra.mxu0 0
    %2183 = vmatprep.subr.bf16.mxu0 0
    %2184 = vmatpush1.bf16.msra.mxu0 0
    %2185 = vmatprep.subr.bf16.mxu0 0
    %2186 = vmatpush1.bf16.msra.mxu0 0
    %2187 = vmatprep.subr.bf16.mxu0 0
    %2188 = vmatpush1.bf16.msra.mxu0 0
    %2189 = vmatprep.subr.bf16.mxu0 0
    %2190 = vmatpush1.bf16.msra.mxu0 0
    %2191 = vmatprep.subr.bf16.mxu0 0
    %2192 = vmatpush1.bf16.msra.mxu0 0
    %2193 = vmatprep.subr.bf16.mxu0 0
    %2194 = vmatpush1.bf16.msra.mxu0 0
    %2195 = vmatprep.subr.bf16.mxu0 0
    %2196 = vmatpush1.bf16.msra.mxu0 0
    %2197 = vmatprep.subr.bf16.mxu0 0
    %2198 = vmatpush1.bf16.msra.mxu0 0
    %2199 = vmatprep.subr.bf16.mxu0 0
    %2200 = vmatpush1.bf16.msra.mxu0 0
    %2201 = vmatprep.subr.bf16.mxu0 0
    %2202 = vmatpush1.bf16.msra.mxu0 0
    %2203 = vmatprep.subr.bf16.mxu0 0
    %2204 = vmatpush1.bf16.msra.mxu0 0
    %2205 = vmatprep.subr.bf16.mxu0 0
    %2206 = vmatpush1.bf16.msra.mxu0 0
    %2207 = vmatprep.subr.bf16.mxu0 0
    %2208 = vmatpush1.bf16.msra.mxu0 0
    %2209 = vmatprep.mubr.bf16.mxu0 0
    %2210 = vmatmul.mubr.bf16.gmra.mrb[0].mxu0 %v2172
    %v2211 = vpop.f32.mrb[0].mxu0
    %v2212 = vadd.f32 0.0, %v2211
    %v2213 = vpop.f32.mrb[0].mxu0
    %v2214 = vpop.f32.mrb[0].mxu0
    %v2215 = vpop.f32.mrb[0].mxu0
    %2216 = vdwg.mxu0
    %2217 = vrot.lane.b32.xlu0 %v1533, 64
    %v2218 = vpop.permute.xlu0 %2217
    %v2220 = vsel %vm210, %v2021, 0
    %v2223 = vsel %vm701, %v2218, 0
    %2225 = vmatprep.subr.bf16.mxu0 0
    %2226 = vmatpush1.bf16.msra.mxu0 %v2223
    %2227 = vmatprep.subr.bf16.mxu0 0
    %2228 = vmatpush1.bf16.msra.mxu0 0
    %2229 = vmatprep.subr.bf16.mxu0 0
    %2230 = vmatpush1.bf16.msra.mxu0 0
    %2231 = vmatprep.subr.bf16.mxu0 0
    %2232 = vmatpush1.bf16.msra.mxu0 0
    %2233 = vmatprep.subr.bf16.mxu0 0
    %2234 = vmatpush1.bf16.msra.mxu0 0
    %2235 = vmatprep.subr.bf16.mxu0 0
    %2236 = vmatpush1.bf16.msra.mxu0 0
    %2237 = vmatprep.subr.bf16.mxu0 0
    %2238 = vmatpush1.bf16.msra.mxu0 0
    %2239 = vmatprep.subr.bf16.mxu0 0
    %2240 = vmatpush1.bf16.msra.mxu0 0
    %2241 = vmatprep.subr.bf16.mxu0 0
    %2242 = vmatpush1.bf16.msra.mxu0 0
    %2243 = vmatprep.subr.bf16.mxu0 0
    %2244 = vmatpush1.bf16.msra.mxu0 0
    %2245 = vmatprep.subr.bf16.mxu0 0
    %2246 = vmatpush1.bf16.msra.mxu0 0
    %2247 = vmatprep.subr.bf16.mxu0 0
    %2248 = vmatpush1.bf16.msra.mxu0 0
    %2249 = vmatprep.subr.bf16.mxu0 0
    %2250 = vmatpush1.bf16.msra.mxu0 0
    %2251 = vmatprep.subr.bf16.mxu0 0
    %2252 = vmatpush1.bf16.msra.mxu0 0
    %2253 = vmatprep.subr.bf16.mxu0 0
    %2254 = vmatpush1.bf16.msra.mxu0 0
    %2255 = vmatprep.subr.bf16.mxu0 0
    %2256 = vmatpush1.bf16.msra.mxu0 0
    %2257 = vmatprep.mubr.bf16.mxu0 0
    %2258 = vmatmul.mubr.bf16.gmra.mrb[0].mxu0 %v2220
    %v2259 = vpop.f32.mrb[0].mxu0
    %v2260 = vadd.f32 0.0, %v2259
    %v2261 = vpop.f32.mrb[0].mxu0
    %v2262 = vpop.f32.mrb[0].mxu0
    %v2263 = vpop.f32.mrb[0].mxu0
    %2264 = vdwg.mxu0
    %2265 = vrot.lane.b32.xlu0 %v1534, 64
    %v2266 = vpop.permute.xlu0 %2265
    %v2268 = vsel %vm210, %v2022, 0
    %v2271 = vsel %vm701, %v2266, 0
    %2273 = vmatprep.subr.bf16.mxu0 0
    %2274 = vmatpush1.bf16.msra.mxu0 %v2271
    %2275 = vmatprep.subr.bf16.mxu0 0
    %2276 = vmatpush1.bf16.msra.mxu0 0
    %2277 = vmatprep.subr.bf16.mxu0 0
    %2278 = vmatpush1.bf16.msra.mxu0 0
    %2279 = vmatprep.subr.bf16.mxu0 0
    %2280 = vmatpush1.bf16.msra.mxu0 0
    %2281 = vmatprep.subr.bf16.mxu0 0
    %2282 = vmatpush1.bf16.msra.mxu0 0
    %2283 = vmatprep.subr.bf16.mxu0 0
    %2284 = vmatpush1.bf16.msra.mxu0 0
    %2285 = vmatprep.subr.bf16.mxu0 0
    %2286 = vmatpush1.bf16.msra.mxu0 0
    %2287 = vmatprep.subr.bf16.mxu0 0
    %2288 = vmatpush1.bf16.msra.mxu0 0
    %2289 = vmatprep.subr.bf16.mxu0 0
    %2290 = vmatpush1.bf16.msra.mxu0 0
    %2291 = vmatprep.subr.bf16.mxu0 0
    %2292 = vmatpush1.bf16.msra.mxu0 0
    %2293 = vmatprep.subr.bf16.mxu0 0
    %2294 = vmatpush1.bf16.msra.mxu0 0
    %2295 = vmatprep.subr.bf16.mxu0 0
    %2296 = vmatpush1.bf16.msra.mxu0 0
    %2297 = vmatprep.subr.bf16.mxu0 0
    %2298 = vmatpush1.bf16.msra.mxu0 0
    %2299 = vmatprep.subr.bf16.mxu0 0
    %2300 = vmatpush1.bf16.msra.mxu0 0
    %2301 = vmatprep.subr.bf16.mxu0 0
    %2302 = vmatpush1.bf16.msra.mxu0 0
    %2303 = vmatprep.subr.bf16.mxu0 0
    %2304 = vmatpush1.bf16.msra.mxu0 0
    %2305 = vmatprep.mubr.bf16.mxu0 0
    %2306 = vmatmul.mubr.bf16.gmra.mrb[0].mxu0 %v2268
    %v2307 = vpop.f32.mrb[0].mxu0
    %v2308 = vadd.f32 0.0, %v2307
    %v2309 = vpop.f32.mrb[0].mxu0
    %v2310 = vpop.f32.mrb[0].mxu0
    %v2311 = vpop.f32.mrb[0].mxu0
    %2312 = vdwg.mxu0
    %2313 = vrot.lane.b32.xlu0 %v1535, 64
    %v2314 = vpop.permute.xlu0 %2313
    %v2316 = vsel %vm210, %v2023, 0
    %v2319 = vsel %vm701, %v2314, 0
    %2321 = vmatprep.subr.bf16.mxu0 0
    %2322 = vmatpush1.bf16.msra.mxu0 %v2319
    %2323 = vmatprep.subr.bf16.mxu0 0
    %2324 = vmatpush1.bf16.msra.mxu0 0
    %2325 = vmatprep.subr.bf16.mxu0 0
    %2326 = vmatpush1.bf16.msra.mxu0 0
    %2327 = vmatprep.subr.bf16.mxu0 0
    %2328 = vmatpush1.bf16.msra.mxu0 0
    %2329 = vmatprep.subr.bf16.mxu0 0
    %2330 = vmatpush1.bf16.msra.mxu0 0
    %2331 = vmatprep.subr.bf16.mxu0 0
    %2332 = vmatpush1.bf16.msra.mxu0 0
    %2333 = vmatprep.subr.bf16.mxu0 0
    %2334 = vmatpush1.bf16.msra.mxu0 0
    %2335 = vmatprep.subr.bf16.mxu0 0
    %2336 = vmatpush1.bf16.msra.mxu0 0
    %2337 = vmatprep.subr.bf16.mxu0 0
    %2338 = vmatpush1.bf16.msra.mxu0 0
    %2339 = vmatprep.subr.bf16.mxu0 0
    %2340 = vmatpush1.bf16.msra.mxu0 0
    %2341 = vmatprep.subr.bf16.mxu0 0
    %2342 = vmatpush1.bf16.msra.mxu0 0
    %2343 = vmatprep.subr.bf16.mxu0 0
    %2344 = vmatpush1.bf16.msra.mxu0 0
    %2345 = vmatprep.subr.bf16.mxu0 0
    %2346 = vmatpush1.bf16.msra.mxu0 0
    %2347 = vmatprep.subr.bf16.mxu0 0
    %2348 = vmatpush1.bf16.msra.mxu0 0
    %2349 = vmatprep.subr.bf16.mxu0 0
    %2350 = vmatpush1.bf16.msra.mxu0 0
    %2351 = vmatprep.subr.bf16.mxu0 0
    %2352 = vmatpush1.bf16.msra.mxu0 0
    %2353 = vmatprep.mubr.bf16.mxu0 0
    %2354 = vmatmul.mubr.bf16.gmra.mrb[0].mxu0 %v2316
    %v2355 = vpop.f32.mrb[0].mxu0
    %v2356 = vadd.f32 0.0, %v2355
    %v2357 = vpop.f32.mrb[0].mxu0
    %v2358 = vpop.f32.mrb[0].mxu0
    %v2359 = vpop.f32.mrb[0].mxu0
    %2360 = vdwg.mxu0
    %2361 = vrot.lane.b32.xlu0 %v1536, 64
    %v2362 = vpop.permute.xlu0 %2361
    %v2364 = vsel %vm210, %v2024, 0
    %v2367 = vsel %vm701, %v2362, 0
    %2369 = vmatprep.subr.bf16.mxu0 0
    %2370 = vmatpush1.bf16.msra.mxu0 %v2367
    %2371 = vmatprep.subr.bf16.mxu0 0
    %2372 = vmatpush1.bf16.msra.mxu0 0
    %2373 = vmatprep.subr.bf16.mxu0 0
    %2374 = vmatpush1.bf16.msra.mxu0 0
    %2375 = vmatprep.subr.bf16.mxu0 0
    %2376 = vmatpush1.bf16.msra.mxu0 0
    %2377 = vmatprep.subr.bf16.mxu0 0
    %2378 = vmatpush1.bf16.msra.mxu0 0
    %2379 = vmatprep.subr.bf16.mxu0 0
    %2380 = vmatpush1.bf16.msra.mxu0 0
    %2381 = vmatprep.subr.bf16.mxu0 0
    %2382 = vmatpush1.bf16.msra.mxu0 0
    %2383 = vmatprep.subr.bf16.mxu0 0
    %2384 = vmatpush1.bf16.msra.mxu0 0
    %2385 = vmatprep.subr.bf16.mxu0 0
    %2386 = vmatpush1.bf16.msra.mxu0 0
    %2387 = vmatprep.subr.bf16.mxu0 0
    %2388 = vmatpush1.bf16.msra.mxu0 0
    %2389 = vmatprep.subr.bf16.mxu0 0
    %2390 = vmatpush1.bf16.msra.mxu0 0
    %2391 = vmatprep.subr.bf16.mxu0 0
    %2392 = vmatpush1.bf16.msra.mxu0 0
    %2393 = vmatprep.subr.bf16.mxu0 0
    %2394 = vmatpush1.bf16.msra.mxu0 0
    %2395 = vmatprep.subr.bf16.mxu0 0
    %2396 = vmatpush1.bf16.msra.mxu0 0
    %2397 = vmatprep.subr.bf16.mxu0 0
    %2398 = vmatpush1.bf16.msra.mxu0 0
    %2399 = vmatprep.subr.bf16.mxu0 0
    %2400 = vmatpush1.bf16.msra.mxu0 0
    %2401 = vmatprep.mubr.bf16.mxu0 0
    %2402 = vmatmul.mubr.bf16.gmra.mrb[0].mxu0 %v2364
    %v2403 = vpop.f32.mrb[0].mxu0
    %v2404 = vadd.f32 0.0, %v2403
    %v2405 = vpop.f32.mrb[0].mxu0
    %v2406 = vpop.f32.mrb[0].mxu0
    %v2407 = vpop.f32.mrb[0].mxu0
    %2408 = vdwg.mxu0
    %2411 = vrot.lane.b32.xlu0 %v2164, 8
    %v2412 = vpop.permute.xlu0 %2411
    %2413 = vrot.lane.b32.xlu0 %v2212, 8
    %v2414 = vpop.permute.xlu0 %2413
    %2419 = vrot.lane.b32.xlu0 %v2260, 16
    %v2420 = vpop.permute.xlu0 %2419
    %2421 = vrot.lane.b32.xlu0 %v2308, 16
    %v2422 = vpop.permute.xlu0 %2421
    %2427 = vrot.lane.b32.xlu0 %v2356, 24
    %v2428 = vpop.permute.xlu0 %2427
    %2429 = vrot.lane.b32.xlu0 %v2404, 24
    %v2430 = vpop.permute.xlu0 %2429
    %v2433 = vsel %vm210, %v2068, %v2412
    %v2434 = vsel %vm210, %v2116, %v2414
    %v2435 = vsel %vm1107, %v2433, %v2420
    %v2436 = vsel %vm1107, %v2434, %v2422
    %v2437 = vsel %vm1110, %v2435, %v2428
    %v2438 = vsel %vm1110, %v2436, %v2430
    %v2439 = vpack.c.bf16 %v2438, %v2437
    %v2440 = vld [vmem:[#allocation7 + $0x80] sm:$0xf]
    %v2441 = vld [vmem:[#allocation7 + $0x84] sm:$0xf]
    %v2442 = vld [vmem:[#allocation7 + $0x88] sm:$0xf]
    %v2443 = vld [vmem:[#allocation7 + $0x8c] sm:$0xf]
    %v2444 = vld [vmem:[#allocation8 + $0x49] sm:$0x1]
    %v2445 = vlaneseq
    %v2446 = vshrl.u32 %v2445, 7
    %v2447 = vsub.s32 0, %v2446
    %v2448 = vrot.slane %v2444, %v2447
    %v2453 = vunpack.c.l.b16 %v2440
    %v2454 = vunpack.c.l.b16 %v2441
    %v2455 = vunpack.c.l.b16 %v2442
    %v2456 = vunpack.c.l.b16 %v2443
    %v2457 = vpack.c.b16 %v2454, %v2453
    %v2458 = vpack.c.b16 %v2456, %v2455
    %v2462 = vsel %vm134, %v2439, 0
    %2464 = vmatprep.subr.bf16.mxu0 0
    %2465 = vmatpush1.bf16.msra.mxu0 %v2457
    %2466 = vmatprep.subr.bf16.mxu0 0
    %2467 = vmatpush1.bf16.msra.mxu0 %v2458
    %2468 = vmatprep.subr.bf16.mxu0 0
    %2469 = vmatpush1.bf16.msra.mxu0 0
    %2470 = vmatprep.subr.bf16.mxu0 0
    %2471 = vmatpush1.bf16.msra.mxu0 0
    %2472 = vmatprep.subr.bf16.mxu0 0
    %2473 = vmatpush1.bf16.msra.mxu0 0
    %2474 = vmatprep.subr.bf16.mxu0 0
    %2475 = vmatpush1.bf16.msra.mxu0 0
    %2476 = vmatprep.subr.bf16.mxu0 0
    %2477 = vmatpush1.bf16.msra.mxu0 0
    %2478 = vmatprep.subr.bf16.mxu0 0
    %2479 = vmatpush1.bf16.msra.mxu0 0
    %2480 = vmatprep.subr.bf16.mxu0 0
    %2481 = vmatpush1.bf16.msra.mxu0 0
    %2482 = vmatprep.subr.bf16.mxu0 0
    %2483 = vmatpush1.bf16.msra.mxu0 0
    %2484 = vmatprep.subr.bf16.mxu0 0
    %2485 = vmatpush1.bf16.msra.mxu0 0
    %2486 = vmatprep.subr.bf16.mxu0 0
    %2487 = vmatpush1.bf16.msra.mxu0 0
    %2488 = vmatprep.subr.bf16.mxu0 0
    %2489 = vmatpush1.bf16.msra.mxu0 0
    %2490 = vmatprep.subr.bf16.mxu0 0
    %2491 = vmatpush1.bf16.msra.mxu0 0
    %2492 = vmatprep.subr.bf16.mxu0 0
    %2493 = vmatpush1.bf16.msra.mxu0 0
    %2494 = vmatprep.subr.bf16.mxu0 0
    %2495 = vmatpush1.bf16.msra.mxu0 0
    %2496 = vmatprep.mubr.bf16.mxu0 0
    %2497 = vmatmul.mubr.bf16.gmra.mrb[0].mxu0 %v2462
    %v2498 = vpop.f32.mrb[0].mxu0
    %v2499 = vadd.f32 %v2448, %v2498
    %v2500 = vpop.f32.mrb[0].mxu0
    %v2501 = vpop.f32.mrb[0].mxu0
    %v2502 = vadd.f32 %v2448, %v2501
    %v2503 = vpop.f32.mrb[0].mxu0
    %2504 = vdwg.mxu0
    %v2505 = vadd.f32 %v1441, %v2499
    %v2506 = vadd.f32 %v1442, %v2502
    %v2507 = vsel %vm134, %v2505, 0.0
    %2508 = vadd.xlane.f32.xlu0 %v2507
    %v2509 = vpop.xlane.xlu0 %2508
    %v2510 = vsel %vm134, %v2506, 0.0
    %2511 = vadd.xlane.f32.xlu0 %v2510
    %v2512 = vpop.xlane.xlu0 %2511
    %v2513 = vmul.f32 %v2509, %v1187
    %v2514 = vmul.f32 %v2512, %v1187
    %v2515 = vsub.f32 %v2505, %v2513
    %v2516 = vsub.f32 %v2506, %v2514
    %v2517 = vmul.f32 %v2515, %v2515
    %v2518 = vmul.f32 %v2516, %v2516
    %v2519 = vsel %vm134, %v2517, 0.0
    %2520 = vadd.xlane.f32.xlu0 %v2519
    %v2521 = vpop.xlane.xlu0 %2520
    %v2522 = vsel %vm134, %v2518, 0.0
    %2523 = vadd.xlane.f32.xlu0 %v2522
    %v2524 = vpop.xlane.xlu0 %2523
    %v2525 = vmul.f32 %v2521, %v1187
    %v2526 = vmul.f32 %v2524, %v1187
    %v2527 = vadd.f32 %v2525, 1e-05
    %v2528 = vadd.f32 %v2526, 1e-05
    %v2529 = vrsqrt.pop %v2527
    %v2530 = vrsqrt.pop %v2528
    %v2531 = vmul.f32 %v2515, %v2529
    %v2532 = vmul.f32 %v2516, %v2530
    %v2533 = vld [vmem:[#allocation8 + $0x4c] sm:$0x1]
    %v2534 = vlaneseq
    %v2535 = vshrl.u32 %v2534, 7
    %v2536 = vsub.s32 0, %v2535
    %v2537 = vrot.slane %v2533, %v2536
    %v2538 = vmul.f32 %v2531, %v2537
    %v2539 = vmul.f32 %v2532, %v2537
    %v2540 = vld [vmem:[#allocation8 + $0x4d] sm:$0x1]
    %v2541 = vlaneseq
    %v2542 = vshrl.u32 %v2541, 7
    %v2543 = vsub.s32 0, %v2542
    %v2544 = vrot.slane %v2540, %v2543
    %v2545 = vadd.f32 %v2538, %v2544
    %v2546 = vadd.f32 %v2539, %v2544
    %v2547 = vpack.c.bf16 %v2546, %v2545
    %v2548 = vld [vmem:[#allocation7 + $0x90] sm:$0xf]
    %v2549 = vld [vmem:[#allocation7 + $0x94] sm:$0xf]
    %v2550 = vld [vmem:[#allocation7 + $0x98] sm:$0xf]
    %v2551 = vld [vmem:[#allocation7 + $0x9c] sm:$0xf]
    %v2552 = vld [vmem:[#allocation8 + $0x4a] sm:$0x1]
    %v2553 = vlaneseq
    %v2554 = vshrl.u32 %v2553, 7
    %v2555 = vsub.s32 0, %v2554
    %v2556 = vrot.slane %v2552, %v2555
    %v2561 = vunpack.c.l.b16 %v2548
    %v2562 = vunpack.c.l.b16 %v2549
    %v2563 = vunpack.c.l.b16 %v2550
    %v2564 = vunpack.c.l.b16 %v2551
    %v2565 = vpack.c.b16 %v2562, %v2561
    %v2566 = vpack.c.b16 %v2564, %v2563
    %v2570 = vsel %vm134, %v2547, 0
    %2572 = vmatprep.subr.bf16.mxu0 0
    %2573 = vmatpush1.bf16.msra.mxu0 %v2565
    %2574 = vmatprep.subr.bf16.mxu0 0
    %2575 = vmatpush1.bf16.msra.mxu0 %v2566
    %2576 = vmatprep.subr.bf16.mxu0 0
    %2577 = vmatpush1.bf16.msra.mxu0 0
    %2578 = vmatprep.subr.bf16.mxu0 0
    %2579 = vmatpush1.bf16.msra.mxu0 0
    %2580 = vmatprep.subr.bf16.mxu0 0
    %2581 = vmatpush1.bf16.msra.mxu0 0
    %2582 = vmatprep.subr.bf16.mxu0 0
    %2583 = vmatpush1.bf16.msra.mxu0 0
    %2584 = vmatprep.subr.bf16.mxu0 0
    %2585 = vmatpush1.bf16.msra.mxu0 0
    %2586 = vmatprep.subr.bf16.mxu0 0
    %2587 = vmatpush1.bf16.msra.mxu0 0
    %2588 = vmatprep.subr.bf16.mxu0 0
    %2589 = vmatpush1.bf16.msra.mxu0 0
    %2590 = vmatprep.subr.bf16.mxu0 0
    %2591 = vmatpush1.bf16.msra.mxu0 0
    %2592 = vmatprep.subr.bf16.mxu0 0
    %2593 = vmatpush1.bf16.msra.mxu0 0
    %2594 = vmatprep.subr.bf16.mxu0 0
    %2595 = vmatpush1.bf16.msra.mxu0 0
    %2596 = vmatprep.subr.bf16.mxu0 0
    %2597 = vmatpush1.bf16.msra.mxu0 0
    %2598 = vmatprep.subr.bf16.mxu0 0
    %2599 = vmatpush1.bf16.msra.mxu0 0
    %2600 = vmatprep.subr.bf16.mxu0 0
    %2601 = vmatpush1.bf16.msra.mxu0 0
    %2602 = vmatprep.subr.bf16.mxu0 0
    %2603 = vmatpush1.bf16.msra.mxu0 0
    %2604 = vmatprep.mubr.bf16.mxu0 0
    %2605 = vmatmul.mubr.bf16.gmra.mrb[0].mxu0 %v2570
    %v2606 = vpop.f32.mrb[0].mxu0
    %v2607 = vadd.f32 %v2556, %v2606
    %v2608 = vpop.f32.mrb[0].mxu0
    %v2609 = vpop.f32.mrb[0].mxu0
    %v2610 = vadd.f32 %v2556, %v2609
    %v2611 = vpop.f32.mrb[0].mxu0
    %2612 = vdwg.mxu0
    %v2613 = vmax.f32 %v2607, 0.0
    %v2614 = vmax.f32 %v2610, 0.0
    %v2615 = vpack.c.bf16 %v2614, %v2613
    %v2616 = vld [vmem:[#allocation7 + $0xa0] sm:$0xf]
    %v2617 = vld [vmem:[#allocation7 + $0xa4] sm:$0xf]
    %v2618 = vld [vmem:[#allocation7 + $0xa8] sm:$0xf]
    %v2619 = vld [vmem:[#allocation7 + $0xac] sm:$0xf]
    %v2620 = vld [vmem:[#allocation7 + $0xb0] sm:$0xf]
    %v2621 = vld [vmem:[#allocation7 + $0xb4] sm:$0xf]
    %v2622 = vld [vmem:[#allocation7 + $0xb8] sm:$0xf]
    %v2623 = vld [vmem:[#allocation7 + $0xbc] sm:$0xf]
    %v2624 = vld [vmem:[#allocation7 + $0xc0] sm:$0xf]
    %v2625 = vld [vmem:[#allocation7 + $0xc4] sm:$0xf]
    %v2626 = vld [vmem:[#allocation7 + $0xc8] sm:$0xf]
    %v2627 = vld [vmem:[#allocation7 + $0xcc] sm:$0xf]
    %v2628 = vld [vmem:[#allocation7 + $0xd0] sm:$0xf]
    %v2629 = vld [vmem:[#allocation7 + $0xd4] sm:$0xf]
    %v2630 = vld [vmem:[#allocation7 + $0xd8] sm:$0xf]
    %v2631 = vld [vmem:[#allocation7 + $0xdc] sm:$0xf]
    %v2632 = vld [vmem:[#allocation8 + $0x4b] sm:$0x1]
    %v2633 = vlaneseq
    %v2634 = vshrl.u32 %v2633, 7
    %v2635 = vsub.s32 0, %v2634
    %v2636 = vrot.slane %v2632, %v2635
    %v2653 = vunpack.c.l.b16 %v2616
    %v2654 = vunpack.c.l.b16 %v2617
    %v2655 = vunpack.c.l.b16 %v2618
    %v2656 = vunpack.c.l.b16 %v2619
    %v2657 = vunpack.c.l.b16 %v2620
    %v2658 = vunpack.c.l.b16 %v2621
    %v2659 = vunpack.c.l.b16 %v2622
    %v2660 = vunpack.c.l.b16 %v2623
    %v2661 = vunpack.c.l.b16 %v2624
    %v2662 = vunpack.c.l.b16 %v2625
    %v2663 = vunpack.c.l.b16 %v2626
    %v2664 = vunpack.c.l.b16 %v2627
    %v2665 = vunpack.c.l.b16 %v2628
    %v2666 = vunpack.c.l.b16 %v2629
    %v2667 = vunpack.c.l.b16 %v2630
    %v2668 = vunpack.c.l.b16 %v2631
    %v2669 = vpack.c.b16 %v2654, %v2653
    %v2670 = vpack.c.b16 %v2656, %v2655
    %v2671 = vpack.c.b16 %v2658, %v2657
    %v2672 = vpack.c.b16 %v2660, %v2659
    %v2673 = vpack.c.b16 %v2662, %v2661
    %v2674 = vpack.c.b16 %v2664, %v2663
    %v2675 = vpack.c.b16 %v2666, %v2665
    %v2676 = vpack.c.b16 %v2668, %v2667
    %2685 = vmatprep.subr.bf16.mxu0 0
    %2686 = vmatpush1.bf16.msra.mxu0 %v2669
    %2687 = vmatprep.subr.bf16.mxu0 0
    %2688 = vmatpush1.bf16.msra.mxu0 %v2670
    %2689 = vmatprep.subr.bf16.mxu0 0
    %2690 = vmatpush1.bf16.msra.mxu0 %v2671
    %2691 = vmatprep.subr.bf16.mxu0 0
    %2692 = vmatpush1.bf16.msra.mxu0 %v2672
    %2693 = vmatprep.subr.bf16.mxu0 0
    %2694 = vmatpush1.bf16.msra.mxu0 %v2673
    %2695 = vmatprep.subr.bf16.mxu0 0
    %2696 = vmatpush1.bf16.msra.mxu0 %v2674
    %2697 = vmatprep.subr.bf16.mxu0 0
    %2698 = vmatpush1.bf16.msra.mxu0 %v2675
    %2699 = vmatprep.subr.bf16.mxu0 0
    %2700 = vmatpush1.bf16.msra.mxu0 %v2676
    %2701 = vmatprep.subr.bf16.mxu0 0
    %2702 = vmatpush1.bf16.msra.mxu0 0
    %2703 = vmatprep.subr.bf16.mxu0 0
    %2704 = vmatpush1.bf16.msra.mxu0 0
    %2705 = vmatprep.subr.bf16.mxu0 0
    %2706 = vmatpush1.bf16.msra.mxu0 0
    %2707 = vmatprep.subr.bf16.mxu0 0
    %2708 = vmatpush1.bf16.msra.mxu0 0
    %2709 = vmatprep.subr.bf16.mxu0 0
    %2710 = vmatpush1.bf16.msra.mxu0 0
    %2711 = vmatprep.subr.bf16.mxu0 0
    %2712 = vmatpush1.bf16.msra.mxu0 0
    %2713 = vmatprep.subr.bf16.mxu0 0
    %2714 = vmatpush1.bf16.msra.mxu0 0
    %2715 = vmatprep.subr.bf16.mxu0 0
    %2716 = vmatpush1.bf16.msra.mxu0 0
    %2717 = vmatprep.mubr.bf16.mxu0 0
    %2718 = vmatmul.mubr.bf16.gmra.mrb[0].mxu0 %v2615
    %v2719 = vpop.f32.mrb[0].mxu0
    %v2720 = vadd.f32 %v2636, %v2719
    %v2721 = vpop.f32.mrb[0].mxu0
    %v2722 = vpop.f32.mrb[0].mxu0
    %v2723 = vadd.f32 %v2636, %v2722
    %v2724 = vpop.f32.mrb[0].mxu0
    %2725 = vdwg.mxu0
    %v2726 = vadd.f32 %v2545, %v2720
    %v2727 = vadd.f32 %v2546, %v2723
    %v2728 = vsel %vm134, %v2726, 0.0
    %2729 = vadd.xlane.f32.xlu0 %v2728
    %v2730 = vpop.xlane.xlu0 %2729
    %v2731 = vsel %vm134, %v2727, 0.0
    %2732 = vadd.xlane.f32.xlu0 %v2731
    %v2733 = vpop.xlane.xlu0 %2732
    %v2734 = vmul.f32 %v2730, %v1187
    %v2735 = vmul.f32 %v2733, %v1187
    %v2736 = vsub.f32 %v2726, %v2734
    %v2737 = vsub.f32 %v2727, %v2735
    %v2738 = vmul.f32 %v2736, %v2736
    %v2739 = vmul.f32 %v2737, %v2737
    %v2740 = vsel %vm134, %v2738, 0.0
    %2741 = vadd.xlane.f32.xlu0 %v2740
    %v2742 = vpop.xlane.xlu0 %2741
    %v2743 = vsel %vm134, %v2739, 0.0
    %2744 = vadd.xlane.f32.xlu0 %v2743
    %v2745 = vpop.xlane.xlu0 %2744
    %v2746 = vmul.f32 %v2742, %v1187
    %v2747 = vmul.f32 %v2745, %v1187
    %v2748 = vadd.f32 %v2746, 1e-05
    %v2749 = vadd.f32 %v2747, 1e-05
    %v2750 = vrsqrt.pop %v2748
    %v2751 = vrsqrt.pop %v2749
    %v2752 = vmul.f32 %v2736, %v2750
    %v2753 = vmul.f32 %v2737, %v2751
    %v2754 = vld [vmem:[#allocation8 + $0x4e] sm:$0x1]
    %v2755 = vlaneseq
    %v2756 = vshrl.u32 %v2755, 7
    %v2757 = vsub.s32 0, %v2756
    %v2758 = vrot.slane %v2754, %v2757
    %v2759 = vmul.f32 %v2752, %v2758
    %v2760 = vmul.f32 %v2753, %v2758
    %v2761 = vld [vmem:[#allocation8 + $0x4f] sm:$0x1]
    %v2762 = vlaneseq
    %v2763 = vshrl.u32 %v2762, 7
    %v2764 = vsub.s32 0, %v2763
    %v2765 = vrot.slane %v2761, %v2764
    %v2766 = vadd.f32 %v2759, %v2765
    %v2767 = vadd.f32 %v2760, %v2765
    %v2768 = vsel %vm134, %v2766, 0.0
    %2769 = vadd.xlane.f32.xlu0 %v2768
    %v2770 = vpop.xlane.xlu0 %2769
    %v2771 = vsel %vm134, %v2767, 0.0
    %2772 = vadd.xlane.f32.xlu0 %v2771
    %v2773 = vpop.xlane.xlu0 %2772
    %v2774 = vmul.f32 %v2770, %v1187
    %v2775 = vmul.f32 %v2773, %v1187
    %v2776 = vsub.f32 %v2766, %v2774
    %v2777 = vsub.f32 %v2767, %v2775
    %v2778 = vmul.f32 %v2776, %v2776
    %v2779 = vmul.f32 %v2777, %v2777
    %v2780 = vsel %vm134, %v2778, 0.0
    %2781 = vadd.xlane.f32.xlu0 %v2780
    %v2782 = vpop.xlane.xlu0 %2781
    %v2783 = vsel %vm134, %v2779, 0.0
    %2784 = vadd.xlane.f32.xlu0 %v2783
    %v2785 = vpop.xlane.xlu0 %2784
    %v2786 = vmul.f32 %v2782, %v1187
    %v2787 = vmul.f32 %v2785, %v1187
    %v2788 = vadd.f32 %v2786, 1e-05
    %v2789 = vadd.f32 %v2787, 1e-05
    %v2790 = vrsqrt.pop %v2788
    %v2791 = vrsqrt.pop %v2789
    %v2792 = vmul.f32 %v2776, %v2790
    %v2793 = vmul.f32 %v2777, %v2791
    %v2794 = vld [vmem:[#allocation8 + $0x50] sm:$0x1]
    %v2795 = vlaneseq
    %v2796 = vshrl.u32 %v2795, 7
    %v2797 = vsub.s32 0, %v2796
    %v2798 = vrot.slane %v2794, %v2797
    %v2799 = vmul.f32 %v2792, %v2798
    %v2800 = vmul.f32 %v2793, %v2798
    %v2801 = vld [vmem:[#allocation8 + $0x51] sm:$0x1]
    %v2802 = vlaneseq
    %v2803 = vshrl.u32 %v2802, 7
    %v2804 = vsub.s32 0, %v2803
    %v2805 = vrot.slane %v2801, %v2804
    %v2806 = vadd.f32 %v2799, %v2805
    %v2807 = vadd.f32 %v2800, %v2805
    %v2808 = vpack.c.bf16 %v2807, %v2806
    %v2809 = vld [vmem:[#allocation7 + $0xe0] sm:$0xf]
    %v2810 = vld [vmem:[#allocation7 + $0xe4] sm:$0xf]
    %v2811 = vld [vmem:[#allocation7 + $0xe8] sm:$0xf]
    %v2812 = vld [vmem:[#allocation7 + $0xec] sm:$0xf]
    %v2813 = vld [vmem:[#allocation8 + $0x52] sm:$0x1]
    %v2814 = vlaneseq
    %v2815 = vshrl.u32 %v2814, 7
    %v2816 = vsub.s32 0, %v2815
    %v2817 = vrot.slane %v2813, %v2816
    %v2822 = vunpack.c.l.b16 %v2809
    %v2823 = vunpack.c.l.b16 %v2810
    %v2824 = vunpack.c.l.b16 %v2811
    %v2825 = vunpack.c.l.b16 %v2812
    %v2826 = vpack.c.b16 %v2823, %v2822
    %v2827 = vpack.c.b16 %v2825, %v2824
    %v2831 = vsel %vm134, %v2808, 0
    %2833 = vmatprep.subr.bf16.mxu0 0
    %2834 = vmatpush1.bf16.msra.mxu0 %v2826
    %2835 = vmatprep.subr.bf16.mxu0 0
    %2836 = vmatpush1.bf16.msra.mxu0 %v2827
    %2837 = vmatprep.subr.bf16.mxu0 0
    %2838 = vmatpush1.bf16.msra.mxu0 0
    %2839 = vmatprep.subr.bf16.mxu0 0
    %2840 = vmatpush1.bf16.msra.mxu0 0
    %2841 = vmatprep.subr.bf16.mxu0 0
    %2842 = vmatpush1.bf16.msra.mxu0 0
    %2843 = vmatprep.subr.bf16.mxu0 0
    %2844 = vmatpush1.bf16.msra.mxu0 0
    %2845 = vmatprep.subr.bf16.mxu0 0
    %2846 = vmatpush1.bf16.msra.mxu0 0
    %2847 = vmatprep.subr.bf16.mxu0 0
    %2848 = vmatpush1.bf16.msra.mxu0 0
    %2849 = vmatprep.subr.bf16.mxu0 0
    %2850 = vmatpush1.bf16.msra.mxu0 0
    %2851 = vmatprep.subr.bf16.mxu0 0
    %2852 = vmatpush1.bf16.msra.mxu0 0
    %2853 = vmatprep.subr.bf16.mxu0 0
    %2854 = vmatpush1.bf16.msra.mxu0 0
    %2855 = vmatprep.subr.bf16.mxu0 0
    %2856 = vmatpush1.bf16.msra.mxu0 0
    %2857 = vmatprep.subr.bf16.mxu0 0
    %2858 = vmatpush1.bf16.msra.mxu0 0
    %2859 = vmatprep.subr.bf16.mxu0 0
    %2860 = vmatpush1.bf16.msra.mxu0 0
    %2861 = vmatprep.subr.bf16.mxu0 0
    %2862 = vmatpush1.bf16.msra.mxu0 0
    %2863 = vmatprep.subr.bf16.mxu0 0
    %2864 = vmatpush1.bf16.msra.mxu0 0
    %2865 = vmatprep.mubr.bf16.mxu0 0
    %2866 = vmatmul.mubr.bf16.gmra.mrb[0].mxu0 %v2831
    %v2867 = vpop.f32.mrb[0].mxu0
    %v2868 = vadd.f32 %v2817, %v2867
    %v2869 = vpop.f32.mrb[0].mxu0
    %v2870 = vpop.f32.mrb[0].mxu0
    %v2871 = vadd.f32 %v2817, %v2870
    %v2872 = vpop.f32.mrb[0].mxu0
    %2873 = vdwg.mxu0
    %v2874 = vld [vmem:[#allocation5] sm:$0xff]
    %v2875 = vld [vmem:[#allocation5 + $0x8] sm:$0xff]
    %v2876 = vadd.f32 %v2874, %v103
    %v2877 = vadd.f32 %v2875, %v107
    %v2878 = vpack.c.bf16 %v2877, %v2876
    %v2879 = vld [vmem:[#allocation7 + $0xf0] sm:$0xf]
    %v2880 = vld [vmem:[#allocation7 + $0xf4] sm:$0xf]
    %v2881 = vld [vmem:[#allocation7 + $0xf8] sm:$0xf]
    %v2882 = vld [vmem:[#allocation7 + $0xfc] sm:$0xf]
    %v2883 = vld [vmem:[#allocation8 + $0x53] sm:$0x1]
    %v2884 = vlaneseq
    %v2885 = vshrl.u32 %v2884, 7
    %v2886 = vsub.s32 0, %v2885
    %v2887 = vrot.slane %v2883, %v2886
    %v2892 = vunpack.c.l.b16 %v2879
    %v2893 = vunpack.c.l.b16 %v2880
    %v2894 = vunpack.c.l.b16 %v2881
    %v2895 = vunpack.c.l.b16 %v2882
    %v2896 = vpack.c.b16 %v2893, %v2892
    %v2897 = vpack.c.b16 %v2895, %v2894
    %v2901 = vsel %vm134, %v2878, 0
    %2903 = vmatprep.subr.bf16.mxu0 0
    %2904 = vmatpush1.bf16.msra.mxu0 %v2896
    %2905 = vmatprep.subr.bf16.mxu0 0
    %2906 = vmatpush1.bf16.msra.mxu0 %v2897
    %2907 = vmatprep.subr.bf16.mxu0 0
    %2908 = vmatpush1.bf16.msra.mxu0 0
    %2909 = vmatprep.subr.bf16.mxu0 0
    %2910 = vmatpush1.bf16.msra.mxu0 0
    %2911 = vmatprep.subr.bf16.mxu0 0
    %2912 = vmatpush1.bf16.msra.mxu0 0
    %2913 = vmatprep.subr.bf16.mxu0 0
    %2914 = vmatpush1.bf16.msra.mxu0 0
    %2915 = vmatprep.subr.bf16.mxu0 0
    %2916 = vmatpush1.bf16.msra.mxu0 0
    %2917 = vmatprep.subr.bf16.mxu0 0
    %2918 = vmatpush1.bf16.msra.mxu0 0
    %2919 = vmatprep.subr.bf16.mxu0 0
    %2920 = vmatpush1.bf16.msra.mxu0 0
    %2921 = vmatprep.subr.bf16.mxu0 0
    %2922 = vmatpush1.bf16.msra.mxu0 0
    %2923 = vmatprep.subr.bf16.mxu0 0
    %2924 = vmatpush1.bf16.msra.mxu0 0
    %2925 = vmatprep.subr.bf16.mxu0 0
    %2926 = vmatpush1.bf16.msra.mxu0 0
    %2927 = vmatprep.subr.bf16.mxu0 0
    %2928 = vmatpush1.bf16.msra.mxu0 0
    %2929 = vmatprep.subr.bf16.mxu0 0
    %2930 = vmatpush1.bf16.msra.mxu0 0
    %2931 = vmatprep.subr.bf16.mxu0 0
    %2932 = vmatpush1.bf16.msra.mxu0 0
    %2933 = vmatprep.subr.bf16.mxu0 0
    %2934 = vmatpush1.bf16.msra.mxu0 0
    %2935 = vmatprep.mubr.bf16.mxu0 0
    %2936 = vmatmul.mubr.bf16.gmra.mrb[0].mxu0 %v2901
    %v2937 = vpop.f32.mrb[0].mxu0
    %v2938 = vadd.f32 %v2887, %v2937
    %v2939 = vpop.f32.mrb[0].mxu0
    %v2940 = vpop.f32.mrb[0].mxu0
    %v2941 = vadd.f32 %v2887, %v2940
    %v2942 = vpop.f32.mrb[0].mxu0
    %2943 = vdwg.mxu0
    %2946 = vrot.lane.b32.xlu0 %v2938, 120
    %v2947 = vpop.permute.xlu0 %2946
    %2948 = vrot.lane.b32.xlu0 %v2941, 120
    %v2949 = vpop.permute.xlu0 %2948
    %2952 = vrot.lane.b32.xlu0 %v2938, 112
    %v2953 = vpop.permute.xlu0 %2952
    %2954 = vrot.lane.b32.xlu0 %v2941, 112
    %v2955 = vpop.permute.xlu0 %2954
    %2958 = vrot.lane.b32.xlu0 %v2938, 104
    %v2959 = vpop.permute.xlu0 %2958
    %2960 = vrot.lane.b32.xlu0 %v2941, 104
    %v2961 = vpop.permute.xlu0 %2960
    %v2964 = vpack.c.bf16 %v2938, %v2938
    %v2965 = vpack.c.bf16 %v2941, %v2941
    %v2966 = vpack.c.bf16 %v2947, %v2947
    %v2967 = vpack.c.bf16 %v2949, %v2949
    %v2968 = vpack.c.bf16 %v2953, %v2953
    %v2969 = vpack.c.bf16 %v2955, %v2955
    %v2970 = vpack.c.bf16 %v2959, %v2959
    %v2971 = vpack.c.bf16 %v2961, %v2961
    %2973 = vrot.lane.b32.xlu0 %v2964, 96
    %v2974 = vpop.permute.xlu0 %2973
    %v2976 = vsel %vm210, %v2964, 0
    %v2979 = vsel %vm210, %v2974, 0
    %2981 = vmatprep.subr.bf16.mxu0 0
    %2982 = vmatpush1.bf16.xpose.msra.mxu0 %v2979
    %2983 = vmatprep.subr.bf16.mxu0 0
    %2984 = vmatpush1.bf16.xpose.msra.mxu0 0
    %2985 = vmatprep.subr.bf16.mxu0 0
    %2986 = vmatpush1.bf16.xpose.msra.mxu0 0
    %2987 = vmatprep.subr.bf16.mxu0 0
    %2988 = vmatpush1.bf16.xpose.msra.mxu0 0
    %2989 = vmatprep.subr.bf16.mxu0 0
    %2990 = vmatpush1.bf16.xpose.msra.mxu0 0
    %2991 = vmatprep.subr.bf16.mxu0 0
    %2992 = vmatpush1.bf16.xpose.msra.mxu0 0
    %2993 = vmatprep.subr.bf16.mxu0 0
    %2994 = vmatpush1.bf16.xpose.msra.mxu0 0
    %2995 = vmatprep.subr.bf16.mxu0 0
    %2996 = vmatpush1.bf16.xpose.msra.mxu0 0
    %2997 = vmatprep.subr.bf16.mxu0 0
    %2998 = vmatpush1.bf16.xpose.msra.mxu0 0
    %2999 = vmatprep.subr.bf16.mxu0 0
    %3000 = vmatpush1.bf16.xpose.msra.mxu0 0
    %3001 = vmatprep.subr.bf16.mxu0 0
    %3002 = vmatpush1.bf16.xpose.msra.mxu0 0
    %3003 = vmatprep.subr.bf16.mxu0 0
    %3004 = vmatpush1.bf16.xpose.msra.mxu0 0
    %3005 = vmatprep.subr.bf16.mxu0 0
    %3006 = vmatpush1.bf16.xpose.msra.mxu0 0
    %3007 = vmatprep.subr.bf16.mxu0 0
    %3008 = vmatpush1.bf16.xpose.msra.mxu0 0
    %3009 = vmatprep.subr.bf16.mxu0 0
    %3010 = vmatpush1.bf16.xpose.msra.mxu0 0
    %3011 = vmatprep.subr.bf16.mxu0 0
    %3012 = vmatpush1.bf16.xpose.msra.mxu0 0
    %3013 = vmatprep.mubr.bf16.mxu0 0
    %3014 = vmatmul.mubr.bf16.gmra.mrb[0].mxu0 %v2976
    %v3015 = vpop.f32.mrb[0].mxu0
    %v3016 = vadd.f32 0.0, %v3015
    %v3017 = vpop.f32.mrb[0].mxu0
    %v3018 = vpop.f32.mrb[0].mxu0
    %v3019 = vpop.f32.mrb[0].mxu0
    %3020 = vdwg.mxu0
    %3022 = vrot.lane.b32.xlu0 %v2965, 96
    %v3023 = vpop.permute.xlu0 %3022
    %v3025 = vsel %vm210, %v2965, 0
    %v3028 = vsel %vm210, %v3023, 0
    %3030 = vmatprep.subr.bf16.mxu0 0
    %3031 = vmatpush1.bf16.xpose.msra.mxu0 %v3028
    %3032 = vmatprep.subr.bf16.mxu0 0
    %3033 = vmatpush1.bf16.xpose.msra.mxu0 0
    %3034 = vmatprep.subr.bf16.mxu0 0
    %3035 = vmatpush1.bf16.xpose.msra.mxu0 0
    %3036 = vmatprep.subr.bf16.mxu0 0
    %3037 = vmatpush1.bf16.xpose.msra.mxu0 0
    %3038 = vmatprep.subr.bf16.mxu0 0
    %3039 = vmatpush1.bf16.xpose.msra.mxu0 0
    %3040 = vmatprep.subr.bf16.mxu0 0
    %3041 = vmatpush1.bf16.xpose.msra.mxu0 0
    %3042 = vmatprep.subr.bf16.mxu0 0
    %3043 = vmatpush1.bf16.xpose.msra.mxu0 0
    %3044 = vmatprep.subr.bf16.mxu0 0
    %3045 = vmatpush1.bf16.xpose.msra.mxu0 0
    %3046 = vmatprep.subr.bf16.mxu0 0
    %3047 = vmatpush1.bf16.xpose.msra.mxu0 0
    %3048 = vmatprep.subr.bf16.mxu0 0
    %3049 = vmatpush1.bf16.xpose.msra.mxu0 0
    %3050 = vmatprep.subr.bf16.mxu0 0
    %3051 = vmatpush1.bf16.xpose.msra.mxu0 0
    %3052 = vmatprep.subr.bf16.mxu0 0
    %3053 = vmatpush1.bf16.xpose.msra.mxu0 0
    %3054 = vmatprep.subr.bf16.mxu0 0
    %3055 = vmatpush1.bf16.xpose.msra.mxu0 0
    %3056 = vmatprep.subr.bf16.mxu0 0
    %3057 = vmatpush1.bf16.xpose.msra.mxu0 0
    %3058 = vmatprep.subr.bf16.mxu0 0
    %3059 = vmatpush1.bf16.xpose.msra.mxu0 0
    %3060 = vmatprep.subr.bf16.mxu0 0
    %3061 = vmatpush1.bf16.xpose.msra.mxu0 0
    %3062 = vmatprep.mubr.bf16.mxu0 0
    %3063 = vmatmul.mubr.bf16.gmra.mrb[0].mxu0 %v3025
    %v3064 = vpop.f32.mrb[0].mxu0
    %v3065 = vadd.f32 0.0, %v3064
    %v3066 = vpop.f32.mrb[0].mxu0
    %v3067 = vpop.f32.mrb[0].mxu0
    %v3068 = vpop.f32.mrb[0].mxu0
    %3069 = vdwg.mxu0
    %3071 = vrot.lane.b32.xlu0 %v2966, 96
    %v3072 = vpop.permute.xlu0 %3071
    %v3074 = vsel %vm210, %v2966, 0
    %v3077 = vsel %vm210, %v3072, 0
    %3079 = vmatprep.subr.bf16.mxu0 0
    %3080 = vmatpush1.bf16.xpose.msra.mxu0 %v3077
    %3081 = vmatprep.subr.bf16.mxu0 0
    %3082 = vmatpush1.bf16.xpose.msra.mxu0 0
    %3083 = vmatprep.subr.bf16.mxu0 0
    %3084 = vmatpush1.bf16.xpose.msra.mxu0 0
    %3085 = vmatprep.subr.bf16.mxu0 0
    %3086 = vmatpush1.bf16.xpose.msra.mxu0 0
    %3087 = vmatprep.subr.bf16.mxu0 0
    %3088 = vmatpush1.bf16.xpose.msra.mxu0 0
    %3089 = vmatprep.subr.bf16.mxu0 0
    %3090 = vmatpush1.bf16.xpose.msra.mxu0 0
    %3091 = vmatprep.subr.bf16.mxu0 0
    %3092 = vmatpush1.bf16.xpose.msra.mxu0 0
    %3093 = vmatprep.subr.bf16.mxu0 0
    %3094 = vmatpush1.bf16.xpose.msra.mxu0 0
    %3095 = vmatprep.subr.bf16.mxu0 0
    %3096 = vmatpush1.bf16.xpose.msra.mxu0 0
    %3097 = vmatprep.subr.bf16.mxu0 0
    %3098 = vmatpush1.bf16.xpose.msra.mxu0 0
    %3099 = vmatprep.subr.bf16.mxu0 0
    %3100 = vmatpush1.bf16.xpose.msra.mxu0 0
    %3101 = vmatprep.subr.bf16.mxu0 0
    %3102 = vmatpush1.bf16.xpose.msra.mxu0 0
    %3103 = vmatprep.subr.bf16.mxu0 0
    %3104 = vmatpush1.bf16.xpose.msra.mxu0 0
    %3105 = vmatprep.subr.bf16.mxu0 0
    %3106 = vmatpush1.bf16.xpose.msra.mxu0 0
    %3107 = vmatprep.subr.bf16.mxu0 0
    %3108 = vmatpush1.bf16.xpose.msra.mxu0 0
    %3109 = vmatprep.subr.bf16.mxu0 0
    %3110 = vmatpush1.bf16.xpose.msra.mxu0 0
    %3111 = vmatprep.mubr.bf16.mxu0 0
    %3112 = vmatmul.mubr.bf16.gmra.mrb[0].mxu0 %v3074
    %v3113 = vpop.f32.mrb[0].mxu0
    %v3114 = vadd.f32 0.0, %v3113
    %v3115 = vpop.f32.mrb[0].mxu0
    %v3116 = vpop.f32.mrb[0].mxu0
    %v3117 = vpop.f32.mrb[0].mxu0
    %3118 = vdwg.mxu0
    %3120 = vrot.lane.b32.xlu0 %v2967, 96
    %v3121 = vpop.permute.xlu0 %3120
    %v3123 = vsel %vm210, %v2967, 0
    %v3126 = vsel %vm210, %v3121, 0
    %3128 = vmatprep.subr.bf16.mxu0 0
    %3129 = vmatpush1.bf16.xpose.msra.mxu0 %v3126
    %3130 = vmatprep.subr.bf16.mxu0 0
    %3131 = vmatpush1.bf16.xpose.msra.mxu0 0
    %3132 = vmatprep.subr.bf16.mxu0 0
    %3133 = vmatpush1.bf16.xpose.msra.mxu0 0
    %3134 = vmatprep.subr.bf16.mxu0 0
    %3135 = vmatpush1.bf16.xpose.msra.mxu0 0
    %3136 = vmatprep.subr.bf16.mxu0 0
    %3137 = vmatpush1.bf16.xpose.msra.mxu0 0
    %3138 = vmatprep.subr.bf16.mxu0 0
    %3139 = vmatpush1.bf16.xpose.msra.mxu0 0
    %3140 = vmatprep.subr.bf16.mxu0 0
    %3141 = vmatpush1.bf16.xpose.msra.mxu0 0
    %3142 = vmatprep.subr.bf16.mxu0 0
    %3143 = vmatpush1.bf16.xpose.msra.mxu0 0
    %3144 = vmatprep.subr.bf16.mxu0 0
    %3145 = vmatpush1.bf16.xpose.msra.mxu0 0
    %3146 = vmatprep.subr.bf16.mxu0 0
    %3147 = vmatpush1.bf16.xpose.msra.mxu0 0
    %3148 = vmatprep.subr.bf16.mxu0 0
    %3149 = vmatpush1.bf16.xpose.msra.mxu0 0
    %3150 = vmatprep.subr.bf16.mxu0 0
    %3151 = vmatpush1.bf16.xpose.msra.mxu0 0
    %3152 = vmatprep.subr.bf16.mxu0 0
    %3153 = vmatpush1.bf16.xpose.msra.mxu0 0
    %3154 = vmatprep.subr.bf16.mxu0 0
    %3155 = vmatpush1.bf16.xpose.msra.mxu0 0
    %3156 = vmatprep.subr.bf16.mxu0 0
    %3157 = vmatpush1.bf16.xpose.msra.mxu0 0
    %3158 = vmatprep.subr.bf16.mxu0 0
    %3159 = vmatpush1.bf16.xpose.msra.mxu0 0
    %3160 = vmatprep.mubr.bf16.mxu0 0
    %3161 = vmatmul.mubr.bf16.gmra.mrb[0].mxu0 %v3123
    %v3162 = vpop.f32.mrb[0].mxu0
    %v3163 = vadd.f32 0.0, %v3162
    %v3164 = vpop.f32.mrb[0].mxu0
    %v3165 = vpop.f32.mrb[0].mxu0
    %v3166 = vpop.f32.mrb[0].mxu0
    %3167 = vdwg.mxu0
    %3169 = vrot.lane.b32.xlu0 %v2968, 96
    %v3170 = vpop.permute.xlu0 %3169
    %v3172 = vsel %vm210, %v2968, 0
    %v3175 = vsel %vm210, %v3170, 0
    %3177 = vmatprep.subr.bf16.mxu0 0
    %3178 = vmatpush1.bf16.xpose.msra.mxu0 %v3175
    %3179 = vmatprep.subr.bf16.mxu0 0
    %3180 = vmatpush1.bf16.xpose.msra.mxu0 0
    %3181 = vmatprep.subr.bf16.mxu0 0
    %3182 = vmatpush1.bf16.xpose.msra.mxu0 0
    %3183 = vmatprep.subr.bf16.mxu0 0
    %3184 = vmatpush1.bf16.xpose.msra.mxu0 0
    %3185 = vmatprep.subr.bf16.mxu0 0
    %3186 = vmatpush1.bf16.xpose.msra.mxu0 0
    %3187 = vmatprep.subr.bf16.mxu0 0
    %3188 = vmatpush1.bf16.xpose.msra.mxu0 0
    %3189 = vmatprep.subr.bf16.mxu0 0
    %3190 = vmatpush1.bf16.xpose.msra.mxu0 0
    %3191 = vmatprep.subr.bf16.mxu0 0
    %3192 = vmatpush1.bf16.xpose.msra.mxu0 0
    %3193 = vmatprep.subr.bf16.mxu0 0
    %3194 = vmatpush1.bf16.xpose.msra.mxu0 0
    %3195 = vmatprep.subr.bf16.mxu0 0
    %3196 = vmatpush1.bf16.xpose.msra.mxu0 0
    %3197 = vmatprep.subr.bf16.mxu0 0
    %3198 = vmatpush1.bf16.xpose.msra.mxu0 0
    %3199 = vmatprep.subr.bf16.mxu0 0
    %3200 = vmatpush1.bf16.xpose.msra.mxu0 0
    %3201 = vmatprep.subr.bf16.mxu0 0
    %3202 = vmatpush1.bf16.xpose.msra.mxu0 0
    %3203 = vmatprep.subr.bf16.mxu0 0
    %3204 = vmatpush1.bf16.xpose.msra.mxu0 0
    %3205 = vmatprep.subr.bf16.mxu0 0
    %3206 = vmatpush1.bf16.xpose.msra.mxu0 0
    %3207 = vmatprep.subr.bf16.mxu0 0
    %3208 = vmatpush1.bf16.xpose.msra.mxu0 0
    %3209 = vmatprep.mubr.bf16.mxu0 0
    %3210 = vmatmul.mubr.bf16.gmra.mrb[0].mxu0 %v3172
    %v3211 = vpop.f32.mrb[0].mxu0
    %v3212 = vadd.f32 0.0, %v3211
    %v3213 = vpop.f32.mrb[0].mxu0
    %v3214 = vpop.f32.mrb[0].mxu0
    %v3215 = vpop.f32.mrb[0].mxu0
    %3216 = vdwg.mxu0
    %3218 = vrot.lane.b32.xlu0 %v2969, 96
    %v3219 = vpop.permute.xlu0 %3218
    %v3221 = vsel %vm210, %v2969, 0
    %v3224 = vsel %vm210, %v3219, 0
    %3226 = vmatprep.subr.bf16.mxu0 0
    %3227 = vmatpush1.bf16.xpose.msra.mxu0 %v3224
    %3228 = vmatprep.subr.bf16.mxu0 0
    %3229 = vmatpush1.bf16.xpose.msra.mxu0 0
    %3230 = vmatprep.subr.bf16.mxu0 0
    %3231 = vmatpush1.bf16.xpose.msra.mxu0 0
    %3232 = vmatprep.subr.bf16.mxu0 0
    %3233 = vmatpush1.bf16.xpose.msra.mxu0 0
    %3234 = vmatprep.subr.bf16.mxu0 0
    %3235 = vmatpush1.bf16.xpose.msra.mxu0 0
    %3236 = vmatprep.subr.bf16.mxu0 0
    %3237 = vmatpush1.bf16.xpose.msra.mxu0 0
    %3238 = vmatprep.subr.bf16.mxu0 0
    %3239 = vmatpush1.bf16.xpose.msra.mxu0 0
    %3240 = vmatprep.subr.bf16.mxu0 0
    %3241 = vmatpush1.bf16.xpose.msra.mxu0 0
    %3242 = vmatprep.subr.bf16.mxu0 0
    %3243 = vmatpush1.bf16.xpose.msra.mxu0 0
    %3244 = vmatprep.subr.bf16.mxu0 0
    %3245 = vmatpush1.bf16.xpose.msra.mxu0 0
    %3246 = vmatprep.subr.bf16.mxu0 0
    %3247 = vmatpush1.bf16.xpose.msra.mxu0 0
    %3248 = vmatprep.subr.bf16.mxu0 0
    %3249 = vmatpush1.bf16.xpose.msra.mxu0 0
    %3250 = vmatprep.subr.bf16.mxu0 0
    %3251 = vmatpush1.bf16.xpose.msra.mxu0 0
    %3252 = vmatprep.subr.bf16.mxu0 0
    %3253 = vmatpush1.bf16.xpose.msra.mxu0 0
    %3254 = vmatprep.subr.bf16.mxu0 0
    %3255 = vmatpush1.bf16.xpose.msra.mxu0 0
    %3256 = vmatprep.subr.bf16.mxu0 0
    %3257 = vmatpush1.bf16.xpose.msra.mxu0 0
    %3258 = vmatprep.mubr.bf16.mxu0 0
    %3259 = vmatmul.mubr.bf16.gmra.mrb[0].mxu0 %v3221
    %v3260 = vpop.f32.mrb[0].mxu0
    %v3261 = vadd.f32 0.0, %v3260
    %v3262 = vpop.f32.mrb[0].mxu0
    %v3263 = vpop.f32.mrb[0].mxu0
    %v3264 = vpop.f32.mrb[0].mxu0
    %3265 = vdwg.mxu0
    %3267 = vrot.lane.b32.xlu0 %v2970, 96
    %v3268 = vpop.permute.xlu0 %3267
    %v3270 = vsel %vm210, %v2970, 0
    %v3273 = vsel %vm210, %v3268, 0
    %3275 = vmatprep.subr.bf16.mxu0 0
    %3276 = vmatpush1.bf16.xpose.msra.mxu0 %v3273
    %3277 = vmatprep.subr.bf16.mxu0 0
    %3278 = vmatpush1.bf16.xpose.msra.mxu0 0
    %3279 = vmatprep.subr.bf16.mxu0 0
    %3280 = vmatpush1.bf16.xpose.msra.mxu0 0
    %3281 = vmatprep.subr.bf16.mxu0 0
    %3282 = vmatpush1.bf16.xpose.msra.mxu0 0
    %3283 = vmatprep.subr.bf16.mxu0 0
    %3284 = vmatpush1.bf16.xpose.msra.mxu0 0
    %3285 = vmatprep.subr.bf16.mxu0 0
    %3286 = vmatpush1.bf16.xpose.msra.mxu0 0
    %3287 = vmatprep.subr.bf16.mxu0 0
    %3288 = vmatpush1.bf16.xpose.msra.mxu0 0
    %3289 = vmatprep.subr.bf16.mxu0 0
    %3290 = vmatpush1.bf16.xpose.msra.mxu0 0
    %3291 = vmatprep.subr.bf16.mxu0 0
    %3292 = vmatpush1.bf16.xpose.msra.mxu0 0
    %3293 = vmatprep.subr.bf16.mxu0 0
    %3294 = vmatpush1.bf16.xpose.msra.mxu0 0
    %3295 = vmatprep.subr.bf16.mxu0 0
    %3296 = vmatpush1.bf16.xpose.msra.mxu0 0
    %3297 = vmatprep.subr.bf16.mxu0 0
    %3298 = vmatpush1.bf16.xpose.msra.mxu0 0
    %3299 = vmatprep.subr.bf16.mxu0 0
    %3300 = vmatpush1.bf16.xpose.msra.mxu0 0
    %3301 = vmatprep.subr.bf16.mxu0 0
    %3302 = vmatpush1.bf16.xpose.msra.mxu0 0
    %3303 = vmatprep.subr.bf16.mxu0 0
    %3304 = vmatpush1.bf16.xpose.msra.mxu0 0
    %3305 = vmatprep.subr.bf16.mxu0 0
    %3306 = vmatpush1.bf16.xpose.msra.mxu0 0
    %3307 = vmatprep.mubr.bf16.mxu0 0
    %3308 = vmatmul.mubr.bf16.gmra.mrb[0].mxu0 %v3270
    %v3309 = vpop.f32.mrb[0].mxu0
    %v3310 = vadd.f32 0.0, %v3309
    %v3311 = vpop.f32.mrb[0].mxu0
    %v3312 = vpop.f32.mrb[0].mxu0
    %v3313 = vpop.f32.mrb[0].mxu0
    %3314 = vdwg.mxu0
    %3316 = vrot.lane.b32.xlu0 %v2971, 96
    %v3317 = vpop.permute.xlu0 %3316
    %v3319 = vsel %vm210, %v2971, 0
    %v3322 = vsel %vm210, %v3317, 0
    %3324 = vmatprep.subr.bf16.mxu0 0
    %3325 = vmatpush1.bf16.xpose.msra.mxu0 %v3322
    %3326 = vmatprep.subr.bf16.mxu0 0
    %3327 = vmatpush1.bf16.xpose.msra.mxu0 0
    %3328 = vmatprep.subr.bf16.mxu0 0
    %3329 = vmatpush1.bf16.xpose.msra.mxu0 0
    %3330 = vmatprep.subr.bf16.mxu0 0
    %3331 = vmatpush1.bf16.xpose.msra.mxu0 0
    %3332 = vmatprep.subr.bf16.mxu0 0
    %3333 = vmatpush1.bf16.xpose.msra.mxu0 0
    %3334 = vmatprep.subr.bf16.mxu0 0
    %3335 = vmatpush1.bf16.xpose.msra.mxu0 0
    %3336 = vmatprep.subr.bf16.mxu0 0
    %3337 = vmatpush1.bf16.xpose.msra.mxu0 0
    %3338 = vmatprep.subr.bf16.mxu0 0
    %3339 = vmatpush1.bf16.xpose.msra.mxu0 0
    %3340 = vmatprep.subr.bf16.mxu0 0
    %3341 = vmatpush1.bf16.xpose.msra.mxu0 0
    %3342 = vmatprep.subr.bf16.mxu0 0
    %3343 = vmatpush1.bf16.xpose.msra.mxu0 0
    %3344 = vmatprep.subr.bf16.mxu0 0
    %3345 = vmatpush1.bf16.xpose.msra.mxu0 0
    %3346 = vmatprep.subr.bf16.mxu0 0
    %3347 = vmatpush1.bf16.xpose.msra.mxu0 0
    %3348 = vmatprep.subr.bf16.mxu0 0
    %3349 = vmatpush1.bf16.xpose.msra.mxu0 0
    %3350 = vmatprep.subr.bf16.mxu0 0
    %3351 = vmatpush1.bf16.xpose.msra.mxu0 0
    %3352 = vmatprep.subr.bf16.mxu0 0
    %3353 = vmatpush1.bf16.xpose.msra.mxu0 0
    %3354 = vmatprep.subr.bf16.mxu0 0
    %3355 = vmatpush1.bf16.xpose.msra.mxu0 0
    %3356 = vmatprep.mubr.bf16.mxu0 0
    %3357 = vmatmul.mubr.bf16.gmra.mrb[0].mxu0 %v3319
    %v3358 = vpop.f32.mrb[0].mxu0
    %v3359 = vadd.f32 0.0, %v3358
    %v3360 = vpop.f32.mrb[0].mxu0
    %v3361 = vpop.f32.mrb[0].mxu0
    %v3362 = vpop.f32.mrb[0].mxu0
    %3363 = vdwg.mxu0
    %v3364 = vsel %vm210, %v3016, -inf
    %3365 = vmax.xlane.f32.xlu0 %v3364
    %v3366 = vpop.xlane.xlu0 %3365
    %v3367 = vsel %vm210, %v3065, -inf
    %3368 = vmax.xlane.f32.xlu0 %v3367
    %v3369 = vpop.xlane.xlu0 %3368
    %v3370 = vsel %vm210, %v3114, -inf
    %3371 = vmax.xlane.f32.xlu0 %v3370
    %v3372 = vpop.xlane.xlu0 %3371
    %v3373 = vsel %vm210, %v3163, -inf
    %3374 = vmax.xlane.f32.xlu0 %v3373
    %v3375 = vpop.xlane.xlu0 %3374
    %v3376 = vsel %vm210, %v3212, -inf
    %3377 = vmax.xlane.f32.xlu0 %v3376
    %v3378 = vpop.xlane.xlu0 %3377
    %v3379 = vsel %vm210, %v3261, -inf
    %3380 = vmax.xlane.f32.xlu0 %v3379
    %v3381 = vpop.xlane.xlu0 %3380
    %v3382 = vsel %vm210, %v3310, -inf
    %3383 = vmax.xlane.f32.xlu0 %v3382
    %v3384 = vpop.xlane.xlu0 %3383
    %v3385 = vsel %vm210, %v3359, -inf
    %3386 = vmax.xlane.f32.xlu0 %v3385
    %v3387 = vpop.xlane.xlu0 %3386
    %v3388 = vsub.f32 %v3016, %v3366
    %v3389 = vsub.f32 %v3065, %v3369
    %v3390 = vsub.f32 %v3114, %v3372
    %v3391 = vsub.f32 %v3163, %v3375
    %v3392 = vsub.f32 %v3212, %v3378
    %v3393 = vsub.f32 %v3261, %v3381
    %v3394 = vsub.f32 %v3310, %v3384
    %v3395 = vsub.f32 %v3359, %v3387
    %v3396 = vmul.f32 %v3388, 1.442695
    %v3397 = vpow.pop %v3396
    %v3398 = vmul.f32 %v3389, 1.442695
    %v3399 = vpow.pop %v3398
    %v3400 = vmul.f32 %v3390, 1.442695
    %v3401 = vpow.pop %v3400
    %v3402 = vmul.f32 %v3391, 1.442695
    %v3403 = vpow.pop %v3402
    %v3404 = vmul.f32 %v3392, 1.442695
    %v3405 = vpow.pop %v3404
    %v3406 = vmul.f32 %v3393, 1.442695
    %v3407 = vpow.pop %v3406
    %v3408 = vmul.f32 %v3394, 1.442695
    %v3409 = vpow.pop %v3408
    %v3410 = vmul.f32 %v3395, 1.442695
    %v3411 = vpow.pop %v3410
    %v3412 = vsel %vm210, %v3397, 0.0
    %3413 = vadd.xlane.f32.xlu0 %v3412
    %v3414 = vpop.xlane.xlu0 %3413
    %v3415 = vsel %vm210, %v3399, 0.0
    %3416 = vadd.xlane.f32.xlu0 %v3415
    %v3417 = vpop.xlane.xlu0 %3416
    %v3418 = vsel %vm210, %v3401, 0.0
    %3419 = vadd.xlane.f32.xlu0 %v3418
    %v3420 = vpop.xlane.xlu0 %3419
    %v3421 = vsel %vm210, %v3403, 0.0
    %3422 = vadd.xlane.f32.xlu0 %v3421
    %v3423 = vpop.xlane.xlu0 %3422
    %v3424 = vsel %vm210, %v3405, 0.0
    %3425 = vadd.xlane.f32.xlu0 %v3424
    %v3426 = vpop.xlane.xlu0 %3425
    %v3427 = vsel %vm210, %v3407, 0.0
    %3428 = vadd.xlane.f32.xlu0 %v3427
    %v3429 = vpop.xlane.xlu0 %3428
    %v3430 = vsel %vm210, %v3409, 0.0
    %3431 = vadd.xlane.f32.xlu0 %v3430
    %v3432 = vpop.xlane.xlu0 %3431
    %v3433 = vsel %vm210, %v3411, 0.0
    %3434 = vadd.xlane.f32.xlu0 %v3433
    %v3435 = vpop.xlane.xlu0 %3434
    %v3436 = vrcp.pop %v3414
    %v3437 = vrcp.pop %v3417
    %v3438 = vrcp.pop %v3420
    %v3439 = vrcp.pop %v3423
    %v3440 = vrcp.pop %v3426
    %v3441 = vrcp.pop %v3429
    %v3442 = vrcp.pop %v3432
    %v3443 = vrcp.pop %v3435
    %v3444 = vmul.f32 %v3397, %v3436
    %v3445 = vmul.f32 %v3399, %v3437
    %v3446 = vmul.f32 %v3401, %v3438
    %v3447 = vmul.f32 %v3403, %v3439
    %v3448 = vmul.f32 %v3405, %v3440
    %v3449 = vmul.f32 %v3407, %v3441
    %v3450 = vmul.f32 %v3409, %v3442
    %v3451 = vmul.f32 %v3411, %v3443
    %v3452 = vpack.c.bf16 %v3444, %v3444
    %v3453 = vpack.c.bf16 %v3445, %v3445
    %v3454 = vpack.c.bf16 %v3446, %v3446
    %v3455 = vpack.c.bf16 %v3447, %v3447
    %v3456 = vpack.c.bf16 %v3448, %v3448
    %v3457 = vpack.c.bf16 %v3449, %v3449
    %v3458 = vpack.c.bf16 %v3450, %v3450
    %v3459 = vpack.c.bf16 %v3451, %v3451
    %3460 = vrot.lane.b32.xlu0 %v2964, 64
    %v3461 = vpop.permute.xlu0 %3460
    %v3463 = vsel %vm210, %v3452, 0
    %v3466 = vsel %vm701, %v3461, 0
    %3468 = vmatprep.subr.bf16.mxu0 0
    %3469 = vmatpush1.bf16.msra.mxu0 %v3466
    %3470 = vmatprep.subr.bf16.mxu0 0
    %3471 = vmatpush1.bf16.msra.mxu0 0
    %3472 = vmatprep.subr.bf16.mxu0 0
    %3473 = vmatpush1.bf16.msra.mxu0 0
    %3474 = vmatprep.subr.bf16.mxu0 0
    %3475 = vmatpush1.bf16.msra.mxu0 0
    %3476 = vmatprep.subr.bf16.mxu0 0
    %3477 = vmatpush1.bf16.msra.mxu0 0
    %3478 = vmatprep.subr.bf16.mxu0 0
    %3479 = vmatpush1.bf16.msra.mxu0 0
    %3480 = vmatprep.subr.bf16.mxu0 0
    %3481 = vmatpush1.bf16.msra.mxu0 0
    %3482 = vmatprep.subr.bf16.mxu0 0
    %3483 = vmatpush1.bf16.msra.mxu0 0
    %3484 = vmatprep.subr.bf16.mxu0 0
    %3485 = vmatpush1.bf16.msra.mxu0 0
    %3486 = vmatprep.subr.bf16.mxu0 0
    %3487 = vmatpush1.bf16.msra.mxu0 0
    %3488 = vmatprep.subr.bf16.mxu0 0
    %3489 = vmatpush1.bf16.msra.mxu0 0
    %3490 = vmatprep.subr.bf16.mxu0 0
    %3491 = vmatpush1.bf16.msra.mxu0 0
    %3492 = vmatprep.subr.bf16.mxu0 0
    %3493 = vmatpush1.bf16.msra.mxu0 0
    %3494 = vmatprep.subr.bf16.mxu0 0
    %3495 = vmatpush1.bf16.msra.mxu0 0
    %3496 = vmatprep.subr.bf16.mxu0 0
    %3497 = vmatpush1.bf16.msra.mxu0 0
    %3498 = vmatprep.subr.bf16.mxu0 0
    %3499 = vmatpush1.bf16.msra.mxu0 0
    %3500 = vmatprep.mubr.bf16.mxu0 0
    %3501 = vmatmul.mubr.bf16.gmra.mrb[0].mxu0 %v3463
    %v3502 = vpop.f32.mrb[0].mxu0
    %v3503 = vadd.f32 0.0, %v3502
    %v3504 = vpop.f32.mrb[0].mxu0
    %v3505 = vpop.f32.mrb[0].mxu0
    %v3506 = vpop.f32.mrb[0].mxu0
    %3507 = vdwg.mxu0
    %3508 = vrot.lane.b32.xlu0 %v2965, 64
    %v3509 = vpop.permute.xlu0 %3508
    %v3511 = vsel %vm210, %v3453, 0
    %v3514 = vsel %vm701, %v3509, 0
    %3516 = vmatprep.subr.bf16.mxu0 0
    %3517 = vmatpush1.bf16.msra.mxu0 %v3514
    %3518 = vmatprep.subr.bf16.mxu0 0
    %3519 = vmatpush1.bf16.msra.mxu0 0
    %3520 = vmatprep.subr.bf16.mxu0 0
    %3521 = vmatpush1.bf16.msra.mxu0 0
    %3522 = vmatprep.subr.bf16.mxu0 0
    %3523 = vmatpush1.bf16.msra.mxu0 0
    %3524 = vmatprep.subr.bf16.mxu0 0
    %3525 = vmatpush1.bf16.msra.mxu0 0
    %3526 = vmatprep.subr.bf16.mxu0 0
    %3527 = vmatpush1.bf16.msra.mxu0 0
    %3528 = vmatprep.subr.bf16.mxu0 0
    %3529 = vmatpush1.bf16.msra.mxu0 0
    %3530 = vmatprep.subr.bf16.mxu0 0
    %3531 = vmatpush1.bf16.msra.mxu0 0
    %3532 = vmatprep.subr.bf16.mxu0 0
    %3533 = vmatpush1.bf16.msra.mxu0 0
    %3534 = vmatprep.subr.bf16.mxu0 0
    %3535 = vmatpush1.bf16.msra.mxu0 0
    %3536 = vmatprep.subr.bf16.mxu0 0
    %3537 = vmatpush1.bf16.msra.mxu0 0
    %3538 = vmatprep.subr.bf16.mxu0 0
    %3539 = vmatpush1.bf16.msra.mxu0 0
    %3540 = vmatprep.subr.bf16.mxu0 0
    %3541 = vmatpush1.bf16.msra.mxu0 0
    %3542 = vmatprep.subr.bf16.mxu0 0
    %3543 = vmatpush1.bf16.msra.mxu0 0
    %3544 = vmatprep.subr.bf16.mxu0 0
    %3545 = vmatpush1.bf16.msra.mxu0 0
    %3546 = vmatprep.subr.bf16.mxu0 0
    %3547 = vmatpush1.bf16.msra.mxu0 0
    %3548 = vmatprep.mubr.bf16.mxu0 0
    %3549 = vmatmul.mubr.bf16.gmra.mrb[0].mxu0 %v3511
    %v3550 = vpop.f32.mrb[0].mxu0
    %v3551 = vadd.f32 0.0, %v3550
    %v3552 = vpop.f32.mrb[0].mxu0
    %v3553 = vpop.f32.mrb[0].mxu0
    %v3554 = vpop.f32.mrb[0].mxu0
    %3555 = vdwg.mxu0
    %3556 = vrot.lane.b32.xlu0 %v2966, 64
    %v3557 = vpop.permute.xlu0 %3556
    %v3559 = vsel %vm210, %v3454, 0
    %v3562 = vsel %vm701, %v3557, 0
    %3564 = vmatprep.subr.bf16.mxu0 0
    %3565 = vmatpush1.bf16.msra.mxu0 %v3562
    %3566 = vmatprep.subr.bf16.mxu0 0
    %3567 = vmatpush1.bf16.msra.mxu0 0
    %3568 = vmatprep.subr.bf16.mxu0 0
    %3569 = vmatpush1.bf16.msra.mxu0 0
    %3570 = vmatprep.subr.bf16.mxu0 0
    %3571 = vmatpush1.bf16.msra.mxu0 0
    %3572 = vmatprep.subr.bf16.mxu0 0
    %3573 = vmatpush1.bf16.msra.mxu0 0
    %3574 = vmatprep.subr.bf16.mxu0 0
    %3575 = vmatpush1.bf16.msra.mxu0 0
    %3576 = vmatprep.subr.bf16.mxu0 0
    %3577 = vmatpush1.bf16.msra.mxu0 0
    %3578 = vmatprep.subr.bf16.mxu0 0
    %3579 = vmatpush1.bf16.msra.mxu0 0
    %3580 = vmatprep.subr.bf16.mxu0 0
    %3581 = vmatpush1.bf16.msra.mxu0 0
    %3582 = vmatprep.subr.bf16.mxu0 0
    %3583 = vmatpush1.bf16.msra.mxu0 0
    %3584 = vmatprep.subr.bf16.mxu0 0
    %3585 = vmatpush1.bf16.msra.mxu0 0
    %3586 = vmatprep.subr.bf16.mxu0 0
    %3587 = vmatpush1.bf16.msra.mxu0 0
    %3588 = vmatprep.subr.bf16.mxu0 0
    %3589 = vmatpush1.bf16.msra.mxu0 0
    %3590 = vmatprep.subr.bf16.mxu0 0
    %3591 = vmatpush1.bf16.msra.mxu0 0
    %3592 = vmatprep.subr.bf16.mxu0 0
    %3593 = vmatpush1.bf16.msra.mxu0 0
    %3594 = vmatprep.subr.bf16.mxu0 0
    %3595 = vmatpush1.bf16.msra.mxu0 0
    %3596 = vmatprep.mubr.bf16.mxu0 0
    %3597 = vmatmul.mubr.bf16.gmra.mrb[0].mxu0 %v3559
    %v3598 = vpop.f32.mrb[0].mxu0
    %v3599 = vadd.f32 0.0, %v3598
    %v3600 = vpop.f32.mrb[0].mxu0
    %v3601 = vpop.f32.mrb[0].mxu0
    %v3602 = vpop.f32.mrb[0].mxu0
    %3603 = vdwg.mxu0
    %3604 = vrot.lane.b32.xlu0 %v2967, 64
    %v3605 = vpop.permute.xlu0 %3604
    %v3607 = vsel %vm210, %v3455, 0
    %v3610 = vsel %vm701, %v3605, 0
    %3612 = vmatprep.subr.bf16.mxu0 0
    %3613 = vmatpush1.bf16.msra.mxu0 %v3610
    %3614 = vmatprep.subr.bf16.mxu0 0
    %3615 = vmatpush1.bf16.msra.mxu0 0
    %3616 = vmatprep.subr.bf16.mxu0 0
    %3617 = vmatpush1.bf16.msra.mxu0 0
    %3618 = vmatprep.subr.bf16.mxu0 0
    %3619 = vmatpush1.bf16.msra.mxu0 0
    %3620 = vmatprep.subr.bf16.mxu0 0
    %3621 = vmatpush1.bf16.msra.mxu0 0
    %3622 = vmatprep.subr.bf16.mxu0 0
    %3623 = vmatpush1.bf16.msra.mxu0 0
    %3624 = vmatprep.subr.bf16.mxu0 0
    %3625 = vmatpush1.bf16.msra.mxu0 0
    %3626 = vmatprep.subr.bf16.mxu0 0
    %3627 = vmatpush1.bf16.msra.mxu0 0
    %3628 = vmatprep.subr.bf16.mxu0 0
    %3629 = vmatpush1.bf16.msra.mxu0 0
    %3630 = vmatprep.subr.bf16.mxu0 0
    %3631 = vmatpush1.bf16.msra.mxu0 0
    %3632 = vmatprep.subr.bf16.mxu0 0
    %3633 = vmatpush1.bf16.msra.mxu0 0
    %3634 = vmatprep.subr.bf16.mxu0 0
    %3635 = vmatpush1.bf16.msra.mxu0 0
    %3636 = vmatprep.subr.bf16.mxu0 0
    %3637 = vmatpush1.bf16.msra.mxu0 0
    %3638 = vmatprep.subr.bf16.mxu0 0
    %3639 = vmatpush1.bf16.msra.mxu0 0
    %3640 = vmatprep.subr.bf16.mxu0 0
    %3641 = vmatpush1.bf16.msra.mxu0 0
    %3642 = vmatprep.subr.bf16.mxu0 0
    %3643 = vmatpush1.bf16.msra.mxu0 0
    %3644 = vmatprep.mubr.bf16.mxu0 0
    %3645 = vmatmul.mubr.bf16.gmra.mrb[0].mxu0 %v3607
    %v3646 = vpop.f32.mrb[0].mxu0
    %v3647 = vadd.f32 0.0, %v3646
    %v3648 = vpop.f32.mrb[0].mxu0
    %v3649 = vpop.f32.mrb[0].mxu0
    %v3650 = vpop.f32.mrb[0].mxu0
    %3651 = vdwg.mxu0
    %3652 = vrot.lane.b32.xlu0 %v2968, 64
    %v3653 = vpop.permute.xlu0 %3652
    %v3655 = vsel %vm210, %v3456, 0
    %v3658 = vsel %vm701, %v3653, 0
    %3660 = vmatprep.subr.bf16.mxu0 0
    %3661 = vmatpush1.bf16.msra.mxu0 %v3658
    %3662 = vmatprep.subr.bf16.mxu0 0
    %3663 = vmatpush1.bf16.msra.mxu0 0
    %3664 = vmatprep.subr.bf16.mxu0 0
    %3665 = vmatpush1.bf16.msra.mxu0 0
    %3666 = vmatprep.subr.bf16.mxu0 0
    %3667 = vmatpush1.bf16.msra.mxu0 0
    %3668 = vmatprep.subr.bf16.mxu0 0
    %3669 = vmatpush1.bf16.msra.mxu0 0
    %3670 = vmatprep.subr.bf16.mxu0 0
    %3671 = vmatpush1.bf16.msra.mxu0 0
    %3672 = vmatprep.subr.bf16.mxu0 0
    %3673 = vmatpush1.bf16.msra.mxu0 0
    %3674 = vmatprep.subr.bf16.mxu0 0
    %3675 = vmatpush1.bf16.msra.mxu0 0
    %3676 = vmatprep.subr.bf16.mxu0 0
    %3677 = vmatpush1.bf16.msra.mxu0 0
    %3678 = vmatprep.subr.bf16.mxu0 0
    %3679 = vmatpush1.bf16.msra.mxu0 0
    %3680 = vmatprep.subr.bf16.mxu0 0
    %3681 = vmatpush1.bf16.msra.mxu0 0
    %3682 = vmatprep.subr.bf16.mxu0 0
    %3683 = vmatpush1.bf16.msra.mxu0 0
    %3684 = vmatprep.subr.bf16.mxu0 0
    %3685 = vmatpush1.bf16.msra.mxu0 0
    %3686 = vmatprep.subr.bf16.mxu0 0
    %3687 = vmatpush1.bf16.msra.mxu0 0
    %3688 = vmatprep.subr.bf16.mxu0 0
    %3689 = vmatpush1.bf16.msra.mxu0 0
    %3690 = vmatprep.subr.bf16.mxu0 0
    %3691 = vmatpush1.bf16.msra.mxu0 0
    %3692 = vmatprep.mubr.bf16.mxu0 0
    %3693 = vmatmul.mubr.bf16.gmra.mrb[0].mxu0 %v3655
    %v3694 = vpop.f32.mrb[0].mxu0
    %v3695 = vadd.f32 0.0, %v3694
    %v3696 = vpop.f32.mrb[0].mxu0
    %v3697 = vpop.f32.mrb[0].mxu0
    %v3698 = vpop.f32.mrb[0].mxu0
    %3699 = vdwg.mxu0
    %3700 = vrot.lane.b32.xlu0 %v2969, 64
    %v3701 = vpop.permute.xlu0 %3700
    %v3703 = vsel %vm210, %v3457, 0
    %v3706 = vsel %vm701, %v3701, 0
    %3708 = vmatprep.subr.bf16.mxu0 0
    %3709 = vmatpush1.bf16.msra.mxu0 %v3706
    %3710 = vmatprep.subr.bf16.mxu0 0
    %3711 = vmatpush1.bf16.msra.mxu0 0
    %3712 = vmatprep.subr.bf16.mxu0 0
    %3713 = vmatpush1.bf16.msra.mxu0 0
    %3714 = vmatprep.subr.bf16.mxu0 0
    %3715 = vmatpush1.bf16.msra.mxu0 0
    %3716 = vmatprep.subr.bf16.mxu0 0
    %3717 = vmatpush1.bf16.msra.mxu0 0
    %3718 = vmatprep.subr.bf16.mxu0 0
    %3719 = vmatpush1.bf16.msra.mxu0 0
    %3720 = vmatprep.subr.bf16.mxu0 0
    %3721 = vmatpush1.bf16.msra.mxu0 0
    %3722 = vmatprep.subr.bf16.mxu0 0
    %3723 = vmatpush1.bf16.msra.mxu0 0
    %3724 = vmatprep.subr.bf16.mxu0 0
    %3725 = vmatpush1.bf16.msra.mxu0 0
    %3726 = vmatprep.subr.bf16.mxu0 0
    %3727 = vmatpush1.bf16.msra.mxu0 0
    %3728 = vmatprep.subr.bf16.mxu0 0
    %3729 = vmatpush1.bf16.msra.mxu0 0
    %3730 = vmatprep.subr.bf16.mxu0 0
    %3731 = vmatpush1.bf16.msra.mxu0 0
    %3732 = vmatprep.subr.bf16.mxu0 0
    %3733 = vmatpush1.bf16.msra.mxu0 0
    %3734 = vmatprep.subr.bf16.mxu0 0
    %3735 = vmatpush1.bf16.msra.mxu0 0
    %3736 = vmatprep.subr.bf16.mxu0 0
    %3737 = vmatpush1.bf16.msra.mxu0 0
    %3738 = vmatprep.subr.bf16.mxu0 0
    %3739 = vmatpush1.bf16.msra.mxu0 0
    %3740 = vmatprep.mubr.bf16.mxu0 0
    %3741 = vmatmul.mubr.bf16.gmra.mrb[0].mxu0 %v3703
    %v3742 = vpop.f32.mrb[0].mxu0
    %v3743 = vadd.f32 0.0, %v3742
    %v3744 = vpop.f32.mrb[0].mxu0
    %v3745 = vpop.f32.mrb[0].mxu0
    %v3746 = vpop.f32.mrb[0].mxu0
    %3747 = vdwg.mxu0
    %3748 = vrot.lane.b32.xlu0 %v2970, 64
    %v3749 = vpop.permute.xlu0 %3748
    %v3751 = vsel %vm210, %v3458, 0
    %v3754 = vsel %vm701, %v3749, 0
    %3756 = vmatprep.subr.bf16.mxu0 0
    %3757 = vmatpush1.bf16.msra.mxu0 %v3754
    %3758 = vmatprep.subr.bf16.mxu0 0
    %3759 = vmatpush1.bf16.msra.mxu0 0
    %3760 = vmatprep.subr.bf16.mxu0 0
    %3761 = vmatpush1.bf16.msra.mxu0 0
    %3762 = vmatprep.subr.bf16.mxu0 0
    %3763 = vmatpush1.bf16.msra.mxu0 0
    %3764 = vmatprep.subr.bf16.mxu0 0
    %3765 = vmatpush1.bf16.msra.mxu0 0
    %3766 = vmatprep.subr.bf16.mxu0 0
    %3767 = vmatpush1.bf16.msra.mxu0 0
    %3768 = vmatprep.subr.bf16.mxu0 0
    %3769 = vmatpush1.bf16.msra.mxu0 0
    %3770 = vmatprep.subr.bf16.mxu0 0
    %3771 = vmatpush1.bf16.msra.mxu0 0
    %3772 = vmatprep.subr.bf16.mxu0 0
    %3773 = vmatpush1.bf16.msra.mxu0 0
    %3774 = vmatprep.subr.bf16.mxu0 0
    %3775 = vmatpush1.bf16.msra.mxu0 0
    %3776 = vmatprep.subr.bf16.mxu0 0
    %3777 = vmatpush1.bf16.msra.mxu0 0
    %3778 = vmatprep.subr.bf16.mxu0 0
    %3779 = vmatpush1.bf16.msra.mxu0 0
    %3780 = vmatprep.subr.bf16.mxu0 0
    %3781 = vmatpush1.bf16.msra.mxu0 0
    %3782 = vmatprep.subr.bf16.mxu0 0
    %3783 = vmatpush1.bf16.msra.mxu0 0
    %3784 = vmatprep.subr.bf16.mxu0 0
    %3785 = vmatpush1.bf16.msra.mxu0 0
    %3786 = vmatprep.subr.bf16.mxu0 0
    %3787 = vmatpush1.bf16.msra.mxu0 0
    %3788 = vmatprep.mubr.bf16.mxu0 0
    %3789 = vmatmul.mubr.bf16.gmra.mrb[0].mxu0 %v3751
    %v3790 = vpop.f32.mrb[0].mxu0
    %v3791 = vadd.f32 0.0, %v3790
    %v3792 = vpop.f32.mrb[0].mxu0
    %v3793 = vpop.f32.mrb[0].mxu0
    %v3794 = vpop.f32.mrb[0].mxu0
    %3795 = vdwg.mxu0
    %3796 = vrot.lane.b32.xlu0 %v2971, 64
    %v3797 = vpop.permute.xlu0 %3796
    %v3799 = vsel %vm210, %v3459, 0
    %v3802 = vsel %vm701, %v3797, 0
    %3804 = vmatprep.subr.bf16.mxu0 0
    %3805 = vmatpush1.bf16.msra.mxu0 %v3802
    %3806 = vmatprep.subr.bf16.mxu0 0
    %3807 = vmatpush1.bf16.msra.mxu0 0
    %3808 = vmatprep.subr.bf16.mxu0 0
    %3809 = vmatpush1.bf16.msra.mxu0 0
    %3810 = vmatprep.subr.bf16.mxu0 0
    %3811 = vmatpush1.bf16.msra.mxu0 0
    %3812 = vmatprep.subr.bf16.mxu0 0
    %3813 = vmatpush1.bf16.msra.mxu0 0
    %3814 = vmatprep.subr.bf16.mxu0 0
    %3815 = vmatpush1.bf16.msra.mxu0 0
    %3816 = vmatprep.subr.bf16.mxu0 0
    %3817 = vmatpush1.bf16.msra.mxu0 0
    %3818 = vmatprep.subr.bf16.mxu0 0
    %3819 = vmatpush1.bf16.msra.mxu0 0
    %3820 = vmatprep.subr.bf16.mxu0 0
    %3821 = vmatpush1.bf16.msra.mxu0 0
    %3822 = vmatprep.subr.bf16.mxu0 0
    %3823 = vmatpush1.bf16.msra.mxu0 0
    %3824 = vmatprep.subr.bf16.mxu0 0
    %3825 = vmatpush1.bf16.msra.mxu0 0
    %3826 = vmatprep.subr.bf16.mxu0 0
    %3827 = vmatpush1.bf16.msra.mxu0 0
    %3828 = vmatprep.subr.bf16.mxu0 0
    %3829 = vmatpush1.bf16.msra.mxu0 0
    %3830 = vmatprep.subr.bf16.mxu0 0
    %3831 = vmatpush1.bf16.msra.mxu0 0
    %3832 = vmatprep.subr.bf16.mxu0 0
    %3833 = vmatpush1.bf16.msra.mxu0 0
    %3834 = vmatprep.subr.bf16.mxu0 0
    %3835 = vmatpush1.bf16.msra.mxu0 0
    %3836 = vmatprep.mubr.bf16.mxu0 0
    %3837 = vmatmul.mubr.bf16.gmra.mrb[0].mxu0 %v3799
    %v3838 = vpop.f32.mrb[0].mxu0
    %v3839 = vadd.f32 0.0, %v3838
    %v3840 = vpop.f32.mrb[0].mxu0
    %v3841 = vpop.f32.mrb[0].mxu0
    %v3842 = vpop.f32.mrb[0].mxu0
    %3843 = vdwg.mxu0
    %3846 = vrot.lane.b32.xlu0 %v3599, 8
    %v3847 = vpop.permute.xlu0 %3846
    %3848 = vrot.lane.b32.xlu0 %v3647, 8
    %v3849 = vpop.permute.xlu0 %3848
    %3854 = vrot.lane.b32.xlu0 %v3695, 16
    %v3855 = vpop.permute.xlu0 %3854
    %3856 = vrot.lane.b32.xlu0 %v3743, 16
    %v3857 = vpop.permute.xlu0 %3856
    %3862 = vrot.lane.b32.xlu0 %v3791, 24
    %v3863 = vpop.permute.xlu0 %3862
    %3864 = vrot.lane.b32.xlu0 %v3839, 24
    %v3865 = vpop.permute.xlu0 %3864
    %v3868 = vsel %vm210, %v3503, %v3847
    %v3869 = vsel %vm210, %v3551, %v3849
    %v3870 = vsel %vm1107, %v3868, %v3855
    %v3871 = vsel %vm1107, %v3869, %v3857
    %v3872 = vsel %vm1110, %v3870, %v3863
    %v3873 = vsel %vm1110, %v3871, %v3865
    %v3874 = vpack.c.bf16 %v3873, %v3872
    %v3875 = vld [vmem:[#allocation7 + $0x100] sm:$0xf]
    %v3876 = vld [vmem:[#allocation7 + $0x104] sm:$0xf]
    %v3877 = vld [vmem:[#allocation7 + $0x108] sm:$0xf]
    %v3878 = vld [vmem:[#allocation7 + $0x10c] sm:$0xf]
    %v3879 = vld [vmem:[#allocation8 + $0x54] sm:$0x1]
    %v3880 = vlaneseq
    %v3881 = vshrl.u32 %v3880, 7
    %v3882 = vsub.s32 0, %v3881
    %v3883 = vrot.slane %v3879, %v3882
    %v3888 = vunpack.c.l.b16 %v3875
    %v3889 = vunpack.c.l.b16 %v3876
    %v3890 = vunpack.c.l.b16 %v3877
    %v3891 = vunpack.c.l.b16 %v3878
    %v3892 = vpack.c.b16 %v3889, %v3888
    %v3893 = vpack.c.b16 %v3891, %v3890
    %v3897 = vsel %vm134, %v3874, 0
    %3899 = vmatprep.subr.bf16.mxu0 0
    %3900 = vmatpush1.bf16.msra.mxu0 %v3892
    %3901 = vmatprep.subr.bf16.mxu0 0
    %3902 = vmatpush1.bf16.msra.mxu0 %v3893
    %3903 = vmatprep.subr.bf16.mxu0 0
    %3904 = vmatpush1.bf16.msra.mxu0 0
    %3905 = vmatprep.subr.bf16.mxu0 0
    %3906 = vmatpush1.bf16.msra.mxu0 0
    %3907 = vmatprep.subr.bf16.mxu0 0
    %3908 = vmatpush1.bf16.msra.mxu0 0
    %3909 = vmatprep.subr.bf16.mxu0 0
    %3910 = vmatpush1.bf16.msra.mxu0 0
    %3911 = vmatprep.subr.bf16.mxu0 0
    %3912 = vmatpush1.bf16.msra.mxu0 0
    %3913 = vmatprep.subr.bf16.mxu0 0
    %3914 = vmatpush1.bf16.msra.mxu0 0
    %3915 = vmatprep.subr.bf16.mxu0 0
    %3916 = vmatpush1.bf16.msra.mxu0 0
    %3917 = vmatprep.subr.bf16.mxu0 0
    %3918 = vmatpush1.bf16.msra.mxu0 0
    %3919 = vmatprep.subr.bf16.mxu0 0
    %3920 = vmatpush1.bf16.msra.mxu0 0
    %3921 = vmatprep.subr.bf16.mxu0 0
    %3922 = vmatpush1.bf16.msra.mxu0 0
    %3923 = vmatprep.subr.bf16.mxu0 0
    %3924 = vmatpush1.bf16.msra.mxu0 0
    %3925 = vmatprep.subr.bf16.mxu0 0
    %3926 = vmatpush1.bf16.msra.mxu0 0
    %3927 = vmatprep.subr.bf16.mxu0 0
    %3928 = vmatpush1.bf16.msra.mxu0 0
    %3929 = vmatprep.subr.bf16.mxu0 0
    %3930 = vmatpush1.bf16.msra.mxu0 0
    %3931 = vmatprep.mubr.bf16.mxu0 0
    %3932 = vmatmul.mubr.bf16.gmra.mrb[0].mxu0 %v3897
    %v3933 = vpop.f32.mrb[0].mxu0
    %v3934 = vadd.f32 %v3883, %v3933
    %v3935 = vpop.f32.mrb[0].mxu0
    %v3936 = vpop.f32.mrb[0].mxu0
    %v3937 = vadd.f32 %v3883, %v3936
    %v3938 = vpop.f32.mrb[0].mxu0
    %3939 = vdwg.mxu0
    %v3940 = vadd.f32 %v2876, %v3934
    %v3941 = vadd.f32 %v2877, %v3937
    %v3942 = vsel %vm134, %v3940, 0.0
    %3943 = vadd.xlane.f32.xlu0 %v3942
    %v3944 = vpop.xlane.xlu0 %3943
    %v3945 = vsel %vm134, %v3941, 0.0
    %3946 = vadd.xlane.f32.xlu0 %v3945
    %v3947 = vpop.xlane.xlu0 %3946
    %v3948 = vmul.f32 %v3944, %v1187
    %v3949 = vmul.f32 %v3947, %v1187
    %v3950 = vsub.f32 %v3940, %v3948
    %v3951 = vsub.f32 %v3941, %v3949
    %v3952 = vmul.f32 %v3950, %v3950
    %v3953 = vmul.f32 %v3951, %v3951
    %v3954 = vsel %vm134, %v3952, 0.0
    %3955 = vadd.xlane.f32.xlu0 %v3954
    %v3956 = vpop.xlane.xlu0 %3955
    %v3957 = vsel %vm134, %v3953, 0.0
    %3958 = vadd.xlane.f32.xlu0 %v3957
    %v3959 = vpop.xlane.xlu0 %3958
    %v3960 = vmul.f32 %v3956, %v1187
    %v3961 = vmul.f32 %v3959, %v1187
    %v3962 = vadd.f32 %v3960, 1e-05
    %v3963 = vadd.f32 %v3961, 1e-05
    %v3964 = vrsqrt.pop %v3962
    %v3965 = vrsqrt.pop %v3963
    %v3966 = vmul.f32 %v3950, %v3964
    %v3967 = vmul.f32 %v3951, %v3965
    %v3968 = vld [vmem:[#allocation8 + $0x59] sm:$0x1]
    %v3969 = vlaneseq
    %v3970 = vshrl.u32 %v3969, 7
    %v3971 = vsub.s32 0, %v3970
    %v3972 = vrot.slane %v3968, %v3971
    %v3973 = vmul.f32 %v3966, %v3972
    %v3974 = vmul.f32 %v3967, %v3972
    %v3975 = vld [vmem:[#allocation8 + $0x5a] sm:$0x1]
    %v3976 = vlaneseq
    %v3977 = vshrl.u32 %v3976, 7
    %v3978 = vsub.s32 0, %v3977
    %v3979 = vrot.slane %v3975, %v3978
    %v3980 = vadd.f32 %v3973, %v3979
    %v3981 = vadd.f32 %v3974, %v3979
    %v3982 = vpack.c.bf16 %v3981, %v3980
    %v3983 = vld [vmem:[#allocation7 + $0x110] sm:$0xf]
    %v3984 = vld [vmem:[#allocation7 + $0x114] sm:$0xf]
    %v3985 = vld [vmem:[#allocation7 + $0x118] sm:$0xf]
    %v3986 = vld [vmem:[#allocation7 + $0x11c] sm:$0xf]
    %v3987 = vld [vmem:[#allocation8 + $0x55] sm:$0x1]
    %v3988 = vlaneseq
    %v3989 = vshrl.u32 %v3988, 7
    %v3990 = vsub.s32 0, %v3989
    %v3991 = vrot.slane %v3987, %v3990
    %v3996 = vunpack.c.l.b16 %v3983
    %v3997 = vunpack.c.l.b16 %v3984
    %v3998 = vunpack.c.l.b16 %v3985
    %v3999 = vunpack.c.l.b16 %v3986
    %v4000 = vpack.c.b16 %v3997, %v3996
    %v4001 = vpack.c.b16 %v3999, %v3998
    %v4005 = vsel %vm134, %v3982, 0
    %4007 = vmatprep.subr.bf16.mxu0 0
    %4008 = vmatpush1.bf16.msra.mxu0 %v4000
    %4009 = vmatprep.subr.bf16.mxu0 0
    %4010 = vmatpush1.bf16.msra.mxu0 %v4001
    %4011 = vmatprep.subr.bf16.mxu0 0
    %4012 = vmatpush1.bf16.msra.mxu0 0
    %4013 = vmatprep.subr.bf16.mxu0 0
    %4014 = vmatpush1.bf16.msra.mxu0 0
    %4015 = vmatprep.subr.bf16.mxu0 0
    %4016 = vmatpush1.bf16.msra.mxu0 0
    %4017 = vmatprep.subr.bf16.mxu0 0
    %4018 = vmatpush1.bf16.msra.mxu0 0
    %4019 = vmatprep.subr.bf16.mxu0 0
    %4020 = vmatpush1.bf16.msra.mxu0 0
    %4021 = vmatprep.subr.bf16.mxu0 0
    %4022 = vmatpush1.bf16.msra.mxu0 0
    %4023 = vmatprep.subr.bf16.mxu0 0
    %4024 = vmatpush1.bf16.msra.mxu0 0
    %4025 = vmatprep.subr.bf16.mxu0 0
    %4026 = vmatpush1.bf16.msra.mxu0 0
    %4027 = vmatprep.subr.bf16.mxu0 0
    %4028 = vmatpush1.bf16.msra.mxu0 0
    %4029 = vmatprep.subr.bf16.mxu0 0
    %4030 = vmatpush1.bf16.msra.mxu0 0
    %4031 = vmatprep.subr.bf16.mxu0 0
    %4032 = vmatpush1.bf16.msra.mxu0 0
    %4033 = vmatprep.subr.bf16.mxu0 0
    %4034 = vmatpush1.bf16.msra.mxu0 0
    %4035 = vmatprep.subr.bf16.mxu0 0
    %4036 = vmatpush1.bf16.msra.mxu0 0
    %4037 = vmatprep.subr.bf16.mxu0 0
    %4038 = vmatpush1.bf16.msra.mxu0 0
    %4039 = vmatprep.mubr.bf16.mxu0 0
    %4040 = vmatmul.mubr.bf16.gmra.mrb[0].mxu0 %v4005
    %v4041 = vpop.f32.mrb[0].mxu0
    %v4042 = vadd.f32 %v3991, %v4041
    %v4043 = vpop.f32.mrb[0].mxu0
    %v4044 = vpop.f32.mrb[0].mxu0
    %v4045 = vadd.f32 %v3991, %v4044
    %v4046 = vpop.f32.mrb[0].mxu0
    %4047 = vdwg.mxu0
    %4050 = vrot.lane.b32.xlu0 %v4042, 120
    %v4051 = vpop.permute.xlu0 %4050
    %4052 = vrot.lane.b32.xlu0 %v4045, 120
    %v4053 = vpop.permute.xlu0 %4052
    %4056 = vrot.lane.b32.xlu0 %v4042, 112
    %v4057 = vpop.permute.xlu0 %4056
    %4058 = vrot.lane.b32.xlu0 %v4045, 112
    %v4059 = vpop.permute.xlu0 %4058
    %4062 = vrot.lane.b32.xlu0 %v4042, 104
    %v4063 = vpop.permute.xlu0 %4062
    %4064 = vrot.lane.b32.xlu0 %v4045, 104
    %v4065 = vpop.permute.xlu0 %4064
    %4070 = vrot.lane.b32.xlu0 %v2868, 120
    %v4071 = vpop.permute.xlu0 %4070
    %4072 = vrot.lane.b32.xlu0 %v2871, 120
    %v4073 = vpop.permute.xlu0 %4072
    %4076 = vrot.lane.b32.xlu0 %v2868, 112
    %v4077 = vpop.permute.xlu0 %4076
    %4078 = vrot.lane.b32.xlu0 %v2871, 112
    %v4079 = vpop.permute.xlu0 %4078
    %4082 = vrot.lane.b32.xlu0 %v2868, 104
    %v4083 = vpop.permute.xlu0 %4082
    %4084 = vrot.lane.b32.xlu0 %v2871, 104
    %v4085 = vpop.permute.xlu0 %4084
    %v4088 = vpack.c.bf16 %v4042, %v4042
    %v4089 = vpack.c.bf16 %v4045, %v4045
    %v4090 = vpack.c.bf16 %v4051, %v4051
    %v4091 = vpack.c.bf16 %v4053, %v4053
    %v4092 = vpack.c.bf16 %v4057, %v4057
    %v4093 = vpack.c.bf16 %v4059, %v4059
    %v4094 = vpack.c.bf16 %v4063, %v4063
    %v4095 = vpack.c.bf16 %v4065, %v4065
    %v4096 = vpack.c.bf16 %v2868, %v2868
    %v4097 = vpack.c.bf16 %v2871, %v2871
    %v4098 = vpack.c.bf16 %v4071, %v4071
    %v4099 = vpack.c.bf16 %v4073, %v4073
    %v4100 = vpack.c.bf16 %v4077, %v4077
    %v4101 = vpack.c.bf16 %v4079, %v4079
    %v4102 = vpack.c.bf16 %v4083, %v4083
    %v4103 = vpack.c.bf16 %v4085, %v4085
    %v4105 = vsel %vm210, %v4088, 0
    %v4108 = vsel %vm210, %v4096, 0
    %4110 = vmatprep.subr.bf16.mxu0 0
    %4111 = vmatpush1.bf16.xpose.msra.mxu0 %v4108
    %4112 = vmatprep.subr.bf16.mxu0 0
    %4113 = vmatpush1.bf16.xpose.msra.mxu0 0
    %4114 = vmatprep.subr.bf16.mxu0 0
    %4115 = vmatpush1.bf16.xpose.msra.mxu0 0
    %4116 = vmatprep.subr.bf16.mxu0 0
    %4117 = vmatpush1.bf16.xpose.msra.mxu0 0
    %4118 = vmatprep.subr.bf16.mxu0 0
    %4119 = vmatpush1.bf16.xpose.msra.mxu0 0
    %4120 = vmatprep.subr.bf16.mxu0 0
    %4121 = vmatpush1.bf16.xpose.msra.mxu0 0
    %4122 = vmatprep.subr.bf16.mxu0 0
    %4123 = vmatpush1.bf16.xpose.msra.mxu0 0
    %4124 = vmatprep.subr.bf16.mxu0 0
    %4125 = vmatpush1.bf16.xpose.msra.mxu0 0
    %4126 = vmatprep.subr.bf16.mxu0 0
    %4127 = vmatpush1.bf16.xpose.msra.mxu0 0
    %4128 = vmatprep.subr.bf16.mxu0 0
    %4129 = vmatpush1.bf16.xpose.msra.mxu0 0
    %4130 = vmatprep.subr.bf16.mxu0 0
    %4131 = vmatpush1.bf16.xpose.msra.mxu0 0
    %4132 = vmatprep.subr.bf16.mxu0 0
    %4133 = vmatpush1.bf16.xpose.msra.mxu0 0
    %4134 = vmatprep.subr.bf16.mxu0 0
    %4135 = vmatpush1.bf16.xpose.msra.mxu0 0
    %4136 = vmatprep.subr.bf16.mxu0 0
    %4137 = vmatpush1.bf16.xpose.msra.mxu0 0
    %4138 = vmatprep.subr.bf16.mxu0 0
    %4139 = vmatpush1.bf16.xpose.msra.mxu0 0
    %4140 = vmatprep.subr.bf16.mxu0 0
    %4141 = vmatpush1.bf16.xpose.msra.mxu0 0
    %4142 = vmatprep.mubr.bf16.mxu0 0
    %4143 = vmatmul.mubr.bf16.gmra.mrb[0].mxu0 %v4105
    %v4144 = vpop.f32.mrb[0].mxu0
    %v4145 = vadd.f32 0.0, %v4144
    %v4146 = vpop.f32.mrb[0].mxu0
    %v4147 = vpop.f32.mrb[0].mxu0
    %v4148 = vpop.f32.mrb[0].mxu0
    %4149 = vdwg.mxu0
    %v4151 = vsel %vm210, %v4089, 0
    %v4154 = vsel %vm210, %v4097, 0
    %4156 = vmatprep.subr.bf16.mxu0 0
    %4157 = vmatpush1.bf16.xpose.msra.mxu0 %v4154
    %4158 = vmatprep.subr.bf16.mxu0 0
    %4159 = vmatpush1.bf16.xpose.msra.mxu0 0
    %4160 = vmatprep.subr.bf16.mxu0 0
    %4161 = vmatpush1.bf16.xpose.msra.mxu0 0
    %4162 = vmatprep.subr.bf16.mxu0 0
    %4163 = vmatpush1.bf16.xpose.msra.mxu0 0
    %4164 = vmatprep.subr.bf16.mxu0 0
    %4165 = vmatpush1.bf16.xpose.msra.mxu0 0
    %4166 = vmatprep.subr.bf16.mxu0 0
    %4167 = vmatpush1.bf16.xpose.msra.mxu0 0
    %4168 = vmatprep.subr.bf16.mxu0 0
    %4169 = vmatpush1.bf16.xpose.msra.mxu0 0
    %4170 = vmatprep.subr.bf16.mxu0 0
    %4171 = vmatpush1.bf16.xpose.msra.mxu0 0
    %4172 = vmatprep.subr.bf16.mxu0 0
    %4173 = vmatpush1.bf16.xpose.msra.mxu0 0
    %4174 = vmatprep.subr.bf16.mxu0 0
    %4175 = vmatpush1.bf16.xpose.msra.mxu0 0
    %4176 = vmatprep.subr.bf16.mxu0 0
    %4177 = vmatpush1.bf16.xpose.msra.mxu0 0
    %4178 = vmatprep.subr.bf16.mxu0 0
    %4179 = vmatpush1.bf16.xpose.msra.mxu0 0
    %4180 = vmatprep.subr.bf16.mxu0 0
    %4181 = vmatpush1.bf16.xpose.msra.mxu0 0
    %4182 = vmatprep.subr.bf16.mxu0 0
    %4183 = vmatpush1.bf16.xpose.msra.mxu0 0
    %4184 = vmatprep.subr.bf16.mxu0 0
    %4185 = vmatpush1.bf16.xpose.msra.mxu0 0
    %4186 = vmatprep.subr.bf16.mxu0 0
    %4187 = vmatpush1.bf16.xpose.msra.mxu0 0
    %4188 = vmatprep.mubr.bf16.mxu0 0
    %4189 = vmatmul.mubr.bf16.gmra.mrb[0].mxu0 %v4151
    %v4190 = vpop.f32.mrb[0].mxu0
    %v4191 = vadd.f32 0.0, %v4190
    %v4192 = vpop.f32.mrb[0].mxu0
    %v4193 = vpop.f32.mrb[0].mxu0
    %v4194 = vpop.f32.mrb[0].mxu0
    %4195 = vdwg.mxu0
    %v4197 = vsel %vm210, %v4090, 0
    %v4200 = vsel %vm210, %v4098, 0
    %4202 = vmatprep.subr.bf16.mxu0 0
    %4203 = vmatpush1.bf16.xpose.msra.mxu0 %v4200
    %4204 = vmatprep.subr.bf16.mxu0 0
    %4205 = vmatpush1.bf16.xpose.msra.mxu0 0
    %4206 = vmatprep.subr.bf16.mxu0 0
    %4207 = vmatpush1.bf16.xpose.msra.mxu0 0
    %4208 = vmatprep.subr.bf16.mxu0 0
    %4209 = vmatpush1.bf16.xpose.msra.mxu0 0
    %4210 = vmatprep.subr.bf16.mxu0 0
    %4211 = vmatpush1.bf16.xpose.msra.mxu0 0
    %4212 = vmatprep.subr.bf16.mxu0 0
    %4213 = vmatpush1.bf16.xpose.msra.mxu0 0
    %4214 = vmatprep.subr.bf16.mxu0 0
    %4215 = vmatpush1.bf16.xpose.msra.mxu0 0
    %4216 = vmatprep.subr.bf16.mxu0 0
    %4217 = vmatpush1.bf16.xpose.msra.mxu0 0
    %4218 = vmatprep.subr.bf16.mxu0 0
    %4219 = vmatpush1.bf16.xpose.msra.mxu0 0
    %4220 = vmatprep.subr.bf16.mxu0 0
    %4221 = vmatpush1.bf16.xpose.msra.mxu0 0
    %4222 = vmatprep.subr.bf16.mxu0 0
    %4223 = vmatpush1.bf16.xpose.msra.mxu0 0
    %4224 = vmatprep.subr.bf16.mxu0 0
    %4225 = vmatpush1.bf16.xpose.msra.mxu0 0
    %4226 = vmatprep.subr.bf16.mxu0 0
    %4227 = vmatpush1.bf16.xpose.msra.mxu0 0
    %4228 = vmatprep.subr.bf16.mxu0 0
    %4229 = vmatpush1.bf16.xpose.msra.mxu0 0
    %4230 = vmatprep.subr.bf16.mxu0 0
    %4231 = vmatpush1.bf16.xpose.msra.mxu0 0
    %4232 = vmatprep.subr.bf16.mxu0 0
    %4233 = vmatpush1.bf16.xpose.msra.mxu0 0
    %4234 = vmatprep.mubr.bf16.mxu0 0
    %4235 = vmatmul.mubr.bf16.gmra.mrb[0].mxu0 %v4197
    %v4236 = vpop.f32.mrb[0].mxu0
    %v4237 = vadd.f32 0.0, %v4236
    %v4238 = vpop.f32.mrb[0].mxu0
    %v4239 = vpop.f32.mrb[0].mxu0
    %v4240 = vpop.f32.mrb[0].mxu0
    %4241 = vdwg.mxu0
    %v4243 = vsel %vm210, %v4091, 0
    %v4246 = vsel %vm210, %v4099, 0
    %4248 = vmatprep.subr.bf16.mxu0 0
    %4249 = vmatpush1.bf16.xpose.msra.mxu0 %v4246
    %4250 = vmatprep.subr.bf16.mxu0 0
    %4251 = vmatpush1.bf16.xpose.msra.mxu0 0
    %4252 = vmatprep.subr.bf16.mxu0 0
    %4253 = vmatpush1.bf16.xpose.msra.mxu0 0
    %4254 = vmatprep.subr.bf16.mxu0 0
    %4255 = vmatpush1.bf16.xpose.msra.mxu0 0
    %4256 = vmatprep.subr.bf16.mxu0 0
    %4257 = vmatpush1.bf16.xpose.msra.mxu0 0
    %4258 = vmatprep.subr.bf16.mxu0 0
    %4259 = vmatpush1.bf16.xpose.msra.mxu0 0
    %4260 = vmatprep.subr.bf16.mxu0 0
    %4261 = vmatpush1.bf16.xpose.msra.mxu0 0
    %4262 = vmatprep.subr.bf16.mxu0 0
    %4263 = vmatpush1.bf16.xpose.msra.mxu0 0
    %4264 = vmatprep.subr.bf16.mxu0 0
    %4265 = vmatpush1.bf16.xpose.msra.mxu0 0
    %4266 = vmatprep.subr.bf16.mxu0 0
    %4267 = vmatpush1.bf16.xpose.msra.mxu0 0
    %4268 = vmatprep.subr.bf16.mxu0 0
    %4269 = vmatpush1.bf16.xpose.msra.mxu0 0
    %4270 = vmatprep.subr.bf16.mxu0 0
    %4271 = vmatpush1.bf16.xpose.msra.mxu0 0
    %4272 = vmatprep.subr.bf16.mxu0 0
    %4273 = vmatpush1.bf16.xpose.msra.mxu0 0
    %4274 = vmatprep.subr.bf16.mxu0 0
    %4275 = vmatpush1.bf16.xpose.msra.mxu0 0
    %4276 = vmatprep.subr.bf16.mxu0 0
    %4277 = vmatpush1.bf16.xpose.msra.mxu0 0
    %4278 = vmatprep.subr.bf16.mxu0 0
    %4279 = vmatpush1.bf16.xpose.msra.mxu0 0
    %4280 = vmatprep.mubr.bf16.mxu0 0
    %4281 = vmatmul.mubr.bf16.gmra.mrb[0].mxu0 %v4243
    %v4282 = vpop.f32.mrb[0].mxu0
    %v4283 = vadd.f32 0.0, %v4282
    %v4284 = vpop.f32.mrb[0].mxu0
    %v4285 = vpop.f32.mrb[0].mxu0
    %v4286 = vpop.f32.mrb[0].mxu0
    %4287 = vdwg.mxu0
    %v4289 = vsel %vm210, %v4092, 0
    %v4292 = vsel %vm210, %v4100, 0
    %4294 = vmatprep.subr.bf16.mxu0 0
    %4295 = vmatpush1.bf16.xpose.msra.mxu0 %v4292
    %4296 = vmatprep.subr.bf16.mxu0 0
    %4297 = vmatpush1.bf16.xpose.msra.mxu0 0
    %4298 = vmatprep.subr.bf16.mxu0 0
    %4299 = vmatpush1.bf16.xpose.msra.mxu0 0
    %4300 = vmatprep.subr.bf16.mxu0 0
    %4301 = vmatpush1.bf16.xpose.msra.mxu0 0
    %4302 = vmatprep.subr.bf16.mxu0 0
    %4303 = vmatpush1.bf16.xpose.msra.mxu0 0
    %4304 = vmatprep.subr.bf16.mxu0 0
    %4305 = vmatpush1.bf16.xpose.msra.mxu0 0
    %4306 = vmatprep.subr.bf16.mxu0 0
    %4307 = vmatpush1.bf16.xpose.msra.mxu0 0
    %4308 = vmatprep.subr.bf16.mxu0 0
    %4309 = vmatpush1.bf16.xpose.msra.mxu0 0
    %4310 = vmatprep.subr.bf16.mxu0 0
    %4311 = vmatpush1.bf16.xpose.msra.mxu0 0
    %4312 = vmatprep.subr.bf16.mxu0 0
    %4313 = vmatpush1.bf16.xpose.msra.mxu0 0
    %4314 = vmatprep.subr.bf16.mxu0 0
    %4315 = vmatpush1.bf16.xpose.msra.mxu0 0
    %4316 = vmatprep.subr.bf16.mxu0 0
    %4317 = vmatpush1.bf16.xpose.msra.mxu0 0
    %4318 = vmatprep.subr.bf16.mxu0 0
    %4319 = vmatpush1.bf16.xpose.msra.mxu0 0
    %4320 = vmatprep.subr.bf16.mxu0 0
    %4321 = vmatpush1.bf16.xpose.msra.mxu0 0
    %4322 = vmatprep.subr.bf16.mxu0 0
    %4323 = vmatpush1.bf16.xpose.msra.mxu0 0
    %4324 = vmatprep.subr.bf16.mxu0 0
    %4325 = vmatpush1.bf16.xpose.msra.mxu0 0
    %4326 = vmatprep.mubr.bf16.mxu0 0
    %4327 = vmatmul.mubr.bf16.gmra.mrb[0].mxu0 %v4289
    %v4328 = vpop.f32.mrb[0].mxu0
    %v4329 = vadd.f32 0.0, %v4328
    %v4330 = vpop.f32.mrb[0].mxu0
    %v4331 = vpop.f32.mrb[0].mxu0
    %v4332 = vpop.f32.mrb[0].mxu0
    %4333 = vdwg.mxu0
    %v4335 = vsel %vm210, %v4093, 0
    %v4338 = vsel %vm210, %v4101, 0
    %4340 = vmatprep.subr.bf16.mxu0 0
    %4341 = vmatpush1.bf16.xpose.msra.mxu0 %v4338
    %4342 = vmatprep.subr.bf16.mxu0 0
    %4343 = vmatpush1.bf16.xpose.msra.mxu0 0
    %4344 = vmatprep.subr.bf16.mxu0 0
    %4345 = vmatpush1.bf16.xpose.msra.mxu0 0
    %4346 = vmatprep.subr.bf16.mxu0 0
    %4347 = vmatpush1.bf16.xpose.msra.mxu0 0
    %4348 = vmatprep.subr.bf16.mxu0 0
    %4349 = vmatpush1.bf16.xpose.msra.mxu0 0
    %4350 = vmatprep.subr.bf16.mxu0 0
    %4351 = vmatpush1.bf16.xpose.msra.mxu0 0
    %4352 = vmatprep.subr.bf16.mxu0 0
    %4353 = vmatpush1.bf16.xpose.msra.mxu0 0
    %4354 = vmatprep.subr.bf16.mxu0 0
    %4355 = vmatpush1.bf16.xpose.msra.mxu0 0
    %4356 = vmatprep.subr.bf16.mxu0 0
    %4357 = vmatpush1.bf16.xpose.msra.mxu0 0
    %4358 = vmatprep.subr.bf16.mxu0 0
    %4359 = vmatpush1.bf16.xpose.msra.mxu0 0
    %4360 = vmatprep.subr.bf16.mxu0 0
    %4361 = vmatpush1.bf16.xpose.msra.mxu0 0
    %4362 = vmatprep.subr.bf16.mxu0 0
    %4363 = vmatpush1.bf16.xpose.msra.mxu0 0
    %4364 = vmatprep.subr.bf16.mxu0 0
    %4365 = vmatpush1.bf16.xpose.msra.mxu0 0
    %4366 = vmatprep.subr.bf16.mxu0 0
    %4367 = vmatpush1.bf16.xpose.msra.mxu0 0
    %4368 = vmatprep.subr.bf16.mxu0 0
    %4369 = vmatpush1.bf16.xpose.msra.mxu0 0
    %4370 = vmatprep.subr.bf16.mxu0 0
    %4371 = vmatpush1.bf16.xpose.msra.mxu0 0
    %4372 = vmatprep.mubr.bf16.mxu0 0
    %4373 = vmatmul.mubr.bf16.gmra.mrb[0].mxu0 %v4335
    %v4374 = vpop.f32.mrb[0].mxu0
    %v4375 = vadd.f32 0.0, %v4374
    %v4376 = vpop.f32.mrb[0].mxu0
    %v4377 = vpop.f32.mrb[0].mxu0
    %v4378 = vpop.f32.mrb[0].mxu0
    %4379 = vdwg.mxu0
    %v4381 = vsel %vm210, %v4094, 0
    %v4384 = vsel %vm210, %v4102, 0
    %4386 = vmatprep.subr.bf16.mxu0 0
    %4387 = vmatpush1.bf16.xpose.msra.mxu0 %v4384
    %4388 = vmatprep.subr.bf16.mxu0 0
    %4389 = vmatpush1.bf16.xpose.msra.mxu0 0
    %4390 = vmatprep.subr.bf16.mxu0 0
    %4391 = vmatpush1.bf16.xpose.msra.mxu0 0
    %4392 = vmatprep.subr.bf16.mxu0 0
    %4393 = vmatpush1.bf16.xpose.msra.mxu0 0
    %4394 = vmatprep.subr.bf16.mxu0 0
    %4395 = vmatpush1.bf16.xpose.msra.mxu0 0
    %4396 = vmatprep.subr.bf16.mxu0 0
    %4397 = vmatpush1.bf16.xpose.msra.mxu0 0
    %4398 = vmatprep.subr.bf16.mxu0 0
    %4399 = vmatpush1.bf16.xpose.msra.mxu0 0
    %4400 = vmatprep.subr.bf16.mxu0 0
    %4401 = vmatpush1.bf16.xpose.msra.mxu0 0
    %4402 = vmatprep.subr.bf16.mxu0 0
    %4403 = vmatpush1.bf16.xpose.msra.mxu0 0
    %4404 = vmatprep.subr.bf16.mxu0 0
    %4405 = vmatpush1.bf16.xpose.msra.mxu0 0
    %4406 = vmatprep.subr.bf16.mxu0 0
    %4407 = vmatpush1.bf16.xpose.msra.mxu0 0
    %4408 = vmatprep.subr.bf16.mxu0 0
    %4409 = vmatpush1.bf16.xpose.msra.mxu0 0
    %4410 = vmatprep.subr.bf16.mxu0 0
    %4411 = vmatpush1.bf16.xpose.msra.mxu0 0
    %4412 = vmatprep.subr.bf16.mxu0 0
    %4413 = vmatpush1.bf16.xpose.msra.mxu0 0
    %4414 = vmatprep.subr.bf16.mxu0 0
    %4415 = vmatpush1.bf16.xpose.msra.mxu0 0
    %4416 = vmatprep.subr.bf16.mxu0 0
    %4417 = vmatpush1.bf16.xpose.msra.mxu0 0
    %4418 = vmatprep.mubr.bf16.mxu0 0
    %4419 = vmatmul.mubr.bf16.gmra.mrb[0].mxu0 %v4381
    %v4420 = vpop.f32.mrb[0].mxu0
    %v4421 = vadd.f32 0.0, %v4420
    %v4422 = vpop.f32.mrb[0].mxu0
    %v4423 = vpop.f32.mrb[0].mxu0
    %v4424 = vpop.f32.mrb[0].mxu0
    %4425 = vdwg.mxu0
    %v4427 = vsel %vm210, %v4095, 0
    %v4430 = vsel %vm210, %v4103, 0
    %4432 = vmatprep.subr.bf16.mxu0 0
    %4433 = vmatpush1.bf16.xpose.msra.mxu0 %v4430
    %4434 = vmatprep.subr.bf16.mxu0 0
    %4435 = vmatpush1.bf16.xpose.msra.mxu0 0
    %4436 = vmatprep.subr.bf16.mxu0 0
    %4437 = vmatpush1.bf16.xpose.msra.mxu0 0
    %4438 = vmatprep.subr.bf16.mxu0 0
    %4439 = vmatpush1.bf16.xpose.msra.mxu0 0
    %4440 = vmatprep.subr.bf16.mxu0 0
    %4441 = vmatpush1.bf16.xpose.msra.mxu0 0
    %4442 = vmatprep.subr.bf16.mxu0 0
    %4443 = vmatpush1.bf16.xpose.msra.mxu0 0
    %4444 = vmatprep.subr.bf16.mxu0 0
    %4445 = vmatpush1.bf16.xpose.msra.mxu0 0
    %4446 = vmatprep.subr.bf16.mxu0 0
    %4447 = vmatpush1.bf16.xpose.msra.mxu0 0
    %4448 = vmatprep.subr.bf16.mxu0 0
    %4449 = vmatpush1.bf16.xpose.msra.mxu0 0
    %4450 = vmatprep.subr.bf16.mxu0 0
    %4451 = vmatpush1.bf16.xpose.msra.mxu0 0
    %4452 = vmatprep.subr.bf16.mxu0 0
    %4453 = vmatpush1.bf16.xpose.msra.mxu0 0
    %4454 = vmatprep.subr.bf16.mxu0 0
    %4455 = vmatpush1.bf16.xpose.msra.mxu0 0
    %4456 = vmatprep.subr.bf16.mxu0 0
    %4457 = vmatpush1.bf16.xpose.msra.mxu0 0
    %4458 = vmatprep.subr.bf16.mxu0 0
    %4459 = vmatpush1.bf16.xpose.msra.mxu0 0
    %4460 = vmatprep.subr.bf16.mxu0 0
    %4461 = vmatpush1.bf16.xpose.msra.mxu0 0
    %4462 = vmatprep.subr.bf16.mxu0 0
    %4463 = vmatpush1.bf16.xpose.msra.mxu0 0
    %4464 = vmatprep.mubr.bf16.mxu0 0
    %4465 = vmatmul.mubr.bf16.gmra.mrb[0].mxu0 %v4427
    %v4466 = vpop.f32.mrb[0].mxu0
    %v4467 = vadd.f32 0.0, %v4466
    %v4468 = vpop.f32.mrb[0].mxu0
    %v4469 = vpop.f32.mrb[0].mxu0
    %v4470 = vpop.f32.mrb[0].mxu0
    %4471 = vdwg.mxu0
    %v4472 = vsel %vm210, %v4145, -inf
    %4473 = vmax.xlane.f32.xlu0 %v4472
    %v4474 = vpop.xlane.xlu0 %4473
    %v4475 = vsel %vm210, %v4191, -inf
    %4476 = vmax.xlane.f32.xlu0 %v4475
    %v4477 = vpop.xlane.xlu0 %4476
    %v4478 = vsel %vm210, %v4237, -inf
    %4479 = vmax.xlane.f32.xlu0 %v4478
    %v4480 = vpop.xlane.xlu0 %4479
    %v4481 = vsel %vm210, %v4283, -inf
    %4482 = vmax.xlane.f32.xlu0 %v4481
    %v4483 = vpop.xlane.xlu0 %4482
    %v4484 = vsel %vm210, %v4329, -inf
    %4485 = vmax.xlane.f32.xlu0 %v4484
    %v4486 = vpop.xlane.xlu0 %4485
    %v4487 = vsel %vm210, %v4375, -inf
    %4488 = vmax.xlane.f32.xlu0 %v4487
    %v4489 = vpop.xlane.xlu0 %4488
    %v4490 = vsel %vm210, %v4421, -inf
    %4491 = vmax.xlane.f32.xlu0 %v4490
    %v4492 = vpop.xlane.xlu0 %4491
    %v4493 = vsel %vm210, %v4467, -inf
    %4494 = vmax.xlane.f32.xlu0 %v4493
    %v4495 = vpop.xlane.xlu0 %4494
    %v4496 = vsub.f32 %v4145, %v4474
    %v4497 = vsub.f32 %v4191, %v4477
    %v4498 = vsub.f32 %v4237, %v4480
    %v4499 = vsub.f32 %v4283, %v4483
    %v4500 = vsub.f32 %v4329, %v4486
    %v4501 = vsub.f32 %v4375, %v4489
    %v4502 = vsub.f32 %v4421, %v4492
    %v4503 = vsub.f32 %v4467, %v4495
    %v4504 = vmul.f32 %v4496, 1.442695
    %v4505 = vpow.pop %v4504
    %v4506 = vmul.f32 %v4497, 1.442695
    %v4507 = vpow.pop %v4506
    %v4508 = vmul.f32 %v4498, 1.442695
    %v4509 = vpow.pop %v4508
    %v4510 = vmul.f32 %v4499, 1.442695
    %v4511 = vpow.pop %v4510
    %v4512 = vmul.f32 %v4500, 1.442695
    %v4513 = vpow.pop %v4512
    %v4514 = vmul.f32 %v4501, 1.442695
    %v4515 = vpow.pop %v4514
    %v4516 = vmul.f32 %v4502, 1.442695
    %v4517 = vpow.pop %v4516
    %v4518 = vmul.f32 %v4503, 1.442695
    %v4519 = vpow.pop %v4518
    %v4520 = vsel %vm210, %v4505, 0.0
    %4521 = vadd.xlane.f32.xlu0 %v4520
    %v4522 = vpop.xlane.xlu0 %4521
    %v4523 = vsel %vm210, %v4507, 0.0
    %4524 = vadd.xlane.f32.xlu0 %v4523
    %v4525 = vpop.xlane.xlu0 %4524
    %v4526 = vsel %vm210, %v4509, 0.0
    %4527 = vadd.xlane.f32.xlu0 %v4526
    %v4528 = vpop.xlane.xlu0 %4527
    %v4529 = vsel %vm210, %v4511, 0.0
    %4530 = vadd.xlane.f32.xlu0 %v4529
    %v4531 = vpop.xlane.xlu0 %4530
    %v4532 = vsel %vm210, %v4513, 0.0
    %4533 = vadd.xlane.f32.xlu0 %v4532
    %v4534 = vpop.xlane.xlu0 %4533
    %v4535 = vsel %vm210, %v4515, 0.0
    %4536 = vadd.xlane.f32.xlu0 %v4535
    %v4537 = vpop.xlane.xlu0 %4536
    %v4538 = vsel %vm210, %v4517, 0.0
    %4539 = vadd.xlane.f32.xlu0 %v4538
    %v4540 = vpop.xlane.xlu0 %4539
    %v4541 = vsel %vm210, %v4519, 0.0
    %4542 = vadd.xlane.f32.xlu0 %v4541
    %v4543 = vpop.xlane.xlu0 %4542
    %v4544 = vrcp.pop %v4522
    %v4545 = vrcp.pop %v4525
    %v4546 = vrcp.pop %v4528
    %v4547 = vrcp.pop %v4531
    %v4548 = vrcp.pop %v4534
    %v4549 = vrcp.pop %v4537
    %v4550 = vrcp.pop %v4540
    %v4551 = vrcp.pop %v4543
    %v4552 = vmul.f32 %v4505, %v4544
    %v4553 = vmul.f32 %v4507, %v4545
    %v4554 = vmul.f32 %v4509, %v4546
    %v4555 = vmul.f32 %v4511, %v4547
    %v4556 = vmul.f32 %v4513, %v4548
    %v4557 = vmul.f32 %v4515, %v4549
    %v4558 = vmul.f32 %v4517, %v4550
    %v4559 = vmul.f32 %v4519, %v4551
    %v4560 = vpack.c.bf16 %v4552, %v4552
    %v4561 = vpack.c.bf16 %v4553, %v4553
    %v4562 = vpack.c.bf16 %v4554, %v4554
    %v4563 = vpack.c.bf16 %v4555, %v4555
    %v4564 = vpack.c.bf16 %v4556, %v4556
    %v4565 = vpack.c.bf16 %v4557, %v4557
    %v4566 = vpack.c.bf16 %v4558, %v4558
    %v4567 = vpack.c.bf16 %v4559, %v4559
    %4569 = vrot.lane.b32.xlu0 %v4096, 96
    %v4570 = vpop.permute.xlu0 %4569
    %v4572 = vsel %vm210, %v4560, 0
    %v4575 = vsel %vm701, %v4570, 0
    %4577 = vmatprep.subr.bf16.mxu0 0
    %4578 = vmatpush1.bf16.msra.mxu0 %v4575
    %4579 = vmatprep.subr.bf16.mxu0 0
    %4580 = vmatpush1.bf16.msra.mxu0 0
    %4581 = vmatprep.subr.bf16.mxu0 0
    %4582 = vmatpush1.bf16.msra.mxu0 0
    %4583 = vmatprep.subr.bf16.mxu0 0
    %4584 = vmatpush1.bf16.msra.mxu0 0
    %4585 = vmatprep.subr.bf16.mxu0 0
    %4586 = vmatpush1.bf16.msra.mxu0 0
    %4587 = vmatprep.subr.bf16.mxu0 0
    %4588 = vmatpush1.bf16.msra.mxu0 0
    %4589 = vmatprep.subr.bf16.mxu0 0
    %4590 = vmatpush1.bf16.msra.mxu0 0
    %4591 = vmatprep.subr.bf16.mxu0 0
    %4592 = vmatpush1.bf16.msra.mxu0 0
    %4593 = vmatprep.subr.bf16.mxu0 0
    %4594 = vmatpush1.bf16.msra.mxu0 0
    %4595 = vmatprep.subr.bf16.mxu0 0
    %4596 = vmatpush1.bf16.msra.mxu0 0
    %4597 = vmatprep.subr.bf16.mxu0 0
    %4598 = vmatpush1.bf16.msra.mxu0 0
    %4599 = vmatprep.subr.bf16.mxu0 0
    %4600 = vmatpush1.bf16.msra.mxu0 0
    %4601 = vmatprep.subr.bf16.mxu0 0
    %4602 = vmatpush1.bf16.msra.mxu0 0
    %4603 = vmatprep.subr.bf16.mxu0 0
    %4604 = vmatpush1.bf16.msra.mxu0 0
    %4605 = vmatprep.subr.bf16.mxu0 0
    %4606 = vmatpush1.bf16.msra.mxu0 0
    %4607 = vmatprep.subr.bf16.mxu0 0
    %4608 = vmatpush1.bf16.msra.mxu0 0
    %4609 = vmatprep.mubr.bf16.mxu0 0
    %4610 = vmatmul.mubr.bf16.gmra.mrb[0].mxu0 %v4572
    %v4611 = vpop.f32.mrb[0].mxu0
    %v4612 = vadd.f32 0.0, %v4611
    %v4613 = vpop.f32.mrb[0].mxu0
    %v4614 = vpop.f32.mrb[0].mxu0
    %v4615 = vpop.f32.mrb[0].mxu0
    %4616 = vdwg.mxu0
    %4618 = vrot.lane.b32.xlu0 %v4097, 96
    %v4619 = vpop.permute.xlu0 %4618
    %v4621 = vsel %vm210, %v4561, 0
    %v4624 = vsel %vm701, %v4619, 0
    %4626 = vmatprep.subr.bf16.mxu0 0
    %4627 = vmatpush1.bf16.msra.mxu0 %v4624
    %4628 = vmatprep.subr.bf16.mxu0 0
    %4629 = vmatpush1.bf16.msra.mxu0 0
    %4630 = vmatprep.subr.bf16.mxu0 0
    %4631 = vmatpush1.bf16.msra.mxu0 0
    %4632 = vmatprep.subr.bf16.mxu0 0
    %4633 = vmatpush1.bf16.msra.mxu0 0
    %4634 = vmatprep.subr.bf16.mxu0 0
    %4635 = vmatpush1.bf16.msra.mxu0 0
    %4636 = vmatprep.subr.bf16.mxu0 0
    %4637 = vmatpush1.bf16.msra.mxu0 0
    %4638 = vmatprep.subr.bf16.mxu0 0
    %4639 = vmatpush1.bf16.msra.mxu0 0
    %4640 = vmatprep.subr.bf16.mxu0 0
    %4641 = vmatpush1.bf16.msra.mxu0 0
    %4642 = vmatprep.subr.bf16.mxu0 0
    %4643 = vmatpush1.bf16.msra.mxu0 0
    %4644 = vmatprep.subr.bf16.mxu0 0
    %4645 = vmatpush1.bf16.msra.mxu0 0
    %4646 = vmatprep.subr.bf16.mxu0 0
    %4647 = vmatpush1.bf16.msra.mxu0 0
    %4648 = vmatprep.subr.bf16.mxu0 0
    %4649 = vmatpush1.bf16.msra.mxu0 0
    %4650 = vmatprep.subr.bf16.mxu0 0
    %4651 = vmatpush1.bf16.msra.mxu0 0
    %4652 = vmatprep.subr.bf16.mxu0 0
    %4653 = vmatpush1.bf16.msra.mxu0 0
    %4654 = vmatprep.subr.bf16.mxu0 0
    %4655 = vmatpush1.bf16.msra.mxu0 0
    %4656 = vmatprep.subr.bf16.mxu0 0
    %4657 = vmatpush1.bf16.msra.mxu0 0
    %4658 = vmatprep.mubr.bf16.mxu0 0
    %4659 = vmatmul.mubr.bf16.gmra.mrb[0].mxu0 %v4621
    %v4660 = vpop.f32.mrb[0].mxu0
    %v4661 = vadd.f32 0.0, %v4660
    %v4662 = vpop.f32.mrb[0].mxu0
    %v4663 = vpop.f32.mrb[0].mxu0
    %v4664 = vpop.f32.mrb[0].mxu0
    %4665 = vdwg.mxu0
    %4667 = vrot.lane.b32.xlu0 %v4098, 96
    %v4668 = vpop.permute.xlu0 %4667
    %v4670 = vsel %vm210, %v4562, 0
    %v4673 = vsel %vm701, %v4668, 0
    %4675 = vmatprep.subr.bf16.mxu0 0
    %4676 = vmatpush1.bf16.msra.mxu0 %v4673
    %4677 = vmatprep.subr.bf16.mxu0 0
    %4678 = vmatpush1.bf16.msra.mxu0 0
    %4679 = vmatprep.subr.bf16.mxu0 0
    %4680 = vmatpush1.bf16.msra.mxu0 0
    %4681 = vmatprep.subr.bf16.mxu0 0
    %4682 = vmatpush1.bf16.msra.mxu0 0
    %4683 = vmatprep.subr.bf16.mxu0 0
    %4684 = vmatpush1.bf16.msra.mxu0 0
    %4685 = vmatprep.subr.bf16.mxu0 0
    %4686 = vmatpush1.bf16.msra.mxu0 0
    %4687 = vmatprep.subr.bf16.mxu0 0
    %4688 = vmatpush1.bf16.msra.mxu0 0
    %4689 = vmatprep.subr.bf16.mxu0 0
    %4690 = vmatpush1.bf16.msra.mxu0 0
    %4691 = vmatprep.subr.bf16.mxu0 0
    %4692 = vmatpush1.bf16.msra.mxu0 0
    %4693 = vmatprep.subr.bf16.mxu0 0
    %4694 = vmatpush1.bf16.msra.mxu0 0
    %4695 = vmatprep.subr.bf16.mxu0 0
    %4696 = vmatpush1.bf16.msra.mxu0 0
    %4697 = vmatprep.subr.bf16.mxu0 0
    %4698 = vmatpush1.bf16.msra.mxu0 0
    %4699 = vmatprep.subr.bf16.mxu0 0
    %4700 = vmatpush1.bf16.msra.mxu0 0
    %4701 = vmatprep.subr.bf16.mxu0 0
    %4702 = vmatpush1.bf16.msra.mxu0 0
    %4703 = vmatprep.subr.bf16.mxu0 0
    %4704 = vmatpush1.bf16.msra.mxu0 0
    %4705 = vmatprep.subr.bf16.mxu0 0
    %4706 = vmatpush1.bf16.msra.mxu0 0
    %4707 = vmatprep.mubr.bf16.mxu0 0
    %4708 = vmatmul.mubr.bf16.gmra.mrb[0].mxu0 %v4670
    %v4709 = vpop.f32.mrb[0].mxu0
    %v4710 = vadd.f32 0.0, %v4709
    %v4711 = vpop.f32.mrb[0].mxu0
    %v4712 = vpop.f32.mrb[0].mxu0
    %v4713 = vpop.f32.mrb[0].mxu0
    %4714 = vdwg.mxu0
    %4716 = vrot.lane.b32.xlu0 %v4099, 96
    %v4717 = vpop.permute.xlu0 %4716
    %v4719 = vsel %vm210, %v4563, 0
    %v4722 = vsel %vm701, %v4717, 0
    %4724 = vmatprep.subr.bf16.mxu0 0
    %4725 = vmatpush1.bf16.msra.mxu0 %v4722
    %4726 = vmatprep.subr.bf16.mxu0 0
    %4727 = vmatpush1.bf16.msra.mxu0 0
    %4728 = vmatprep.subr.bf16.mxu0 0
    %4729 = vmatpush1.bf16.msra.mxu0 0
    %4730 = vmatprep.subr.bf16.mxu0 0
    %4731 = vmatpush1.bf16.msra.mxu0 0
    %4732 = vmatprep.subr.bf16.mxu0 0
    %4733 = vmatpush1.bf16.msra.mxu0 0
    %4734 = vmatprep.subr.bf16.mxu0 0
    %4735 = vmatpush1.bf16.msra.mxu0 0
    %4736 = vmatprep.subr.bf16.mxu0 0
    %4737 = vmatpush1.bf16.msra.mxu0 0
    %4738 = vmatprep.subr.bf16.mxu0 0
    %4739 = vmatpush1.bf16.msra.mxu0 0
    %4740 = vmatprep.subr.bf16.mxu0 0
    %4741 = vmatpush1.bf16.msra.mxu0 0
    %4742 = vmatprep.subr.bf16.mxu0 0
    %4743 = vmatpush1.bf16.msra.mxu0 0
    %4744 = vmatprep.subr.bf16.mxu0 0
    %4745 = vmatpush1.bf16.msra.mxu0 0
    %4746 = vmatprep.subr.bf16.mxu0 0
    %4747 = vmatpush1.bf16.msra.mxu0 0
    %4748 = vmatprep.subr.bf16.mxu0 0
    %4749 = vmatpush1.bf16.msra.mxu0 0
    %4750 = vmatprep.subr.bf16.mxu0 0
    %4751 = vmatpush1.bf16.msra.mxu0 0
    %4752 = vmatprep.subr.bf16.mxu0 0
    %4753 = vmatpush1.bf16.msra.mxu0 0
    %4754 = vmatprep.subr.bf16.mxu0 0
    %4755 = vmatpush1.bf16.msra.mxu0 0
    %4756 = vmatprep.mubr.bf16.mxu0 0
    %4757 = vmatmul.mubr.bf16.gmra.mrb[0].mxu0 %v4719
    %v4758 = vpop.f32.mrb[0].mxu0
    %v4759 = vadd.f32 0.0, %v4758
    %v4760 = vpop.f32.mrb[0].mxu0
    %v4761 = vpop.f32.mrb[0].mxu0
    %v4762 = vpop.f32.mrb[0].mxu0
    %4763 = vdwg.mxu0
    %4765 = vrot.lane.b32.xlu0 %v4100, 96
    %v4766 = vpop.permute.xlu0 %4765
    %v4768 = vsel %vm210, %v4564, 0
    %v4771 = vsel %vm701, %v4766, 0
    %4773 = vmatprep.subr.bf16.mxu0 0
    %4774 = vmatpush1.bf16.msra.mxu0 %v4771
    %4775 = vmatprep.subr.bf16.mxu0 0
    %4776 = vmatpush1.bf16.msra.mxu0 0
    %4777 = vmatprep.subr.bf16.mxu0 0
    %4778 = vmatpush1.bf16.msra.mxu0 0
    %4779 = vmatprep.subr.bf16.mxu0 0
    %4780 = vmatpush1.bf16.msra.mxu0 0
    %4781 = vmatprep.subr.bf16.mxu0 0
    %4782 = vmatpush1.bf16.msra.mxu0 0
    %4783 = vmatprep.subr.bf16.mxu0 0
    %4784 = vmatpush1.bf16.msra.mxu0 0
    %4785 = vmatprep.subr.bf16.mxu0 0
    %4786 = vmatpush1.bf16.msra.mxu0 0
    %4787 = vmatprep.subr.bf16.mxu0 0
    %4788 = vmatpush1.bf16.msra.mxu0 0
    %4789 = vmatprep.subr.bf16.mxu0 0
    %4790 = vmatpush1.bf16.msra.mxu0 0
    %4791 = vmatprep.subr.bf16.mxu0 0
    %4792 = vmatpush1.bf16.msra.mxu0 0
    %4793 = vmatprep.subr.bf16.mxu0 0
    %4794 = vmatpush1.bf16.msra.mxu0 0
    %4795 = vmatprep.subr.bf16.mxu0 0
    %4796 = vmatpush1.bf16.msra.mxu0 0
    %4797 = vmatprep.subr.bf16.mxu0 0
    %4798 = vmatpush1.bf16.msra.mxu0 0
    %4799 = vmatprep.subr.bf16.mxu0 0
    %4800 = vmatpush1.bf16.msra.mxu0 0
    %4801 = vmatprep.subr.bf16.mxu0 0
    %4802 = vmatpush1.bf16.msra.mxu0 0
    %4803 = vmatprep.subr.bf16.mxu0 0
    %4804 = vmatpush1.bf16.msra.mxu0 0
    %4805 = vmatprep.mubr.bf16.mxu0 0
    %4806 = vmatmul.mubr.bf16.gmra.mrb[0].mxu0 %v4768
    %v4807 = vpop.f32.mrb[0].mxu0
    %v4808 = vadd.f32 0.0, %v4807
    %v4809 = vpop.f32.mrb[0].mxu0
    %v4810 = vpop.f32.mrb[0].mxu0
    %v4811 = vpop.f32.mrb[0].mxu0
    %4812 = vdwg.mxu0
    %4814 = vrot.lane.b32.xlu0 %v4101, 96
    %v4815 = vpop.permute.xlu0 %4814
    %v4817 = vsel %vm210, %v4565, 0
    %v4820 = vsel %vm701, %v4815, 0
    %4822 = vmatprep.subr.bf16.mxu0 0
    %4823 = vmatpush1.bf16.msra.mxu0 %v4820
    %4824 = vmatprep.subr.bf16.mxu0 0
    %4825 = vmatpush1.bf16.msra.mxu0 0
    %4826 = vmatprep.subr.bf16.mxu0 0
    %4827 = vmatpush1.bf16.msra.mxu0 0
    %4828 = vmatprep.subr.bf16.mxu0 0
    %4829 = vmatpush1.bf16.msra.mxu0 0
    %4830 = vmatprep.subr.bf16.mxu0 0
    %4831 = vmatpush1.bf16.msra.mxu0 0
    %4832 = vmatprep.subr.bf16.mxu0 0
    %4833 = vmatpush1.bf16.msra.mxu0 0
    %4834 = vmatprep.subr.bf16.mxu0 0
    %4835 = vmatpush1.bf16.msra.mxu0 0
    %4836 = vmatprep.subr.bf16.mxu0 0
    %4837 = vmatpush1.bf16.msra.mxu0 0
    %4838 = vmatprep.subr.bf16.mxu0 0
    %4839 = vmatpush1.bf16.msra.mxu0 0
    %4840 = vmatprep.subr.bf16.mxu0 0
    %4841 = vmatpush1.bf16.msra.mxu0 0
    %4842 = vmatprep.subr.bf16.mxu0 0
    %4843 = vmatpush1.bf16.msra.mxu0 0
    %4844 = vmatprep.subr.bf16.mxu0 0
    %4845 = vmatpush1.bf16.msra.mxu0 0
    %4846 = vmatprep.subr.bf16.mxu0 0
    %4847 = vmatpush1.bf16.msra.mxu0 0
    %4848 = vmatprep.subr.bf16.mxu0 0
    %4849 = vmatpush1.bf16.msra.mxu0 0
    %4850 = vmatprep.subr.bf16.mxu0 0
    %4851 = vmatpush1.bf16.msra.mxu0 0
    %4852 = vmatprep.subr.bf16.mxu0 0
    %4853 = vmatpush1.bf16.msra.mxu0 0
    %4854 = vmatprep.mubr.bf16.mxu0 0
    %4855 = vmatmul.mubr.bf16.gmra.mrb[0].mxu0 %v4817
    %v4856 = vpop.f32.mrb[0].mxu0
    %v4857 = vadd.f32 0.0, %v4856
    %v4858 = vpop.f32.mrb[0].mxu0
    %v4859 = vpop.f32.mrb[0].mxu0
    %v4860 = vpop.f32.mrb[0].mxu0
    %4861 = vdwg.mxu0
    %4863 = vrot.lane.b32.xlu0 %v4102, 96
    %v4864 = vpop.permute.xlu0 %4863
    %v4866 = vsel %vm210, %v4566, 0
    %v4869 = vsel %vm701, %v4864, 0
    %4871 = vmatprep.subr.bf16.mxu0 0
    %4872 = vmatpush1.bf16.msra.mxu0 %v4869
    %4873 = vmatprep.subr.bf16.mxu0 0
    %4874 = vmatpush1.bf16.msra.mxu0 0
    %4875 = vmatprep.subr.bf16.mxu0 0
    %4876 = vmatpush1.bf16.msra.mxu0 0
    %4877 = vmatprep.subr.bf16.mxu0 0
    %4878 = vmatpush1.bf16.msra.mxu0 0
    %4879 = vmatprep.subr.bf16.mxu0 0
    %4880 = vmatpush1.bf16.msra.mxu0 0
    %4881 = vmatprep.subr.bf16.mxu0 0
    %4882 = vmatpush1.bf16.msra.mxu0 0
    %4883 = vmatprep.subr.bf16.mxu0 0
    %4884 = vmatpush1.bf16.msra.mxu0 0
    %4885 = vmatprep.subr.bf16.mxu0 0
    %4886 = vmatpush1.bf16.msra.mxu0 0
    %4887 = vmatprep.subr.bf16.mxu0 0
    %4888 = vmatpush1.bf16.msra.mxu0 0
    %4889 = vmatprep.subr.bf16.mxu0 0
    %4890 = vmatpush1.bf16.msra.mxu0 0
    %4891 = vmatprep.subr.bf16.mxu0 0
    %4892 = vmatpush1.bf16.msra.mxu0 0
    %4893 = vmatprep.subr.bf16.mxu0 0
    %4894 = vmatpush1.bf16.msra.mxu0 0
    %4895 = vmatprep.subr.bf16.mxu0 0
    %4896 = vmatpush1.bf16.msra.mxu0 0
    %4897 = vmatprep.subr.bf16.mxu0 0
    %4898 = vmatpush1.bf16.msra.mxu0 0
    %4899 = vmatprep.subr.bf16.mxu0 0
    %4900 = vmatpush1.bf16.msra.mxu0 0
    %4901 = vmatprep.subr.bf16.mxu0 0
    %4902 = vmatpush1.bf16.msra.mxu0 0
    %4903 = vmatprep.mubr.bf16.mxu0 0
    %4904 = vmatmul.mubr.bf16.gmra.mrb[0].mxu0 %v4866
    %v4905 = vpop.f32.mrb[0].mxu0
    %v4906 = vadd.f32 0.0, %v4905
    %v4907 = vpop.f32.mrb[0].mxu0
    %v4908 = vpop.f32.mrb[0].mxu0
    %v4909 = vpop.f32.mrb[0].mxu0
    %4910 = vdwg.mxu0
    %4912 = vrot.lane.b32.xlu0 %v4103, 96
    %v4913 = vpop.permute.xlu0 %4912
    %v4915 = vsel %vm210, %v4567, 0
    %v4918 = vsel %vm701, %v4913, 0
    %4920 = vmatprep.subr.bf16.mxu0 0
    %4921 = vmatpush1.bf16.msra.mxu0 %v4918
    %4922 = vmatprep.subr.bf16.mxu0 0
    %4923 = vmatpush1.bf16.msra.mxu0 0
    %4924 = vmatprep.subr.bf16.mxu0 0
    %4925 = vmatpush1.bf16.msra.mxu0 0
    %4926 = vmatprep.subr.bf16.mxu0 0
    %4927 = vmatpush1.bf16.msra.mxu0 0
    %4928 = vmatprep.subr.bf16.mxu0 0
    %4929 = vmatpush1.bf16.msra.mxu0 0
    %4930 = vmatprep.subr.bf16.mxu0 0
    %4931 = vmatpush1.bf16.msra.mxu0 0
    %4932 = vmatprep.subr.bf16.mxu0 0
    %4933 = vmatpush1.bf16.msra.mxu0 0
    %4934 = vmatprep.subr.bf16.mxu0 0
    %4935 = vmatpush1.bf16.msra.mxu0 0
    %4936 = vmatprep.subr.bf16.mxu0 0
    %4937 = vmatpush1.bf16.msra.mxu0 0
    %4938 = vmatprep.subr.bf16.mxu0 0
    %4939 = vmatpush1.bf16.msra.mxu0 0
    %4940 = vmatprep.subr.bf16.mxu0 0
    %4941 = vmatpush1.bf16.msra.mxu0 0
    %4942 = vmatprep.subr.bf16.mxu0 0
    %4943 = vmatpush1.bf16.msra.mxu0 0
    %4944 = vmatprep.subr.bf16.mxu0 0
    %4945 = vmatpush1.bf16.msra.mxu0 0
    %4946 = vmatprep.subr.bf16.mxu0 0
    %4947 = vmatpush1.bf16.msra.mxu0 0
    %4948 = vmatprep.subr.bf16.mxu0 0
    %4949 = vmatpush1.bf16.msra.mxu0 0
    %4950 = vmatprep.subr.bf16.mxu0 0
    %4951 = vmatpush1.bf16.msra.mxu0 0
    %4952 = vmatprep.mubr.bf16.mxu0 0
    %4953 = vmatmul.mubr.bf16.gmra.mrb[0].mxu0 %v4915
    %v4954 = vpop.f32.mrb[0].mxu0
    %v4955 = vadd.f32 0.0, %v4954
    %v4956 = vpop.f32.mrb[0].mxu0
    %v4957 = vpop.f32.mrb[0].mxu0
    %v4958 = vpop.f32.mrb[0].mxu0
    %4959 = vdwg.mxu0
    %4962 = vrot.lane.b32.xlu0 %v4710, 8
    %v4963 = vpop.permute.xlu0 %4962
    %4964 = vrot.lane.b32.xlu0 %v4759, 8
    %v4965 = vpop.permute.xlu0 %4964
    %4970 = vrot.lane.b32.xlu0 %v4808, 16
    %v4971 = vpop.permute.xlu0 %4970
    %4972 = vrot.lane.b32.xlu0 %v4857, 16
    %v4973 = vpop.permute.xlu0 %4972
    %4978 = vrot.lane.b32.xlu0 %v4906, 24
    %v4979 = vpop.permute.xlu0 %4978
    %4980 = vrot.lane.b32.xlu0 %v4955, 24
    %v4981 = vpop.permute.xlu0 %4980
    %v4984 = vsel %vm210, %v4612, %v4963
    %v4985 = vsel %vm210, %v4661, %v4965
    %v4986 = vsel %vm1107, %v4984, %v4971
    %v4987 = vsel %vm1107, %v4985, %v4973
    %v4988 = vsel %vm1110, %v4986, %v4979
    %v4989 = vsel %vm1110, %v4987, %v4981
    %v4990 = vpack.c.bf16 %v4989, %v4988
    %v4991 = vld [vmem:[#allocation7 + $0x120] sm:$0xf]
    %v4992 = vld [vmem:[#allocation7 + $0x124] sm:$0xf]
    %v4993 = vld [vmem:[#allocation7 + $0x128] sm:$0xf]
    %v4994 = vld [vmem:[#allocation7 + $0x12c] sm:$0xf]
    %v4995 = vld [vmem:[#allocation8 + $0x56] sm:$0x1]
    %v4996 = vlaneseq
    %v4997 = vshrl.u32 %v4996, 7
    %v4998 = vsub.s32 0, %v4997
    %v4999 = vrot.slane %v4995, %v4998
    %v5004 = vunpack.c.l.b16 %v4991
    %v5005 = vunpack.c.l.b16 %v4992
    %v5006 = vunpack.c.l.b16 %v4993
    %v5007 = vunpack.c.l.b16 %v4994
    %v5008 = vpack.c.b16 %v5005, %v5004
    %v5009 = vpack.c.b16 %v5007, %v5006
    %v5013 = vsel %vm134, %v4990, 0
    %5015 = vmatprep.subr.bf16.mxu0 0
    %5016 = vmatpush1.bf16.msra.mxu0 %v5008
    %5017 = vmatprep.subr.bf16.mxu0 0
    %5018 = vmatpush1.bf16.msra.mxu0 %v5009
    %5019 = vmatprep.subr.bf16.mxu0 0
    %5020 = vmatpush1.bf16.msra.mxu0 0
    %5021 = vmatprep.subr.bf16.mxu0 0
    %5022 = vmatpush1.bf16.msra.mxu0 0
    %5023 = vmatprep.subr.bf16.mxu0 0
    %5024 = vmatpush1.bf16.msra.mxu0 0
    %5025 = vmatprep.subr.bf16.mxu0 0
    %5026 = vmatpush1.bf16.msra.mxu0 0
    %5027 = vmatprep.subr.bf16.mxu0 0
    %5028 = vmatpush1.bf16.msra.mxu0 0
    %5029 = vmatprep.subr.bf16.mxu0 0
    %5030 = vmatpush1.bf16.msra.mxu0 0
    %5031 = vmatprep.subr.bf16.mxu0 0
    %5032 = vmatpush1.bf16.msra.mxu0 0
    %5033 = vmatprep.subr.bf16.mxu0 0
    %5034 = vmatpush1.bf16.msra.mxu0 0
    %5035 = vmatprep.subr.bf16.mxu0 0
    %5036 = vmatpush1.bf16.msra.mxu0 0
    %5037 = vmatprep.subr.bf16.mxu0 0
    %5038 = vmatpush1.bf16.msra.mxu0 0
    %5039 = vmatprep.subr.bf16.mxu0 0
    %5040 = vmatpush1.bf16.msra.mxu0 0
    %5041 = vmatprep.subr.bf16.mxu0 0
    %5042 = vmatpush1.bf16.msra.mxu0 0
    %5043 = vmatprep.subr.bf16.mxu0 0
    %5044 = vmatpush1.bf16.msra.mxu0 0
    %5045 = vmatprep.subr.bf16.mxu0 0
    %5046 = vmatpush1.bf16.msra.mxu0 0
    %5047 = vmatprep.mubr.bf16.mxu0 0
    %5048 = vmatmul.mubr.bf16.gmra.mrb[0].mxu0 %v5013
    %v5049 = vpop.f32.mrb[0].mxu0
    %v5050 = vadd.f32 %v4999, %v5049
    %v5051 = vpop.f32.mrb[0].mxu0
    %v5052 = vpop.f32.mrb[0].mxu0
    %v5053 = vadd.f32 %v4999, %v5052
    %v5054 = vpop.f32.mrb[0].mxu0
    %5055 = vdwg.mxu0
    %v5056 = vadd.f32 %v3980, %v5050
    %v5057 = vadd.f32 %v3981, %v5053
    %v5058 = vsel %vm134, %v5056, 0.0
    %5059 = vadd.xlane.f32.xlu0 %v5058
    %v5060 = vpop.xlane.xlu0 %5059
    %v5061 = vsel %vm134, %v5057, 0.0
    %5062 = vadd.xlane.f32.xlu0 %v5061
    %v5063 = vpop.xlane.xlu0 %5062
    %v5064 = vmul.f32 %v5060, %v1187
    %v5065 = vmul.f32 %v5063, %v1187
    %v5066 = vsub.f32 %v5056, %v5064
    %v5067 = vsub.f32 %v5057, %v5065
    %v5068 = vmul.f32 %v5066, %v5066
    %v5069 = vmul.f32 %v5067, %v5067
    %v5070 = vsel %vm134, %v5068, 0.0
    %5071 = vadd.xlane.f32.xlu0 %v5070
    %v5072 = vpop.xlane.xlu0 %5071
    %v5073 = vsel %vm134, %v5069, 0.0
    %5074 = vadd.xlane.f32.xlu0 %v5073
    %v5075 = vpop.xlane.xlu0 %5074
    %v5076 = vmul.f32 %v5072, %v1187
    %v5077 = vmul.f32 %v5075, %v1187
    %v5078 = vadd.f32 %v5076, 1e-05
    %v5079 = vadd.f32 %v5077, 1e-05
    %v5080 = vrsqrt.pop %v5078
    %v5081 = vrsqrt.pop %v5079
    %v5082 = vmul.f32 %v5066, %v5080
    %v5083 = vmul.f32 %v5067, %v5081
    %v5084 = vld [vmem:[#allocation8 + $0x5b] sm:$0x1]
    %v5085 = vlaneseq
    %v5086 = vshrl.u32 %v5085, 7
    %v5087 = vsub.s32 0, %v5086
    %v5088 = vrot.slane %v5084, %v5087
    %v5089 = vmul.f32 %v5082, %v5088
    %v5090 = vmul.f32 %v5083, %v5088
    %v5091 = vld [vmem:[#allocation8 + $0x5c] sm:$0x1]
    %v5092 = vlaneseq
    %v5093 = vshrl.u32 %v5092, 7
    %v5094 = vsub.s32 0, %v5093
    %v5095 = vrot.slane %v5091, %v5094
    %v5096 = vadd.f32 %v5089, %v5095
    %v5097 = vadd.f32 %v5090, %v5095
    %v5098 = vpack.c.bf16 %v5097, %v5096
    %v5099 = vld [vmem:[#allocation7 + $0x130] sm:$0xf]
    %v5100 = vld [vmem:[#allocation7 + $0x134] sm:$0xf]
    %v5101 = vld [vmem:[#allocation7 + $0x138] sm:$0xf]
    %v5102 = vld [vmem:[#allocation7 + $0x13c] sm:$0xf]
    %v5103 = vld [vmem:[#allocation8 + $0x57] sm:$0x1]
    %v5104 = vlaneseq
    %v5105 = vshrl.u32 %v5104, 7
    %v5106 = vsub.s32 0, %v5105
    %v5107 = vrot.slane %v5103, %v5106
    %v5112 = vunpack.c.l.b16 %v5099
    %v5113 = vunpack.c.l.b16 %v5100
    %v5114 = vunpack.c.l.b16 %v5101
    %v5115 = vunpack.c.l.b16 %v5102
    %v5116 = vpack.c.b16 %v5113, %v5112
    %v5117 = vpack.c.b16 %v5115, %v5114
    %v5121 = vsel %vm134, %v5098, 0
    %5123 = vmatprep.subr.bf16.mxu0 0
    %5124 = vmatpush1.bf16.msra.mxu0 %v5116
    %5125 = vmatprep.subr.bf16.mxu0 0
    %5126 = vmatpush1.bf16.msra.mxu0 %v5117
    %5127 = vmatprep.subr.bf16.mxu0 0
    %5128 = vmatpush1.bf16.msra.mxu0 0
    %5129 = vmatprep.subr.bf16.mxu0 0
    %5130 = vmatpush1.bf16.msra.mxu0 0
    %5131 = vmatprep.subr.bf16.mxu0 0
    %5132 = vmatpush1.bf16.msra.mxu0 0
    %5133 = vmatprep.subr.bf16.mxu0 0
    %5134 = vmatpush1.bf16.msra.mxu0 0
    %5135 = vmatprep.subr.bf16.mxu0 0
    %5136 = vmatpush1.bf16.msra.mxu0 0
    %5137 = vmatprep.subr.bf16.mxu0 0
    %5138 = vmatpush1.bf16.msra.mxu0 0
    %5139 = vmatprep.subr.bf16.mxu0 0
    %5140 = vmatpush1.bf16.msra.mxu0 0
    %5141 = vmatprep.subr.bf16.mxu0 0
    %5142 = vmatpush1.bf16.msra.mxu0 0
    %5143 = vmatprep.subr.bf16.mxu0 0
    %5144 = vmatpush1.bf16.msra.mxu0 0
    %5145 = vmatprep.subr.bf16.mxu0 0
    %5146 = vmatpush1.bf16.msra.mxu0 0
    %5147 = vmatprep.subr.bf16.mxu0 0
    %5148 = vmatpush1.bf16.msra.mxu0 0
    %5149 = vmatprep.subr.bf16.mxu0 0
    %5150 = vmatpush1.bf16.msra.mxu0 0
    %5151 = vmatprep.subr.bf16.mxu0 0
    %5152 = vmatpush1.bf16.msra.mxu0 0
    %5153 = vmatprep.subr.bf16.mxu0 0
    %5154 = vmatpush1.bf16.msra.mxu0 0
    %5155 = vmatprep.mubr.bf16.mxu0 0
    %5156 = vmatmul.mubr.bf16.gmra.mrb[0].mxu0 %v5121
    %v5157 = vpop.f32.mrb[0].mxu0
    %v5158 = vadd.f32 %v5107, %v5157
    %v5159 = vpop.f32.mrb[0].mxu0
    %v5160 = vpop.f32.mrb[0].mxu0
    %v5161 = vadd.f32 %v5107, %v5160
    %v5162 = vpop.f32.mrb[0].mxu0
    %5163 = vdwg.mxu0
    %v5164 = vmax.f32 %v5158, 0.0
    %v5165 = vmax.f32 %v5161, 0.0
    %v5166 = vpack.c.bf16 %v5165, %v5164
    %v5167 = vld [vmem:[#allocation7 + $0x140] sm:$0xf]
    %v5168 = vld [vmem:[#allocation7 + $0x144] sm:$0xf]
    %v5169 = vld [vmem:[#allocation7 + $0x148] sm:$0xf]
    %v5170 = vld [vmem:[#allocation7 + $0x14c] sm:$0xf]
    %v5171 = vld [vmem:[#allocation7 + $0x150] sm:$0xf]
    %v5172 = vld [vmem:[#allocation7 + $0x154] sm:$0xf]
    %v5173 = vld [vmem:[#allocation7 + $0x158] sm:$0xf]
    %v5174 = vld [vmem:[#allocation7 + $0x15c] sm:$0xf]
    %v5175 = vld [vmem:[#allocation7 + $0x160] sm:$0xf]
    %v5176 = vld [vmem:[#allocation7 + $0x164] sm:$0xf]
    %v5177 = vld [vmem:[#allocation7 + $0x168] sm:$0xf]
    %v5178 = vld [vmem:[#allocation7 + $0x16c] sm:$0xf]
    %v5179 = vld [vmem:[#allocation7 + $0x170] sm:$0xf]
    %v5180 = vld [vmem:[#allocation7 + $0x174] sm:$0xf]
    %v5181 = vld [vmem:[#allocation7 + $0x178] sm:$0xf]
    %v5182 = vld [vmem:[#allocation7 + $0x17c] sm:$0xf]
    %v5183 = vld [vmem:[#allocation8 + $0x58] sm:$0x1]
    %v5184 = vlaneseq
    %v5185 = vshrl.u32 %v5184, 7
    %v5186 = vsub.s32 0, %v5185
    %v5187 = vrot.slane %v5183, %v5186
    %v5204 = vunpack.c.l.b16 %v5167
    %v5205 = vunpack.c.l.b16 %v5168
    %v5206 = vunpack.c.l.b16 %v5169
    %v5207 = vunpack.c.l.b16 %v5170
    %v5208 = vunpack.c.l.b16 %v5171
    %v5209 = vunpack.c.l.b16 %v5172
    %v5210 = vunpack.c.l.b16 %v5173
    %v5211 = vunpack.c.l.b16 %v5174
    %v5212 = vunpack.c.l.b16 %v5175
    %v5213 = vunpack.c.l.b16 %v5176
    %v5214 = vunpack.c.l.b16 %v5177
    %v5215 = vunpack.c.l.b16 %v5178
    %v5216 = vunpack.c.l.b16 %v5179
    %v5217 = vunpack.c.l.b16 %v5180
    %v5218 = vunpack.c.l.b16 %v5181
    %v5219 = vunpack.c.l.b16 %v5182
    %v5220 = vpack.c.b16 %v5205, %v5204
    %v5221 = vpack.c.b16 %v5207, %v5206
    %v5222 = vpack.c.b16 %v5209, %v5208
    %v5223 = vpack.c.b16 %v5211, %v5210
    %v5224 = vpack.c.b16 %v5213, %v5212
    %v5225 = vpack.c.b16 %v5215, %v5214
    %v5226 = vpack.c.b16 %v5217, %v5216
    %v5227 = vpack.c.b16 %v5219, %v5218
    %5236 = vmatprep.subr.bf16.mxu0 0
    %5237 = vmatpush1.bf16.msra.mxu0 %v5220
    %5238 = vmatprep.subr.bf16.mxu0 0
    %5239 = vmatpush1.bf16.msra.mxu0 %v5221
    %5240 = vmatprep.subr.bf16.mxu0 0
    %5241 = vmatpush1.bf16.msra.mxu0 %v5222
    %5242 = vmatprep.subr.bf16.mxu0 0
    %5243 = vmatpush1.bf16.msra.mxu0 %v5223
    %5244 = vmatprep.subr.bf16.mxu0 0
    %5245 = vmatpush1.bf16.msra.mxu0 %v5224
    %5246 = vmatprep.subr.bf16.mxu0 0
    %5247 = vmatpush1.bf16.msra.mxu0 %v5225
    %5248 = vmatprep.subr.bf16.mxu0 0
    %5249 = vmatpush1.bf16.msra.mxu0 %v5226
    %5250 = vmatprep.subr.bf16.mxu0 0
    %5251 = vmatpush1.bf16.msra.mxu0 %v5227
    %5252 = vmatprep.subr.bf16.mxu0 0
    %5253 = vmatpush1.bf16.msra.mxu0 0
    %5254 = vmatprep.subr.bf16.mxu0 0
    %5255 = vmatpush1.bf16.msra.mxu0 0
    %5256 = vmatprep.subr.bf16.mxu0 0
    %5257 = vmatpush1.bf16.msra.mxu0 0
    %5258 = vmatprep.subr.bf16.mxu0 0
    %5259 = vmatpush1.bf16.msra.mxu0 0
    %5260 = vmatprep.subr.bf16.mxu0 0
    %5261 = vmatpush1.bf16.msra.mxu0 0
    %5262 = vmatprep.subr.bf16.mxu0 0
    %5263 = vmatpush1.bf16.msra.mxu0 0
    %5264 = vmatprep.subr.bf16.mxu0 0
    %5265 = vmatpush1.bf16.msra.mxu0 0
    %5266 = vmatprep.subr.bf16.mxu0 0
    %5267 = vmatpush1.bf16.msra.mxu0 0
    %5268 = vmatprep.mubr.bf16.mxu0 0
    %5269 = vmatmul.mubr.bf16.gmra.mrb[0].mxu0 %v5166
    %v5270 = vpop.f32.mrb[0].mxu0
    %v5271 = vadd.f32 %v5187, %v5270
    %v5272 = vpop.f32.mrb[0].mxu0
    %v5273 = vpop.f32.mrb[0].mxu0
    %v5274 = vadd.f32 %v5187, %v5273
    %v5275 = vpop.f32.mrb[0].mxu0
    %5276 = vdwg.mxu0
    %v5277 = vadd.f32 %v5096, %v5271
    %v5278 = vadd.f32 %v5097, %v5274
    %v5279 = vsel %vm134, %v5277, 0.0
    %5280 = vadd.xlane.f32.xlu0 %v5279
    %v5281 = vpop.xlane.xlu0 %5280
    %v5282 = vsel %vm134, %v5278, 0.0
    %5283 = vadd.xlane.f32.xlu0 %v5282
    %v5284 = vpop.xlane.xlu0 %5283
    %v5285 = vmul.f32 %v5281, %v1187
    %v5286 = vmul.f32 %v5284, %v1187
    %v5287 = vsub.f32 %v5277, %v5285
    %v5288 = vsub.f32 %v5278, %v5286
    %v5289 = vmul.f32 %v5287, %v5287
    %v5290 = vmul.f32 %v5288, %v5288
    %v5291 = vsel %vm134, %v5289, 0.0
    %5292 = vadd.xlane.f32.xlu0 %v5291
    %v5293 = vpop.xlane.xlu0 %5292
    %v5294 = vsel %vm134, %v5290, 0.0
    %5295 = vadd.xlane.f32.xlu0 %v5294
    %v5296 = vpop.xlane.xlu0 %5295
    %v5297 = vmul.f32 %v5293, %v1187
    %v5298 = vmul.f32 %v5296, %v1187
    %v5299 = vadd.f32 %v5297, 1e-05
    %v5300 = vadd.f32 %v5298, 1e-05
    %v5301 = vrsqrt.pop %v5299
    %v5302 = vrsqrt.pop %v5300
    %v5303 = vmul.f32 %v5287, %v5301
    %v5304 = vmul.f32 %v5288, %v5302
    %v5305 = vld [vmem:[#allocation8 + $0x5d] sm:$0x1]
    %v5306 = vlaneseq
    %v5307 = vshrl.u32 %v5306, 7
    %v5308 = vsub.s32 0, %v5307
    %v5309 = vrot.slane %v5305, %v5308
    %v5310 = vmul.f32 %v5303, %v5309
    %v5311 = vmul.f32 %v5304, %v5309
    %v5312 = vld [vmem:[#allocation8 + $0x5e] sm:$0x1]
    %v5313 = vlaneseq
    %v5314 = vshrl.u32 %v5313, 7
    %v5315 = vsub.s32 0, %v5314
    %v5316 = vrot.slane %v5312, %v5315
    %v5317 = vadd.f32 %v5310, %v5316
    %v5318 = vadd.f32 %v5311, %v5316
    %v5319 = vpack.c.bf16 %v5318, %v5317
    %v5320 = vld [vmem:[#allocation7 + $0x180] sm:$0xf]
    %v5321 = vld [vmem:[#allocation7 + $0x184] sm:$0xf]
    %v5322 = vld [vmem:[#allocation7 + $0x188] sm:$0xf]
    %v5323 = vld [vmem:[#allocation7 + $0x18c] sm:$0xf]
    %v5324 = vld [vmem:[#allocation8 + $0x5f] sm:$0x1]
    %v5325 = vlaneseq
    %v5326 = vshrl.u32 %v5325, 7
    %v5327 = vsub.s32 0, %v5326
    %v5328 = vrot.slane %v5324, %v5327
    %v5333 = vunpack.c.l.b16 %v5320
    %v5334 = vunpack.c.l.b16 %v5321
    %v5335 = vunpack.c.l.b16 %v5322
    %v5336 = vunpack.c.l.b16 %v5323
    %v5337 = vpack.c.b16 %v5334, %v5333
    %v5338 = vpack.c.b16 %v5336, %v5335
    %v5342 = vsel %vm134, %v5319, 0
    %5344 = vmatprep.subr.bf16.mxu0 0
    %5345 = vmatpush1.bf16.msra.mxu0 %v5337
    %5346 = vmatprep.subr.bf16.mxu0 0
    %5347 = vmatpush1.bf16.msra.mxu0 %v5338
    %5348 = vmatprep.subr.bf16.mxu0 0
    %5349 = vmatpush1.bf16.msra.mxu0 0
    %5350 = vmatprep.subr.bf16.mxu0 0
    %5351 = vmatpush1.bf16.msra.mxu0 0
    %5352 = vmatprep.subr.bf16.mxu0 0
    %5353 = vmatpush1.bf16.msra.mxu0 0
    %5354 = vmatprep.subr.bf16.mxu0 0
    %5355 = vmatpush1.bf16.msra.mxu0 0
    %5356 = vmatprep.subr.bf16.mxu0 0
    %5357 = vmatpush1.bf16.msra.mxu0 0
    %5358 = vmatprep.subr.bf16.mxu0 0
    %5359 = vmatpush1.bf16.msra.mxu0 0
    %5360 = vmatprep.subr.bf16.mxu0 0
    %5361 = vmatpush1.bf16.msra.mxu0 0
    %5362 = vmatprep.subr.bf16.mxu0 0
    %5363 = vmatpush1.bf16.msra.mxu0 0
    %5364 = vmatprep.subr.bf16.mxu0 0
    %5365 = vmatpush1.bf16.msra.mxu0 0
    %5366 = vmatprep.subr.bf16.mxu0 0
    %5367 = vmatpush1.bf16.msra.mxu0 0
    %5368 = vmatprep.subr.bf16.mxu0 0
    %5369 = vmatpush1.bf16.msra.mxu0 0
    %5370 = vmatprep.subr.bf16.mxu0 0
    %5371 = vmatpush1.bf16.msra.mxu0 0
    %5372 = vmatprep.subr.bf16.mxu0 0
    %5373 = vmatpush1.bf16.msra.mxu0 0
    %5374 = vmatprep.subr.bf16.mxu0 0
    %5375 = vmatpush1.bf16.msra.mxu0 0
    %5376 = vmatprep.mubr.bf16.mxu0 0
    %5377 = vmatmul.mubr.bf16.gmra.mrb[0].mxu0 %v5342
    %v5378 = vpop.f32.mrb[0].mxu0
    %v5379 = vadd.f32 %v5328, %v5378
    %v5380 = vpop.f32.mrb[0].mxu0
    %v5381 = vpop.f32.mrb[0].mxu0
    %v5382 = vadd.f32 %v5328, %v5381
    %v5383 = vpop.f32.mrb[0].mxu0
    %5384 = vdwg.mxu0
    %5387 = vrot.lane.b32.xlu0 %v5379, 120
    %v5388 = vpop.permute.xlu0 %5387
    %5389 = vrot.lane.b32.xlu0 %v5382, 120
    %v5390 = vpop.permute.xlu0 %5389
    %5393 = vrot.lane.b32.xlu0 %v5379, 112
    %v5394 = vpop.permute.xlu0 %5393
    %5395 = vrot.lane.b32.xlu0 %v5382, 112
    %v5396 = vpop.permute.xlu0 %5395
    %5399 = vrot.lane.b32.xlu0 %v5379, 104
    %v5400 = vpop.permute.xlu0 %5399
    %5401 = vrot.lane.b32.xlu0 %v5382, 104
    %v5402 = vpop.permute.xlu0 %5401
    %v5405 = vpack.c.bf16 %v5379, %v5379
    %v5406 = vpack.c.bf16 %v5382, %v5382
    %v5407 = vpack.c.bf16 %v5388, %v5388
    %v5408 = vpack.c.bf16 %v5390, %v5390
    %v5409 = vpack.c.bf16 %v5394, %v5394
    %v5410 = vpack.c.bf16 %v5396, %v5396
    %v5411 = vpack.c.bf16 %v5400, %v5400
    %v5412 = vpack.c.bf16 %v5402, %v5402
    %5414 = vrot.lane.b32.xlu0 %v5405, 96
    %v5415 = vpop.permute.xlu0 %5414
    %v5417 = vsel %vm210, %v5405, 0
    %v5420 = vsel %vm210, %v5415, 0
    %5422 = vmatprep.subr.bf16.mxu0 0
    %5423 = vmatpush1.bf16.xpose.msra.mxu0 %v5420
    %5424 = vmatprep.subr.bf16.mxu0 0
    %5425 = vmatpush1.bf16.xpose.msra.mxu0 0
    %5426 = vmatprep.subr.bf16.mxu0 0
    %5427 = vmatpush1.bf16.xpose.msra.mxu0 0
    %5428 = vmatprep.subr.bf16.mxu0 0
    %5429 = vmatpush1.bf16.xpose.msra.mxu0 0
    %5430 = vmatprep.subr.bf16.mxu0 0
    %5431 = vmatpush1.bf16.xpose.msra.mxu0 0
    %5432 = vmatprep.subr.bf16.mxu0 0
    %5433 = vmatpush1.bf16.xpose.msra.mxu0 0
    %5434 = vmatprep.subr.bf16.mxu0 0
    %5435 = vmatpush1.bf16.xpose.msra.mxu0 0
    %5436 = vmatprep.subr.bf16.mxu0 0
    %5437 = vmatpush1.bf16.xpose.msra.mxu0 0
    %5438 = vmatprep.subr.bf16.mxu0 0
    %5439 = vmatpush1.bf16.xpose.msra.mxu0 0
    %5440 = vmatprep.subr.bf16.mxu0 0
    %5441 = vmatpush1.bf16.xpose.msra.mxu0 0
    %5442 = vmatprep.subr.bf16.mxu0 0
    %5443 = vmatpush1.bf16.xpose.msra.mxu0 0
    %5444 = vmatprep.subr.bf16.mxu0 0
    %5445 = vmatpush1.bf16.xpose.msra.mxu0 0
    %5446 = vmatprep.subr.bf16.mxu0 0
    %5447 = vmatpush1.bf16.xpose.msra.mxu0 0
    %5448 = vmatprep.subr.bf16.mxu0 0
    %5449 = vmatpush1.bf16.xpose.msra.mxu0 0
    %5450 = vmatprep.subr.bf16.mxu0 0
    %5451 = vmatpush1.bf16.xpose.msra.mxu0 0
    %5452 = vmatprep.subr.bf16.mxu0 0
    %5453 = vmatpush1.bf16.xpose.msra.mxu0 0
    %5454 = vmatprep.mubr.bf16.mxu0 0
    %5455 = vmatmul.mubr.bf16.gmra.mrb[0].mxu0 %v5417
    %v5456 = vpop.f32.mrb[0].mxu0
    %v5457 = vadd.f32 0.0, %v5456
    %v5458 = vpop.f32.mrb[0].mxu0
    %v5459 = vpop.f32.mrb[0].mxu0
    %v5460 = vpop.f32.mrb[0].mxu0
    %5461 = vdwg.mxu0
    %5463 = vrot.lane.b32.xlu0 %v5406, 96
    %v5464 = vpop.permute.xlu0 %5463
    %v5466 = vsel %vm210, %v5406, 0
    %v5469 = vsel %vm210, %v5464, 0
    %5471 = vmatprep.subr.bf16.mxu0 0
    %5472 = vmatpush1.bf16.xpose.msra.mxu0 %v5469
    %5473 = vmatprep.subr.bf16.mxu0 0
    %5474 = vmatpush1.bf16.xpose.msra.mxu0 0
    %5475 = vmatprep.subr.bf16.mxu0 0
    %5476 = vmatpush1.bf16.xpose.msra.mxu0 0
    %5477 = vmatprep.subr.bf16.mxu0 0
    %5478 = vmatpush1.bf16.xpose.msra.mxu0 0
    %5479 = vmatprep.subr.bf16.mxu0 0
    %5480 = vmatpush1.bf16.xpose.msra.mxu0 0
    %5481 = vmatprep.subr.bf16.mxu0 0
    %5482 = vmatpush1.bf16.xpose.msra.mxu0 0
    %5483 = vmatprep.subr.bf16.mxu0 0
    %5484 = vmatpush1.bf16.xpose.msra.mxu0 0
    %5485 = vmatprep.subr.bf16.mxu0 0
    %5486 = vmatpush1.bf16.xpose.msra.mxu0 0
    %5487 = vmatprep.subr.bf16.mxu0 0
    %5488 = vmatpush1.bf16.xpose.msra.mxu0 0
    %5489 = vmatprep.subr.bf16.mxu0 0
    %5490 = vmatpush1.bf16.xpose.msra.mxu0 0
    %5491 = vmatprep.subr.bf16.mxu0 0
    %5492 = vmatpush1.bf16.xpose.msra.mxu0 0
    %5493 = vmatprep.subr.bf16.mxu0 0
    %5494 = vmatpush1.bf16.xpose.msra.mxu0 0
    %5495 = vmatprep.subr.bf16.mxu0 0
    %5496 = vmatpush1.bf16.xpose.msra.mxu0 0
    %5497 = vmatprep.subr.bf16.mxu0 0
    %5498 = vmatpush1.bf16.xpose.msra.mxu0 0
    %5499 = vmatprep.subr.bf16.mxu0 0
    %5500 = vmatpush1.bf16.xpose.msra.mxu0 0
    %5501 = vmatprep.subr.bf16.mxu0 0
    %5502 = vmatpush1.bf16.xpose.msra.mxu0 0
    %5503 = vmatprep.mubr.bf16.mxu0 0
    %5504 = vmatmul.mubr.bf16.gmra.mrb[0].mxu0 %v5466
    %v5505 = vpop.f32.mrb[0].mxu0
    %v5506 = vadd.f32 0.0, %v5505
    %v5507 = vpop.f32.mrb[0].mxu0
    %v5508 = vpop.f32.mrb[0].mxu0
    %v5509 = vpop.f32.mrb[0].mxu0
    %5510 = vdwg.mxu0
    %5512 = vrot.lane.b32.xlu0 %v5407, 96
    %v5513 = vpop.permute.xlu0 %5512
    %v5515 = vsel %vm210, %v5407, 0
    %v5518 = vsel %vm210, %v5513, 0
    %5520 = vmatprep.subr.bf16.mxu0 0
    %5521 = vmatpush1.bf16.xpose.msra.mxu0 %v5518
    %5522 = vmatprep.subr.bf16.mxu0 0
    %5523 = vmatpush1.bf16.xpose.msra.mxu0 0
    %5524 = vmatprep.subr.bf16.mxu0 0
    %5525 = vmatpush1.bf16.xpose.msra.mxu0 0
    %5526 = vmatprep.subr.bf16.mxu0 0
    %5527 = vmatpush1.bf16.xpose.msra.mxu0 0
    %5528 = vmatprep.subr.bf16.mxu0 0
    %5529 = vmatpush1.bf16.xpose.msra.mxu0 0
    %5530 = vmatprep.subr.bf16.mxu0 0
    %5531 = vmatpush1.bf16.xpose.msra.mxu0 0
    %5532 = vmatprep.subr.bf16.mxu0 0
    %5533 = vmatpush1.bf16.xpose.msra.mxu0 0
    %5534 = vmatprep.subr.bf16.mxu0 0
    %5535 = vmatpush1.bf16.xpose.msra.mxu0 0
    %5536 = vmatprep.subr.bf16.mxu0 0
    %5537 = vmatpush1.bf16.xpose.msra.mxu0 0
    %5538 = vmatprep.subr.bf16.mxu0 0
    %5539 = vmatpush1.bf16.xpose.msra.mxu0 0
    %5540 = vmatprep.subr.bf16.mxu0 0
    %5541 = vmatpush1.bf16.xpose.msra.mxu0 0
    %5542 = vmatprep.subr.bf16.mxu0 0
    %5543 = vmatpush1.bf16.xpose.msra.mxu0 0
    %5544 = vmatprep.subr.bf16.mxu0 0
    %5545 = vmatpush1.bf16.xpose.msra.mxu0 0
    %5546 = vmatprep.subr.bf16.mxu0 0
    %5547 = vmatpush1.bf16.xpose.msra.mxu0 0
    %5548 = vmatprep.subr.bf16.mxu0 0
    %5549 = vmatpush1.bf16.xpose.msra.mxu0 0
    %5550 = vmatprep.subr.bf16.mxu0 0
    %5551 = vmatpush1.bf16.xpose.msra.mxu0 0
    %5552 = vmatprep.mubr.bf16.mxu0 0
    %5553 = vmatmul.mubr.bf16.gmra.mrb[0].mxu0 %v5515
    %v5554 = vpop.f32.mrb[0].mxu0
    %v5555 = vadd.f32 0.0, %v5554
    %v5556 = vpop.f32.mrb[0].mxu0
    %v5557 = vpop.f32.mrb[0].mxu0
    %v5558 = vpop.f32.mrb[0].mxu0
    %5559 = vdwg.mxu0
    %5561 = vrot.lane.b32.xlu0 %v5408, 96
    %v5562 = vpop.permute.xlu0 %5561
    %v5564 = vsel %vm210, %v5408, 0
    %v5567 = vsel %vm210, %v5562, 0
    %5569 = vmatprep.subr.bf16.mxu0 0
    %5570 = vmatpush1.bf16.xpose.msra.mxu0 %v5567
    %5571 = vmatprep.subr.bf16.mxu0 0
    %5572 = vmatpush1.bf16.xpose.msra.mxu0 0
    %5573 = vmatprep.subr.bf16.mxu0 0
    %5574 = vmatpush1.bf16.xpose.msra.mxu0 0
    %5575 = vmatprep.subr.bf16.mxu0 0
    %5576 = vmatpush1.bf16.xpose.msra.mxu0 0
    %5577 = vmatprep.subr.bf16.mxu0 0
    %5578 = vmatpush1.bf16.xpose.msra.mxu0 0
    %5579 = vmatprep.subr.bf16.mxu0 0
    %5580 = vmatpush1.bf16.xpose.msra.mxu0 0
    %5581 = vmatprep.subr.bf16.mxu0 0
    %5582 = vmatpush1.bf16.xpose.msra.mxu0 0
    %5583 = vmatprep.subr.bf16.mxu0 0
    %5584 = vmatpush1.bf16.xpose.msra.mxu0 0
    %5585 = vmatprep.subr.bf16.mxu0 0
    %5586 = vmatpush1.bf16.xpose.msra.mxu0 0
    %5587 = vmatprep.subr.bf16.mxu0 0
    %5588 = vmatpush1.bf16.xpose.msra.mxu0 0
    %5589 = vmatprep.subr.bf16.mxu0 0
    %5590 = vmatpush1.bf16.xpose.msra.mxu0 0
    %5591 = vmatprep.subr.bf16.mxu0 0
    %5592 = vmatpush1.bf16.xpose.msra.mxu0 0
    %5593 = vmatprep.subr.bf16.mxu0 0
    %5594 = vmatpush1.bf16.xpose.msra.mxu0 0
    %5595 = vmatprep.subr.bf16.mxu0 0
    %5596 = vmatpush1.bf16.xpose.msra.mxu0 0
    %5597 = vmatprep.subr.bf16.mxu0 0
    %5598 = vmatpush1.bf16.xpose.msra.mxu0 0
    %5599 = vmatprep.subr.bf16.mxu0 0
    %5600 = vmatpush1.bf16.xpose.msra.mxu0 0
    %5601 = vmatprep.mubr.bf16.mxu0 0
    %5602 = vmatmul.mubr.bf16.gmra.mrb[0].mxu0 %v5564
    %v5603 = vpop.f32.mrb[0].mxu0
    %v5604 = vadd.f32 0.0, %v5603
    %v5605 = vpop.f32.mrb[0].mxu0
    %v5606 = vpop.f32.mrb[0].mxu0
    %v5607 = vpop.f32.mrb[0].mxu0
    %5608 = vdwg.mxu0
    %5610 = vrot.lane.b32.xlu0 %v5409, 96
    %v5611 = vpop.permute.xlu0 %5610
    %v5613 = vsel %vm210, %v5409, 0
    %v5616 = vsel %vm210, %v5611, 0
    %5618 = vmatprep.subr.bf16.mxu0 0
    %5619 = vmatpush1.bf16.xpose.msra.mxu0 %v5616
    %5620 = vmatprep.subr.bf16.mxu0 0
    %5621 = vmatpush1.bf16.xpose.msra.mxu0 0
    %5622 = vmatprep.subr.bf16.mxu0 0
    %5623 = vmatpush1.bf16.xpose.msra.mxu0 0
    %5624 = vmatprep.subr.bf16.mxu0 0
    %5625 = vmatpush1.bf16.xpose.msra.mxu0 0
    %5626 = vmatprep.subr.bf16.mxu0 0
    %5627 = vmatpush1.bf16.xpose.msra.mxu0 0
    %5628 = vmatprep.subr.bf16.mxu0 0
    %5629 = vmatpush1.bf16.xpose.msra.mxu0 0
    %5630 = vmatprep.subr.bf16.mxu0 0
    %5631 = vmatpush1.bf16.xpose.msra.mxu0 0
    %5632 = vmatprep.subr.bf16.mxu0 0
    %5633 = vmatpush1.bf16.xpose.msra.mxu0 0
    %5634 = vmatprep.subr.bf16.mxu0 0
    %5635 = vmatpush1.bf16.xpose.msra.mxu0 0
    %5636 = vmatprep.subr.bf16.mxu0 0
    %5637 = vmatpush1.bf16.xpose.msra.mxu0 0
    %5638 = vmatprep.subr.bf16.mxu0 0
    %5639 = vmatpush1.bf16.xpose.msra.mxu0 0
    %5640 = vmatprep.subr.bf16.mxu0 0
    %5641 = vmatpush1.bf16.xpose.msra.mxu0 0
    %5642 = vmatprep.subr.bf16.mxu0 0
    %5643 = vmatpush1.bf16.xpose.msra.mxu0 0
    %5644 = vmatprep.subr.bf16.mxu0 0
    %5645 = vmatpush1.bf16.xpose.msra.mxu0 0
    %5646 = vmatprep.subr.bf16.mxu0 0
    %5647 = vmatpush1.bf16.xpose.msra.mxu0 0
    %5648 = vmatprep.subr.bf16.mxu0 0
    %5649 = vmatpush1.bf16.xpose.msra.mxu0 0
    %5650 = vmatprep.mubr.bf16.mxu0 0
    %5651 = vmatmul.mubr.bf16.gmra.mrb[0].mxu0 %v5613
    %v5652 = vpop.f32.mrb[0].mxu0
    %v5653 = vadd.f32 0.0, %v5652
    %v5654 = vpop.f32.mrb[0].mxu0
    %v5655 = vpop.f32.mrb[0].mxu0
    %v5656 = vpop.f32.mrb[0].mxu0
    %5657 = vdwg.mxu0
    %5659 = vrot.lane.b32.xlu0 %v5410, 96
    %v5660 = vpop.permute.xlu0 %5659
    %v5662 = vsel %vm210, %v5410, 0
    %v5665 = vsel %vm210, %v5660, 0
    %5667 = vmatprep.subr.bf16.mxu0 0
    %5668 = vmatpush1.bf16.xpose.msra.mxu0 %v5665
    %5669 = vmatprep.subr.bf16.mxu0 0
    %5670 = vmatpush1.bf16.xpose.msra.mxu0 0
    %5671 = vmatprep.subr.bf16.mxu0 0
    %5672 = vmatpush1.bf16.xpose.msra.mxu0 0
    %5673 = vmatprep.subr.bf16.mxu0 0
    %5674 = vmatpush1.bf16.xpose.msra.mxu0 0
    %5675 = vmatprep.subr.bf16.mxu0 0
    %5676 = vmatpush1.bf16.xpose.msra.mxu0 0
    %5677 = vmatprep.subr.bf16.mxu0 0
    %5678 = vmatpush1.bf16.xpose.msra.mxu0 0
    %5679 = vmatprep.subr.bf16.mxu0 0
    %5680 = vmatpush1.bf16.xpose.msra.mxu0 0
    %5681 = vmatprep.subr.bf16.mxu0 0
    %5682 = vmatpush1.bf16.xpose.msra.mxu0 0
    %5683 = vmatprep.subr.bf16.mxu0 0
    %5684 = vmatpush1.bf16.xpose.msra.mxu0 0
    %5685 = vmatprep.subr.bf16.mxu0 0
    %5686 = vmatpush1.bf16.xpose.msra.mxu0 0
    %5687 = vmatprep.subr.bf16.mxu0 0
    %5688 = vmatpush1.bf16.xpose.msra.mxu0 0
    %5689 = vmatprep.subr.bf16.mxu0 0
    %5690 = vmatpush1.bf16.xpose.msra.mxu0 0
    %5691 = vmatprep.subr.bf16.mxu0 0
    %5692 = vmatpush1.bf16.xpose.msra.mxu0 0
    %5693 = vmatprep.subr.bf16.mxu0 0
    %5694 = vmatpush1.bf16.xpose.msra.mxu0 0
    %5695 = vmatprep.subr.bf16.mxu0 0
    %5696 = vmatpush1.bf16.xpose.msra.mxu0 0
    %5697 = vmatprep.subr.bf16.mxu0 0
    %5698 = vmatpush1.bf16.xpose.msra.mxu0 0
    %5699 = vmatprep.mubr.bf16.mxu0 0
    %5700 = vmatmul.mubr.bf16.gmra.mrb[0].mxu0 %v5662
    %v5701 = vpop.f32.mrb[0].mxu0
    %v5702 = vadd.f32 0.0, %v5701
    %v5703 = vpop.f32.mrb[0].mxu0
    %v5704 = vpop.f32.mrb[0].mxu0
    %v5705 = vpop.f32.mrb[0].mxu0
    %5706 = vdwg.mxu0
    %5708 = vrot.lane.b32.xlu0 %v5411, 96
    %v5709 = vpop.permute.xlu0 %5708
    %v5711 = vsel %vm210, %v5411, 0
    %v5714 = vsel %vm210, %v5709, 0
    %5716 = vmatprep.subr.bf16.mxu0 0
    %5717 = vmatpush1.bf16.xpose.msra.mxu0 %v5714
    %5718 = vmatprep.subr.bf16.mxu0 0
    %5719 = vmatpush1.bf16.xpose.msra.mxu0 0
    %5720 = vmatprep.subr.bf16.mxu0 0
    %5721 = vmatpush1.bf16.xpose.msra.mxu0 0
    %5722 = vmatprep.subr.bf16.mxu0 0
    %5723 = vmatpush1.bf16.xpose.msra.mxu0 0
    %5724 = vmatprep.subr.bf16.mxu0 0
    %5725 = vmatpush1.bf16.xpose.msra.mxu0 0
    %5726 = vmatprep.subr.bf16.mxu0 0
    %5727 = vmatpush1.bf16.xpose.msra.mxu0 0
    %5728 = vmatprep.subr.bf16.mxu0 0
    %5729 = vmatpush1.bf16.xpose.msra.mxu0 0
    %5730 = vmatprep.subr.bf16.mxu0 0
    %5731 = vmatpush1.bf16.xpose.msra.mxu0 0
    %5732 = vmatprep.subr.bf16.mxu0 0
    %5733 = vmatpush1.bf16.xpose.msra.mxu0 0
    %5734 = vmatprep.subr.bf16.mxu0 0
    %5735 = vmatpush1.bf16.xpose.msra.mxu0 0
    %5736 = vmatprep.subr.bf16.mxu0 0
    %5737 = vmatpush1.bf16.xpose.msra.mxu0 0
    %5738 = vmatprep.subr.bf16.mxu0 0
    %5739 = vmatpush1.bf16.xpose.msra.mxu0 0
    %5740 = vmatprep.subr.bf16.mxu0 0
    %5741 = vmatpush1.bf16.xpose.msra.mxu0 0
    %5742 = vmatprep.subr.bf16.mxu0 0
    %5743 = vmatpush1.bf16.xpose.msra.mxu0 0
    %5744 = vmatprep.subr.bf16.mxu0 0
    %5745 = vmatpush1.bf16.xpose.msra.mxu0 0
    %5746 = vmatprep.subr.bf16.mxu0 0
    %5747 = vmatpush1.bf16.xpose.msra.mxu0 0
    %5748 = vmatprep.mubr.bf16.mxu0 0
    %5749 = vmatmul.mubr.bf16.gmra.mrb[0].mxu0 %v5711
    %v5750 = vpop.f32.mrb[0].mxu0
    %v5751 = vadd.f32 0.0, %v5750
    %v5752 = vpop.f32.mrb[0].mxu0
    %v5753 = vpop.f32.mrb[0].mxu0
    %v5754 = vpop.f32.mrb[0].mxu0
    %5755 = vdwg.mxu0
    %5757 = vrot.lane.b32.xlu0 %v5412, 96
    %v5758 = vpop.permute.xlu0 %5757
    %v5760 = vsel %vm210, %v5412, 0
    %v5763 = vsel %vm210, %v5758, 0
    %5765 = vmatprep.subr.bf16.mxu0 0
    %5766 = vmatpush1.bf16.xpose.msra.mxu0 %v5763
    %5767 = vmatprep.subr.bf16.mxu0 0
    %5768 = vmatpush1.bf16.xpose.msra.mxu0 0
    %5769 = vmatprep.subr.bf16.mxu0 0
    %5770 = vmatpush1.bf16.xpose.msra.mxu0 0
    %5771 = vmatprep.subr.bf16.mxu0 0
    %5772 = vmatpush1.bf16.xpose.msra.mxu0 0
    %5773 = vmatprep.subr.bf16.mxu0 0
    %5774 = vmatpush1.bf16.xpose.msra.mxu0 0
    %5775 = vmatprep.subr.bf16.mxu0 0
    %5776 = vmatpush1.bf16.xpose.msra.mxu0 0
    %5777 = vmatprep.subr.bf16.mxu0 0
    %5778 = vmatpush1.bf16.xpose.msra.mxu0 0
    %5779 = vmatprep.subr.bf16.mxu0 0
    %5780 = vmatpush1.bf16.xpose.msra.mxu0 0
    %5781 = vmatprep.subr.bf16.mxu0 0
    %5782 = vmatpush1.bf16.xpose.msra.mxu0 0
    %5783 = vmatprep.subr.bf16.mxu0 0
    %5784 = vmatpush1.bf16.xpose.msra.mxu0 0
    %5785 = vmatprep.subr.bf16.mxu0 0
    %5786 = vmatpush1.bf16.xpose.msra.mxu0 0
    %5787 = vmatprep.subr.bf16.mxu0 0
    %5788 = vmatpush1.bf16.xpose.msra.mxu0 0
    %5789 = vmatprep.subr.bf16.mxu0 0
    %5790 = vmatpush1.bf16.xpose.msra.mxu0 0
    %5791 = vmatprep.subr.bf16.mxu0 0
    %5792 = vmatpush1.bf16.xpose.msra.mxu0 0
    %5793 = vmatprep.subr.bf16.mxu0 0
    %5794 = vmatpush1.bf16.xpose.msra.mxu0 0
    %5795 = vmatprep.subr.bf16.mxu0 0
    %5796 = vmatpush1.bf16.xpose.msra.mxu0 0
    %5797 = vmatprep.mubr.bf16.mxu0 0
    %5798 = vmatmul.mubr.bf16.gmra.mrb[0].mxu0 %v5760
    %v5799 = vpop.f32.mrb[0].mxu0
    %v5800 = vadd.f32 0.0, %v5799
    %v5801 = vpop.f32.mrb[0].mxu0
    %v5802 = vpop.f32.mrb[0].mxu0
    %v5803 = vpop.f32.mrb[0].mxu0
    %5804 = vdwg.mxu0
    %v5805 = vsel %vm210, %v5457, -inf
    %5806 = vmax.xlane.f32.xlu0 %v5805
    %v5807 = vpop.xlane.xlu0 %5806
    %v5808 = vsel %vm210, %v5506, -inf
    %5809 = vmax.xlane.f32.xlu0 %v5808
    %v5810 = vpop.xlane.xlu0 %5809
    %v5811 = vsel %vm210, %v5555, -inf
    %5812 = vmax.xlane.f32.xlu0 %v5811
    %v5813 = vpop.xlane.xlu0 %5812
    %v5814 = vsel %vm210, %v5604, -inf
    %5815 = vmax.xlane.f32.xlu0 %v5814
    %v5816 = vpop.xlane.xlu0 %5815
    %v5817 = vsel %vm210, %v5653, -inf
    %5818 = vmax.xlane.f32.xlu0 %v5817
    %v5819 = vpop.xlane.xlu0 %5818
    %v5820 = vsel %vm210, %v5702, -inf
    %5821 = vmax.xlane.f32.xlu0 %v5820
    %v5822 = vpop.xlane.xlu0 %5821
    %v5823 = vsel %vm210, %v5751, -inf
    %5824 = vmax.xlane.f32.xlu0 %v5823
    %v5825 = vpop.xlane.xlu0 %5824
    %v5826 = vsel %vm210, %v5800, -inf
    %5827 = vmax.xlane.f32.xlu0 %v5826
    %v5828 = vpop.xlane.xlu0 %5827
    %v5829 = vsub.f32 %v5457, %v5807
    %v5830 = vsub.f32 %v5506, %v5810
    %v5831 = vsub.f32 %v5555, %v5813
    %v5832 = vsub.f32 %v5604, %v5816
    %v5833 = vsub.f32 %v5653, %v5819
    %v5834 = vsub.f32 %v5702, %v5822
    %v5835 = vsub.f32 %v5751, %v5825
    %v5836 = vsub.f32 %v5800, %v5828
    %v5837 = vmul.f32 %v5829, 1.442695
    %v5838 = vpow.pop %v5837
    %v5839 = vmul.f32 %v5830, 1.442695
    %v5840 = vpow.pop %v5839
    %v5841 = vmul.f32 %v5831, 1.442695
    %v5842 = vpow.pop %v5841
    %v5843 = vmul.f32 %v5832, 1.442695
    %v5844 = vpow.pop %v5843
    %v5845 = vmul.f32 %v5833, 1.442695
    %v5846 = vpow.pop %v5845
    %v5847 = vmul.f32 %v5834, 1.442695
    %v5848 = vpow.pop %v5847
    %v5849 = vmul.f32 %v5835, 1.442695
    %v5850 = vpow.pop %v5849
    %v5851 = vmul.f32 %v5836, 1.442695
    %v5852 = vpow.pop %v5851
    %v5853 = vsel %vm210, %v5838, 0.0
    %5854 = vadd.xlane.f32.xlu0 %v5853
    %v5855 = vpop.xlane.xlu0 %5854
    %v5856 = vsel %vm210, %v5840, 0.0
    %5857 = vadd.xlane.f32.xlu0 %v5856
    %v5858 = vpop.xlane.xlu0 %5857
    %v5859 = vsel %vm210, %v5842, 0.0
    %5860 = vadd.xlane.f32.xlu0 %v5859
    %v5861 = vpop.xlane.xlu0 %5860
    %v5862 = vsel %vm210, %v5844, 0.0
    %5863 = vadd.xlane.f32.xlu0 %v5862
    %v5864 = vpop.xlane.xlu0 %5863
    %v5865 = vsel %vm210, %v5846, 0.0
    %5866 = vadd.xlane.f32.xlu0 %v5865
    %v5867 = vpop.xlane.xlu0 %5866
    %v5868 = vsel %vm210, %v5848, 0.0
    %5869 = vadd.xlane.f32.xlu0 %v5868
    %v5870 = vpop.xlane.xlu0 %5869
    %v5871 = vsel %vm210, %v5850, 0.0
    %5872 = vadd.xlane.f32.xlu0 %v5871
    %v5873 = vpop.xlane.xlu0 %5872
    %v5874 = vsel %vm210, %v5852, 0.0
    %5875 = vadd.xlane.f32.xlu0 %v5874
    %v5876 = vpop.xlane.xlu0 %5875
    %v5877 = vrcp.pop %v5855
    %v5878 = vrcp.pop %v5858
    %v5879 = vrcp.pop %v5861
    %v5880 = vrcp.pop %v5864
    %v5881 = vrcp.pop %v5867
    %v5882 = vrcp.pop %v5870
    %v5883 = vrcp.pop %v5873
    %v5884 = vrcp.pop %v5876
    %v5885 = vmul.f32 %v5838, %v5877
    %v5886 = vmul.f32 %v5840, %v5878
    %v5887 = vmul.f32 %v5842, %v5879
    %v5888 = vmul.f32 %v5844, %v5880
    %v5889 = vmul.f32 %v5846, %v5881
    %v5890 = vmul.f32 %v5848, %v5882
    %v5891 = vmul.f32 %v5850, %v5883
    %v5892 = vmul.f32 %v5852, %v5884
    %v5893 = vpack.c.bf16 %v5885, %v5885
    %v5894 = vpack.c.bf16 %v5886, %v5886
    %v5895 = vpack.c.bf16 %v5887, %v5887
    %v5896 = vpack.c.bf16 %v5888, %v5888
    %v5897 = vpack.c.bf16 %v5889, %v5889
    %v5898 = vpack.c.bf16 %v5890, %v5890
    %v5899 = vpack.c.bf16 %v5891, %v5891
    %v5900 = vpack.c.bf16 %v5892, %v5892
    %5901 = vrot.lane.b32.xlu0 %v5405, 64
    %v5902 = vpop.permute.xlu0 %5901
    %v5904 = vsel %vm210, %v5893, 0
    %v5907 = vsel %vm701, %v5902, 0
    %5909 = vmatprep.subr.bf16.mxu0 0
    %5910 = vmatpush1.bf16.msra.mxu0 %v5907
    %5911 = vmatprep.subr.bf16.mxu0 0
    %5912 = vmatpush1.bf16.msra.mxu0 0
    %5913 = vmatprep.subr.bf16.mxu0 0
    %5914 = vmatpush1.bf16.msra.mxu0 0
    %5915 = vmatprep.subr.bf16.mxu0 0
    %5916 = vmatpush1.bf16.msra.mxu0 0
    %5917 = vmatprep.subr.bf16.mxu0 0
    %5918 = vmatpush1.bf16.msra.mxu0 0
    %5919 = vmatprep.subr.bf16.mxu0 0
    %5920 = vmatpush1.bf16.msra.mxu0 0
    %5921 = vmatprep.subr.bf16.mxu0 0
    %5922 = vmatpush1.bf16.msra.mxu0 0
    %5923 = vmatprep.subr.bf16.mxu0 0
    %5924 = vmatpush1.bf16.msra.mxu0 0
    %5925 = vmatprep.subr.bf16.mxu0 0
    %5926 = vmatpush1.bf16.msra.mxu0 0
    %5927 = vmatprep.subr.bf16.mxu0 0
    %5928 = vmatpush1.bf16.msra.mxu0 0
    %5929 = vmatprep.subr.bf16.mxu0 0
    %5930 = vmatpush1.bf16.msra.mxu0 0
    %5931 = vmatprep.subr.bf16.mxu0 0
    %5932 = vmatpush1.bf16.msra.mxu0 0
    %5933 = vmatprep.subr.bf16.mxu0 0
    %5934 = vmatpush1.bf16.msra.mxu0 0
    %5935 = vmatprep.subr.bf16.mxu0 0
    %5936 = vmatpush1.bf16.msra.mxu0 0
    %5937 = vmatprep.subr.bf16.mxu0 0
    %5938 = vmatpush1.bf16.msra.mxu0 0
    %5939 = vmatprep.subr.bf16.mxu0 0
    %5940 = vmatpush1.bf16.msra.mxu0 0
    %5941 = vmatprep.mubr.bf16.mxu0 0
    %5942 = vmatmul.mubr.bf16.gmra.mrb[0].mxu0 %v5904
    %v5943 = vpop.f32.mrb[0].mxu0
    %v5944 = vadd.f32 0.0, %v5943
    %v5945 = vpop.f32.mrb[0].mxu0
    %v5946 = vpop.f32.mrb[0].mxu0
    %v5947 = vpop.f32.mrb[0].mxu0
    %5948 = vdwg.mxu0
    %5949 = vrot.lane.b32.xlu0 %v5406, 64
    %v5950 = vpop.permute.xlu0 %5949
    %v5952 = vsel %vm210, %v5894, 0
    %v5955 = vsel %vm701, %v5950, 0
    %5957 = vmatprep.subr.bf16.mxu0 0
    %5958 = vmatpush1.bf16.msra.mxu0 %v5955
    %5959 = vmatprep.subr.bf16.mxu0 0
    %5960 = vmatpush1.bf16.msra.mxu0 0
    %5961 = vmatprep.subr.bf16.mxu0 0
    %5962 = vmatpush1.bf16.msra.mxu0 0
    %5963 = vmatprep.subr.bf16.mxu0 0
    %5964 = vmatpush1.bf16.msra.mxu0 0
    %5965 = vmatprep.subr.bf16.mxu0 0
    %5966 = vmatpush1.bf16.msra.mxu0 0
    %5967 = vmatprep.subr.bf16.mxu0 0
    %5968 = vmatpush1.bf16.msra.mxu0 0
    %5969 = vmatprep.subr.bf16.mxu0 0
    %5970 = vmatpush1.bf16.msra.mxu0 0
    %5971 = vmatprep.subr.bf16.mxu0 0
    %5972 = vmatpush1.bf16.msra.mxu0 0
    %5973 = vmatprep.subr.bf16.mxu0 0
    %5974 = vmatpush1.bf16.msra.mxu0 0
    %5975 = vmatprep.subr.bf16.mxu0 0
    %5976 = vmatpush1.bf16.msra.mxu0 0
    %5977 = vmatprep.subr.bf16.mxu0 0
    %5978 = vmatpush1.bf16.msra.mxu0 0
    %5979 = vmatprep.subr.bf16.mxu0 0
    %5980 = vmatpush1.bf16.msra.mxu0 0
    %5981 = vmatprep.subr.bf16.mxu0 0
    %5982 = vmatpush1.bf16.msra.mxu0 0
    %5983 = vmatprep.subr.bf16.mxu0 0
    %5984 = vmatpush1.bf16.msra.mxu0 0
    %5985 = vmatprep.subr.bf16.mxu0 0
    %5986 = vmatpush1.bf16.msra.mxu0 0
    %5987 = vmatprep.subr.bf16.mxu0 0
    %5988 = vmatpush1.bf16.msra.mxu0 0
    %5989 = vmatprep.mubr.bf16.mxu0 0
    %5990 = vmatmul.mubr.bf16.gmra.mrb[0].mxu0 %v5952
    %v5991 = vpop.f32.mrb[0].mxu0
    %v5992 = vadd.f32 0.0, %v5991
    %v5993 = vpop.f32.mrb[0].mxu0
    %v5994 = vpop.f32.mrb[0].mxu0
    %v5995 = vpop.f32.mrb[0].mxu0
    %5996 = vdwg.mxu0
    %5997 = vrot.lane.b32.xlu0 %v5407, 64
    %v5998 = vpop.permute.xlu0 %5997
    %v6000 = vsel %vm210, %v5895, 0
    %v6003 = vsel %vm701, %v5998, 0
    %6005 = vmatprep.subr.bf16.mxu0 0
    %6006 = vmatpush1.bf16.msra.mxu0 %v6003
    %6007 = vmatprep.subr.bf16.mxu0 0
    %6008 = vmatpush1.bf16.msra.mxu0 0
    %6009 = vmatprep.subr.bf16.mxu0 0
    %6010 = vmatpush1.bf16.msra.mxu0 0
    %6011 = vmatprep.subr.bf16.mxu0 0
    %6012 = vmatpush1.bf16.msra.mxu0 0
    %6013 = vmatprep.subr.bf16.mxu0 0
    %6014 = vmatpush1.bf16.msra.mxu0 0
    %6015 = vmatprep.subr.bf16.mxu0 0
    %6016 = vmatpush1.bf16.msra.mxu0 0
    %6017 = vmatprep.subr.bf16.mxu0 0
    %6018 = vmatpush1.bf16.msra.mxu0 0
    %6019 = vmatprep.subr.bf16.mxu0 0
    %6020 = vmatpush1.bf16.msra.mxu0 0
    %6021 = vmatprep.subr.bf16.mxu0 0
    %6022 = vmatpush1.bf16.msra.mxu0 0
    %6023 = vmatprep.subr.bf16.mxu0 0
    %6024 = vmatpush1.bf16.msra.mxu0 0
    %6025 = vmatprep.subr.bf16.mxu0 0
    %6026 = vmatpush1.bf16.msra.mxu0 0
    %6027 = vmatprep.subr.bf16.mxu0 0
    %6028 = vmatpush1.bf16.msra.mxu0 0
    %6029 = vmatprep.subr.bf16.mxu0 0
    %6030 = vmatpush1.bf16.msra.mxu0 0
    %6031 = vmatprep.subr.bf16.mxu0 0
    %6032 = vmatpush1.bf16.msra.mxu0 0
    %6033 = vmatprep.subr.bf16.mxu0 0
    %6034 = vmatpush1.bf16.msra.mxu0 0
    %6035 = vmatprep.subr.bf16.mxu0 0
    %6036 = vmatpush1.bf16.msra.mxu0 0
    %6037 = vmatprep.mubr.bf16.mxu0 0
    %6038 = vmatmul.mubr.bf16.gmra.mrb[0].mxu0 %v6000
    %v6039 = vpop.f32.mrb[0].mxu0
    %v6040 = vadd.f32 0.0, %v6039
    %v6041 = vpop.f32.mrb[0].mxu0
    %v6042 = vpop.f32.mrb[0].mxu0
    %v6043 = vpop.f32.mrb[0].mxu0
    %6044 = vdwg.mxu0
    %6045 = vrot.lane.b32.xlu0 %v5408, 64
    %v6046 = vpop.permute.xlu0 %6045
    %v6048 = vsel %vm210, %v5896, 0
    %v6051 = vsel %vm701, %v6046, 0
    %6053 = vmatprep.subr.bf16.mxu0 0
    %6054 = vmatpush1.bf16.msra.mxu0 %v6051
    %6055 = vmatprep.subr.bf16.mxu0 0
    %6056 = vmatpush1.bf16.msra.mxu0 0
    %6057 = vmatprep.subr.bf16.mxu0 0
    %6058 = vmatpush1.bf16.msra.mxu0 0
    %6059 = vmatprep.subr.bf16.mxu0 0
    %6060 = vmatpush1.bf16.msra.mxu0 0
    %6061 = vmatprep.subr.bf16.mxu0 0
    %6062 = vmatpush1.bf16.msra.mxu0 0
    %6063 = vmatprep.subr.bf16.mxu0 0
    %6064 = vmatpush1.bf16.msra.mxu0 0
    %6065 = vmatprep.subr.bf16.mxu0 0
    %6066 = vmatpush1.bf16.msra.mxu0 0
    %6067 = vmatprep.subr.bf16.mxu0 0
    %6068 = vmatpush1.bf16.msra.mxu0 0
    %6069 = vmatprep.subr.bf16.mxu0 0
    %6070 = vmatpush1.bf16.msra.mxu0 0
    %6071 = vmatprep.subr.bf16.mxu0 0
    %6072 = vmatpush1.bf16.msra.mxu0 0
    %6073 = vmatprep.subr.bf16.mxu0 0
    %6074 = vmatpush1.bf16.msra.mxu0 0
    %6075 = vmatprep.subr.bf16.mxu0 0
    %6076 = vmatpush1.bf16.msra.mxu0 0
    %6077 = vmatprep.subr.bf16.mxu0 0
    %6078 = vmatpush1.bf16.msra.mxu0 0
    %6079 = vmatprep.subr.bf16.mxu0 0
    %6080 = vmatpush1.bf16.msra.mxu0 0
    %6081 = vmatprep.subr.bf16.mxu0 0
    %6082 = vmatpush1.bf16.msra.mxu0 0
    %6083 = vmatprep.subr.bf16.mxu0 0
    %6084 = vmatpush1.bf16.msra.mxu0 0
    %6085 = vmatprep.mubr.bf16.mxu0 0
    %6086 = vmatmul.mubr.bf16.gmra.mrb[0].mxu0 %v6048
    %v6087 = vpop.f32.mrb[0].mxu0
    %v6088 = vadd.f32 0.0, %v6087
    %v6089 = vpop.f32.mrb[0].mxu0
    %v6090 = vpop.f32.mrb[0].mxu0
    %v6091 = vpop.f32.mrb[0].mxu0
    %6092 = vdwg.mxu0
    %6093 = vrot.lane.b32.xlu0 %v5409, 64
    %v6094 = vpop.permute.xlu0 %6093
    %v6096 = vsel %vm210, %v5897, 0
    %v6099 = vsel %vm701, %v6094, 0
    %6101 = vmatprep.subr.bf16.mxu0 0
    %6102 = vmatpush1.bf16.msra.mxu0 %v6099
    %6103 = vmatprep.subr.bf16.mxu0 0
    %6104 = vmatpush1.bf16.msra.mxu0 0
    %6105 = vmatprep.subr.bf16.mxu0 0
    %6106 = vmatpush1.bf16.msra.mxu0 0
    %6107 = vmatprep.subr.bf16.mxu0 0
    %6108 = vmatpush1.bf16.msra.mxu0 0
    %6109 = vmatprep.subr.bf16.mxu0 0
    %6110 = vmatpush1.bf16.msra.mxu0 0
    %6111 = vmatprep.subr.bf16.mxu0 0
    %6112 = vmatpush1.bf16.msra.mxu0 0
    %6113 = vmatprep.subr.bf16.mxu0 0
    %6114 = vmatpush1.bf16.msra.mxu0 0
    %6115 = vmatprep.subr.bf16.mxu0 0
    %6116 = vmatpush1.bf16.msra.mxu0 0
    %6117 = vmatprep.subr.bf16.mxu0 0
    %6118 = vmatpush1.bf16.msra.mxu0 0
    %6119 = vmatprep.subr.bf16.mxu0 0
    %6120 = vmatpush1.bf16.msra.mxu0 0
    %6121 = vmatprep.subr.bf16.mxu0 0
    %6122 = vmatpush1.bf16.msra.mxu0 0
    %6123 = vmatprep.subr.bf16.mxu0 0
    %6124 = vmatpush1.bf16.msra.mxu0 0
    %6125 = vmatprep.subr.bf16.mxu0 0
    %6126 = vmatpush1.bf16.msra.mxu0 0
    %6127 = vmatprep.subr.bf16.mxu0 0
    %6128 = vmatpush1.bf16.msra.mxu0 0
    %6129 = vmatprep.subr.bf16.mxu0 0
    %6130 = vmatpush1.bf16.msra.mxu0 0
    %6131 = vmatprep.subr.bf16.mxu0 0
    %6132 = vmatpush1.bf16.msra.mxu0 0
    %6133 = vmatprep.mubr.bf16.mxu0 0
    %6134 = vmatmul.mubr.bf16.gmra.mrb[0].mxu0 %v6096
    %v6135 = vpop.f32.mrb[0].mxu0
    %v6136 = vadd.f32 0.0, %v6135
    %v6137 = vpop.f32.mrb[0].mxu0
    %v6138 = vpop.f32.mrb[0].mxu0
    %v6139 = vpop.f32.mrb[0].mxu0
    %6140 = vdwg.mxu0
    %6141 = vrot.lane.b32.xlu0 %v5410, 64
    %v6142 = vpop.permute.xlu0 %6141
    %v6144 = vsel %vm210, %v5898, 0
    %v6147 = vsel %vm701, %v6142, 0
    %6149 = vmatprep.subr.bf16.mxu0 0
    %6150 = vmatpush1.bf16.msra.mxu0 %v6147
    %6151 = vmatprep.subr.bf16.mxu0 0
    %6152 = vmatpush1.bf16.msra.mxu0 0
    %6153 = vmatprep.subr.bf16.mxu0 0
    %6154 = vmatpush1.bf16.msra.mxu0 0
    %6155 = vmatprep.subr.bf16.mxu0 0
    %6156 = vmatpush1.bf16.msra.mxu0 0
    %6157 = vmatprep.subr.bf16.mxu0 0
    %6158 = vmatpush1.bf16.msra.mxu0 0
    %6159 = vmatprep.subr.bf16.mxu0 0
    %6160 = vmatpush1.bf16.msra.mxu0 0
    %6161 = vmatprep.subr.bf16.mxu0 0
    %6162 = vmatpush1.bf16.msra.mxu0 0
    %6163 = vmatprep.subr.bf16.mxu0 0
    %6164 = vmatpush1.bf16.msra.mxu0 0
    %6165 = vmatprep.subr.bf16.mxu0 0
    %6166 = vmatpush1.bf16.msra.mxu0 0
    %6167 = vmatprep.subr.bf16.mxu0 0
    %6168 = vmatpush1.bf16.msra.mxu0 0
    %6169 = vmatprep.subr.bf16.mxu0 0
    %6170 = vmatpush1.bf16.msra.mxu0 0
    %6171 = vmatprep.subr.bf16.mxu0 0
    %6172 = vmatpush1.bf16.msra.mxu0 0
    %6173 = vmatprep.subr.bf16.mxu0 0
    %6174 = vmatpush1.bf16.msra.mxu0 0
    %6175 = vmatprep.subr.bf16.mxu0 0
    %6176 = vmatpush1.bf16.msra.mxu0 0
    %6177 = vmatprep.subr.bf16.mxu0 0
    %6178 = vmatpush1.bf16.msra.mxu0 0
    %6179 = vmatprep.subr.bf16.mxu0 0
    %6180 = vmatpush1.bf16.msra.mxu0 0
    %6181 = vmatprep.mubr.bf16.mxu0 0
    %6182 = vmatmul.mubr.bf16.gmra.mrb[0].mxu0 %v6144
    %v6183 = vpop.f32.mrb[0].mxu0
    %v6184 = vadd.f32 0.0, %v6183
    %v6185 = vpop.f32.mrb[0].mxu0
    %v6186 = vpop.f32.mrb[0].mxu0
    %v6187 = vpop.f32.mrb[0].mxu0
    %6188 = vdwg.mxu0
    %6189 = vrot.lane.b32.xlu0 %v5411, 64
    %v6190 = vpop.permute.xlu0 %6189
    %v6192 = vsel %vm210, %v5899, 0
    %v6195 = vsel %vm701, %v6190, 0
    %6197 = vmatprep.subr.bf16.mxu0 0
    %6198 = vmatpush1.bf16.msra.mxu0 %v6195
    %6199 = vmatprep.subr.bf16.mxu0 0
    %6200 = vmatpush1.bf16.msra.mxu0 0
    %6201 = vmatprep.subr.bf16.mxu0 0
    %6202 = vmatpush1.bf16.msra.mxu0 0
    %6203 = vmatprep.subr.bf16.mxu0 0
    %6204 = vmatpush1.bf16.msra.mxu0 0
    %6205 = vmatprep.subr.bf16.mxu0 0
    %6206 = vmatpush1.bf16.msra.mxu0 0
    %6207 = vmatprep.subr.bf16.mxu0 0
    %6208 = vmatpush1.bf16.msra.mxu0 0
    %6209 = vmatprep.subr.bf16.mxu0 0
    %6210 = vmatpush1.bf16.msra.mxu0 0
    %6211 = vmatprep.subr.bf16.mxu0 0
    %6212 = vmatpush1.bf16.msra.mxu0 0
    %6213 = vmatprep.subr.bf16.mxu0 0
    %6214 = vmatpush1.bf16.msra.mxu0 0
    %6215 = vmatprep.subr.bf16.mxu0 0
    %6216 = vmatpush1.bf16.msra.mxu0 0
    %6217 = vmatprep.subr.bf16.mxu0 0
    %6218 = vmatpush1.bf16.msra.mxu0 0
    %6219 = vmatprep.subr.bf16.mxu0 0
    %6220 = vmatpush1.bf16.msra.mxu0 0
    %6221 = vmatprep.subr.bf16.mxu0 0
    %6222 = vmatpush1.bf16.msra.mxu0 0
    %6223 = vmatprep.subr.bf16.mxu0 0
    %6224 = vmatpush1.bf16.msra.mxu0 0
    %6225 = vmatprep.subr.bf16.mxu0 0
    %6226 = vmatpush1.bf16.msra.mxu0 0
    %6227 = vmatprep.subr.bf16.mxu0 0
    %6228 = vmatpush1.bf16.msra.mxu0 0
    %6229 = vmatprep.mubr.bf16.mxu0 0
    %6230 = vmatmul.mubr.bf16.gmra.mrb[0].mxu0 %v6192
    %v6231 = vpop.f32.mrb[0].mxu0
    %v6232 = vadd.f32 0.0, %v6231
    %v6233 = vpop.f32.mrb[0].mxu0
    %v6234 = vpop.f32.mrb[0].mxu0
    %v6235 = vpop.f32.mrb[0].mxu0
    %6236 = vdwg.mxu0
    %6237 = vrot.lane.b32.xlu0 %v5412, 64
    %v6238 = vpop.permute.xlu0 %6237
    %v6240 = vsel %vm210, %v5900, 0
    %v6243 = vsel %vm701, %v6238, 0
    %6245 = vmatprep.subr.bf16.mxu0 0
    %6246 = vmatpush1.bf16.msra.mxu0 %v6243
    %6247 = vmatprep.subr.bf16.mxu0 0
    %6248 = vmatpush1.bf16.msra.mxu0 0
    %6249 = vmatprep.subr.bf16.mxu0 0
    %6250 = vmatpush1.bf16.msra.mxu0 0
    %6251 = vmatprep.subr.bf16.mxu0 0
    %6252 = vmatpush1.bf16.msra.mxu0 0
    %6253 = vmatprep.subr.bf16.mxu0 0
    %6254 = vmatpush1.bf16.msra.mxu0 0
    %6255 = vmatprep.subr.bf16.mxu0 0
    %6256 = vmatpush1.bf16.msra.mxu0 0
    %6257 = vmatprep.subr.bf16.mxu0 0
    %6258 = vmatpush1.bf16.msra.mxu0 0
    %6259 = vmatprep.subr.bf16.mxu0 0
    %6260 = vmatpush1.bf16.msra.mxu0 0
    %6261 = vmatprep.subr.bf16.mxu0 0
    %6262 = vmatpush1.bf16.msra.mxu0 0
    %6263 = vmatprep.subr.bf16.mxu0 0
    %6264 = vmatpush1.bf16.msra.mxu0 0
    %6265 = vmatprep.subr.bf16.mxu0 0
    %6266 = vmatpush1.bf16.msra.mxu0 0
    %6267 = vmatprep.subr.bf16.mxu0 0
    %6268 = vmatpush1.bf16.msra.mxu0 0
    %6269 = vmatprep.subr.bf16.mxu0 0
    %6270 = vmatpush1.bf16.msra.mxu0 0
    %6271 = vmatprep.subr.bf16.mxu0 0
    %6272 = vmatpush1.bf16.msra.mxu0 0
    %6273 = vmatprep.subr.bf16.mxu0 0
    %6274 = vmatpush1.bf16.msra.mxu0 0
    %6275 = vmatprep.subr.bf16.mxu0 0
    %6276 = vmatpush1.bf16.msra.mxu0 0
    %6277 = vmatprep.mubr.bf16.mxu0 0
    %6278 = vmatmul.mubr.bf16.gmra.mrb[0].mxu0 %v6240
    %v6279 = vpop.f32.mrb[0].mxu0
    %v6280 = vadd.f32 0.0, %v6279
    %v6281 = vpop.f32.mrb[0].mxu0
    %v6282 = vpop.f32.mrb[0].mxu0
    %v6283 = vpop.f32.mrb[0].mxu0
    %6284 = vdwg.mxu0
    %6287 = vrot.lane.b32.xlu0 %v6040, 8
    %v6288 = vpop.permute.xlu0 %6287
    %6289 = vrot.lane.b32.xlu0 %v6088, 8
    %v6290 = vpop.permute.xlu0 %6289
    %6295 = vrot.lane.b32.xlu0 %v6136, 16
    %v6296 = vpop.permute.xlu0 %6295
    %6297 = vrot.lane.b32.xlu0 %v6184, 16
    %v6298 = vpop.permute.xlu0 %6297
    %6303 = vrot.lane.b32.xlu0 %v6232, 24
    %v6304 = vpop.permute.xlu0 %6303
    %6305 = vrot.lane.b32.xlu0 %v6280, 24
    %v6306 = vpop.permute.xlu0 %6305
    %v6309 = vsel %vm210, %v5944, %v6288
    %v6310 = vsel %vm210, %v5992, %v6290
    %v6311 = vsel %vm1107, %v6309, %v6296
    %v6312 = vsel %vm1107, %v6310, %v6298
    %v6313 = vsel %vm1110, %v6311, %v6304
    %v6314 = vsel %vm1110, %v6312, %v6306
    %v6315 = vpack.c.bf16 %v6314, %v6313
    %v6316 = vld [vmem:[#allocation7 + $0x190] sm:$0xf]
    %v6317 = vld [vmem:[#allocation7 + $0x194] sm:$0xf]
    %v6318 = vld [vmem:[#allocation7 + $0x198] sm:$0xf]
    %v6319 = vld [vmem:[#allocation7 + $0x19c] sm:$0xf]
    %v6320 = vld [vmem:[#allocation8 + $0x60] sm:$0x1]
    %v6321 = vlaneseq
    %v6322 = vshrl.u32 %v6321, 7
    %v6323 = vsub.s32 0, %v6322
    %v6324 = vrot.slane %v6320, %v6323
    %v6329 = vunpack.c.l.b16 %v6316
    %v6330 = vunpack.c.l.b16 %v6317
    %v6331 = vunpack.c.l.b16 %v6318
    %v6332 = vunpack.c.l.b16 %v6319
    %v6333 = vpack.c.b16 %v6330, %v6329
    %v6334 = vpack.c.b16 %v6332, %v6331
    %v6338 = vsel %vm134, %v6315, 0
    %6340 = vmatprep.subr.bf16.mxu0 0
    %6341 = vmatpush1.bf16.msra.mxu0 %v6333
    %6342 = vmatprep.subr.bf16.mxu0 0
    %6343 = vmatpush1.bf16.msra.mxu0 %v6334
    %6344 = vmatprep.subr.bf16.mxu0 0
    %6345 = vmatpush1.bf16.msra.mxu0 0
    %6346 = vmatprep.subr.bf16.mxu0 0
    %6347 = vmatpush1.bf16.msra.mxu0 0
    %6348 = vmatprep.subr.bf16.mxu0 0
    %6349 = vmatpush1.bf16.msra.mxu0 0
    %6350 = vmatprep.subr.bf16.mxu0 0
    %6351 = vmatpush1.bf16.msra.mxu0 0
    %6352 = vmatprep.subr.bf16.mxu0 0
    %6353 = vmatpush1.bf16.msra.mxu0 0
    %6354 = vmatprep.subr.bf16.mxu0 0
    %6355 = vmatpush1.bf16.msra.mxu0 0
    %6356 = vmatprep.subr.bf16.mxu0 0
    %6357 = vmatpush1.bf16.msra.mxu0 0
    %6358 = vmatprep.subr.bf16.mxu0 0
    %6359 = vmatpush1.bf16.msra.mxu0 0
    %6360 = vmatprep.subr.bf16.mxu0 0
    %6361 = vmatpush1.bf16.msra.mxu0 0
    %6362 = vmatprep.subr.bf16.mxu0 0
    %6363 = vmatpush1.bf16.msra.mxu0 0
    %6364 = vmatprep.subr.bf16.mxu0 0
    %6365 = vmatpush1.bf16.msra.mxu0 0
    %6366 = vmatprep.subr.bf16.mxu0 0
    %6367 = vmatpush1.bf16.msra.mxu0 0
    %6368 = vmatprep.subr.bf16.mxu0 0
    %6369 = vmatpush1.bf16.msra.mxu0 0
    %6370 = vmatprep.subr.bf16.mxu0 0
    %6371 = vmatpush1.bf16.msra.mxu0 0
    %6372 = vmatprep.mubr.bf16.mxu0 0
    %6373 = vmatmul.mubr.bf16.gmra.mrb[0].mxu0 %v6338
    %v6374 = vpop.f32.mrb[0].mxu0
    %v6375 = vadd.f32 %v6324, %v6374
    %v6376 = vpop.f32.mrb[0].mxu0
    %v6377 = vpop.f32.mrb[0].mxu0
    %v6378 = vadd.f32 %v6324, %v6377
    %v6379 = vpop.f32.mrb[0].mxu0
    %6380 = vdwg.mxu0
    %v6381 = vadd.f32 %v5317, %v6375
    %v6382 = vadd.f32 %v5318, %v6378
    %v6383 = vsel %vm134, %v6381, 0.0
    %6384 = vadd.xlane.f32.xlu0 %v6383
    %v6385 = vpop.xlane.xlu0 %6384
    %v6386 = vsel %vm134, %v6382, 0.0
    %6387 = vadd.xlane.f32.xlu0 %v6386
    %v6388 = vpop.xlane.xlu0 %6387
    %v6389 = vmul.f32 %v6385, %v1187
    %v6390 = vmul.f32 %v6388, %v1187
    %v6391 = vsub.f32 %v6381, %v6389
    %v6392 = vsub.f32 %v6382, %v6390
    %v6393 = vmul.f32 %v6391, %v6391
    %v6394 = vmul.f32 %v6392, %v6392
    %v6395 = vsel %vm134, %v6393, 0.0
    %6396 = vadd.xlane.f32.xlu0 %v6395
    %v6397 = vpop.xlane.xlu0 %6396
    %v6398 = vsel %vm134, %v6394, 0.0
    %6399 = vadd.xlane.f32.xlu0 %v6398
    %v6400 = vpop.xlane.xlu0 %6399
    %v6401 = vmul.f32 %v6397, %v1187
    %v6402 = vmul.f32 %v6400, %v1187
    %v6403 = vadd.f32 %v6401, 1e-05
    %v6404 = vadd.f32 %v6402, 1e-05
    %v6405 = vrsqrt.pop %v6403
    %v6406 = vrsqrt.pop %v6404
    %v6407 = vmul.f32 %v6391, %v6405
    %v6408 = vmul.f32 %v6392, %v6406
    %v6409 = vld [vmem:[#allocation8 + $0x65] sm:$0x1]
    %v6410 = vlaneseq
    %v6411 = vshrl.u32 %v6410, 7
    %v6412 = vsub.s32 0, %v6411
    %v6413 = vrot.slane %v6409, %v6412
    %v6414 = vmul.f32 %v6407, %v6413
    %v6415 = vmul.f32 %v6408, %v6413
    %v6416 = vld [vmem:[#allocation8 + $0x66] sm:$0x1]
    %v6417 = vlaneseq
    %v6418 = vshrl.u32 %v6417, 7
    %v6419 = vsub.s32 0, %v6418
    %v6420 = vrot.slane %v6416, %v6419
    %v6421 = vadd.f32 %v6414, %v6420
    %v6422 = vadd.f32 %v6415, %v6420
    %v6423 = vpack.c.bf16 %v6422, %v6421
    %v6424 = vld [vmem:[#allocation7 + $0x1a0] sm:$0xf]
    %v6425 = vld [vmem:[#allocation7 + $0x1a4] sm:$0xf]
    %v6426 = vld [vmem:[#allocation7 + $0x1a8] sm:$0xf]
    %v6427 = vld [vmem:[#allocation7 + $0x1ac] sm:$0xf]
    %v6428 = vld [vmem:[#allocation8 + $0x61] sm:$0x1]
    %v6429 = vlaneseq
    %v6430 = vshrl.u32 %v6429, 7
    %v6431 = vsub.s32 0, %v6430
    %v6432 = vrot.slane %v6428, %v6431
    %v6437 = vunpack.c.l.b16 %v6424
    %v6438 = vunpack.c.l.b16 %v6425
    %v6439 = vunpack.c.l.b16 %v6426
    %v6440 = vunpack.c.l.b16 %v6427
    %v6441 = vpack.c.b16 %v6438, %v6437
    %v6442 = vpack.c.b16 %v6440, %v6439
    %v6446 = vsel %vm134, %v6423, 0
    %6448 = vmatprep.subr.bf16.mxu0 0
    %6449 = vmatpush1.bf16.msra.mxu0 %v6441
    %6450 = vmatprep.subr.bf16.mxu0 0
    %6451 = vmatpush1.bf16.msra.mxu0 %v6442
    %6452 = vmatprep.subr.bf16.mxu0 0
    %6453 = vmatpush1.bf16.msra.mxu0 0
    %6454 = vmatprep.subr.bf16.mxu0 0
    %6455 = vmatpush1.bf16.msra.mxu0 0
    %6456 = vmatprep.subr.bf16.mxu0 0
    %6457 = vmatpush1.bf16.msra.mxu0 0
    %6458 = vmatprep.subr.bf16.mxu0 0
    %6459 = vmatpush1.bf16.msra.mxu0 0
    %6460 = vmatprep.subr.bf16.mxu0 0
    %6461 = vmatpush1.bf16.msra.mxu0 0
    %6462 = vmatprep.subr.bf16.mxu0 0
    %6463 = vmatpush1.bf16.msra.mxu0 0
    %6464 = vmatprep.subr.bf16.mxu0 0
    %6465 = vmatpush1.bf16.msra.mxu0 0
    %6466 = vmatprep.subr.bf16.mxu0 0
    %6467 = vmatpush1.bf16.msra.mxu0 0
    %6468 = vmatprep.subr.bf16.mxu0 0
    %6469 = vmatpush1.bf16.msra.mxu0 0
    %6470 = vmatprep.subr.bf16.mxu0 0
    %6471 = vmatpush1.bf16.msra.mxu0 0
    %6472 = vmatprep.subr.bf16.mxu0 0
    %6473 = vmatpush1.bf16.msra.mxu0 0
    %6474 = vmatprep.subr.bf16.mxu0 0
    %6475 = vmatpush1.bf16.msra.mxu0 0
    %6476 = vmatprep.subr.bf16.mxu0 0
    %6477 = vmatpush1.bf16.msra.mxu0 0
    %6478 = vmatprep.subr.bf16.mxu0 0
    %6479 = vmatpush1.bf16.msra.mxu0 0
    %6480 = vmatprep.mubr.bf16.mxu0 0
    %6481 = vmatmul.mubr.bf16.gmra.mrb[0].mxu0 %v6446
    %v6482 = vpop.f32.mrb[0].mxu0
    %v6483 = vadd.f32 %v6432, %v6482
    %v6484 = vpop.f32.mrb[0].mxu0
    %v6485 = vpop.f32.mrb[0].mxu0
    %v6486 = vadd.f32 %v6432, %v6485
    %v6487 = vpop.f32.mrb[0].mxu0
    %6488 = vdwg.mxu0
    %6491 = vrot.lane.b32.xlu0 %v6483, 120
    %v6492 = vpop.permute.xlu0 %6491
    %6493 = vrot.lane.b32.xlu0 %v6486, 120
    %v6494 = vpop.permute.xlu0 %6493
    %6497 = vrot.lane.b32.xlu0 %v6483, 112
    %v6498 = vpop.permute.xlu0 %6497
    %6499 = vrot.lane.b32.xlu0 %v6486, 112
    %v6500 = vpop.permute.xlu0 %6499
    %6503 = vrot.lane.b32.xlu0 %v6483, 104
    %v6504 = vpop.permute.xlu0 %6503
    %6505 = vrot.lane.b32.xlu0 %v6486, 104
    %v6506 = vpop.permute.xlu0 %6505
    %v6509 = vpack.c.bf16 %v6483, %v6483
    %v6510 = vpack.c.bf16 %v6486, %v6486
    %v6511 = vpack.c.bf16 %v6492, %v6492
    %v6512 = vpack.c.bf16 %v6494, %v6494
    %v6513 = vpack.c.bf16 %v6498, %v6498
    %v6514 = vpack.c.bf16 %v6500, %v6500
    %v6515 = vpack.c.bf16 %v6504, %v6504
    %v6516 = vpack.c.bf16 %v6506, %v6506
    %6517 = vrot.lane.b32.xlu0 %v4096, 64
    %v6518 = vpop.permute.xlu0 %6517
    %v6520 = vsel %vm210, %v6509, 0
    %v6523 = vsel %vm210, %v6518, 0
    %6525 = vmatprep.subr.bf16.mxu0 0
    %6526 = vmatpush1.bf16.xpose.msra.mxu0 %v6523
    %6527 = vmatprep.subr.bf16.mxu0 0
    %6528 = vmatpush1.bf16.xpose.msra.mxu0 0
    %6529 = vmatprep.subr.bf16.mxu0 0
    %6530 = vmatpush1.bf16.xpose.msra.mxu0 0
    %6531 = vmatprep.subr.bf16.mxu0 0
    %6532 = vmatpush1.bf16.xpose.msra.mxu0 0
    %6533 = vmatprep.subr.bf16.mxu0 0
    %6534 = vmatpush1.bf16.xpose.msra.mxu0 0
    %6535 = vmatprep.subr.bf16.mxu0 0
    %6536 = vmatpush1.bf16.xpose.msra.mxu0 0
    %6537 = vmatprep.subr.bf16.mxu0 0
    %6538 = vmatpush1.bf16.xpose.msra.mxu0 0
    %6539 = vmatprep.subr.bf16.mxu0 0
    %6540 = vmatpush1.bf16.xpose.msra.mxu0 0
    %6541 = vmatprep.subr.bf16.mxu0 0
    %6542 = vmatpush1.bf16.xpose.msra.mxu0 0
    %6543 = vmatprep.subr.bf16.mxu0 0
    %6544 = vmatpush1.bf16.xpose.msra.mxu0 0
    %6545 = vmatprep.subr.bf16.mxu0 0
    %6546 = vmatpush1.bf16.xpose.msra.mxu0 0
    %6547 = vmatprep.subr.bf16.mxu0 0
    %6548 = vmatpush1.bf16.xpose.msra.mxu0 0
    %6549 = vmatprep.subr.bf16.mxu0 0
    %6550 = vmatpush1.bf16.xpose.msra.mxu0 0
    %6551 = vmatprep.subr.bf16.mxu0 0
    %6552 = vmatpush1.bf16.xpose.msra.mxu0 0
    %6553 = vmatprep.subr.bf16.mxu0 0
    %6554 = vmatpush1.bf16.xpose.msra.mxu0 0
    %6555 = vmatprep.subr.bf16.mxu0 0
    %6556 = vmatpush1.bf16.xpose.msra.mxu0 0
    %6557 = vmatprep.mubr.bf16.mxu0 0
    %6558 = vmatmul.mubr.bf16.gmra.mrb[0].mxu0 %v6520
    %v6559 = vpop.f32.mrb[0].mxu0
    %v6560 = vadd.f32 0.0, %v6559
    %v6561 = vpop.f32.mrb[0].mxu0
    %v6562 = vpop.f32.mrb[0].mxu0
    %v6563 = vpop.f32.mrb[0].mxu0
    %6564 = vdwg.mxu0
    %6565 = vrot.lane.b32.xlu0 %v4097, 64
    %v6566 = vpop.permute.xlu0 %6565
    %v6568 = vsel %vm210, %v6510, 0
    %v6571 = vsel %vm210, %v6566, 0
    %6573 = vmatprep.subr.bf16.mxu0 0
    %6574 = vmatpush1.bf16.xpose.msra.mxu0 %v6571
    %6575 = vmatprep.subr.bf16.mxu0 0
    %6576 = vmatpush1.bf16.xpose.msra.mxu0 0
    %6577 = vmatprep.subr.bf16.mxu0 0
    %6578 = vmatpush1.bf16.xpose.msra.mxu0 0
    %6579 = vmatprep.subr.bf16.mxu0 0
    %6580 = vmatpush1.bf16.xpose.msra.mxu0 0
    %6581 = vmatprep.subr.bf16.mxu0 0
    %6582 = vmatpush1.bf16.xpose.msra.mxu0 0
    %6583 = vmatprep.subr.bf16.mxu0 0
    %6584 = vmatpush1.bf16.xpose.msra.mxu0 0
    %6585 = vmatprep.subr.bf16.mxu0 0
    %6586 = vmatpush1.bf16.xpose.msra.mxu0 0
    %6587 = vmatprep.subr.bf16.mxu0 0
    %6588 = vmatpush1.bf16.xpose.msra.mxu0 0
    %6589 = vmatprep.subr.bf16.mxu0 0
    %6590 = vmatpush1.bf16.xpose.msra.mxu0 0
    %6591 = vmatprep.subr.bf16.mxu0 0
    %6592 = vmatpush1.bf16.xpose.msra.mxu0 0
    %6593 = vmatprep.subr.bf16.mxu0 0
    %6594 = vmatpush1.bf16.xpose.msra.mxu0 0
    %6595 = vmatprep.subr.bf16.mxu0 0
    %6596 = vmatpush1.bf16.xpose.msra.mxu0 0
    %6597 = vmatprep.subr.bf16.mxu0 0
    %6598 = vmatpush1.bf16.xpose.msra.mxu0 0
    %6599 = vmatprep.subr.bf16.mxu0 0
    %6600 = vmatpush1.bf16.xpose.msra.mxu0 0
    %6601 = vmatprep.subr.bf16.mxu0 0
    %6602 = vmatpush1.bf16.xpose.msra.mxu0 0
    %6603 = vmatprep.subr.bf16.mxu0 0
    %6604 = vmatpush1.bf16.xpose.msra.mxu0 0
    %6605 = vmatprep.mubr.bf16.mxu0 0
    %6606 = vmatmul.mubr.bf16.gmra.mrb[0].mxu0 %v6568
    %v6607 = vpop.f32.mrb[0].mxu0
    %v6608 = vadd.f32 0.0, %v6607
    %v6609 = vpop.f32.mrb[0].mxu0
    %v6610 = vpop.f32.mrb[0].mxu0
    %v6611 = vpop.f32.mrb[0].mxu0
    %6612 = vdwg.mxu0
    %6613 = vrot.lane.b32.xlu0 %v4098, 64
    %v6614 = vpop.permute.xlu0 %6613
    %v6616 = vsel %vm210, %v6511, 0
    %v6619 = vsel %vm210, %v6614, 0
    %6621 = vmatprep.subr.bf16.mxu0 0
    %6622 = vmatpush1.bf16.xpose.msra.mxu0 %v6619
    %6623 = vmatprep.subr.bf16.mxu0 0
    %6624 = vmatpush1.bf16.xpose.msra.mxu0 0
    %6625 = vmatprep.subr.bf16.mxu0 0
    %6626 = vmatpush1.bf16.xpose.msra.mxu0 0
    %6627 = vmatprep.subr.bf16.mxu0 0
    %6628 = vmatpush1.bf16.xpose.msra.mxu0 0
    %6629 = vmatprep.subr.bf16.mxu0 0
    %6630 = vmatpush1.bf16.xpose.msra.mxu0 0
    %6631 = vmatprep.subr.bf16.mxu0 0
    %6632 = vmatpush1.bf16.xpose.msra.mxu0 0
    %6633 = vmatprep.subr.bf16.mxu0 0
    %6634 = vmatpush1.bf16.xpose.msra.mxu0 0
    %6635 = vmatprep.subr.bf16.mxu0 0
    %6636 = vmatpush1.bf16.xpose.msra.mxu0 0
    %6637 = vmatprep.subr.bf16.mxu0 0
    %6638 = vmatpush1.bf16.xpose.msra.mxu0 0
    %6639 = vmatprep.subr.bf16.mxu0 0
    %6640 = vmatpush1.bf16.xpose.msra.mxu0 0
    %6641 = vmatprep.subr.bf16.mxu0 0
    %6642 = vmatpush1.bf16.xpose.msra.mxu0 0
    %6643 = vmatprep.subr.bf16.mxu0 0
    %6644 = vmatpush1.bf16.xpose.msra.mxu0 0
    %6645 = vmatprep.subr.bf16.mxu0 0
    %6646 = vmatpush1.bf16.xpose.msra.mxu0 0
    %6647 = vmatprep.subr.bf16.mxu0 0
    %6648 = vmatpush1.bf16.xpose.msra.mxu0 0
    %6649 = vmatprep.subr.bf16.mxu0 0
    %6650 = vmatpush1.bf16.xpose.msra.mxu0 0
    %6651 = vmatprep.subr.bf16.mxu0 0
    %6652 = vmatpush1.bf16.xpose.msra.mxu0 0
    %6653 = vmatprep.mubr.bf16.mxu0 0
    %6654 = vmatmul.mubr.bf16.gmra.mrb[0].mxu0 %v6616
    %v6655 = vpop.f32.mrb[0].mxu0
    %v6656 = vadd.f32 0.0, %v6655
    %v6657 = vpop.f32.mrb[0].mxu0
    %v6658 = vpop.f32.mrb[0].mxu0
    %v6659 = vpop.f32.mrb[0].mxu0
    %6660 = vdwg.mxu0
    %6661 = vrot.lane.b32.xlu0 %v4099, 64
    %v6662 = vpop.permute.xlu0 %6661
    %v6664 = vsel %vm210, %v6512, 0
    %v6667 = vsel %vm210, %v6662, 0
    %6669 = vmatprep.subr.bf16.mxu0 0
    %6670 = vmatpush1.bf16.xpose.msra.mxu0 %v6667
    %6671 = vmatprep.subr.bf16.mxu0 0
    %6672 = vmatpush1.bf16.xpose.msra.mxu0 0
    %6673 = vmatprep.subr.bf16.mxu0 0
    %6674 = vmatpush1.bf16.xpose.msra.mxu0 0
    %6675 = vmatprep.subr.bf16.mxu0 0
    %6676 = vmatpush1.bf16.xpose.msra.mxu0 0
    %6677 = vmatprep.subr.bf16.mxu0 0
    %6678 = vmatpush1.bf16.xpose.msra.mxu0 0
    %6679 = vmatprep.subr.bf16.mxu0 0
    %6680 = vmatpush1.bf16.xpose.msra.mxu0 0
    %6681 = vmatprep.subr.bf16.mxu0 0
    %6682 = vmatpush1.bf16.xpose.msra.mxu0 0
    %6683 = vmatprep.subr.bf16.mxu0 0
    %6684 = vmatpush1.bf16.xpose.msra.mxu0 0
    %6685 = vmatprep.subr.bf16.mxu0 0
    %6686 = vmatpush1.bf16.xpose.msra.mxu0 0
    %6687 = vmatprep.subr.bf16.mxu0 0
    %6688 = vmatpush1.bf16.xpose.msra.mxu0 0
    %6689 = vmatprep.subr.bf16.mxu0 0
    %6690 = vmatpush1.bf16.xpose.msra.mxu0 0
    %6691 = vmatprep.subr.bf16.mxu0 0
    %6692 = vmatpush1.bf16.xpose.msra.mxu0 0
    %6693 = vmatprep.subr.bf16.mxu0 0
    %6694 = vmatpush1.bf16.xpose.msra.mxu0 0
    %6695 = vmatprep.subr.bf16.mxu0 0
    %6696 = vmatpush1.bf16.xpose.msra.mxu0 0
    %6697 = vmatprep.subr.bf16.mxu0 0
    %6698 = vmatpush1.bf16.xpose.msra.mxu0 0
    %6699 = vmatprep.subr.bf16.mxu0 0
    %6700 = vmatpush1.bf16.xpose.msra.mxu0 0
    %6701 = vmatprep.mubr.bf16.mxu0 0
    %6702 = vmatmul.mubr.bf16.gmra.mrb[0].mxu0 %v6664
    %v6703 = vpop.f32.mrb[0].mxu0
    %v6704 = vadd.f32 0.0, %v6703
    %v6705 = vpop.f32.mrb[0].mxu0
    %v6706 = vpop.f32.mrb[0].mxu0
    %v6707 = vpop.f32.mrb[0].mxu0
    %6708 = vdwg.mxu0
    %6709 = vrot.lane.b32.xlu0 %v4100, 64
    %v6710 = vpop.permute.xlu0 %6709
    %v6712 = vsel %vm210, %v6513, 0
    %v6715 = vsel %vm210, %v6710, 0
    %6717 = vmatprep.subr.bf16.mxu0 0
    %6718 = vmatpush1.bf16.xpose.msra.mxu0 %v6715
    %6719 = vmatprep.subr.bf16.mxu0 0
    %6720 = vmatpush1.bf16.xpose.msra.mxu0 0
    %6721 = vmatprep.subr.bf16.mxu0 0
    %6722 = vmatpush1.bf16.xpose.msra.mxu0 0
    %6723 = vmatprep.subr.bf16.mxu0 0
    %6724 = vmatpush1.bf16.xpose.msra.mxu0 0
    %6725 = vmatprep.subr.bf16.mxu0 0
    %6726 = vmatpush1.bf16.xpose.msra.mxu0 0
    %6727 = vmatprep.subr.bf16.mxu0 0
    %6728 = vmatpush1.bf16.xpose.msra.mxu0 0
    %6729 = vmatprep.subr.bf16.mxu0 0
    %6730 = vmatpush1.bf16.xpose.msra.mxu0 0
    %6731 = vmatprep.subr.bf16.mxu0 0
    %6732 = vmatpush1.bf16.xpose.msra.mxu0 0
    %6733 = vmatprep.subr.bf16.mxu0 0
    %6734 = vmatpush1.bf16.xpose.msra.mxu0 0
    %6735 = vmatprep.subr.bf16.mxu0 0
    %6736 = vmatpush1.bf16.xpose.msra.mxu0 0
    %6737 = vmatprep.subr.bf16.mxu0 0
    %6738 = vmatpush1.bf16.xpose.msra.mxu0 0
    %6739 = vmatprep.subr.bf16.mxu0 0
    %6740 = vmatpush1.bf16.xpose.msra.mxu0 0
    %6741 = vmatprep.subr.bf16.mxu0 0
    %6742 = vmatpush1.bf16.xpose.msra.mxu0 0
    %6743 = vmatprep.subr.bf16.mxu0 0
    %6744 = vmatpush1.bf16.xpose.msra.mxu0 0
    %6745 = vmatprep.subr.bf16.mxu0 0
    %6746 = vmatpush1.bf16.xpose.msra.mxu0 0
    %6747 = vmatprep.subr.bf16.mxu0 0
    %6748 = vmatpush1.bf16.xpose.msra.mxu0 0
    %6749 = vmatprep.mubr.bf16.mxu0 0
    %6750 = vmatmul.mubr.bf16.gmra.mrb[0].mxu0 %v6712
    %v6751 = vpop.f32.mrb[0].mxu0
    %v6752 = vadd.f32 0.0, %v6751
    %v6753 = vpop.f32.mrb[0].mxu0
    %v6754 = vpop.f32.mrb[0].mxu0
    %v6755 = vpop.f32.mrb[0].mxu0
    %6756 = vdwg.mxu0
    %6757 = vrot.lane.b32.xlu0 %v4101, 64
    %v6758 = vpop.permute.xlu0 %6757
    %v6760 = vsel %vm210, %v6514, 0
    %v6763 = vsel %vm210, %v6758, 0
    %6765 = vmatprep.subr.bf16.mxu0 0
    %6766 = vmatpush1.bf16.xpose.msra.mxu0 %v6763
    %6767 = vmatprep.subr.bf16.mxu0 0
    %6768 = vmatpush1.bf16.xpose.msra.mxu0 0
    %6769 = vmatprep.subr.bf16.mxu0 0
    %6770 = vmatpush1.bf16.xpose.msra.mxu0 0
    %6771 = vmatprep.subr.bf16.mxu0 0
    %6772 = vmatpush1.bf16.xpose.msra.mxu0 0
    %6773 = vmatprep.subr.bf16.mxu0 0
    %6774 = vmatpush1.bf16.xpose.msra.mxu0 0
    %6775 = vmatprep.subr.bf16.mxu0 0
    %6776 = vmatpush1.bf16.xpose.msra.mxu0 0
    %6777 = vmatprep.subr.bf16.mxu0 0
    %6778 = vmatpush1.bf16.xpose.msra.mxu0 0
    %6779 = vmatprep.subr.bf16.mxu0 0
    %6780 = vmatpush1.bf16.xpose.msra.mxu0 0
    %6781 = vmatprep.subr.bf16.mxu0 0
    %6782 = vmatpush1.bf16.xpose.msra.mxu0 0
    %6783 = vmatprep.subr.bf16.mxu0 0
    %6784 = vmatpush1.bf16.xpose.msra.mxu0 0
    %6785 = vmatprep.subr.bf16.mxu0 0
    %6786 = vmatpush1.bf16.xpose.msra.mxu0 0
    %6787 = vmatprep.subr.bf16.mxu0 0
    %6788 = vmatpush1.bf16.xpose.msra.mxu0 0
    %6789 = vmatprep.subr.bf16.mxu0 0
    %6790 = vmatpush1.bf16.xpose.msra.mxu0 0
    %6791 = vmatprep.subr.bf16.mxu0 0
    %6792 = vmatpush1.bf16.xpose.msra.mxu0 0
    %6793 = vmatprep.subr.bf16.mxu0 0
    %6794 = vmatpush1.bf16.xpose.msra.mxu0 0
    %6795 = vmatprep.subr.bf16.mxu0 0
    %6796 = vmatpush1.bf16.xpose.msra.mxu0 0
    %6797 = vmatprep.mubr.bf16.mxu0 0
    %6798 = vmatmul.mubr.bf16.gmra.mrb[0].mxu0 %v6760
    %v6799 = vpop.f32.mrb[0].mxu0
    %v6800 = vadd.f32 0.0, %v6799
    %v6801 = vpop.f32.mrb[0].mxu0
    %v6802 = vpop.f32.mrb[0].mxu0
    %v6803 = vpop.f32.mrb[0].mxu0
    %6804 = vdwg.mxu0
    %6805 = vrot.lane.b32.xlu0 %v4102, 64
    %v6806 = vpop.permute.xlu0 %6805
    %v6808 = vsel %vm210, %v6515, 0
    %v6811 = vsel %vm210, %v6806, 0
    %6813 = vmatprep.subr.bf16.mxu0 0
    %6814 = vmatpush1.bf16.xpose.msra.mxu0 %v6811
    %6815 = vmatprep.subr.bf16.mxu0 0
    %6816 = vmatpush1.bf16.xpose.msra.mxu0 0
    %6817 = vmatprep.subr.bf16.mxu0 0
    %6818 = vmatpush1.bf16.xpose.msra.mxu0 0
    %6819 = vmatprep.subr.bf16.mxu0 0
    %6820 = vmatpush1.bf16.xpose.msra.mxu0 0
    %6821 = vmatprep.subr.bf16.mxu0 0
    %6822 = vmatpush1.bf16.xpose.msra.mxu0 0
    %6823 = vmatprep.subr.bf16.mxu0 0
    %6824 = vmatpush1.bf16.xpose.msra.mxu0 0
    %6825 = vmatprep.subr.bf16.mxu0 0
    %6826 = vmatpush1.bf16.xpose.msra.mxu0 0
    %6827 = vmatprep.subr.bf16.mxu0 0
    %6828 = vmatpush1.bf16.xpose.msra.mxu0 0
    %6829 = vmatprep.subr.bf16.mxu0 0
    %6830 = vmatpush1.bf16.xpose.msra.mxu0 0
    %6831 = vmatprep.subr.bf16.mxu0 0
    %6832 = vmatpush1.bf16.xpose.msra.mxu0 0
    %6833 = vmatprep.subr.bf16.mxu0 0
    %6834 = vmatpush1.bf16.xpose.msra.mxu0 0
    %6835 = vmatprep.subr.bf16.mxu0 0
    %6836 = vmatpush1.bf16.xpose.msra.mxu0 0
    %6837 = vmatprep.subr.bf16.mxu0 0
    %6838 = vmatpush1.bf16.xpose.msra.mxu0 0
    %6839 = vmatprep.subr.bf16.mxu0 0
    %6840 = vmatpush1.bf16.xpose.msra.mxu0 0
    %6841 = vmatprep.subr.bf16.mxu0 0
    %6842 = vmatpush1.bf16.xpose.msra.mxu0 0
    %6843 = vmatprep.subr.bf16.mxu0 0
    %6844 = vmatpush1.bf16.xpose.msra.mxu0 0
    %6845 = vmatprep.mubr.bf16.mxu0 0
    %6846 = vmatmul.mubr.bf16.gmra.mrb[0].mxu0 %v6808
    %v6847 = vpop.f32.mrb[0].mxu0
    %v6848 = vadd.f32 0.0, %v6847
    %v6849 = vpop.f32.mrb[0].mxu0
    %v6850 = vpop.f32.mrb[0].mxu0
    %v6851 = vpop.f32.mrb[0].mxu0
    %6852 = vdwg.mxu0
    %6853 = vrot.lane.b32.xlu0 %v4103, 64
    %v6854 = vpop.permute.xlu0 %6853
    %v6856 = vsel %vm210, %v6516, 0
    %v6859 = vsel %vm210, %v6854, 0
    %6861 = vmatprep.subr.bf16.mxu0 0
    %6862 = vmatpush1.bf16.xpose.msra.mxu0 %v6859
    %6863 = vmatprep.subr.bf16.mxu0 0
    %6864 = vmatpush1.bf16.xpose.msra.mxu0 0
    %6865 = vmatprep.subr.bf16.mxu0 0
    %6866 = vmatpush1.bf16.xpose.msra.mxu0 0
    %6867 = vmatprep.subr.bf16.mxu0 0
    %6868 = vmatpush1.bf16.xpose.msra.mxu0 0
    %6869 = vmatprep.subr.bf16.mxu0 0
    %6870 = vmatpush1.bf16.xpose.msra.mxu0 0
    %6871 = vmatprep.subr.bf16.mxu0 0
    %6872 = vmatpush1.bf16.xpose.msra.mxu0 0
    %6873 = vmatprep.subr.bf16.mxu0 0
    %6874 = vmatpush1.bf16.xpose.msra.mxu0 0
    %6875 = vmatprep.subr.bf16.mxu0 0
    %6876 = vmatpush1.bf16.xpose.msra.mxu0 0
    %6877 = vmatprep.subr.bf16.mxu0 0
    %6878 = vmatpush1.bf16.xpose.msra.mxu0 0
    %6879 = vmatprep.subr.bf16.mxu0 0
    %6880 = vmatpush1.bf16.xpose.msra.mxu0 0
    %6881 = vmatprep.subr.bf16.mxu0 0
    %6882 = vmatpush1.bf16.xpose.msra.mxu0 0
    %6883 = vmatprep.subr.bf16.mxu0 0
    %6884 = vmatpush1.bf16.xpose.msra.mxu0 0
    %6885 = vmatprep.subr.bf16.mxu0 0
    %6886 = vmatpush1.bf16.xpose.msra.mxu0 0
    %6887 = vmatprep.subr.bf16.mxu0 0
    %6888 = vmatpush1.bf16.xpose.msra.mxu0 0
    %6889 = vmatprep.subr.bf16.mxu0 0
    %6890 = vmatpush1.bf16.xpose.msra.mxu0 0
    %6891 = vmatprep.subr.bf16.mxu0 0
    %6892 = vmatpush1.bf16.xpose.msra.mxu0 0
    %6893 = vmatprep.mubr.bf16.mxu0 0
    %6894 = vmatmul.mubr.bf16.gmra.mrb[0].mxu0 %v6856
    %v6895 = vpop.f32.mrb[0].mxu0
    %v6896 = vadd.f32 0.0, %v6895
    %v6897 = vpop.f32.mrb[0].mxu0
    %v6898 = vpop.f32.mrb[0].mxu0
    %v6899 = vpop.f32.mrb[0].mxu0
    %6900 = vdwg.mxu0
    %v6901 = vsel %vm210, %v6560, -inf
    %6902 = vmax.xlane.f32.xlu0 %v6901
    %v6903 = vpop.xlane.xlu0 %6902
    %v6904 = vsel %vm210, %v6608, -inf
    %6905 = vmax.xlane.f32.xlu0 %v6904
    %v6906 = vpop.xlane.xlu0 %6905
    %v6907 = vsel %vm210, %v6656, -inf
    %6908 = vmax.xlane.f32.xlu0 %v6907
    %v6909 = vpop.xlane.xlu0 %6908
    %v6910 = vsel %vm210, %v6704, -inf
    %6911 = vmax.xlane.f32.xlu0 %v6910
    %v6912 = vpop.xlane.xlu0 %6911
    %v6913 = vsel %vm210, %v6752, -inf
    %6914 = vmax.xlane.f32.xlu0 %v6913
    %v6915 = vpop.xlane.xlu0 %6914
    %v6916 = vsel %vm210, %v6800, -inf
    %6917 = vmax.xlane.f32.xlu0 %v6916
    %v6918 = vpop.xlane.xlu0 %6917
    %v6919 = vsel %vm210, %v6848, -inf
    %6920 = vmax.xlane.f32.xlu0 %v6919
    %v6921 = vpop.xlane.xlu0 %6920
    %v6922 = vsel %vm210, %v6896, -inf
    %6923 = vmax.xlane.f32.xlu0 %v6922
    %v6924 = vpop.xlane.xlu0 %6923
    %v6925 = vsub.f32 %v6560, %v6903
    %v6926 = vsub.f32 %v6608, %v6906
    %v6927 = vsub.f32 %v6656, %v6909
    %v6928 = vsub.f32 %v6704, %v6912
    %v6929 = vsub.f32 %v6752, %v6915
    %v6930 = vsub.f32 %v6800, %v6918
    %v6931 = vsub.f32 %v6848, %v6921
    %v6932 = vsub.f32 %v6896, %v6924
    %v6933 = vmul.f32 %v6925, 1.442695
    %v6934 = vpow.pop %v6933
    %v6935 = vmul.f32 %v6926, 1.442695
    %v6936 = vpow.pop %v6935
    %v6937 = vmul.f32 %v6927, 1.442695
    %v6938 = vpow.pop %v6937
    %v6939 = vmul.f32 %v6928, 1.442695
    %v6940 = vpow.pop %v6939
    %v6941 = vmul.f32 %v6929, 1.442695
    %v6942 = vpow.pop %v6941
    %v6943 = vmul.f32 %v6930, 1.442695
    %v6944 = vpow.pop %v6943
    %v6945 = vmul.f32 %v6931, 1.442695
    %v6946 = vpow.pop %v6945
    %v6947 = vmul.f32 %v6932, 1.442695
    %v6948 = vpow.pop %v6947
    %v6949 = vsel %vm210, %v6934, 0.0
    %6950 = vadd.xlane.f32.xlu0 %v6949
    %v6951 = vpop.xlane.xlu0 %6950
    %v6952 = vsel %vm210, %v6936, 0.0
    %6953 = vadd.xlane.f32.xlu0 %v6952
    %v6954 = vpop.xlane.xlu0 %6953
    %v6955 = vsel %vm210, %v6938, 0.0
    %6956 = vadd.xlane.f32.xlu0 %v6955
    %v6957 = vpop.xlane.xlu0 %6956
    %v6958 = vsel %vm210, %v6940, 0.0
    %6959 = vadd.xlane.f32.xlu0 %v6958
    %v6960 = vpop.xlane.xlu0 %6959
    %v6961 = vsel %vm210, %v6942, 0.0
    %6962 = vadd.xlane.f32.xlu0 %v6961
    %v6963 = vpop.xlane.xlu0 %6962
    %v6964 = vsel %vm210, %v6944, 0.0
    %6965 = vadd.xlane.f32.xlu0 %v6964
    %v6966 = vpop.xlane.xlu0 %6965
    %v6967 = vsel %vm210, %v6946, 0.0
    %6968 = vadd.xlane.f32.xlu0 %v6967
    %v6969 = vpop.xlane.xlu0 %6968
    %v6970 = vsel %vm210, %v6948, 0.0
    %6971 = vadd.xlane.f32.xlu0 %v6970
    %v6972 = vpop.xlane.xlu0 %6971
    %v6973 = vrcp.pop %v6951
    %v6974 = vrcp.pop %v6954
    %v6975 = vrcp.pop %v6957
    %v6976 = vrcp.pop %v6960
    %v6977 = vrcp.pop %v6963
    %v6978 = vrcp.pop %v6966
    %v6979 = vrcp.pop %v6969
    %v6980 = vrcp.pop %v6972
    %v6981 = vmul.f32 %v6934, %v6973
    %v6982 = vmul.f32 %v6936, %v6974
    %v6983 = vmul.f32 %v6938, %v6975
    %v6984 = vmul.f32 %v6940, %v6976
    %v6985 = vmul.f32 %v6942, %v6977
    %v6986 = vmul.f32 %v6944, %v6978
    %v6987 = vmul.f32 %v6946, %v6979
    %v6988 = vmul.f32 %v6948, %v6980
    %v6989 = vpack.c.bf16 %v6981, %v6981
    %v6990 = vpack.c.bf16 %v6982, %v6982
    %v6991 = vpack.c.bf16 %v6983, %v6983
    %v6992 = vpack.c.bf16 %v6984, %v6984
    %v6993 = vpack.c.bf16 %v6985, %v6985
    %v6994 = vpack.c.bf16 %v6986, %v6986
    %v6995 = vpack.c.bf16 %v6987, %v6987
    %v6996 = vpack.c.bf16 %v6988, %v6988
    %6997 = vrot.lane.b32.xlu0 %v4096, 32
    %v6998 = vpop.permute.xlu0 %6997
    %v7000 = vsel %vm210, %v6989, 0
    %v7003 = vsel %vm701, %v6998, 0
    %7005 = vmatprep.subr.bf16.mxu0 0
    %7006 = vmatpush1.bf16.msra.mxu0 %v7003
    %7007 = vmatprep.subr.bf16.mxu0 0
    %7008 = vmatpush1.bf16.msra.mxu0 0
    %7009 = vmatprep.subr.bf16.mxu0 0
    %7010 = vmatpush1.bf16.msra.mxu0 0
    %7011 = vmatprep.subr.bf16.mxu0 0
    %7012 = vmatpush1.bf16.msra.mxu0 0
    %7013 = vmatprep.subr.bf16.mxu0 0
    %7014 = vmatpush1.bf16.msra.mxu0 0
    %7015 = vmatprep.subr.bf16.mxu0 0
    %7016 = vmatpush1.bf16.msra.mxu0 0
    %7017 = vmatprep.subr.bf16.mxu0 0
    %7018 = vmatpush1.bf16.msra.mxu0 0
    %7019 = vmatprep.subr.bf16.mxu0 0
    %7020 = vmatpush1.bf16.msra.mxu0 0
    %7021 = vmatprep.subr.bf16.mxu0 0
    %7022 = vmatpush1.bf16.msra.mxu0 0
    %7023 = vmatprep.subr.bf16.mxu0 0
    %7024 = vmatpush1.bf16.msra.mxu0 0
    %7025 = vmatprep.subr.bf16.mxu0 0
    %7026 = vmatpush1.bf16.msra.mxu0 0
    %7027 = vmatprep.subr.bf16.mxu0 0
    %7028 = vmatpush1.bf16.msra.mxu0 0
    %7029 = vmatprep.subr.bf16.mxu0 0
    %7030 = vmatpush1.bf16.msra.mxu0 0
    %7031 = vmatprep.subr.bf16.mxu0 0
    %7032 = vmatpush1.bf16.msra.mxu0 0
    %7033 = vmatprep.subr.bf16.mxu0 0
    %7034 = vmatpush1.bf16.msra.mxu0 0
    %7035 = vmatprep.subr.bf16.mxu0 0
    %7036 = vmatpush1.bf16.msra.mxu0 0
    %7037 = vmatprep.mubr.bf16.mxu0 0
    %7038 = vmatmul.mubr.bf16.gmra.mrb[0].mxu0 %v7000
    %v7039 = vpop.f32.mrb[0].mxu0
    %v7040 = vadd.f32 0.0, %v7039
    %v7041 = vpop.f32.mrb[0].mxu0
    %v7042 = vpop.f32.mrb[0].mxu0
    %v7043 = vpop.f32.mrb[0].mxu0
    %7044 = vdwg.mxu0
    %7045 = vrot.lane.b32.xlu0 %v4097, 32
    %v7046 = vpop.permute.xlu0 %7045
    %v7048 = vsel %vm210, %v6990, 0
    %v7051 = vsel %vm701, %v7046, 0
    %7053 = vmatprep.subr.bf16.mxu0 0
    %7054 = vmatpush1.bf16.msra.mxu0 %v7051
    %7055 = vmatprep.subr.bf16.mxu0 0
    %7056 = vmatpush1.bf16.msra.mxu0 0
    %7057 = vmatprep.subr.bf16.mxu0 0
    %7058 = vmatpush1.bf16.msra.mxu0 0
    %7059 = vmatprep.subr.bf16.mxu0 0
    %7060 = vmatpush1.bf16.msra.mxu0 0
    %7061 = vmatprep.subr.bf16.mxu0 0
    %7062 = vmatpush1.bf16.msra.mxu0 0
    %7063 = vmatprep.subr.bf16.mxu0 0
    %7064 = vmatpush1.bf16.msra.mxu0 0
    %7065 = vmatprep.subr.bf16.mxu0 0
    %7066 = vmatpush1.bf16.msra.mxu0 0
    %7067 = vmatprep.subr.bf16.mxu0 0
    %7068 = vmatpush1.bf16.msra.mxu0 0
    %7069 = vmatprep.subr.bf16.mxu0 0
    %7070 = vmatpush1.bf16.msra.mxu0 0
    %7071 = vmatprep.subr.bf16.mxu0 0
    %7072 = vmatpush1.bf16.msra.mxu0 0
    %7073 = vmatprep.subr.bf16.mxu0 0
    %7074 = vmatpush1.bf16.msra.mxu0 0
    %7075 = vmatprep.subr.bf16.mxu0 0
    %7076 = vmatpush1.bf16.msra.mxu0 0
    %7077 = vmatprep.subr.bf16.mxu0 0
    %7078 = vmatpush1.bf16.msra.mxu0 0
    %7079 = vmatprep.subr.bf16.mxu0 0
    %7080 = vmatpush1.bf16.msra.mxu0 0
    %7081 = vmatprep.subr.bf16.mxu0 0
    %7082 = vmatpush1.bf16.msra.mxu0 0
    %7083 = vmatprep.subr.bf16.mxu0 0
    %7084 = vmatpush1.bf16.msra.mxu0 0
    %7085 = vmatprep.mubr.bf16.mxu0 0
    %7086 = vmatmul.mubr.bf16.gmra.mrb[0].mxu0 %v7048
    %v7087 = vpop.f32.mrb[0].mxu0
    %v7088 = vadd.f32 0.0, %v7087
    %v7089 = vpop.f32.mrb[0].mxu0
    %v7090 = vpop.f32.mrb[0].mxu0
    %v7091 = vpop.f32.mrb[0].mxu0
    %7092 = vdwg.mxu0
    %7093 = vrot.lane.b32.xlu0 %v4098, 32
    %v7094 = vpop.permute.xlu0 %7093
    %v7096 = vsel %vm210, %v6991, 0
    %v7099 = vsel %vm701, %v7094, 0
    %7101 = vmatprep.subr.bf16.mxu0 0
    %7102 = vmatpush1.bf16.msra.mxu0 %v7099
    %7103 = vmatprep.subr.bf16.mxu0 0
    %7104 = vmatpush1.bf16.msra.mxu0 0
    %7105 = vmatprep.subr.bf16.mxu0 0
    %7106 = vmatpush1.bf16.msra.mxu0 0
    %7107 = vmatprep.subr.bf16.mxu0 0
    %7108 = vmatpush1.bf16.msra.mxu0 0
    %7109 = vmatprep.subr.bf16.mxu0 0
    %7110 = vmatpush1.bf16.msra.mxu0 0
    %7111 = vmatprep.subr.bf16.mxu0 0
    %7112 = vmatpush1.bf16.msra.mxu0 0
    %7113 = vmatprep.subr.bf16.mxu0 0
    %7114 = vmatpush1.bf16.msra.mxu0 0
    %7115 = vmatprep.subr.bf16.mxu0 0
    %7116 = vmatpush1.bf16.msra.mxu0 0
    %7117 = vmatprep.subr.bf16.mxu0 0
    %7118 = vmatpush1.bf16.msra.mxu0 0
    %7119 = vmatprep.subr.bf16.mxu0 0
    %7120 = vmatpush1.bf16.msra.mxu0 0
    %7121 = vmatprep.subr.bf16.mxu0 0
    %7122 = vmatpush1.bf16.msra.mxu0 0
    %7123 = vmatprep.subr.bf16.mxu0 0
    %7124 = vmatpush1.bf16.msra.mxu0 0
    %7125 = vmatprep.subr.bf16.mxu0 0
    %7126 = vmatpush1.bf16.msra.mxu0 0
    %7127 = vmatprep.subr.bf16.mxu0 0
    %7128 = vmatpush1.bf16.msra.mxu0 0
    %7129 = vmatprep.subr.bf16.mxu0 0
    %7130 = vmatpush1.bf16.msra.mxu0 0
    %7131 = vmatprep.subr.bf16.mxu0 0
    %7132 = vmatpush1.bf16.msra.mxu0 0
    %7133 = vmatprep.mubr.bf16.mxu0 0
    %7134 = vmatmul.mubr.bf16.gmra.mrb[0].mxu0 %v7096
    %v7135 = vpop.f32.mrb[0].mxu0
    %v7136 = vadd.f32 0.0, %v7135
    %v7137 = vpop.f32.mrb[0].mxu0
    %v7138 = vpop.f32.mrb[0].mxu0
    %v7139 = vpop.f32.mrb[0].mxu0
    %7140 = vdwg.mxu0
    %7141 = vrot.lane.b32.xlu0 %v4099, 32
    %v7142 = vpop.permute.xlu0 %7141
    %v7144 = vsel %vm210, %v6992, 0
    %v7147 = vsel %vm701, %v7142, 0
    %7149 = vmatprep.subr.bf16.mxu0 0
    %7150 = vmatpush1.bf16.msra.mxu0 %v7147
    %7151 = vmatprep.subr.bf16.mxu0 0
    %7152 = vmatpush1.bf16.msra.mxu0 0
    %7153 = vmatprep.subr.bf16.mxu0 0
    %7154 = vmatpush1.bf16.msra.mxu0 0
    %7155 = vmatprep.subr.bf16.mxu0 0
    %7156 = vmatpush1.bf16.msra.mxu0 0
    %7157 = vmatprep.subr.bf16.mxu0 0
    %7158 = vmatpush1.bf16.msra.mxu0 0
    %7159 = vmatprep.subr.bf16.mxu0 0
    %7160 = vmatpush1.bf16.msra.mxu0 0
    %7161 = vmatprep.subr.bf16.mxu0 0
    %7162 = vmatpush1.bf16.msra.mxu0 0
    %7163 = vmatprep.subr.bf16.mxu0 0
    %7164 = vmatpush1.bf16.msra.mxu0 0
    %7165 = vmatprep.subr.bf16.mxu0 0
    %7166 = vmatpush1.bf16.msra.mxu0 0
    %7167 = vmatprep.subr.bf16.mxu0 0
    %7168 = vmatpush1.bf16.msra.mxu0 0
    %7169 = vmatprep.subr.bf16.mxu0 0
    %7170 = vmatpush1.bf16.msra.mxu0 0
    %7171 = vmatprep.subr.bf16.mxu0 0
    %7172 = vmatpush1.bf16.msra.mxu0 0
    %7173 = vmatprep.subr.bf16.mxu0 0
    %7174 = vmatpush1.bf16.msra.mxu0 0
    %7175 = vmatprep.subr.bf16.mxu0 0
    %7176 = vmatpush1.bf16.msra.mxu0 0
    %7177 = vmatprep.subr.bf16.mxu0 0
    %7178 = vmatpush1.bf16.msra.mxu0 0
    %7179 = vmatprep.subr.bf16.mxu0 0
    %7180 = vmatpush1.bf16.msra.mxu0 0
    %7181 = vmatprep.mubr.bf16.mxu0 0
    %7182 = vmatmul.mubr.bf16.gmra.mrb[0].mxu0 %v7144
    %v7183 = vpop.f32.mrb[0].mxu0
    %v7184 = vadd.f32 0.0, %v7183
    %v7185 = vpop.f32.mrb[0].mxu0
    %v7186 = vpop.f32.mrb[0].mxu0
    %v7187 = vpop.f32.mrb[0].mxu0
    %7188 = vdwg.mxu0
    %7189 = vrot.lane.b32.xlu0 %v4100, 32
    %v7190 = vpop.permute.xlu0 %7189
    %v7192 = vsel %vm210, %v6993, 0
    %v7195 = vsel %vm701, %v7190, 0
    %7197 = vmatprep.subr.bf16.mxu0 0
    %7198 = vmatpush1.bf16.msra.mxu0 %v7195
    %7199 = vmatprep.subr.bf16.mxu0 0
    %7200 = vmatpush1.bf16.msra.mxu0 0
    %7201 = vmatprep.subr.bf16.mxu0 0
    %7202 = vmatpush1.bf16.msra.mxu0 0
    %7203 = vmatprep.subr.bf16.mxu0 0
    %7204 = vmatpush1.bf16.msra.mxu0 0
    %7205 = vmatprep.subr.bf16.mxu0 0
    %7206 = vmatpush1.bf16.msra.mxu0 0
    %7207 = vmatprep.subr.bf16.mxu0 0
    %7208 = vmatpush1.bf16.msra.mxu0 0
    %7209 = vmatprep.subr.bf16.mxu0 0
    %7210 = vmatpush1.bf16.msra.mxu0 0
    %7211 = vmatprep.subr.bf16.mxu0 0
    %7212 = vmatpush1.bf16.msra.mxu0 0
    %7213 = vmatprep.subr.bf16.mxu0 0
    %7214 = vmatpush1.bf16.msra.mxu0 0
    %7215 = vmatprep.subr.bf16.mxu0 0
    %7216 = vmatpush1.bf16.msra.mxu0 0
    %7217 = vmatprep.subr.bf16.mxu0 0
    %7218 = vmatpush1.bf16.msra.mxu0 0
    %7219 = vmatprep.subr.bf16.mxu0 0
    %7220 = vmatpush1.bf16.msra.mxu0 0
    %7221 = vmatprep.subr.bf16.mxu0 0
    %7222 = vmatpush1.bf16.msra.mxu0 0
    %7223 = vmatprep.subr.bf16.mxu0 0
    %7224 = vmatpush1.bf16.msra.mxu0 0
    %7225 = vmatprep.subr.bf16.mxu0 0
    %7226 = vmatpush1.bf16.msra.mxu0 0
    %7227 = vmatprep.subr.bf16.mxu0 0
    %7228 = vmatpush1.bf16.msra.mxu0 0
    %7229 = vmatprep.mubr.bf16.mxu0 0
    %7230 = vmatmul.mubr.bf16.gmra.mrb[0].mxu0 %v7192
    %v7231 = vpop.f32.mrb[0].mxu0
    %v7232 = vadd.f32 0.0, %v7231
    %v7233 = vpop.f32.mrb[0].mxu0
    %v7234 = vpop.f32.mrb[0].mxu0
    %v7235 = vpop.f32.mrb[0].mxu0
    %7236 = vdwg.mxu0
    %7237 = vrot.lane.b32.xlu0 %v4101, 32
    %v7238 = vpop.permute.xlu0 %7237
    %v7240 = vsel %vm210, %v6994, 0
    %v7243 = vsel %vm701, %v7238, 0
    %7245 = vmatprep.subr.bf16.mxu0 0
    %7246 = vmatpush1.bf16.msra.mxu0 %v7243
    %7247 = vmatprep.subr.bf16.mxu0 0
    %7248 = vmatpush1.bf16.msra.mxu0 0
    %7249 = vmatprep.subr.bf16.mxu0 0
    %7250 = vmatpush1.bf16.msra.mxu0 0
    %7251 = vmatprep.subr.bf16.mxu0 0
    %7252 = vmatpush1.bf16.msra.mxu0 0
    %7253 = vmatprep.subr.bf16.mxu0 0
    %7254 = vmatpush1.bf16.msra.mxu0 0
    %7255 = vmatprep.subr.bf16.mxu0 0
    %7256 = vmatpush1.bf16.msra.mxu0 0
    %7257 = vmatprep.subr.bf16.mxu0 0
    %7258 = vmatpush1.bf16.msra.mxu0 0
    %7259 = vmatprep.subr.bf16.mxu0 0
    %7260 = vmatpush1.bf16.msra.mxu0 0
    %7261 = vmatprep.subr.bf16.mxu0 0
    %7262 = vmatpush1.bf16.msra.mxu0 0
    %7263 = vmatprep.subr.bf16.mxu0 0
    %7264 = vmatpush1.bf16.msra.mxu0 0
    %7265 = vmatprep.subr.bf16.mxu0 0
    %7266 = vmatpush1.bf16.msra.mxu0 0
    %7267 = vmatprep.subr.bf16.mxu0 0
    %7268 = vmatpush1.bf16.msra.mxu0 0
    %7269 = vmatprep.subr.bf16.mxu0 0
    %7270 = vmatpush1.bf16.msra.mxu0 0
    %7271 = vmatprep.subr.bf16.mxu0 0
    %7272 = vmatpush1.bf16.msra.mxu0 0
    %7273 = vmatprep.subr.bf16.mxu0 0
    %7274 = vmatpush1.bf16.msra.mxu0 0
    %7275 = vmatprep.subr.bf16.mxu0 0
    %7276 = vmatpush1.bf16.msra.mxu0 0
    %7277 = vmatprep.mubr.bf16.mxu0 0
    %7278 = vmatmul.mubr.bf16.gmra.mrb[0].mxu0 %v7240
    %v7279 = vpop.f32.mrb[0].mxu0
    %v7280 = vadd.f32 0.0, %v7279
    %v7281 = vpop.f32.mrb[0].mxu0
    %v7282 = vpop.f32.mrb[0].mxu0
    %v7283 = vpop.f32.mrb[0].mxu0
    %7284 = vdwg.mxu0
    %7285 = vrot.lane.b32.xlu0 %v4102, 32
    %v7286 = vpop.permute.xlu0 %7285
    %v7288 = vsel %vm210, %v6995, 0
    %v7291 = vsel %vm701, %v7286, 0
    %7293 = vmatprep.subr.bf16.mxu0 0
    %7294 = vmatpush1.bf16.msra.mxu0 %v7291
    %7295 = vmatprep.subr.bf16.mxu0 0
    %7296 = vmatpush1.bf16.msra.mxu0 0
    %7297 = vmatprep.subr.bf16.mxu0 0
    %7298 = vmatpush1.bf16.msra.mxu0 0
    %7299 = vmatprep.subr.bf16.mxu0 0
    %7300 = vmatpush1.bf16.msra.mxu0 0
    %7301 = vmatprep.subr.bf16.mxu0 0
    %7302 = vmatpush1.bf16.msra.mxu0 0
    %7303 = vmatprep.subr.bf16.mxu0 0
    %7304 = vmatpush1.bf16.msra.mxu0 0
    %7305 = vmatprep.subr.bf16.mxu0 0
    %7306 = vmatpush1.bf16.msra.mxu0 0
    %7307 = vmatprep.subr.bf16.mxu0 0
    %7308 = vmatpush1.bf16.msra.mxu0 0
    %7309 = vmatprep.subr.bf16.mxu0 0
    %7310 = vmatpush1.bf16.msra.mxu0 0
    %7311 = vmatprep.subr.bf16.mxu0 0
    %7312 = vmatpush1.bf16.msra.mxu0 0
    %7313 = vmatprep.subr.bf16.mxu0 0
    %7314 = vmatpush1.bf16.msra.mxu0 0
    %7315 = vmatprep.subr.bf16.mxu0 0
    %7316 = vmatpush1.bf16.msra.mxu0 0
    %7317 = vmatprep.subr.bf16.mxu0 0
    %7318 = vmatpush1.bf16.msra.mxu0 0
    %7319 = vmatprep.subr.bf16.mxu0 0
    %7320 = vmatpush1.bf16.msra.mxu0 0
    %7321 = vmatprep.subr.bf16.mxu0 0
    %7322 = vmatpush1.bf16.msra.mxu0 0
    %7323 = vmatprep.subr.bf16.mxu0 0
    %7324 = vmatpush1.bf16.msra.mxu0 0
    %7325 = vmatprep.mubr.bf16.mxu0 0
    %7326 = vmatmul.mubr.bf16.gmra.mrb[0].mxu0 %v7288
    %v7327 = vpop.f32.mrb[0].mxu0
    %v7328 = vadd.f32 0.0, %v7327
    %v7329 = vpop.f32.mrb[0].mxu0
    %v7330 = vpop.f32.mrb[0].mxu0
    %v7331 = vpop.f32.mrb[0].mxu0
    %7332 = vdwg.mxu0
    %7333 = vrot.lane.b32.xlu0 %v4103, 32
    %v7334 = vpop.permute.xlu0 %7333
    %v7336 = vsel %vm210, %v6996, 0
    %v7339 = vsel %vm701, %v7334, 0
    %7341 = vmatprep.subr.bf16.mxu0 0
    %7342 = vmatpush1.bf16.msra.mxu0 %v7339
    %7343 = vmatprep.subr.bf16.mxu0 0
    %7344 = vmatpush1.bf16.msra.mxu0 0
    %7345 = vmatprep.subr.bf16.mxu0 0
    %7346 = vmatpush1.bf16.msra.mxu0 0
    %7347 = vmatprep.subr.bf16.mxu0 0
    %7348 = vmatpush1.bf16.msra.mxu0 0
    %7349 = vmatprep.subr.bf16.mxu0 0
    %7350 = vmatpush1.bf16.msra.mxu0 0
    %7351 = vmatprep.subr.bf16.mxu0 0
    %7352 = vmatpush1.bf16.msra.mxu0 0
    %7353 = vmatprep.subr.bf16.mxu0 0
    %7354 = vmatpush1.bf16.msra.mxu0 0
    %7355 = vmatprep.subr.bf16.mxu0 0
    %7356 = vmatpush1.bf16.msra.mxu0 0
    %7357 = vmatprep.subr.bf16.mxu0 0
    %7358 = vmatpush1.bf16.msra.mxu0 0
    %7359 = vmatprep.subr.bf16.mxu0 0
    %7360 = vmatpush1.bf16.msra.mxu0 0
    %7361 = vmatprep.subr.bf16.mxu0 0
    %7362 = vmatpush1.bf16.msra.mxu0 0
    %7363 = vmatprep.subr.bf16.mxu0 0
    %7364 = vmatpush1.bf16.msra.mxu0 0
    %7365 = vmatprep.subr.bf16.mxu0 0
    %7366 = vmatpush1.bf16.msra.mxu0 0
    %7367 = vmatprep.subr.bf16.mxu0 0
    %7368 = vmatpush1.bf16.msra.mxu0 0
    %7369 = vmatprep.subr.bf16.mxu0 0
    %7370 = vmatpush1.bf16.msra.mxu0 0
    %7371 = vmatprep.subr.bf16.mxu0 0
    %7372 = vmatpush1.bf16.msra.mxu0 0
    %7373 = vmatprep.mubr.bf16.mxu0 0
    %7374 = vmatmul.mubr.bf16.gmra.mrb[0].mxu0 %v7336
    %v7375 = vpop.f32.mrb[0].mxu0
    %v7376 = vadd.f32 0.0, %v7375
    %v7377 = vpop.f32.mrb[0].mxu0
    %v7378 = vpop.f32.mrb[0].mxu0
    %v7379 = vpop.f32.mrb[0].mxu0
    %7380 = vdwg.mxu0
    %7383 = vrot.lane.b32.xlu0 %v7136, 8
    %v7384 = vpop.permute.xlu0 %7383
    %7385 = vrot.lane.b32.xlu0 %v7184, 8
    %v7386 = vpop.permute.xlu0 %7385
    %7391 = vrot.lane.b32.xlu0 %v7232, 16
    %v7392 = vpop.permute.xlu0 %7391
    %7393 = vrot.lane.b32.xlu0 %v7280, 16
    %v7394 = vpop.permute.xlu0 %7393
    %7399 = vrot.lane.b32.xlu0 %v7328, 24
    %v7400 = vpop.permute.xlu0 %7399
    %7401 = vrot.lane.b32.xlu0 %v7376, 24
    %v7402 = vpop.permute.xlu0 %7401
    %v7405 = vsel %vm210, %v7040, %v7384
    %v7406 = vsel %vm210, %v7088, %v7386
    %v7407 = vsel %vm1107, %v7405, %v7392
    %v7408 = vsel %vm1107, %v7406, %v7394
    %v7409 = vsel %vm1110, %v7407, %v7400
    %v7410 = vsel %vm1110, %v7408, %v7402
    %v7411 = vpack.c.bf16 %v7410, %v7409
    %v7412 = vld [vmem:[#allocation7 + $0x1b0] sm:$0xf]
    %v7413 = vld [vmem:[#allocation7 + $0x1b4] sm:$0xf]
    %v7414 = vld [vmem:[#allocation7 + $0x1b8] sm:$0xf]
    %v7415 = vld [vmem:[#allocation7 + $0x1bc] sm:$0xf]
    %v7416 = vld [vmem:[#allocation8 + $0x62] sm:$0x1]
    %v7417 = vlaneseq
    %v7418 = vshrl.u32 %v7417, 7
    %v7419 = vsub.s32 0, %v7418
    %v7420 = vrot.slane %v7416, %v7419
    %v7425 = vunpack.c.l.b16 %v7412
    %v7426 = vunpack.c.l.b16 %v7413
    %v7427 = vunpack.c.l.b16 %v7414
    %v7428 = vunpack.c.l.b16 %v7415
    %v7429 = vpack.c.b16 %v7426, %v7425
    %v7430 = vpack.c.b16 %v7428, %v7427
    %v7434 = vsel %vm134, %v7411, 0
    %7436 = vmatprep.subr.bf16.mxu0 0
    %7437 = vmatpush1.bf16.msra.mxu0 %v7429
    %7438 = vmatprep.subr.bf16.mxu0 0
    %7439 = vmatpush1.bf16.msra.mxu0 %v7430
    %7440 = vmatprep.subr.bf16.mxu0 0
    %7441 = vmatpush1.bf16.msra.mxu0 0
    %7442 = vmatprep.subr.bf16.mxu0 0
    %7443 = vmatpush1.bf16.msra.mxu0 0
    %7444 = vmatprep.subr.bf16.mxu0 0
    %7445 = vmatpush1.bf16.msra.mxu0 0
    %7446 = vmatprep.subr.bf16.mxu0 0
    %7447 = vmatpush1.bf16.msra.mxu0 0
    %7448 = vmatprep.subr.bf16.mxu0 0
    %7449 = vmatpush1.bf16.msra.mxu0 0
    %7450 = vmatprep.subr.bf16.mxu0 0
    %7451 = vmatpush1.bf16.msra.mxu0 0
    %7452 = vmatprep.subr.bf16.mxu0 0
    %7453 = vmatpush1.bf16.msra.mxu0 0
    %7454 = vmatprep.subr.bf16.mxu0 0
    %7455 = vmatpush1.bf16.msra.mxu0 0
    %7456 = vmatprep.subr.bf16.mxu0 0
    %7457 = vmatpush1.bf16.msra.mxu0 0
    %7458 = vmatprep.subr.bf16.mxu0 0
    %7459 = vmatpush1.bf16.msra.mxu0 0
    %7460 = vmatprep.subr.bf16.mxu0 0
    %7461 = vmatpush1.bf16.msra.mxu0 0
    %7462 = vmatprep.subr.bf16.mxu0 0
    %7463 = vmatpush1.bf16.msra.mxu0 0
    %7464 = vmatprep.subr.bf16.mxu0 0
    %7465 = vmatpush1.bf16.msra.mxu0 0
    %7466 = vmatprep.subr.bf16.mxu0 0
    %7467 = vmatpush1.bf16.msra.mxu0 0
    %7468 = vmatprep.mubr.bf16.mxu0 0
    %7469 = vmatmul.mubr.bf16.gmra.mrb[0].mxu0 %v7434
    %v7470 = vpop.f32.mrb[0].mxu0
    %v7471 = vadd.f32 %v7420, %v7470
    %v7472 = vpop.f32.mrb[0].mxu0
    %v7473 = vpop.f32.mrb[0].mxu0
    %v7474 = vadd.f32 %v7420, %v7473
    %v7475 = vpop.f32.mrb[0].mxu0
    %7476 = vdwg.mxu0
    %v7477 = vadd.f32 %v6421, %v7471
    %v7478 = vadd.f32 %v6422, %v7474
    %v7479 = vsel %vm134, %v7477, 0.0
    %7480 = vadd.xlane.f32.xlu0 %v7479
    %v7481 = vpop.xlane.xlu0 %7480
    %v7482 = vsel %vm134, %v7478, 0.0
    %7483 = vadd.xlane.f32.xlu0 %v7482
    %v7484 = vpop.xlane.xlu0 %7483
    %v7485 = vmul.f32 %v7481, %v1187
    %v7486 = vmul.f32 %v7484, %v1187
    %v7487 = vsub.f32 %v7477, %v7485
    %v7488 = vsub.f32 %v7478, %v7486
    %v7489 = vmul.f32 %v7487, %v7487
    %v7490 = vmul.f32 %v7488, %v7488
    %v7491 = vsel %vm134, %v7489, 0.0
    %7492 = vadd.xlane.f32.xlu0 %v7491
    %v7493 = vpop.xlane.xlu0 %7492
    %v7494 = vsel %vm134, %v7490, 0.0
    %7495 = vadd.xlane.f32.xlu0 %v7494
    %v7496 = vpop.xlane.xlu0 %7495
    %v7497 = vmul.f32 %v7493, %v1187
    %v7498 = vmul.f32 %v7496, %v1187
    %v7499 = vadd.f32 %v7497, 1e-05
    %v7500 = vadd.f32 %v7498, 1e-05
    %v7501 = vrsqrt.pop %v7499
    %v7502 = vrsqrt.pop %v7500
    %v7503 = vmul.f32 %v7487, %v7501
    %v7504 = vmul.f32 %v7488, %v7502
    %v7505 = vld [vmem:[#allocation8 + $0x67] sm:$0x1]
    %v7506 = vlaneseq
    %v7507 = vshrl.u32 %v7506, 7
    %v7508 = vsub.s32 0, %v7507
    %v7509 = vrot.slane %v7505, %v7508
    %v7510 = vmul.f32 %v7503, %v7509
    %v7511 = vmul.f32 %v7504, %v7509
    %v7512 = vld [vmem:[#allocation8 + $0x68] sm:$0x1]
    %v7513 = vlaneseq
    %v7514 = vshrl.u32 %v7513, 7
    %v7515 = vsub.s32 0, %v7514
    %v7516 = vrot.slane %v7512, %v7515
    %v7517 = vadd.f32 %v7510, %v7516
    %v7518 = vadd.f32 %v7511, %v7516
    %v7519 = vpack.c.bf16 %v7518, %v7517
    %v7520 = vld [vmem:[#allocation7 + $0x1c0] sm:$0xf]
    %v7521 = vld [vmem:[#allocation7 + $0x1c4] sm:$0xf]
    %v7522 = vld [vmem:[#allocation7 + $0x1c8] sm:$0xf]
    %v7523 = vld [vmem:[#allocation7 + $0x1cc] sm:$0xf]
    %v7524 = vld [vmem:[#allocation8 + $0x63] sm:$0x1]
    %v7525 = vlaneseq
    %v7526 = vshrl.u32 %v7525, 7
    %v7527 = vsub.s32 0, %v7526
    %v7528 = vrot.slane %v7524, %v7527
    %v7533 = vunpack.c.l.b16 %v7520
    %v7534 = vunpack.c.l.b16 %v7521
    %v7535 = vunpack.c.l.b16 %v7522
    %v7536 = vunpack.c.l.b16 %v7523
    %v7537 = vpack.c.b16 %v7534, %v7533
    %v7538 = vpack.c.b16 %v7536, %v7535
    %v7542 = vsel %vm134, %v7519, 0
    %7544 = vmatprep.subr.bf16.mxu0 0
    %7545 = vmatpush1.bf16.msra.mxu0 %v7537
    %7546 = vmatprep.subr.bf16.mxu0 0
    %7547 = vmatpush1.bf16.msra.mxu0 %v7538
    %7548 = vmatprep.subr.bf16.mxu0 0
    %7549 = vmatpush1.bf16.msra.mxu0 0
    %7550 = vmatprep.subr.bf16.mxu0 0
    %7551 = vmatpush1.bf16.msra.mxu0 0
    %7552 = vmatprep.subr.bf16.mxu0 0
    %7553 = vmatpush1.bf16.msra.mxu0 0
    %7554 = vmatprep.subr.bf16.mxu0 0
    %7555 = vmatpush1.bf16.msra.mxu0 0
    %7556 = vmatprep.subr.bf16.mxu0 0
    %7557 = vmatpush1.bf16.msra.mxu0 0
    %7558 = vmatprep.subr.bf16.mxu0 0
    %7559 = vmatpush1.bf16.msra.mxu0 0
    %7560 = vmatprep.subr.bf16.mxu0 0
    %7561 = vmatpush1.bf16.msra.mxu0 0
    %7562 = vmatprep.subr.bf16.mxu0 0
    %7563 = vmatpush1.bf16.msra.mxu0 0
    %7564 = vmatprep.subr.bf16.mxu0 0
    %7565 = vmatpush1.bf16.msra.mxu0 0
    %7566 = vmatprep.subr.bf16.mxu0 0
    %7567 = vmatpush1.bf16.msra.mxu0 0
    %7568 = vmatprep.subr.bf16.mxu0 0
    %7569 = vmatpush1.bf16.msra.mxu0 0
    %7570 = vmatprep.subr.bf16.mxu0 0
    %7571 = vmatpush1.bf16.msra.mxu0 0
    %7572 = vmatprep.subr.bf16.mxu0 0
    %7573 = vmatpush1.bf16.msra.mxu0 0
    %7574 = vmatprep.subr.bf16.mxu0 0
    %7575 = vmatpush1.bf16.msra.mxu0 0
    %7576 = vmatprep.mubr.bf16.mxu0 0
    %7577 = vmatmul.mubr.bf16.gmra.mrb[0].mxu0 %v7542
    %v7578 = vpop.f32.mrb[0].mxu0
    %v7579 = vadd.f32 %v7528, %v7578
    %v7580 = vpop.f32.mrb[0].mxu0
    %v7581 = vpop.f32.mrb[0].mxu0
    %v7582 = vadd.f32 %v7528, %v7581
    %v7583 = vpop.f32.mrb[0].mxu0
    %7584 = vdwg.mxu0
    %v7585 = vmax.f32 %v7579, 0.0
    %v7586 = vmax.f32 %v7582, 0.0
    %v7587 = vpack.c.bf16 %v7586, %v7585
    %v7588 = vld [vmem:[#allocation7 + $0x1d0] sm:$0xf]
    %v7589 = vld [vmem:[#allocation7 + $0x1d4] sm:$0xf]
    %v7590 = vld [vmem:[#allocation7 + $0x1d8] sm:$0xf]
    %v7591 = vld [vmem:[#allocation7 + $0x1dc] sm:$0xf]
    %v7592 = vld [vmem:[#allocation7 + $0x1e0] sm:$0xf]
    %v7593 = vld [vmem:[#allocation7 + $0x1e4] sm:$0xf]
    %v7594 = vld [vmem:[#allocation7 + $0x1e8] sm:$0xf]
    %v7595 = vld [vmem:[#allocation7 + $0x1ec] sm:$0xf]
    %v7596 = vld [vmem:[#allocation7 + $0x1f0] sm:$0xf]
    %v7597 = vld [vmem:[#allocation7 + $0x1f4] sm:$0xf]
    %v7598 = vld [vmem:[#allocation7 + $0x1f8] sm:$0xf]
    %v7599 = vld [vmem:[#allocation7 + $0x1fc] sm:$0xf]
    %v7600 = vld [vmem:[#allocation7 + $0x200] sm:$0xf]
    %v7601 = vld [vmem:[#allocation7 + $0x204] sm:$0xf]
    %v7602 = vld [vmem:[#allocation7 + $0x208] sm:$0xf]
    %v7603 = vld [vmem:[#allocation7 + $0x20c] sm:$0xf]
    %v7604 = vld [vmem:[#allocation8 + $0x64] sm:$0x1]
    %v7605 = vlaneseq
    %v7606 = vshrl.u32 %v7605, 7
    %v7607 = vsub.s32 0, %v7606
    %v7608 = vrot.slane %v7604, %v7607
    %v7625 = vunpack.c.l.b16 %v7588
    %v7626 = vunpack.c.l.b16 %v7589
    %v7627 = vunpack.c.l.b16 %v7590
    %v7628 = vunpack.c.l.b16 %v7591
    %v7629 = vunpack.c.l.b16 %v7592
    %v7630 = vunpack.c.l.b16 %v7593
    %v7631 = vunpack.c.l.b16 %v7594
    %v7632 = vunpack.c.l.b16 %v7595
    %v7633 = vunpack.c.l.b16 %v7596
    %v7634 = vunpack.c.l.b16 %v7597
    %v7635 = vunpack.c.l.b16 %v7598
    %v7636 = vunpack.c.l.b16 %v7599
    %v7637 = vunpack.c.l.b16 %v7600
    %v7638 = vunpack.c.l.b16 %v7601
    %v7639 = vunpack.c.l.b16 %v7602
    %v7640 = vunpack.c.l.b16 %v7603
    %v7641 = vpack.c.b16 %v7626, %v7625
    %v7642 = vpack.c.b16 %v7628, %v7627
    %v7643 = vpack.c.b16 %v7630, %v7629
    %v7644 = vpack.c.b16 %v7632, %v7631
    %v7645 = vpack.c.b16 %v7634, %v7633
    %v7646 = vpack.c.b16 %v7636, %v7635
    %v7647 = vpack.c.b16 %v7638, %v7637
    %v7648 = vpack.c.b16 %v7640, %v7639
    %7657 = vmatprep.subr.bf16.mxu0 0
    %7658 = vmatpush1.bf16.msra.mxu0 %v7641
    %7659 = vmatprep.subr.bf16.mxu0 0
    %7660 = vmatpush1.bf16.msra.mxu0 %v7642
    %7661 = vmatprep.subr.bf16.mxu0 0
    %7662 = vmatpush1.bf16.msra.mxu0 %v7643
    %7663 = vmatprep.subr.bf16.mxu0 0
    %7664 = vmatpush1.bf16.msra.mxu0 %v7644
    %7665 = vmatprep.subr.bf16.mxu0 0
    %7666 = vmatpush1.bf16.msra.mxu0 %v7645
    %7667 = vmatprep.subr.bf16.mxu0 0
    %7668 = vmatpush1.bf16.msra.mxu0 %v7646
    %7669 = vmatprep.subr.bf16.mxu0 0
    %7670 = vmatpush1.bf16.msra.mxu0 %v7647
    %7671 = vmatprep.subr.bf16.mxu0 0
    %7672 = vmatpush1.bf16.msra.mxu0 %v7648
    %7673 = vmatprep.subr.bf16.mxu0 0
    %7674 = vmatpush1.bf16.msra.mxu0 0
    %7675 = vmatprep.subr.bf16.mxu0 0
    %7676 = vmatpush1.bf16.msra.mxu0 0
    %7677 = vmatprep.subr.bf16.mxu0 0
    %7678 = vmatpush1.bf16.msra.mxu0 0
    %7679 = vmatprep.subr.bf16.mxu0 0
    %7680 = vmatpush1.bf16.msra.mxu0 0
    %7681 = vmatprep.subr.bf16.mxu0 0
    %7682 = vmatpush1.bf16.msra.mxu0 0
    %7683 = vmatprep.subr.bf16.mxu0 0
    %7684 = vmatpush1.bf16.msra.mxu0 0
    %7685 = vmatprep.subr.bf16.mxu0 0
    %7686 = vmatpush1.bf16.msra.mxu0 0
    %7687 = vmatprep.subr.bf16.mxu0 0
    %7688 = vmatpush1.bf16.msra.mxu0 0
    %7689 = vmatprep.mubr.bf16.mxu0 0
    %7690 = vmatmul.mubr.bf16.gmra.mrb[0].mxu0 %v7587
    %v7691 = vpop.f32.mrb[0].mxu0
    %v7692 = vadd.f32 %v7608, %v7691
    %v7693 = vpop.f32.mrb[0].mxu0
    %v7694 = vpop.f32.mrb[0].mxu0
    %v7695 = vadd.f32 %v7608, %v7694
    %v7696 = vpop.f32.mrb[0].mxu0
    %7697 = vdwg.mxu0
    %v7698 = vadd.f32 %v7517, %v7692
    %v7699 = vadd.f32 %v7518, %v7695
    %v7700 = vsel %vm134, %v7698, 0.0
    %7701 = vadd.xlane.f32.xlu0 %v7700
    %v7702 = vpop.xlane.xlu0 %7701
    %v7703 = vsel %vm134, %v7699, 0.0
    %7704 = vadd.xlane.f32.xlu0 %v7703
    %v7705 = vpop.xlane.xlu0 %7704
    %v7706 = vmul.f32 %v7702, %v1187
    %v7707 = vmul.f32 %v7705, %v1187
    %v7708 = vsub.f32 %v7698, %v7706
    %v7709 = vsub.f32 %v7699, %v7707
    %v7710 = vmul.f32 %v7708, %v7708
    %v7711 = vmul.f32 %v7709, %v7709
    %v7712 = vsel %vm134, %v7710, 0.0
    %7713 = vadd.xlane.f32.xlu0 %v7712
    %v7714 = vpop.xlane.xlu0 %7713
    %v7715 = vsel %vm134, %v7711, 0.0
    %7716 = vadd.xlane.f32.xlu0 %v7715
    %v7717 = vpop.xlane.xlu0 %7716
    %v7718 = vmul.f32 %v7714, %v1187
    %v7719 = vmul.f32 %v7717, %v1187
    %v7720 = vadd.f32 %v7718, 1e-05
    %v7721 = vadd.f32 %v7719, 1e-05
    %v7722 = vrsqrt.pop %v7720
    %v7723 = vrsqrt.pop %v7721
    %v7724 = vmul.f32 %v7708, %v7722
    %v7725 = vmul.f32 %v7709, %v7723
    %v7726 = vld [vmem:[#allocation8 + $0x69] sm:$0x1]
    %v7727 = vlaneseq
    %v7728 = vshrl.u32 %v7727, 7
    %v7729 = vsub.s32 0, %v7728
    %v7730 = vrot.slane %v7726, %v7729
    %v7731 = vmul.f32 %v7724, %v7730
    %v7732 = vmul.f32 %v7725, %v7730
    %v7733 = vld [vmem:[#allocation8 + $0x6a] sm:$0x1]
    %v7734 = vlaneseq
    %v7735 = vshrl.u32 %v7734, 7
    %v7736 = vsub.s32 0, %v7735
    %v7737 = vrot.slane %v7733, %v7736
    %v7738 = vadd.f32 %v7731, %v7737
    %v7739 = vadd.f32 %v7732, %v7737
    %v7740 = vsel %vm134, %v7738, 0.0
    %7741 = vadd.xlane.f32.xlu0 %v7740
    %v7742 = vpop.xlane.xlu0 %7741
    %v7743 = vsel %vm134, %v7739, 0.0
    %7744 = vadd.xlane.f32.xlu0 %v7743
    %v7745 = vpop.xlane.xlu0 %7744
    %v7746 = vmul.f32 %v7742, %v1187
    %v7747 = vmul.f32 %v7745, %v1187
    %v7748 = vsub.f32 %v7738, %v7746
    %v7749 = vsub.f32 %v7739, %v7747
    %v7750 = vmul.f32 %v7748, %v7748
    %v7751 = vmul.f32 %v7749, %v7749
    %v7752 = vsel %vm134, %v7750, 0.0
    %7753 = vadd.xlane.f32.xlu0 %v7752
    %v7754 = vpop.xlane.xlu0 %7753
    %v7755 = vsel %vm134, %v7751, 0.0
    %7756 = vadd.xlane.f32.xlu0 %v7755
    %v7757 = vpop.xlane.xlu0 %7756
    %v7758 = vmul.f32 %v7754, %v1187
    %v7759 = vmul.f32 %v7757, %v1187
    %v7760 = vadd.f32 %v7758, 1e-05
    %v7761 = vadd.f32 %v7759, 1e-05
    %v7762 = vrsqrt.pop %v7760
    %v7763 = vrsqrt.pop %v7761
    %v7764 = vmul.f32 %v7748, %v7762
    %v7765 = vmul.f32 %v7749, %v7763
    %v7766 = vld [vmem:[#allocation8 + $0x6b] sm:$0x1]
    %v7767 = vlaneseq
    %v7768 = vshrl.u32 %v7767, 7
    %v7769 = vsub.s32 0, %v7768
    %v7770 = vrot.slane %v7766, %v7769
    %v7771 = vmul.f32 %v7764, %v7770
    %v7772 = vmul.f32 %v7765, %v7770
    %v7773 = vld [vmem:[#allocation8 + $0x6c] sm:$0x1]
    %v7774 = vlaneseq
    %v7775 = vshrl.u32 %v7774, 7
    %v7776 = vsub.s32 0, %v7775
    %v7777 = vrot.slane %v7773, %v7776
    %v7778 = vadd.f32 %v7771, %v7777
    %v7779 = vadd.f32 %v7772, %v7777
    %7780 = vst.msk [vmem:[#allocation10] sm:$0xff] %vm134, %v7778
    %7781 = vst.msk [vmem:[#allocation10 + $0x8] sm:$0xff] %vm134, %v7779
    // Predicated region
    $region34: #{transformer_tsp_forward.1} parent=1 // pred_check
      _
    $region35: #{transformer_tsp_forward.1} parent=1 // pred_check_branch
      %7783 = sbr.rel (0) target = $region37
    $region36: #{transformer_tsp_forward.1} parent=1 // pred_region
      %s7785 = ssub.s32 256, 256
      %7786 = vsyncadd [#allocation4], %s7785
      %s7787 = sshll.u32 [#allocation10], 4
      %s7788 = int_to_ptr.vmem [resolvable:$true] %s7787
      %7793 = dma.vmem_to_hbm [thread:$0]  %s7788, 256, %s4, [#allocation4], 128, 128, 8
    $region37: #{transformer_tsp_forward.1} parent=1 // pred_fallthru
      _
    // Predicated region
    $region38: #{transformer_tsp_forward.1} parent=1 // pred_check
      _
    $region39: #{transformer_tsp_forward.1} parent=1 // pred_check_branch
      %7795 = sbr.rel (0) target = $region41
    $region40: #{transformer_tsp_forward.1} parent=1 // pred_region
      %7796 = dma.done [#allocation4], 256
    $region41: #{transformer_tsp_forward.1} parent=1 // pred_fallthru
      _
    %7797 = vsyncpa [#allocation3], 1
    %7798 = vsyncpa [#allocation6], 1
    %7799 = vsyncpa [#allocation9], 1
    %7800 = vsyncpa [#allocation4], 1

</llo_original>
